<compile_context>
chip_gen: v7x
topology: tpu7x:2x2x1
jax: 0.10.0
libtpu: 0.0.40
codegen_flags: <defaults>
</compile_context>

<pallas_src>
import functools

import jax
import jax.numpy as jnp
from jax.experimental import pallas as pl
from jax.experimental.pallas import tpu as pltpu


def _pick_vmem_limit():
    """Generation-aware scoped-VMEM budget: ~70% of physical, capped at 100 MiB."""
    try:
        info = pltpu.get_tpu_info()
        cap = getattr(info, "vmem_capacity_bytes", None)
        if cap:
            return int(min(cap * 7 // 10, 100 * 1024 * 1024))
    except Exception:
        pass
    return 48 * 1024 * 1024  # safe fallback (fits v5e/v6e/v7x)


VMEM_LIMIT = _pick_vmem_limit()


def _pick_tile(dim, cap, step=128):
    """Largest multiple of `step` <= cap that divides dim (whole dim if dim <= cap)."""
    if dim <= cap:
        return dim
    t = (cap // step) * step
    while t >= step:
        if dim % t == 0:
            return t
        t -= step
    return dim


def _gelu(y):
    # TODO(synk): HF BERT uses exact erf-GELU; tanh approximation used here.
    return 0.5 * y * (1.0 + jnp.tanh(0.7978845608028654 * (y + 0.044715 * y * y * y)))


# ----------------------------- Pallas kernels ---------------------------------------

def _ln_kernel(x_ref, g_ref, b_ref, o_ref, *, eps):
    """o = LayerNorm(x) * gamma + beta  (no residual; stats in f32)."""
    x = x_ref[...].astype(jnp.float32)
    mean = jnp.mean(x, axis=-1, keepdims=True)
    var = jnp.mean((x - mean) * (x - mean), axis=-1, keepdims=True)
    xn = (x - mean) * jax.lax.rsqrt(var + eps)
    o_ref[...] = (xn * g_ref[...] + b_ref[...]).astype(o_ref.dtype)


def layernorm(x, gamma, beta, eps=1e-12, out_dtype=jnp.bfloat16):
    M, H = x.shape
    tm = _pick_tile(M, 1024)  # pure mem-bound: big row tiles
    return pl.pallas_call(
        functools.partial(_ln_kernel, eps=eps),
        out_shape=jax.ShapeDtypeStruct((M, H), out_dtype),
        grid=(M // tm,),
        in_specs=[
            pl.BlockSpec((tm, H), lambda i: (i, 0)),
            pl.BlockSpec((1, H), lambda i: (0, 0)),
            pl.BlockSpec((1, H), lambda i: (0, 0)),
        ],
        out_specs=pl.BlockSpec((tm, H), lambda i: (i, 0)),
        compiler_params=pltpu.CompilerParams(
            dimension_semantics=("parallel",),
            vmem_limit_bytes=VMEM_LIMIT,
        ),
    )(x, gamma.reshape(1, H), beta.reshape(1, H))


def _dense_kernel(x_ref, w_ref, b_ref, o_ref, acc_ref):
    """Tiled o = x @ w + b; bf16 MXU matmul, f32 accumulator scratch."""
    k = pl.program_id(2)

    @pl.when(k == 0)
    def _():
        acc_ref[...] = jnp.zeros_like(acc_ref)

    acc_ref[...] += jnp.dot(x_ref[...], w_ref[...],
                            preferred_element_type=jnp.float32)

    @pl.when(k == pl.num_programs(2) - 1)
    def _():
        o_ref[...] = (acc_ref[...] + b_ref[...]).astype(o_ref.dtype)


def dense(x, w, b, out_dtype=jnp.bfloat16):
    M, K = x.shape
    N = w.shape[1]
    tm = _pick_tile(M, 512)
    tn = _pick_tile(N, 256)
    tk = _pick_tile(K, 256)
    return pl.pallas_call(
        _dense_kernel,
        out_shape=jax.ShapeDtypeStruct((M, N), out_dtype),
        grid=(M // tm, N // tn, K // tk),
        in_specs=[
            pl.BlockSpec((tm, tk), lambda i, j, k: (i, k)),
            pl.BlockSpec((tk, tn), lambda i, j, k: (k, j)),
            pl.BlockSpec((1, tn), lambda i, j, k: (0, j)),
        ],
        out_specs=pl.BlockSpec((tm, tn), lambda i, j, k: (i, j)),
        scratch_shapes=[pltpu.VMEM((tm, tn), jnp.float32)],
        compiler_params=pltpu.CompilerParams(
            dimension_semantics=("parallel", "parallel", "arbitrary"),
            vmem_limit_bytes=VMEM_LIMIT,
        ),
    )(x, w, b.reshape(1, N))


def _dense_ln_kernel(x_ref, w_ref, b_ref, res_ref, g_ref, beta_ref, o_ref, acc_ref,
                     *, eps):
    """Tiled o = LayerNorm(x @ w + b + residual) * gamma + beta (fused epilogue)."""
    k = pl.program_id(1)

    @pl.when(k == 0)
    def _():
        acc_ref[...] = jnp.zeros_like(acc_ref)

    acc_ref[...] += jnp.dot(x_ref[...], w_ref[...],
                            preferred_element_type=jnp.float32)

    @pl.when(k == pl.num_programs(1) - 1)
    def _():
        y = acc_ref[...] + b_ref[...] + res_ref[...].astype(jnp.float32)
        mean = jnp.mean(y, axis=-1, keepdims=True)
        var = jnp.mean((y - mean) * (y - mean), axis=-1, keepdims=True)
        yn = (y - mean) * jax.lax.rsqrt(var + eps)
        o_ref[...] = (yn * g_ref[...] + beta_ref[...]).astype(o_ref.dtype)


def dense_add_layernorm(x, w, b, residual, gamma, beta, eps=1e-12,
                        out_dtype=jnp.bfloat16):
    M, K = x.shape
    H = w.shape[1]            # output dim == hidden; full row needed for LN reduction
    tm = _pick_tile(M, 512)
    tk = _pick_tile(K, 256)
    return pl.pallas_call(
        functools.partial(_dense_ln_kernel, eps=eps),
        out_shape=jax.ShapeDtypeStruct((M, H), out_dtype),
        grid=(M // tm, K // tk),
        in_specs=[
            pl.BlockSpec((tm, tk), lambda i, k: (i, k)),
            pl.BlockSpec((tk, H), lambda i, k: (k, 0)),
            pl.BlockSpec((1, H), lambda i, k: (0, 0)),
            pl.BlockSpec((tm, H), lambda i, k: (i, 0)),
            pl.BlockSpec((1, H), lambda i, k: (0, 0)),
            pl.BlockSpec((1, H), lambda i, k: (0, 0)),
        ],
        out_specs=pl.BlockSpec((tm, H), lambda i, k: (i, 0)),
        scratch_shapes=[pltpu.VMEM((tm, H), jnp.float32)],
        compiler_params=pltpu.CompilerParams(
            dimension_semantics=("parallel", "arbitrary"),
            vmem_limit_bytes=VMEM_LIMIT,
        ),
    )(x, w, b.reshape(1, H), residual, gamma.reshape(1, H), beta.reshape(1, H))


def _ffn_kernel(x_ref, w1_ref, b1_ref, w2_ref, b2_ref, g_ref, beta_ref, o_ref,
                acc_ref, *, eps):
    """Fused FFN block:
       o = LayerNorm( GELU(x @ w1 + b1) @ w2 + b2 + x ) * gamma + beta.
    The intermediate activation never leaves VMEM; the grid's second axis tiles the
    intermediate (reduction) dimension, and x doubles as the residual."""
    k = pl.program_id(1)

    @pl.when(k == 0)
    def _():
        acc_ref[...] = jnp.zeros_like(acc_ref)

    h = jnp.dot(x_ref[...], w1_ref[...], preferred_element_type=jnp.float32)
    h = _gelu(h + b1_ref[...])
    acc_ref[...] += jnp.dot(h.astype(jnp.bfloat16), w2_ref[...],
                            preferred_element_type=jnp.float32)

    @pl.when(k == pl.num_programs(1) - 1)
    def _():
        y = acc_ref[...] + b2_ref[...] + x_ref[...].astype(jnp.float32)
        mean = jnp.mean(y, axis=-1, keepdims=True)
        var = jnp.mean((y - mean) * (y - mean), axis=-1, keepdims=True)
        yn = (y - mean) * jax.lax.rsqrt(var + eps)
        o_ref[...] = (yn * g_ref[...] + beta_ref[...]).astype(o_ref.dtype)


def ffn_fused(x, w1, b1, w2, b2, gamma, beta, eps=1e-12, out_dtype=jnp.bfloat16):
    M, H = x.shape
    I = w1.shape[1]
    tm = _pick_tile(M, 512)
    ti = _pick_tile(I, 512)
    return pl.pallas_call(
        functools.partial(_ffn_kernel, eps=eps),
        out_shape=jax.ShapeDtypeStruct((M, H), out_dtype),
        grid=(M // tm, I // ti),
        in_specs=[
            pl.BlockSpec((tm, H), lambda i, k: (i, 0)),   # x (also the residual)
            pl.BlockSpec((H, ti), lambda i, k: (0, k)),   # w1
            pl.BlockSpec((1, ti), lambda i, k: (0, k)),   # b1
            pl.BlockSpec((ti, H), lambda i, k: (k, 0)),   # w2
            pl.BlockSpec((1, H), lambda i, k: (0, 0)),    # b2
            pl.BlockSpec((1, H), lambda i, k: (0, 0)),    # gamma
            pl.BlockSpec((1, H), lambda i, k: (0, 0)),    # beta
        ],
        out_specs=pl.BlockSpec((tm, H), lambda i, k: (i, 0)),
        scratch_shapes=[pltpu.VMEM((tm, H), jnp.float32)],
        compiler_params=pltpu.CompilerParams(
            dimension_semantics=("parallel", "arbitrary"),
            vmem_limit_bytes=VMEM_LIMIT,
        ),
    )(x, w1, b1.reshape(1, I), w2, b2.reshape(1, H),
      gamma.reshape(1, H), beta.reshape(1, H))


def _attention_kernel(qkv_ref, bias_ref, o_ref, *, heads_per_group, head_dim):
    """MHSA for one (batch, head-group) grid cell from a packed [S, 3*g*dh] slab.

    The 1/sqrt(dh) scale is pre-folded into the Q weights.  The key-mask broadcast is
    hoisted out of the per-head loop; the group output is stored lane-dense."""
    g, dh = heads_per_group, head_dim
    gw = g * dh
    S = qkv_ref.shape[1]
    mb = jnp.broadcast_to(bias_ref[0], (S, S))                    # hoisted mask bias

    ctxs = []
    for h in range(g):
        q = qkv_ref[0, :, pl.ds(h * dh, dh)]                      # (S, dh) bf16
        k = qkv_ref[0, :, pl.ds(gw + h * dh, dh)]                 # (S, dh) bf16
        v = qkv_ref[0, :, pl.ds(2 * gw + h * dh, dh)]             # (S, dh) bf16
        s = jax.lax.dot_general(q, k, (((1,), (1,)), ((), ())),
                                preferred_element_type=jnp.float32)   # (S, S) f32
        s = s + mb                                                # BERT extended mask
        m = jnp.max(s, axis=-1, keepdims=True)
        p = jnp.exp(s - m)
        l = jnp.sum(p, axis=-1, keepdims=True)
        ctx = jnp.dot(p.astype(jnp.bfloat16), v,
                      preferred_element_type=jnp.float32)         # (S, dh)
        ctx = ctx * pl.reciprocal(l, approx=True)                 # EUP, not S*S divide
        ctxs.append(ctx.astype(o_ref.dtype))
    o_ref[0] = ctxs[0] if g == 1 else jnp.concatenate(ctxs, axis=-1)  # lane-dense


def _heads_per_group(num_heads, head_dim):
    """Pack heads so each group spans >= 128 lanes (lane-aligned blocks)."""
    g = min(num_heads, max(1, 128 // head_dim))
    while num_heads % g:
        g -= 1
    return g


def attention(qkv, mask_bias, num_heads, head_dim):
    B, S, _ = qkv.shape
    H = num_heads * head_dim
    g = _heads_per_group(num_heads, head_dim)
    ng = num_heads // g
    gw = g * head_dim
    return pl.pallas_call(
        functools.partial(_attention_kernel, heads_per_group=g, head_dim=head_dim),
        out_shape=jax.ShapeDtypeStruct((B, S, H), jnp.bfloat16),
        grid=(B, ng),
        in_specs=[
            pl.BlockSpec((1, S, 3 * gw), lambda b, gi: (b, 0, gi)),
            pl.BlockSpec((1, 1, S), lambda b, gi: (b, 0, 0)),
        ],
        out_specs=pl.BlockSpec((1, S, gw), lambda b, gi: (b, 0, gi)),
        compiler_params=pltpu.CompilerParams(
            dimension_semantics=("parallel", "parallel"),
            vmem_limit_bytes=VMEM_LIMIT,
        ),
    )(qkv, mask_bias)


# ------------------------------ model glue -------------------------------------------

def init_params(key, cfg):
    H, I, V, P = cfg["hidden"], cfg["intermediate"], cfg["vocab"], cfg["max_pos"]
    nh = cfg["heads"]
    dh = H // nh
    g = _heads_per_group(nh, dh)
    scale = 1.0 / (dh ** 0.5)
    std = 0.02

    def nrm(k, shape, dtype=jnp.bfloat16):
        return (std * jax.random.normal(k, shape, jnp.float32)).astype(dtype)

    keys = iter(jax.random.split(key, 4 + 8 * cfg["layers"]))
    params = {
        "word_emb": nrm(next(keys), (V, H), jnp.float32),
        "pos_emb": nrm(next(keys), (P, H), jnp.float32),
        "tok_emb": nrm(next(keys), (2, H), jnp.float32),
        "emb_ln_g": jnp.ones((H,), jnp.float32),
        "emb_ln_b": jnp.zeros((H,), jnp.float32),
        "layers": [],
    }
    for _ in range(cfg["layers"]):
        wq = nrm(next(keys), (H, H))
        wk = nrm(next(keys), (H, H))
        wv = nrm(next(keys), (H, H))
        bq = jnp.zeros((H,), jnp.float32)
        bk = jnp.zeros((H,), jnp.float32)
        bv = jnp.zeros((H,), jnp.float32)
        # fold the softmax scale into the Q projection (saves per-head VPU passes)
        wq = (wq.astype(jnp.float32) * scale).astype(jnp.bfloat16)
        bq = bq * scale
        # pack QKV columns head-group-major: [q_g | k_g | v_g] per group of g heads,
        # so the attention kernel gets contiguous 128-lane-aligned per-group slabs.
        w_cols, b_cols = [], []
        for g0 in range(0, nh, g):
            sl = slice(g0 * dh, (g0 + g) * dh)
            w_cols += [wq[:, sl], wk[:, sl], wv[:, sl]]
            b_cols += [bq[sl], bk[sl], bv[sl]]
        lp = {
            "w_qkv": jnp.concatenate(w_cols, axis=1),     # (H, 3H) bf16, group-packed
            "b_qkv": jnp.concatenate(b_cols, axis=0),     # (3H,) f32
            "wo": nrm(next(keys), (H, H)), "bo": jnp.zeros((H,), jnp.float32),
            "ln1_g": jnp.ones((H,), jnp.float32), "ln1_b": jnp.zeros((H,), jnp.float32),
            "w1": nrm(next(keys), (H, I)), "b1": jnp.zeros((I,), jnp.float32),
            "w2": nrm(next(keys), (I, H)), "b2": jnp.zeros((H,), jnp.float32),
            "ln2_g": jnp.ones((H,), jnp.float32), "ln2_b": jnp.zeros((H,), jnp.float32),
        }
        params["layers"].append(lp)
    return params


def bert_encoder_forward(params, input_ids, attention_mask, cfg):
    """Equivalent of BertEncoder.forward: run BERT, return CLS token embedding."""
    B, S = input_ids.shape
    H, nh = cfg["hidden"], cfg["heads"]
    dh = H // nh

    # --- embeddings (gather / adds are XLA glue; LN is a Pallas kernel) ---
    x = jnp.take(params["word_emb"], input_ids, axis=0)           # (B, S, H) f32
    x = x + params["pos_emb"][:S][None, :, :]
    x = x + params["tok_emb"][0][None, None, :]                   # token_type_ids = 0
    x2 = layernorm(x.reshape(B * S, H),
                   params["emb_ln_g"], params["emb_ln_b"])        # (B*S, H) bf16

    mask_bias = ((1.0 - attention_mask.astype(jnp.float32)) * -10000.0
                 ).reshape(B, 1, S)                               # BERT extended mask

    for lp in params["layers"]:
        # self-attention: one fused (group-packed) QKV matmul, heads handled in-kernel
        qkv = dense(x2, lp["w_qkv"], lp["b_qkv"])                 # (B*S, 3H) bf16
        ctx = attention(qkv.reshape(B, S, 3 * H), mask_bias, nh, dh)  # (B, S, H)
        # output projection fused with bias + residual + LayerNorm
        x2 = dense_add_layernorm(ctx.reshape(B * S, H), lp["wo"], lp["bo"],
                                 x2, lp["ln1_g"], lp["ln1_b"])
        # feed-forward: w1+GELU+w2+bias+residual+LN fused in a single pallas_call,
        # the (B*S, I) intermediate never round-trips through HBM.
        x2 = ffn_fused(x2, lp["w1"], lp["b1"], lp["w2"], lp["b2"],
                       lp["ln2_g"], lp["ln2_b"])

    out = x2.reshape(B, S, H)                 # sequence_output = bert_encoder(...)[0]
    cls = out[:, 0, :].astype(jnp.float32)    # output[:, 0, :]
    return cls


if __name__ == "__main__":
    # Small but lane-aligned config (all matmul dims multiples of 128).
    cfg = dict(vocab=512, hidden=128, heads=4, layers=2,
               intermediate=512, max_pos=128, seq=128, batch=2)

    key = jax.random.PRNGKey(0)
    pkey, ikey = jax.random.split(key)
    params = init_params(pkey, cfg)

    B, S = cfg["batch"], cfg["seq"]
    # TODO(synk): HF tokenizer / pretrained checkpoint have no Pallas equivalent;
    # synthetic token ids + mask with deterministic synthetic weights.
    input_ids = jax.random.randint(ikey, (B, S), 2, cfg["vocab"])
    input_ids = input_ids.at[:, 0].set(1)                   # [CLS]-like special token
    attention_mask = jnp.ones((B, S), dtype=jnp.int32)
    attention_mask = attention_mask.at[1, S - 16:].set(0)   # padding on second caption
    input_ids = jnp.where(attention_mask == 1, input_ids, 0)

    fwd = jax.jit(functools.partial(bert_encoder_forward, cfg=cfg))
    cls = fwd(params, input_ids, attention_mask)
    cls = jax.block_until_ready(cls)
    assert cls.shape == (B, cfg["hidden"]) and cls.dtype == jnp.float32
    print("KERNEL_OK")
</pallas_src>

<mosaic_0001>
module attributes {stable_mosaic.version = 11 : i64} {
  func.func @_ln_kernel(%arg0: i32, %arg1: memref<256x128xf32, #tpu.memory_space<vmem>>, %arg2: memref<1x128xf32, #tpu.memory_space<vmem>>, %arg3: memref<1x128xf32, #tpu.memory_space<vmem>>, %arg4: memref<256x128xbf16, #tpu.memory_space<vmem>>) attributes {dimension_semantics = [#tpu.dimension_semantics<parallel>], iteration_bounds = array<i64: 1>, scalar_prefetch = 0 : i64, scratch_operands = 0 : i64, tpu.core_type = #tpu.core_type<tc>, window_params = [{transform_indices = @transform_0, window_bounds = array<i64: 256, 128>}, {pipeline_mode = #tpu.pipeline_mode<synchronous>, transform_indices = @transform_1, window_bounds = array<i64: 1, 128>}, {pipeline_mode = #tpu.pipeline_mode<synchronous>, transform_indices = @transform_2, window_bounds = array<i64: 1, 128>}, {transform_indices = @transform_3, window_bounds = array<i64: 256, 128>}]} {
    %c0 = arith.constant 0 : index
    %c0_0 = arith.constant 0 : index
    %0 = vector.load %arg1[%c0, %c0_0] : memref<256x128xf32, #tpu.memory_space<vmem>>, vector<256x128xf32>
    %cst = arith.constant dense<0.000000e+00> : vector<256xf32>
    %1 = vector.multi_reduction <add>, %0, %cst [1] : vector<256x128xf32> to vector<256xf32>
    %2 = vector.shape_cast %1 : vector<256xf32> to vector<256x1xf32>
    %cst_1 = arith.constant 1.280000e+02 : f32
    %3 = vector.broadcast %cst_1 : f32 to vector<256x1xf32>
    %4 = arith.divf %2, %3 : vector<256x1xf32>
    %5 = vector.broadcast %4 : vector<256x1xf32> to vector<256x128xf32>
    %6 = arith.subf %0, %5 : vector<256x128xf32>
    %7 = vector.broadcast %4 : vector<256x1xf32> to vector<256x128xf32>
    %8 = arith.subf %0, %7 : vector<256x128xf32>
    %9 = arith.mulf %6, %8 : vector<256x128xf32>
    %cst_2 = arith.constant dense<0.000000e+00> : vector<256xf32>
    %10 = vector.multi_reduction <add>, %9, %cst_2 [1] : vector<256x128xf32> to vector<256xf32>
    %11 = vector.shape_cast %10 : vector<256xf32> to vector<256x1xf32>
    %cst_3 = arith.constant 1.280000e+02 : f32
    %12 = vector.broadcast %cst_3 : f32 to vector<256x1xf32>
    %13 = arith.divf %11, %12 : vector<256x1xf32>
    %14 = vector.broadcast %4 : vector<256x1xf32> to vector<256x128xf32>
    %15 = arith.subf %0, %14 : vector<256x128xf32>
    %cst_4 = arith.constant 9.99999996E-13 : f32
    %16 = vector.broadcast %cst_4 : f32 to vector<256x1xf32>
    %17 = arith.addf %13, %16 : vector<256x1xf32>
    %18 = math.rsqrt %17 : vector<256x1xf32>
    %19 = vector.broadcast %18 : vector<256x1xf32> to vector<256x128xf32>
    %20 = arith.mulf %15, %19 : vector<256x128xf32>
    %c0_5 = arith.constant 0 : index
    %c0_6 = arith.constant 0 : index
    %21 = vector.load %arg2[%c0_5, %c0_6] : memref<1x128xf32, #tpu.memory_space<vmem>>, vector<1x128xf32>
    %22 = vector.broadcast %21 : vector<1x128xf32> to vector<256x128xf32>
    %23 = arith.mulf %20, %22 : vector<256x128xf32>
    %c0_7 = arith.constant 0 : index
    %c0_8 = arith.constant 0 : index
    %24 = vector.load %arg3[%c0_7, %c0_8] : memref<1x128xf32, #tpu.memory_space<vmem>>, vector<1x128xf32>
    %25 = vector.broadcast %24 : vector<1x128xf32> to vector<256x128xf32>
    %26 = arith.addf %23, %25 : vector<256x128xf32>
    %27 = arith.truncf %26 : vector<256x128xf32> to vector<256x128xbf16>
    %c0_9 = arith.constant 0 : index
    %c0_10 = arith.constant 0 : index
    %28 = vector.load %arg4[%c0_9, %c0_10] : memref<256x128xbf16, #tpu.memory_space<vmem>>, vector<256x128xbf16>
    tpu.vector_store %arg4[%c0_9, %c0_10], %27 {strides = array<i32>} : memref<256x128xbf16, #tpu.memory_space<vmem>>, vector<256x128xbf16>,
    return
  }
  func.func @transform_0(%arg0: i32) -> (i32, i32) {
    %c0_i32 = arith.constant 0 : i32
    %c0_i32_0 = arith.constant 0 : i32
    return %arg0, %c0_i32 : i32, i32
  }
  func.func @transform_1(%arg0: i32) -> (i32, i32) {
    %c0_i32 = arith.constant 0 : i32
    %c0_i32_0 = arith.constant 0 : i32
    %c0_i32_1 = arith.constant 0 : i32
    return %c0_i32, %c0_i32_0 : i32, i32
  }
  func.func @transform_2(%arg0: i32) -> (i32, i32) {
    %c0_i32 = arith.constant 0 : i32
    %c0_i32_0 = arith.constant 0 : i32
    %c0_i32_1 = arith.constant 0 : i32
    return %c0_i32, %c0_i32_0 : i32, i32
  }
  func.func @transform_3(%arg0: i32) -> (i32, i32) {
    %c0_i32 = arith.constant 0 : i32
    %c0_i32_0 = arith.constant 0 : i32
    return %arg0, %c0_i32 : i32, i32
  }
}

module attributes {stable_mosaic.version = 11 : i64} {
  func.func @_dense_kernel(%arg0: i32, %arg1: i32, %arg2: i32, %arg3: memref<256x128xbf16, #tpu.memory_space<vmem>>, %arg4: memref<128x128xbf16, #tpu.memory_space<vmem>>, %arg5: memref<1x128xf32, #tpu.memory_space<vmem>>, %arg6: memref<256x128xbf16, #tpu.memory_space<vmem>>, %arg7: memref<256x128xf32, #tpu.memory_space<vmem>>) attributes {dimension_semantics = [#tpu.dimension_semantics<parallel>, #tpu.dimension_semantics<parallel>, #tpu.dimension_semantics<arbitrary>], iteration_bounds = array<i64: 1, 3, 1>, scalar_prefetch = 0 : i64, scratch_operands = 1 : i64, tpu.core_type = #tpu.core_type<tc>, window_params = [{transform_indices = @transform_0, window_bounds = array<i64: 256, 128>}, {transform_indices = @transform_1, window_bounds = array<i64: 128, 128>}, {transform_indices = @transform_2, window_bounds = array<i64: 1, 128>}, {transform_indices = @transform_3, window_bounds = array<i64: 256, 128>}]} {
    %c0_i32 = arith.constant 0 : i32
    %0 = arith.cmpi eq, %arg2, %c0_i32 : i32
    %1 = arith.extui %0 : i1 to i32
    %c0_i32_0 = arith.constant 0 : i32
    %2 = arith.cmpi ne, %1, %c0_i32_0 : i32
    scf.if %2 {
      %cst_10 = arith.constant 0.000000e+00 : f32
      %12 = vector.broadcast %cst_10 : f32 to vector<256x128xf32>
      %c0_11 = arith.constant 0 : index
      %c0_12 = arith.constant 0 : index
      %13 = vector.load %arg7[%c0_11, %c0_12] : memref<256x128xf32, #tpu.memory_space<vmem>>, vector<256x128xf32>
      tpu.vector_store %arg7[%c0_11, %c0_12], %12 {strides = array<i32>} : memref<256x128xf32, #tpu.memory_space<vmem>>, vector<256x128xf32>,
    } else {
    }
    %c0 = arith.constant 0 : index
    %c0_1 = arith.constant 0 : index
    %3 = vector.load %arg7[%c0, %c0_1] : memref<256x128xf32, #tpu.memory_space<vmem>>, vector<256x128xf32>
    %c0_2 = arith.constant 0 : index
    %c0_3 = arith.constant 0 : index
    %4 = vector.load %arg3[%c0_2, %c0_3] : memref<256x128xbf16, #tpu.memory_space<vmem>>, vector<256x128xbf16>
    %c0_4 = arith.constant 0 : index
    %c0_5 = arith.constant 0 : index
    %5 = vector.load %arg4[%c0_4, %c0_5] : memref<128x128xbf16, #tpu.memory_space<vmem>>, vector<128x128xbf16>
    %cst = arith.constant dense<0.000000e+00> : vector<256x128xf32>
    %6 = tpu.matmul %4, %5, %cst {dimension_numbers = #tpu.dot_dimension_numbers<[1], [0], [0], [1], [0, 0, 1, 1], [], []>} : vector<256x128xbf16>, vector<128x128xbf16>, vector<256x128xf32> -> vector<256x128xf32>
    %7 = arith.addf %3, %6 : vector<256x128xf32>
    %c0_6 = arith.constant 0 : index
    %c0_7 = arith.constant 0 : index
    %8 = vector.load %arg7[%c0_6, %c0_7] : memref<256x128xf32, #tpu.memory_space<vmem>>, vector<256x128xf32>
    tpu.vector_store %arg7[%c0_6, %c0_7], %7 {strides = array<i32>} : memref<256x128xf32, #tpu.memory_space<vmem>>, vector<256x128xf32>,
    %c0_i32_8 = arith.constant 0 : i32
    %9 = arith.cmpi eq, %arg2, %c0_i32_8 : i32
    %10 = arith.extui %9 : i1 to i32
    %c0_i32_9 = arith.constant 0 : i32
    %11 = arith.cmpi ne, %10, %c0_i32_9 : i32
    scf.if %11 {
      %c0_10 = arith.constant 0 : index
      %c0_11 = arith.constant 0 : index
      %12 = vector.load %arg7[%c0_10, %c0_11] : memref<256x128xf32, #tpu.memory_space<vmem>>, vector<256x128xf32>
      %c0_12 = arith.constant 0 : index
      %c0_13 = arith.constant 0 : index
      %13 = vector.load %arg5[%c0_12, %c0_13] : memref<1x128xf32, #tpu.memory_space<vmem>>, vector<1x128xf32>
      %14 = vector.broadcast %13 : vector<1x128xf32> to vector<256x128xf32>
      %15 = arith.addf %12, %14 : vector<256x128xf32>
      %16 = arith.truncf %15 : vector<256x128xf32> to vector<256x128xbf16>
      %c0_14 = arith.constant 0 : index
      %c0_15 = arith.constant 0 : index
      %17 = vector.load %arg6[%c0_14, %c0_15] : memref<256x128xbf16, #tpu.memory_space<vmem>>, vector<256x128xbf16>
      tpu.vector_store %arg6[%c0_14, %c0_15], %16 {strides = array<i32>} : memref<256x128xbf16, #tpu.memory_space<vmem>>, vector<256x128xbf16>,
    } else {
    }
    return
  }
  func.func @transform_0(%arg0: i32, %arg1: i32, %arg2: i32) -> (i32, i32) {
    %c0_i32 = arith.constant 0 : i32
    return %arg0, %arg2 : i32, i32
  }
  func.func @transform_1(%arg0: i32, %arg1: i32, %arg2: i32) -> (i32, i32) {
    %c0_i32 = arith.constant 0 : i32
    return %arg2, %arg1 : i32, i32
  }
  func.func @transform_2(%arg0: i32, %arg1: i32, %arg2: i32) -> (i32, i32) {
    %c0_i32 = arith.constant 0 : i32
    %c0_i32_0 = arith.constant 0 : i32
    return %c0_i32, %arg1 : i32, i32
  }
  func.func @transform_3(%arg0: i32, %arg1: i32, %arg2: i32) -> (i32, i32) {
    %c0_i32 = arith.constant 0 : i32
    return %arg0, %arg1 : i32, i32
  }
}

module attributes {stable_mosaic.version = 11 : i64} {
  func.func @_dense_ln_kernel(%arg0: i32, %arg1: i32, %arg2: memref<256x128xbf16, #tpu.memory_space<vmem>>, %arg3: memref<128x128xbf16, #tpu.memory_space<vmem>>, %arg4: memref<1x128xf32, #tpu.memory_space<vmem>>, %arg5: memref<256x128xbf16, #tpu.memory_space<vmem>>, %arg6: memref<1x128xf32, #tpu.memory_space<vmem>>, %arg7: memref<1x128xf32, #tpu.memory_space<vmem>>, %arg8: memref<256x128xbf16, #tpu.memory_space<vmem>>, %arg9: memref<256x128xf32, #tpu.memory_space<vmem>>) attributes {dimension_semantics = [#tpu.dimension_semantics<parallel>, #tpu.dimension_semantics<arbitrary>], iteration_bounds = array<i64: 1, 1>, scalar_prefetch = 0 : i64, scratch_operands = 1 : i64, tpu.core_type = #tpu.core_type<tc>, window_params = [{transform_indices = @transform_0, window_bounds = array<i64: 256, 128>}, {transform_indices = @transform_1, window_bounds = array<i64: 128, 128>}, {pipeline_mode = #tpu.pipeline_mode<synchronous>, transform_indices = @transform_2, window_bounds = array<i64: 1, 128>}, {transform_indices = @transform_3, window_bounds = array<i64: 256, 128>}, {pipeline_mode = #tpu.pipeline_mode<synchronous>, transform_indices = @transform_4, window_bounds = array<i64: 1, 128>}, {pipeline_mode = #tpu.pipeline_mode<synchronous>, transform_indices = @transform_5, window_bounds = array<i64: 1, 128>}, {transform_indices = @transform_6, window_bounds = array<i64: 256, 128>}]} {
    %c0_i32 = arith.constant 0 : i32
    %0 = arith.cmpi eq, %arg1, %c0_i32 : i32
    %1 = arith.extui %0 : i1 to i32
    %c0_i32_0 = arith.constant 0 : i32
    %2 = arith.cmpi ne, %1, %c0_i32_0 : i32
    scf.if %2 {
      %cst_10 = arith.constant 0.000000e+00 : f32
      %12 = vector.broadcast %cst_10 : f32 to vector<256x128xf32>
      %c0_11 = arith.constant 0 : index
      %c0_12 = arith.constant 0 : index
      %13 = vector.load %arg9[%c0_11, %c0_12] : memref<256x128xf32, #tpu.memory_space<vmem>>, vector<256x128xf32>
      tpu.vector_store %arg9[%c0_11, %c0_12], %12 {strides = array<i32>} : memref<256x128xf32, #tpu.memory_space<vmem>>, vector<256x128xf32>,
    } else {
    }
    %c0 = arith.constant 0 : index
    %c0_1 = arith.constant 0 : index
    %3 = vector.load %arg9[%c0, %c0_1] : memref<256x128xf32, #tpu.memory_space<vmem>>, vector<256x128xf32>
    %c0_2 = arith.constant 0 : index
    %c0_3 = arith.constant 0 : index
    %4 = vector.load %arg2[%c0_2, %c0_3] : memref<256x128xbf16, #tpu.memory_space<vmem>>, vector<256x128xbf16>
    %c0_4 = arith.constant 0 : index
    %c0_5 = arith.constant 0 : index
    %5 = vector.load %arg3[%c0_4, %c0_5] : memref<128x128xbf16, #tpu.memory_space<vmem>>, vector<128x128xbf16>
    %cst = arith.constant dense<0.000000e+00> : vector<256x128xf32>
    %6 = tpu.matmul %4, %5, %cst {dimension_numbers = #tpu.dot_dimension_numbers<[1], [0], [0], [1], [0, 0, 1, 1], [], []>} : vector<256x128xbf16>, vector<128x128xbf16>, vector<256x128xf32> -> vector<256x128xf32>
    %7 = arith.addf %3, %6 : vector<256x128xf32>
    %c0_6 = arith.constant 0 : index
    %c0_7 = arith.constant 0 : index
    %8 = vector.load %arg9[%c0_6, %c0_7] : memref<256x128xf32, #tpu.memory_space<vmem>>, vector<256x128xf32>
    tpu.vector_store %arg9[%c0_6, %c0_7], %7 {strides = array<i32>} : memref<256x128xf32, #tpu.memory_space<vmem>>, vector<256x128xf32>,
    %c0_i32_8 = arith.constant 0 : i32
    %9 = arith.cmpi eq, %arg1, %c0_i32_8 : i32
    %10 = arith.extui %9 : i1 to i32
    %c0_i32_9 = arith.constant 0 : i32
    %11 = arith.cmpi ne, %10, %c0_i32_9 : i32
    scf.if %11 {
      %c0_10 = arith.constant 0 : index
      %c0_11 = arith.constant 0 : index
      %12 = vector.load %arg9[%c0_10, %c0_11] : memref<256x128xf32, #tpu.memory_space<vmem>>, vector<256x128xf32>
      %c0_12 = arith.constant 0 : index
      %c0_13 = arith.constant 0 : index
      %13 = vector.load %arg4[%c0_12, %c0_13] : memref<1x128xf32, #tpu.memory_space<vmem>>, vector<1x128xf32>
      %14 = vector.broadcast %13 : vector<1x128xf32> to vector<256x128xf32>
      %15 = arith.addf %12, %14 : vector<256x128xf32>
      %c0_14 = arith.constant 0 : index
      %c0_15 = arith.constant 0 : index
      %16 = vector.load %arg5[%c0_14, %c0_15] : memref<256x128xbf16, #tpu.memory_space<vmem>>, vector<256x128xbf16>
      %17 = arith.extf %16 : vector<256x128xbf16> to vector<256x128xf32>
      %18 = arith.addf %15, %17 : vector<256x128xf32>
      %cst_16 = arith.constant dense<0.000000e+00> : vector<256xf32>
      %19 = vector.multi_reduction <add>, %18, %cst_16 [1] : vector<256x128xf32> to vector<256xf32>
      %20 = vector.shape_cast %19 : vector<256xf32> to vector<256x1xf32>
      %cst_17 = arith.constant 1.280000e+02 : f32
      %21 = vector.broadcast %cst_17 : f32 to vector<256x1xf32>
      %22 = arith.divf %20, %21 : vector<256x1xf32>
      %23 = vector.broadcast %22 : vector<256x1xf32> to vector<256x128xf32>
      %24 = arith.subf %18, %23 : vector<256x128xf32>
      %25 = vector.broadcast %22 : vector<256x1xf32> to vector<256x128xf32>
      %26 = arith.subf %18, %25 : vector<256x128xf32>
      %27 = arith.mulf %24, %26 : vector<256x128xf32>
      %cst_18 = arith.constant dense<0.000000e+00> : vector<256xf32>
      %28 = vector.multi_reduction <add>, %27, %cst_18 [1] : vector<256x128xf32> to vector<256xf32>
      %29 = vector.shape_cast %28 : vector<256xf32> to vector<256x1xf32>
      %cst_19 = arith.constant 1.280000e+02 : f32
      %30 = vector.broadcast %cst_19 : f32 to vector<256x1xf32>
      %31 = arith.divf %29, %30 : vector<256x1xf32>
      %32 = vector.broadcast %22 : vector<256x1xf32> to vector<256x128xf32>
      %33 = arith.subf %18, %32 : vector<256x128xf32>
      %cst_20 = arith.constant 9.99999996E-13 : f32
      %34 = vector.broadcast %cst_20 : f32 to vector<256x1xf32>
      %35 = arith.addf %31, %34 : vector<256x1xf32>
      %36 = math.rsqrt %35 : vector<256x1xf32>
      %37 = vector.broadcast %36 : vector<256x1xf32> to vector<256x128xf32>
      %38 = arith.mulf %33, %37 : vector<256x128xf32>
      %c0_21 = arith.constant 0 : index
      %c0_22 = arith.constant 0 : index
      %39 = vector.load %arg6[%c0_21, %c0_22] : memref<1x128xf32, #tpu.memory_space<vmem>>, vector<1x128xf32>
      %40 = vector.broadcast %39 : vector<1x128xf32> to vector<256x128xf32>
      %41 = arith.mulf %38, %40 : vector<256x128xf32>
      %c0_23 = arith.constant 0 : index
      %c0_24 = arith.constant 0 : index
      %42 = vector.load %arg7[%c0_23, %c0_24] : memref<1x128xf32, #tpu.memory_space<vmem>>, vector<1x128xf32>
      %43 = vector.broadcast %42 : vector<1x128xf32> to vector<256x128xf32>
      %44 = arith.addf %41, %43 : vector<256x128xf32>
      %45 = arith.truncf %44 : vector<256x128xf32> to vector<256x128xbf16>
      %c0_25 = arith.constant 0 : index
      %c0_26 = arith.constant 0 : index
      %46 = vector.load %arg8[%c0_25, %c0_26] : memref<256x128xbf16, #tpu.memory_space<vmem>>, vector<256x128xbf16>
      tpu.vector_store %arg8[%c0_25, %c0_26], %45 {strides = array<i32>} : memref<256x128xbf16, #tpu.memory_space<vmem>>, vector<256x128xbf16>,
    } else {
    }
    return
  }
  func.func @transform_0(%arg0: i32, %arg1: i32) -> (i32, i32) {
    %c0_i32 = arith.constant 0 : i32
    return %arg0, %arg1 : i32, i32
  }
  func.func @transform_1(%arg0: i32, %arg1: i32) -> (i32, i32) {
    %c0_i32 = arith.constant 0 : i32
    %c0_i32_0 = arith.constant 0 : i32
    return %arg1, %c0_i32 : i32, i32
  }
  func.func @transform_2(%arg0: i32, %arg1: i32) -> (i32, i32) {
    %c0_i32 = arith.constant 0 : i32
    %c0_i32_0 = arith.constant 0 : i32
    %c0_i32_1 = arith.constant 0 : i32
    return %c0_i32, %c0_i32_0 : i32, i32
  }
  func.func @transform_3(%arg0: i32, %arg1: i32) -> (i32, i32) {
    %c0_i32 = arith.constant 0 : i32
    %c0_i32_0 = arith.constant 0 : i32
    return %arg0, %c0_i32 : i32, i32
  }
  func.func @transform_4(%arg0: i32, %arg1: i32) -> (i32, i32) {
    %c0_i32 = arith.constant 0 : i32
    %c0_i32_0 = arith.constant 0 : i32
    %c0_i32_1 = arith.constant 0 : i32
    return %c0_i32, %c0_i32_0 : i32, i32
  }
  func.func @transform_5(%arg0: i32, %arg1: i32) -> (i32, i32) {
    %c0_i32 = arith.constant 0 : i32
    %c0_i32_0 = arith.constant 0 : i32
    %c0_i32_1 = arith.constant 0 : i32
    return %c0_i32, %c0_i32_0 : i32, i32
  }
  func.func @transform_6(%arg0: i32, %arg1: i32) -> (i32, i32) {
    %c0_i32 = arith.constant 0 : i32
    %c0_i32_0 = arith.constant 0 : i32
    return %arg0, %c0_i32 : i32, i32
  }
}

module attributes {stable_mosaic.version = 11 : i64} {
  func.func @_attention_kernel(%arg0: i32, %arg1: i32, %arg2: memref<1x128x384xbf16, #tpu.memory_space<vmem>>, %arg3: memref<1x1x128xf32, #tpu.memory_space<vmem>>, %arg4: memref<1x128x128xbf16, #tpu.memory_space<vmem>>) attributes {dimension_semantics = [#tpu.dimension_semantics<parallel>, #tpu.dimension_semantics<parallel>], iteration_bounds = array<i64: 2, 1>, scalar_prefetch = 0 : i64, scratch_operands = 0 : i64, tpu.core_type = #tpu.core_type<tc>, window_params = [{transform_indices = @transform_0, window_bounds = array<i64: 1, 128, 384>}, {transform_indices = @transform_1, window_bounds = array<i64: 1, 1, 128>}, {transform_indices = @transform_2, window_bounds = array<i64: 1, 128, 128>}]} {
    %c0 = arith.constant 0 : index
    %c0_0 = arith.constant 0 : index
    %c0_1 = arith.constant 0 : index
    %0 = vector.load %arg3[%c0, %c0_0, %c0_1] : memref<1x1x128xf32, #tpu.memory_space<vmem>>, vector<1x1x128xf32>
    %1 = vector.shape_cast %0 : vector<1x1x128xf32> to vector<1x128xf32>
    %2 = vector.shape_cast %1 : vector<1x128xf32> to vector<1x128xf32>
    %3 = vector.broadcast %2 : vector<1x128xf32> to vector<128x128xf32>
    %c0_2 = arith.constant 0 : index
    %c0_3 = arith.constant 0 : index
    %c0_4 = arith.constant 0 : index
    %4 = vector.load %arg2[%c0_2, %c0_3, %c0_4] : memref<1x128x384xbf16, #tpu.memory_space<vmem>>, vector<1x128x32xbf16>
    %5 = vector.shape_cast %4 : vector<1x128x32xbf16> to vector<128x32xbf16>
    %c0_5 = arith.constant 0 : index
    %c0_6 = arith.constant 0 : index
    %c128 = arith.constant 128 : index
    %6 = vector.load %arg2[%c0_5, %c0_6, %c128] : memref<1x128x384xbf16, #tpu.memory_space<vmem>>, vector<1x128x32xbf16>
    %7 = vector.shape_cast %6 : vector<1x128x32xbf16> to vector<128x32xbf16>
    %c0_7 = arith.constant 0 : index
    %c0_8 = arith.constant 0 : index
    %c256 = arith.constant 256 : index
    %8 = vector.load %arg2[%c0_7, %c0_8, %c256] : memref<1x128x384xbf16, #tpu.memory_space<vmem>>, vector<1x128x32xbf16>
    %9 = vector.shape_cast %8 : vector<1x128x32xbf16> to vector<128x32xbf16>
    %cst = arith.constant dense<0.000000e+00> : vector<128x128xf32>
    %10 = tpu.matmul %5, %7, %cst {dimension_numbers = #tpu.dot_dimension_numbers<[1], [1], [0], [0], [0, 0, 1, 0], [], []>} : vector<128x32xbf16>, vector<128x32xbf16>, vector<128x128xf32> -> vector<128x128xf32>
    %11 = arith.addf %10, %3 : vector<128x128xf32>
    %cst_9 = arith.constant dense<0xFF800000> : vector<128xf32>
    %12 = vector.multi_reduction <maximumf>, %11, %cst_9 [1] : vector<128x128xf32> to vector<128xf32>
    %13 = vector.shape_cast %12 : vector<128xf32> to vector<128x1xf32>
    %14 = vector.broadcast %13 : vector<128x1xf32> to vector<128x128xf32>
    %15 = arith.subf %11, %14 : vector<128x128xf32>
    %16 = math.exp %15 : vector<128x128xf32>
    %cst_10 = arith.constant dense<0.000000e+00> : vector<128xf32>
    %17 = vector.multi_reduction <add>, %16, %cst_10 [1] : vector<128x128xf32> to vector<128xf32>
    %18 = vector.shape_cast %17 : vector<128xf32> to vector<128x1xf32>
    %19 = arith.truncf %16 : vector<128x128xf32> to vector<128x128xbf16>
    %cst_11 = arith.constant dense<0.000000e+00> : vector<128x32xf32>
    %20 = tpu.matmul %19, %9, %cst_11 {dimension_numbers = #tpu.dot_dimension_numbers<[1], [0], [0], [1], [0, 0, 1, 1], [], []>} : vector<128x128xbf16>, vector<128x32xbf16>, vector<128x32xf32> -> vector<128x32xf32>
    %21 = tpu.reciprocal %18 {approx = true} : vector<128x1xf32> -> vector<128x1xf32>
    %22 = vector.broadcast %21 : vector<128x1xf32> to vector<128x32xf32>
    %23 = arith.mulf %20, %22 : vector<128x32xf32>
    %24 = arith.truncf %23 : vector<128x32xf32> to vector<128x32xbf16>
    %c0_12 = arith.constant 0 : index
    %c0_13 = arith.constant 0 : index
    %c32 = arith.constant 32 : index
    %25 = vector.load %arg2[%c0_12, %c0_13, %c32] : memref<1x128x384xbf16, #tpu.memory_space<vmem>>, vector<1x128x32xbf16>
    %26 = vector.shape_cast %25 : vector<1x128x32xbf16> to vector<128x32xbf16>
    %c0_14 = arith.constant 0 : index
    %c0_15 = arith.constant 0 : index
    %c160 = arith.constant 160 : index
    %27 = vector.load %arg2[%c0_14, %c0_15, %c160] : memref<1x128x384xbf16, #tpu.memory_space<vmem>>, vector<1x128x32xbf16>
    %28 = vector.shape_cast %27 : vector<1x128x32xbf16> to vector<128x32xbf16>
    %c0_16 = arith.constant 0 : index
    %c0_17 = arith.constant 0 : index
    %c288 = arith.constant 288 : index
    %29 = vector.load %arg2[%c0_16, %c0_17, %c288] : memref<1x128x384xbf16, #tpu.memory_space<vmem>>, vector<1x128x32xbf16>
    %30 = vector.shape_cast %29 : vector<1x128x32xbf16> to vector<128x32xbf16>
    %cst_18 = arith.constant dense<0.000000e+00> : vector<128x128xf32>
    %31 = tpu.matmul %26, %28, %cst_18 {dimension_numbers = #tpu.dot_dimension_numbers<[1], [1], [0], [0], [0, 0, 1, 0], [], []>} : vector<128x32xbf16>, vector<128x32xbf16>, vector<128x128xf32> -> vector<128x128xf32>
    %32 = arith.addf %31, %3 : vector<128x128xf32>
    %cst_19 = arith.constant dense<0xFF800000> : vector<128xf32>
    %33 = vector.multi_reduction <maximumf>, %32, %cst_19 [1] : vector<128x128xf32> to vector<128xf32>
    %34 = vector.shape_cast %33 : vector<128xf32> to vector<128x1xf32>
    %35 = vector.broadcast %34 : vector<128x1xf32> to vector<128x128xf32>
    %36 = arith.subf %32, %35 : vector<128x128xf32>
    %37 = math.exp %36 : vector<128x128xf32>
    %cst_20 = arith.constant dense<0.000000e+00> : vector<128xf32>
    %38 = vector.multi_reduction <add>, %37, %cst_20 [1] : vector<128x128xf32> to vector<128xf32>
    %39 = vector.shape_cast %38 : vector<128xf32> to vector<128x1xf32>
    %40 = arith.truncf %37 : vector<128x128xf32> to vector<128x128xbf16>
    %cst_21 = arith.constant dense<0.000000e+00> : vector<128x32xf32>
    %41 = tpu.matmul %40, %30, %cst_21 {dimension_numbers = #tpu.dot_dimension_numbers<[1], [0], [0], [1], [0, 0, 1, 1], [], []>} : vector<128x128xbf16>, vector<128x32xbf16>, vector<128x32xf32> -> vector<128x32xf32>
    %42 = tpu.reciprocal %39 {approx = true} : vector<128x1xf32> -> vector<128x1xf32>
    %43 = vector.broadcast %42 : vector<128x1xf32> to vector<128x32xf32>
    %44 = arith.mulf %41, %43 : vector<128x32xf32>
    %45 = arith.truncf %44 : vector<128x32xf32> to vector<128x32xbf16>
    %c0_22 = arith.constant 0 : index
    %c0_23 = arith.constant 0 : index
    %c64 = arith.constant 64 : index
    %46 = vector.load %arg2[%c0_22, %c0_23, %c64] : memref<1x128x384xbf16, #tpu.memory_space<vmem>>, vector<1x128x32xbf16>
    %47 = vector.shape_cast %46 : vector<1x128x32xbf16> to vector<128x32xbf16>
    %c0_24 = arith.constant 0 : index
    %c0_25 = arith.constant 0 : index
    %c192 = arith.constant 192 : index
    %48 = vector.load %arg2[%c0_24, %c0_25, %c192] : memref<1x128x384xbf16, #tpu.memory_space<vmem>>, vector<1x128x32xbf16>
    %49 = vector.shape_cast %48 : vector<1x128x32xbf16> to vector<128x32xbf16>
    %c0_26 = arith.constant 0 : index
    %c0_27 = arith.constant 0 : index
    %c320 = arith.constant 320 : index
    %50 = vector.load %arg2[%c0_26, %c0_27, %c320] : memref<1x128x384xbf16, #tpu.memory_space<vmem>>, vector<1x128x32xbf16>
    %51 = vector.shape_cast %50 : vector<1x128x32xbf16> to vector<128x32xbf16>
    %cst_28 = arith.constant dense<0.000000e+00> : vector<128x128xf32>
    %52 = tpu.matmul %47, %49, %cst_28 {dimension_numbers = #tpu.dot_dimension_numbers<[1], [1], [0], [0], [0, 0, 1, 0], [], []>} : vector<128x32xbf16>, vector<128x32xbf16>, vector<128x128xf32> -> vector<128x128xf32>
    %53 = arith.addf %52, %3 : vector<128x128xf32>
    %cst_29 = arith.constant dense<0xFF800000> : vector<128xf32>
    %54 = vector.multi_reduction <maximumf>, %53, %cst_29 [1] : vector<128x128xf32> to vector<128xf32>
    %55 = vector.shape_cast %54 : vector<128xf32> to vector<128x1xf32>
    %56 = vector.broadcast %55 : vector<128x1xf32> to vector<128x128xf32>
    %57 = arith.subf %53, %56 : vector<128x128xf32>
    %58 = math.exp %57 : vector<128x128xf32>
    %cst_30 = arith.constant dense<0.000000e+00> : vector<128xf32>
    %59 = vector.multi_reduction <add>, %58, %cst_30 [1] : vector<128x128xf32> to vector<128xf32>
    %60 = vector.shape_cast %59 : vector<128xf32> to vector<128x1xf32>
    %61 = arith.truncf %58 : vector<128x128xf32> to vector<128x128xbf16>
    %cst_31 = arith.constant dense<0.000000e+00> : vector<128x32xf32>
    %62 = tpu.matmul %61, %51, %cst_31 {dimension_numbers = #tpu.dot_dimension_numbers<[1], [0], [0], [1], [0, 0, 1, 1], [], []>} : vector<128x128xbf16>, vector<128x32xbf16>, vector<128x32xf32> -> vector<128x32xf32>
    %63 = tpu.reciprocal %60 {approx = true} : vector<128x1xf32> -> vector<128x1xf32>
    %64 = vector.broadcast %63 : vector<128x1xf32> to vector<128x32xf32>
    %65 = arith.mulf %62, %64 : vector<128x32xf32>
    %66 = arith.truncf %65 : vector<128x32xf32> to vector<128x32xbf16>
    %c0_32 = arith.constant 0 : index
    %c0_33 = arith.constant 0 : index
    %c96 = arith.constant 96 : index
    %67 = vector.load %arg2[%c0_32, %c0_33, %c96] : memref<1x128x384xbf16, #tpu.memory_space<vmem>>, vector<1x128x32xbf16>
    %68 = vector.shape_cast %67 : vector<1x128x32xbf16> to vector<128x32xbf16>
    %c0_34 = arith.constant 0 : index
    %c0_35 = arith.constant 0 : index
    %c224 = arith.constant 224 : index
    %69 = vector.load %arg2[%c0_34, %c0_35, %c224] : memref<1x128x384xbf16, #tpu.memory_space<vmem>>, vector<1x128x32xbf16>
    %70 = vector.shape_cast %69 : vector<1x128x32xbf16> to vector<128x32xbf16>
    %c0_36 = arith.constant 0 : index
    %c0_37 = arith.constant 0 : index
    %c352 = arith.constant 352 : index
    %71 = vector.load %arg2[%c0_36, %c0_37, %c352] : memref<1x128x384xbf16, #tpu.memory_space<vmem>>, vector<1x128x32xbf16>
    %72 = vector.shape_cast %71 : vector<1x128x32xbf16> to vector<128x32xbf16>
    %cst_38 = arith.constant dense<0.000000e+00> : vector<128x128xf32>
    %73 = tpu.matmul %68, %70, %cst_38 {dimension_numbers = #tpu.dot_dimension_numbers<[1], [1], [0], [0], [0, 0, 1, 0], [], []>} : vector<128x32xbf16>, vector<128x32xbf16>, vector<128x128xf32> -> vector<128x128xf32>
    %74 = arith.addf %73, %3 : vector<128x128xf32>
    %cst_39 = arith.constant dense<0xFF800000> : vector<128xf32>
    %75 = vector.multi_reduction <maximumf>, %74, %cst_39 [1] : vector<128x128xf32> to vector<128xf32>
    %76 = vector.shape_cast %75 : vector<128xf32> to vector<128x1xf32>
    %77 = vector.broadcast %76 : vector<128x1xf32> to vector<128x128xf32>
    %78 = arith.subf %74, %77 : vector<128x128xf32>
    %79 = math.exp %78 : vector<128x128xf32>
    %cst_40 = arith.constant dense<0.000000e+00> : vector<128xf32>
    %80 = vector.multi_reduction <add>, %79, %cst_40 [1] : vector<128x128xf32> to vector<128xf32>
    %81 = vector.shape_cast %80 : vector<128xf32> to vector<128x1xf32>
    %82 = arith.truncf %79 : vector<128x128xf32> to vector<128x128xbf16>
    %cst_41 = arith.constant dense<0.000000e+00> : vector<128x32xf32>
    %83 = tpu.matmul %82, %72, %cst_41 {dimension_numbers = #tpu.dot_dimension_numbers<[1], [0], [0], [1], [0, 0, 1, 1], [], []>} : vector<128x128xbf16>, vector<128x32xbf16>, vector<128x32xf32> -> vector<128x32xf32>
    %84 = tpu.reciprocal %81 {approx = true} : vector<128x1xf32> -> vector<128x1xf32>
    %85 = vector.broadcast %84 : vector<128x1xf32> to vector<128x32xf32>
    %86 = arith.mulf %83, %85 : vector<128x32xf32>
    %87 = arith.truncf %86 : vector<128x32xf32> to vector<128x32xbf16>
    %88 = tpu.concatenate %24, %45, %66, %87 in 1 : vector<128x32xbf16>, vector<128x32xbf16>, vector<128x32xbf16>, vector<128x32xbf16> -> vector<128x128xbf16>
    %c0_42 = arith.constant 0 : index
    %c0_43 = arith.constant 0 : index
    %c0_44 = arith.constant 0 : index
    %89 = vector.load %arg4[%c0_42, %c0_43, %c0_44] : memref<1x128x128xbf16, #tpu.memory_space<vmem>>, vector<1x128x128xbf16>
    %90 = vector.shape_cast %89 : vector<1x128x128xbf16> to vector<128x128xbf16>
    %91 = vector.shape_cast %88 : vector<128x128xbf16> to vector<1x128x128xbf16>
    tpu.vector_store %arg4[%c0_42, %c0_43, %c0_44], %91 {strides = array<i32>} : memref<1x128x128xbf16, #tpu.memory_space<vmem>>, vector<1x128x128xbf16>,
    return
  }
  func.func @transform_0(%arg0: i32, %arg1: i32) -> (i32, i32, i32) {
    %c0_i32 = arith.constant 0 : i32
    %c0_i32_0 = arith.constant 0 : i32
    return %arg0, %c0_i32, %arg1 : i32, i32, i32
  }
  func.func @transform_1(%arg0: i32, %arg1: i32) -> (i32, i32, i32) {
    %c0_i32 = arith.constant 0 : i32
    %c0_i32_0 = arith.constant 0 : i32
    %c0_i32_1 = arith.constant 0 : i32
    return %arg0, %c0_i32, %c0_i32_0 : i32, i32, i32
  }
  func.func @transform_2(%arg0: i32, %arg1: i32) -> (i32, i32, i32) {
    %c0_i32 = arith.constant 0 : i32
    %c0_i32_0 = arith.constant 0 : i32
    return %arg0, %c0_i32, %arg1 : i32, i32, i32
  }
}

module attributes {stable_mosaic.version = 11 : i64} {
  func.func @_ffn_kernel(%arg0: i32, %arg1: i32, %arg2: memref<256x128xbf16, #tpu.memory_space<vmem>>, %arg3: memref<128x512xbf16, #tpu.memory_space<vmem>>, %arg4: memref<1x512xf32, #tpu.memory_space<vmem>>, %arg5: memref<512x128xbf16, #tpu.memory_space<vmem>>, %arg6: memref<1x128xf32, #tpu.memory_space<vmem>>, %arg7: memref<1x128xf32, #tpu.memory_space<vmem>>, %arg8: memref<1x128xf32, #tpu.memory_space<vmem>>, %arg9: memref<256x128xbf16, #tpu.memory_space<vmem>>, %arg10: memref<256x128xf32, #tpu.memory_space<vmem>>) attributes {dimension_semantics = [#tpu.dimension_semantics<parallel>, #tpu.dimension_semantics<arbitrary>], iteration_bounds = array<i64: 1, 1>, scalar_prefetch = 0 : i64, scratch_operands = 1 : i64, tpu.core_type = #tpu.core_type<tc>, window_params = [{transform_indices = @transform_0, window_bounds = array<i64: 256, 128>}, {transform_indices = @transform_1, window_bounds = array<i64: 128, 512>}, {transform_indices = @transform_2, window_bounds = array<i64: 1, 512>}, {transform_indices = @transform_3, window_bounds = array<i64: 512, 128>}, {pipeline_mode = #tpu.pipeline_mode<synchronous>, transform_indices = @transform_4, window_bounds = array<i64: 1, 128>}, {pipeline_mode = #tpu.pipeline_mode<synchronous>, transform_indices = @transform_5, window_bounds = array<i64: 1, 128>}, {pipeline_mode = #tpu.pipeline_mode<synchronous>, transform_indices = @transform_6, window_bounds = array<i64: 1, 128>}, {transform_indices = @transform_7, window_bounds = array<i64: 256, 128>}]} {
    %c0_i32 = arith.constant 0 : i32
    %0 = arith.cmpi eq, %arg1, %c0_i32 : i32
    %1 = arith.extui %0 : i1 to i32
    %c0_i32_0 = arith.constant 0 : i32
    %2 = arith.cmpi ne, %1, %c0_i32_0 : i32
    scf.if %2 {
      %cst_19 = arith.constant 0.000000e+00 : f32
      %31 = vector.broadcast %cst_19 : f32 to vector<256x128xf32>
      %c0_20 = arith.constant 0 : index
      %c0_21 = arith.constant 0 : index
      %32 = vector.load %arg10[%c0_20, %c0_21] : memref<256x128xf32, #tpu.memory_space<vmem>>, vector<256x128xf32>
      tpu.vector_store %arg10[%c0_20, %c0_21], %31 {strides = array<i32>} : memref<256x128xf32, #tpu.memory_space<vmem>>, vector<256x128xf32>,
    } else {
    }
    %c0 = arith.constant 0 : index
    %c0_1 = arith.constant 0 : index
    %3 = vector.load %arg2[%c0, %c0_1] : memref<256x128xbf16, #tpu.memory_space<vmem>>, vector<256x128xbf16>
    %c0_2 = arith.constant 0 : index
    %c0_3 = arith.constant 0 : index
    %4 = vector.load %arg3[%c0_2, %c0_3] : memref<128x512xbf16, #tpu.memory_space<vmem>>, vector<128x512xbf16>
    %cst = arith.constant dense<0.000000e+00> : vector<256x512xf32>
    %5 = tpu.matmul %3, %4, %cst {dimension_numbers = #tpu.dot_dimension_numbers<[1], [0], [0], [1], [0, 0, 1, 1], [], []>} : vector<256x128xbf16>, vector<128x512xbf16>, vector<256x512xf32> -> vector<256x512xf32>
    %c0_4 = arith.constant 0 : index
    %c0_5 = arith.constant 0 : index
    %6 = vector.load %arg4[%c0_4, %c0_5] : memref<1x512xf32, #tpu.memory_space<vmem>>, vector<1x512xf32>
    %7 = vector.broadcast %6 : vector<1x512xf32> to vector<256x512xf32>
    %8 = arith.addf %5, %7 : vector<256x512xf32>
    %cst_6 = arith.constant 5.000000e-01 : f32
    %9 = vector.broadcast %cst_6 : f32 to vector<256x512xf32>
    %10 = arith.mulf %9, %8 : vector<256x512xf32>
    %cst_7 = arith.constant 4.471500e-02 : f32
    %11 = vector.broadcast %cst_7 : f32 to vector<256x512xf32>
    %12 = arith.mulf %11, %8 : vector<256x512xf32>
    %13 = arith.mulf %12, %8 : vector<256x512xf32>
    %14 = arith.mulf %13, %8 : vector<256x512xf32>
    %15 = arith.addf %8, %14 : vector<256x512xf32>
    %cst_8 = arith.constant 0.797884583 : f32
    %16 = vector.broadcast %cst_8 : f32 to vector<256x512xf32>
    %17 = arith.mulf %16, %15 : vector<256x512xf32>
    %18 = math.tanh %17 : vector<256x512xf32>
    %cst_9 = arith.constant 1.000000e+00 : f32
    %19 = vector.broadcast %cst_9 : f32 to vector<256x512xf32>
    %20 = arith.addf %19, %18 : vector<256x512xf32>
    %21 = arith.mulf %10, %20 : vector<256x512xf32>
    %c0_10 = arith.constant 0 : index
    %c0_11 = arith.constant 0 : index
    %22 = vector.load %arg10[%c0_10, %c0_11] : memref<256x128xf32, #tpu.memory_space<vmem>>, vector<256x128xf32>
    %23 = arith.truncf %21 : vector<256x512xf32> to vector<256x512xbf16>
    %c0_12 = arith.constant 0 : index
    %c0_13 = arith.constant 0 : index
    %24 = vector.load %arg5[%c0_12, %c0_13] : memref<512x128xbf16, #tpu.memory_space<vmem>>, vector<512x128xbf16>
    %cst_14 = arith.constant dense<0.000000e+00> : vector<256x128xf32>
    %25 = tpu.matmul %23, %24, %cst_14 {dimension_numbers = #tpu.dot_dimension_numbers<[1], [0], [0], [1], [0, 0, 1, 1], [], []>} : vector<256x512xbf16>, vector<512x128xbf16>, vector<256x128xf32> -> vector<256x128xf32>
    %26 = arith.addf %22, %25 : vector<256x128xf32>
    %c0_15 = arith.constant 0 : index
    %c0_16 = arith.constant 0 : index
    %27 = vector.load %arg10[%c0_15, %c0_16] : memref<256x128xf32, #tpu.memory_space<vmem>>, vector<256x128xf32>
    tpu.vector_store %arg10[%c0_15, %c0_16], %26 {strides = array<i32>} : memref<256x128xf32, #tpu.memory_space<vmem>>, vector<256x128xf32>,
    %c0_i32_17 = arith.constant 0 : i32
    %28 = arith.cmpi eq, %arg1, %c0_i32_17 : i32
    %29 = arith.extui %28 : i1 to i32
    %c0_i32_18 = arith.constant 0 : i32
    %30 = arith.cmpi ne, %29, %c0_i32_18 : i32
    scf.if %30 {
      %c0_19 = arith.constant 0 : index
      %c0_20 = arith.constant 0 : index
      %31 = vector.load %arg10[%c0_19, %c0_20] : memref<256x128xf32, #tpu.memory_space<vmem>>, vector<256x128xf32>
      %c0_21 = arith.constant 0 : index
      %c0_22 = arith.constant 0 : index
      %32 = vector.load %arg6[%c0_21, %c0_22] : memref<1x128xf32, #tpu.memory_space<vmem>>, vector<1x128xf32>
      %33 = vector.broadcast %32 : vector<1x128xf32> to vector<256x128xf32>
      %34 = arith.addf %31, %33 : vector<256x128xf32>
      %c0_23 = arith.constant 0 : index
      %c0_24 = arith.constant 0 : index
      %35 = vector.load %arg2[%c0_23, %c0_24] : memref<256x128xbf16, #tpu.memory_space<vmem>>, vector<256x128xbf16>
      %36 = arith.extf %35 : vector<256x128xbf16> to vector<256x128xf32>
      %37 = arith.addf %34, %36 : vector<256x128xf32>
      %cst_25 = arith.constant dense<0.000000e+00> : vector<256xf32>
      %38 = vector.multi_reduction <add>, %37, %cst_25 [1] : vector<256x128xf32> to vector<256xf32>
      %39 = vector.shape_cast %38 : vector<256xf32> to vector<256x1xf32>
      %cst_26 = arith.constant 1.280000e+02 : f32
      %40 = vector.broadcast %cst_26 : f32 to vector<256x1xf32>
      %41 = arith.divf %39, %40 : vector<256x1xf32>
      %42 = vector.broadcast %41 : vector<256x1xf32> to vector<256x128xf32>
      %43 = arith.subf %37, %42 : vector<256x128xf32>
      %44 = vector.broadcast %41 : vector<256x1xf32> to vector<256x128xf32>
      %45 = arith.subf %37, %44 : vector<256x128xf32>
      %46 = arith.mulf %43, %45 : vector<256x128xf32>
      %cst_27 = arith.constant dense<0.000000e+00> : vector<256xf32>
      %47 = vector.multi_reduction <add>, %46, %cst_27 [1] : vector<256x128xf32> to vector<256xf32>
      %48 = vector.shape_cast %47 : vector<256xf32> to vector<256x1xf32>
      %cst_28 = arith.constant 1.280000e+02 : f32
      %49 = vector.broadcast %cst_28 : f32 to vector<256x1xf32>
      %50 = arith.divf %48, %49 : vector<256x1xf32>
      %51 = vector.broadcast %41 : vector<256x1xf32> to vector<256x128xf32>
      %52 = arith.subf %37, %51 : vector<256x128xf32>
      %cst_29 = arith.constant 9.99999996E-13 : f32
      %53 = vector.broadcast %cst_29 : f32 to vector<256x1xf32>
      %54 = arith.addf %50, %53 : vector<256x1xf32>
      %55 = math.rsqrt %54 : vector<256x1xf32>
      %56 = vector.broadcast %55 : vector<256x1xf32> to vector<256x128xf32>
      %57 = arith.mulf %52, %56 : vector<256x128xf32>
      %c0_30 = arith.constant 0 : index
      %c0_31 = arith.constant 0 : index
      %58 = vector.load %arg7[%c0_30, %c0_31] : memref<1x128xf32, #tpu.memory_space<vmem>>, vector<1x128xf32>
      %59 = vector.broadcast %58 : vector<1x128xf32> to vector<256x128xf32>
      %60 = arith.mulf %57, %59 : vector<256x128xf32>
      %c0_32 = arith.constant 0 : index
      %c0_33 = arith.constant 0 : index
      %61 = vector.load %arg8[%c0_32, %c0_33] : memref<1x128xf32, #tpu.memory_space<vmem>>, vector<1x128xf32>
      %62 = vector.broadcast %61 : vector<1x128xf32> to vector<256x128xf32>
      %63 = arith.addf %60, %62 : vector<256x128xf32>
      %64 = arith.truncf %63 : vector<256x128xf32> to vector<256x128xbf16>
      %c0_34 = arith.constant 0 : index
      %c0_35 = arith.constant 0 : index
      %65 = vector.load %arg9[%c0_34, %c0_35] : memref<256x128xbf16, #tpu.memory_space<vmem>>, vector<256x128xbf16>
      tpu.vector_store %arg9[%c0_34, %c0_35], %64 {strides = array<i32>} : memref<256x128xbf16, #tpu.memory_space<vmem>>, vector<256x128xbf16>,
    } else {
    }
    return
  }
  func.func @transform_0(%arg0: i32, %arg1: i32) -> (i32, i32) {
    %c0_i32 = arith.constant 0 : i32
    %c0_i32_0 = arith.constant 0 : i32
    return %arg0, %c0_i32 : i32, i32
  }
  func.func @transform_1(%arg0: i32, %arg1: i32) -> (i32, i32) {
    %c0_i32 = arith.constant 0 : i32
    %c0_i32_0 = arith.constant 0 : i32
    return %c0_i32, %arg1 : i32, i32
  }
  func.func @transform_2(%arg0: i32, %arg1: i32) -> (i32, i32) {
    %c0_i32 = arith.constant 0 : i32
    %c0_i32_0 = arith.constant 0 : i32
    return %c0_i32, %arg1 : i32, i32
  }
  func.func @transform_3(%arg0: i32, %arg1: i32) -> (i32, i32) {
    %c0_i32 = arith.constant 0 : i32
    %c0_i32_0 = arith.constant 0 : i32
    return %arg1, %c0_i32 : i32, i32
  }
  func.func @transform_4(%arg0: i32, %arg1: i32) -> (i32, i32) {
    %c0_i32 = arith.constant 0 : i32
    %c0_i32_0 = arith.constant 0 : i32
    %c0_i32_1 = arith.constant 0 : i32
    return %c0_i32, %c0_i32_0 : i32, i32
  }
  func.func @transform_5(%arg0: i32, %arg1: i32) -> (i32, i32) {
    %c0_i32 = arith.constant 0 : i32
    %c0_i32_0 = arith.constant 0 : i32
    %c0_i32_1 = arith.constant 0 : i32
    return %c0_i32, %c0_i32_0 : i32, i32
  }
  func.func @transform_6(%arg0: i32, %arg1: i32) -> (i32, i32) {
    %c0_i32 = arith.constant 0 : i32
    %c0_i32_0 = arith.constant 0 : i32
    %c0_i32_1 = arith.constant 0 : i32
    return %c0_i32, %c0_i32_0 : i32, i32
  }
  func.func @transform_7(%arg0: i32, %arg1: i32) -> (i32, i32) {
    %c0_i32 = arith.constant 0 : i32
    %c0_i32_0 = arith.constant 0 : i32
    return %arg0, %c0_i32 : i32, i32
  }
}

</mosaic_0001>

<llo_original>
// kernel: bert_encoder_forward.9
$region0: #{bert_encoder_forward.9}
  #allocation0 [shape = 'u32[]', space=smem, size = 0x4, offset = 0x4, fixed_abs, tag = 'smem constant byte address 0x4 - core index']
  #allocation1 [shape = 'u32[144,128]{1,0:T(1,128)}', space=vmem, size = 0x12000, scoped, tag = 'internal scratch']
  %s0 = inlined_call_operand.vmem [shape: f32[256,128], index: 0, kind: input, shape index: {}]
  %s1 = inlined_call_operand.vmem [shape: f32[1,128], index: 1, kind: input, shape index: {}]
  %s2 = inlined_call_operand.vmem [shape: f32[1,128], index: 2, kind: input, shape index: {}]
  %s3 = inlined_call_operand.vmem [shape: bf16[256,128], index: 3, kind: output, shape index: {}]
  %s4 = sld [smem:[#allocation0]]
  $region22: #{bert_encoder_forward.9} parent=0
    _
  %s6 = ssub.s32 1, %s4
  %s7 = scalar_select 0, %s6, %s4
  // Predicated region
  $region2: #{bert_encoder_forward.9} parent=0 // pred_check
    _
  $region3: #{bert_encoder_forward.9} parent=0 // pred_check_branch
    %9 = sbr.rel (0) target = $region5
  $region4: #{bert_encoder_forward.9} parent=0 // pred_region
    _
  $region5: #{bert_encoder_forward.9} parent=0 // pred_fallthru
    _
  // Predicated region
  $region6: #{bert_encoder_forward.9} parent=0 // pred_check
    _
  $region7: #{bert_encoder_forward.9} parent=0 // pred_check_branch
    %11 = sbr.rel (0) target = $region9
  $region8: #{bert_encoder_forward.9} parent=0 // pred_region
    _
  $region9: #{bert_encoder_forward.9} parent=0 // pred_fallthru
    _
  // Predicated region
  $region10: #{bert_encoder_forward.9} parent=0 // pred_check
    _
  $region11: #{bert_encoder_forward.9} parent=0 // pred_check_branch
    %13 = sbr.rel (0) target = $region13
  $region12: #{bert_encoder_forward.9} parent=0 // pred_region
    _
  $region13: #{bert_encoder_forward.9} parent=0 // pred_fallthru
    _
  %v14 = vld [vmem:[%s0] sm:$0xff]
  %v15 = vld [vmem:[%s0 + $0x8] sm:$0xff]
  %v16 = vld [vmem:[%s0 + $0x10] sm:$0xff]
  %v17 = vld [vmem:[%s0 + $0x18] sm:$0xff]
  %v18 = vld [vmem:[%s0 + $0x20] sm:$0xff]
  %v19 = vld [vmem:[%s0 + $0x28] sm:$0xff]
  %v20 = vld [vmem:[%s0 + $0x30] sm:$0xff]
  %v21 = vld [vmem:[%s0 + $0x38] sm:$0xff]
  %v22 = vld [vmem:[%s0 + $0x40] sm:$0xff]
  %v23 = vld [vmem:[%s0 + $0x48] sm:$0xff]
  %v24 = vld [vmem:[%s0 + $0x50] sm:$0xff]
  %v25 = vld [vmem:[%s0 + $0x58] sm:$0xff]
  %v26 = vld [vmem:[%s0 + $0x60] sm:$0xff]
  %v27 = vld [vmem:[%s0 + $0x68] sm:$0xff]
  %v28 = vld [vmem:[%s0 + $0x70] sm:$0xff]
  %v29 = vld [vmem:[%s0 + $0x78] sm:$0xff]
  %v30 = vld [vmem:[%s0 + $0x80] sm:$0xff]
  %v31 = vld [vmem:[%s0 + $0x88] sm:$0xff]
  %v32 = vld [vmem:[%s0 + $0x90] sm:$0xff]
  %v33 = vld [vmem:[%s0 + $0x98] sm:$0xff]
  %v34 = vld [vmem:[%s0 + $0xa0] sm:$0xff]
  %v35 = vld [vmem:[%s0 + $0xa8] sm:$0xff]
  %v36 = vld [vmem:[%s0 + $0xb0] sm:$0xff]
  %v37 = vld [vmem:[%s0 + $0xb8] sm:$0xff]
  %v38 = vld [vmem:[%s0 + $0xc0] sm:$0xff]
  %v39 = vld [vmem:[%s0 + $0xc8] sm:$0xff]
  %v40 = vld [vmem:[%s0 + $0xd0] sm:$0xff]
  %v41 = vld [vmem:[%s0 + $0xd8] sm:$0xff]
  %v42 = vld [vmem:[%s0 + $0xe0] sm:$0xff]
  %v43 = vld [vmem:[%s0 + $0xe8] sm:$0xff]
  %v44 = vld [vmem:[%s0 + $0xf0] sm:$0xff]
  %v45 = vld [vmem:[%s0 + $0xf8] sm:$0xff]
  %46 = vadd.xlane.f32.xlu0 %v14
  %v47 = vpop.xlane.xlu0 %46
  %48 = vadd.xlane.f32.xlu0 %v15
  %v49 = vpop.xlane.xlu0 %48
  %50 = vadd.xlane.f32.xlu0 %v16
  %v51 = vpop.xlane.xlu0 %50
  %52 = vadd.xlane.f32.xlu0 %v17
  %v53 = vpop.xlane.xlu0 %52
  %54 = vadd.xlane.f32.xlu0 %v18
  %v55 = vpop.xlane.xlu0 %54
  %56 = vadd.xlane.f32.xlu0 %v19
  %v57 = vpop.xlane.xlu0 %56
  %58 = vadd.xlane.f32.xlu0 %v20
  %v59 = vpop.xlane.xlu0 %58
  %60 = vadd.xlane.f32.xlu0 %v21
  %v61 = vpop.xlane.xlu0 %60
  %62 = vadd.xlane.f32.xlu0 %v22
  %v63 = vpop.xlane.xlu0 %62
  %64 = vadd.xlane.f32.xlu0 %v23
  %v65 = vpop.xlane.xlu0 %64
  %66 = vadd.xlane.f32.xlu0 %v24
  %v67 = vpop.xlane.xlu0 %66
  %68 = vadd.xlane.f32.xlu0 %v25
  %v69 = vpop.xlane.xlu0 %68
  %70 = vadd.xlane.f32.xlu0 %v26
  %v71 = vpop.xlane.xlu0 %70
  %72 = vadd.xlane.f32.xlu0 %v27
  %v73 = vpop.xlane.xlu0 %72
  %74 = vadd.xlane.f32.xlu0 %v28
  %v75 = vpop.xlane.xlu0 %74
  %76 = vadd.xlane.f32.xlu0 %v29
  %v77 = vpop.xlane.xlu0 %76
  %78 = vadd.xlane.f32.xlu0 %v30
  %v79 = vpop.xlane.xlu0 %78
  %80 = vadd.xlane.f32.xlu0 %v31
  %v81 = vpop.xlane.xlu0 %80
  %82 = vadd.xlane.f32.xlu0 %v32
  %v83 = vpop.xlane.xlu0 %82
  %84 = vadd.xlane.f32.xlu0 %v33
  %v85 = vpop.xlane.xlu0 %84
  %86 = vadd.xlane.f32.xlu0 %v34
  %v87 = vpop.xlane.xlu0 %86
  %88 = vadd.xlane.f32.xlu0 %v35
  %v89 = vpop.xlane.xlu0 %88
  %90 = vadd.xlane.f32.xlu0 %v36
  %v91 = vpop.xlane.xlu0 %90
  %92 = vadd.xlane.f32.xlu0 %v37
  %v93 = vpop.xlane.xlu0 %92
  %94 = vadd.xlane.f32.xlu0 %v38
  %v95 = vpop.xlane.xlu0 %94
  %96 = vadd.xlane.f32.xlu0 %v39
  %v97 = vpop.xlane.xlu0 %96
  %98 = vadd.xlane.f32.xlu0 %v40
  %v99 = vpop.xlane.xlu0 %98
  %100 = vadd.xlane.f32.xlu0 %v41
  %v101 = vpop.xlane.xlu0 %100
  %102 = vadd.xlane.f32.xlu0 %v42
  %v103 = vpop.xlane.xlu0 %102
  %104 = vadd.xlane.f32.xlu0 %v43
  %v105 = vpop.xlane.xlu0 %104
  %106 = vadd.xlane.f32.xlu0 %v44
  %v107 = vpop.xlane.xlu0 %106
  %108 = vadd.xlane.f32.xlu0 %v45
  %v109 = vpop.xlane.xlu0 %108
  %v110 = vrcp.pop 128.0
  %v111 = vmul.f32 %v47, %v110
  %v112 = vmul.f32 %v49, %v110
  %v113 = vmul.f32 %v51, %v110
  %v114 = vmul.f32 %v53, %v110
  %v115 = vmul.f32 %v55, %v110
  %v116 = vmul.f32 %v57, %v110
  %v117 = vmul.f32 %v59, %v110
  %v118 = vmul.f32 %v61, %v110
  %v119 = vmul.f32 %v63, %v110
  %v120 = vmul.f32 %v65, %v110
  %v121 = vmul.f32 %v67, %v110
  %v122 = vmul.f32 %v69, %v110
  %v123 = vmul.f32 %v71, %v110
  %v124 = vmul.f32 %v73, %v110
  %v125 = vmul.f32 %v75, %v110
  %v126 = vmul.f32 %v77, %v110
  %v127 = vmul.f32 %v79, %v110
  %v128 = vmul.f32 %v81, %v110
  %v129 = vmul.f32 %v83, %v110
  %v130 = vmul.f32 %v85, %v110
  %v131 = vmul.f32 %v87, %v110
  %v132 = vmul.f32 %v89, %v110
  %v133 = vmul.f32 %v91, %v110
  %v134 = vmul.f32 %v93, %v110
  %v135 = vmul.f32 %v95, %v110
  %v136 = vmul.f32 %v97, %v110
  %v137 = vmul.f32 %v99, %v110
  %v138 = vmul.f32 %v101, %v110
  %v139 = vmul.f32 %v103, %v110
  %v140 = vmul.f32 %v105, %v110
  %v141 = vmul.f32 %v107, %v110
  %v142 = vmul.f32 %v109, %v110
  %v143 = vsub.f32 %v14, %v111
  %v144 = vsub.f32 %v15, %v112
  %v145 = vsub.f32 %v16, %v113
  %v146 = vsub.f32 %v17, %v114
  %v147 = vsub.f32 %v18, %v115
  %v148 = vsub.f32 %v19, %v116
  %v149 = vsub.f32 %v20, %v117
  %v150 = vsub.f32 %v21, %v118
  %v151 = vsub.f32 %v22, %v119
  %v152 = vsub.f32 %v23, %v120
  %v153 = vsub.f32 %v24, %v121
  %v154 = vsub.f32 %v25, %v122
  %v155 = vsub.f32 %v26, %v123
  %v156 = vsub.f32 %v27, %v124
  %v157 = vsub.f32 %v28, %v125
  %v158 = vsub.f32 %v29, %v126
  %v159 = vsub.f32 %v30, %v127
  %v160 = vsub.f32 %v31, %v128
  %v161 = vsub.f32 %v32, %v129
  %v162 = vsub.f32 %v33, %v130
  %v163 = vsub.f32 %v34, %v131
  %v164 = vsub.f32 %v35, %v132
  %v165 = vsub.f32 %v36, %v133
  %v166 = vsub.f32 %v37, %v134
  %v167 = vsub.f32 %v38, %v135
  %v168 = vsub.f32 %v39, %v136
  %v169 = vsub.f32 %v40, %v137
  %v170 = vsub.f32 %v41, %v138
  %v171 = vsub.f32 %v42, %v139
  %v172 = vsub.f32 %v43, %v140
  %v173 = vsub.f32 %v44, %v141
  %v174 = vsub.f32 %v45, %v142
  %v175 = vmul.f32 %v143, %v143
  %v176 = vmul.f32 %v144, %v144
  %v177 = vmul.f32 %v145, %v145
  %v178 = vmul.f32 %v146, %v146
  %v179 = vmul.f32 %v147, %v147
  %v180 = vmul.f32 %v148, %v148
  %v181 = vmul.f32 %v149, %v149
  %v182 = vmul.f32 %v150, %v150
  %v183 = vmul.f32 %v151, %v151
  %v184 = vmul.f32 %v152, %v152
  %v185 = vmul.f32 %v153, %v153
  %v186 = vmul.f32 %v154, %v154
  %v187 = vmul.f32 %v155, %v155
  %v188 = vmul.f32 %v156, %v156
  %v189 = vmul.f32 %v157, %v157
  %v190 = vmul.f32 %v158, %v158
  %v191 = vmul.f32 %v159, %v159
  %v192 = vmul.f32 %v160, %v160
  %v193 = vmul.f32 %v161, %v161
  %v194 = vmul.f32 %v162, %v162
  %v195 = vmul.f32 %v163, %v163
  %v196 = vmul.f32 %v164, %v164
  %v197 = vmul.f32 %v165, %v165
  %v198 = vmul.f32 %v166, %v166
  %v199 = vmul.f32 %v167, %v167
  %v200 = vmul.f32 %v168, %v168
  %v201 = vmul.f32 %v169, %v169
  %v202 = vmul.f32 %v170, %v170
  %v203 = vmul.f32 %v171, %v171
  %v204 = vmul.f32 %v172, %v172
  %v205 = vmul.f32 %v173, %v173
  %v206 = vmul.f32 %v174, %v174
  %207 = vadd.xlane.f32.xlu0 %v175
  %v208 = vpop.xlane.xlu0 %207
  %209 = vadd.xlane.f32.xlu0 %v176
  %v210 = vpop.xlane.xlu0 %209
  %211 = vadd.xlane.f32.xlu0 %v177
  %v212 = vpop.xlane.xlu0 %211
  %213 = vadd.xlane.f32.xlu0 %v178
  %v214 = vpop.xlane.xlu0 %213
  %215 = vadd.xlane.f32.xlu0 %v179
  %v216 = vpop.xlane.xlu0 %215
  %217 = vadd.xlane.f32.xlu0 %v180
  %v218 = vpop.xlane.xlu0 %217
  %219 = vadd.xlane.f32.xlu0 %v181
  %v220 = vpop.xlane.xlu0 %219
  %221 = vadd.xlane.f32.xlu0 %v182
  %v222 = vpop.xlane.xlu0 %221
  %223 = vadd.xlane.f32.xlu0 %v183
  %v224 = vpop.xlane.xlu0 %223
  %225 = vadd.xlane.f32.xlu0 %v184
  %v226 = vpop.xlane.xlu0 %225
  %227 = vadd.xlane.f32.xlu0 %v185
  %v228 = vpop.xlane.xlu0 %227
  %229 = vadd.xlane.f32.xlu0 %v186
  %v230 = vpop.xlane.xlu0 %229
  %231 = vadd.xlane.f32.xlu0 %v187
  %v232 = vpop.xlane.xlu0 %231
  %233 = vadd.xlane.f32.xlu0 %v188
  %v234 = vpop.xlane.xlu0 %233
  %235 = vadd.xlane.f32.xlu0 %v189
  %v236 = vpop.xlane.xlu0 %235
  %237 = vadd.xlane.f32.xlu0 %v190
  %v238 = vpop.xlane.xlu0 %237
  %239 = vadd.xlane.f32.xlu0 %v191
  %v240 = vpop.xlane.xlu0 %239
  %241 = vadd.xlane.f32.xlu0 %v192
  %v242 = vpop.xlane.xlu0 %241
  %243 = vadd.xlane.f32.xlu0 %v193
  %v244 = vpop.xlane.xlu0 %243
  %245 = vadd.xlane.f32.xlu0 %v194
  %v246 = vpop.xlane.xlu0 %245
  %247 = vadd.xlane.f32.xlu0 %v195
  %v248 = vpop.xlane.xlu0 %247
  %249 = vadd.xlane.f32.xlu0 %v196
  %v250 = vpop.xlane.xlu0 %249
  %251 = vadd.xlane.f32.xlu0 %v197
  %v252 = vpop.xlane.xlu0 %251
  %253 = vadd.xlane.f32.xlu0 %v198
  %v254 = vpop.xlane.xlu0 %253
  %255 = vadd.xlane.f32.xlu0 %v199
  %v256 = vpop.xlane.xlu0 %255
  %257 = vadd.xlane.f32.xlu0 %v200
  %v258 = vpop.xlane.xlu0 %257
  %259 = vadd.xlane.f32.xlu0 %v201
  %v260 = vpop.xlane.xlu0 %259
  %261 = vadd.xlane.f32.xlu0 %v202
  %v262 = vpop.xlane.xlu0 %261
  %263 = vadd.xlane.f32.xlu0 %v203
  %v264 = vpop.xlane.xlu0 %263
  %265 = vadd.xlane.f32.xlu0 %v204
  %v266 = vpop.xlane.xlu0 %265
  %267 = vadd.xlane.f32.xlu0 %v205
  %v268 = vpop.xlane.xlu0 %267
  %269 = vadd.xlane.f32.xlu0 %v206
  %v270 = vpop.xlane.xlu0 %269
  %v271 = vmul.f32 %v208, %v110
  %v272 = vmul.f32 %v210, %v110
  %v273 = vmul.f32 %v212, %v110
  %v274 = vmul.f32 %v214, %v110
  %v275 = vmul.f32 %v216, %v110
  %v276 = vmul.f32 %v218, %v110
  %v277 = vmul.f32 %v220, %v110
  %v278 = vmul.f32 %v222, %v110
  %v279 = vmul.f32 %v224, %v110
  %v280 = vmul.f32 %v226, %v110
  %v281 = vmul.f32 %v228, %v110
  %v282 = vmul.f32 %v230, %v110
  %v283 = vmul.f32 %v232, %v110
  %v284 = vmul.f32 %v234, %v110
  %v285 = vmul.f32 %v236, %v110
  %v286 = vmul.f32 %v238, %v110
  %v287 = vmul.f32 %v240, %v110
  %v288 = vmul.f32 %v242, %v110
  %v289 = vmul.f32 %v244, %v110
  %v290 = vmul.f32 %v246, %v110
  %v291 = vmul.f32 %v248, %v110
  %v292 = vmul.f32 %v250, %v110
  %v293 = vmul.f32 %v252, %v110
  %v294 = vmul.f32 %v254, %v110
  %v295 = vmul.f32 %v256, %v110
  %v296 = vmul.f32 %v258, %v110
  %v297 = vmul.f32 %v260, %v110
  %v298 = vmul.f32 %v262, %v110
  %v299 = vmul.f32 %v264, %v110
  %v300 = vmul.f32 %v266, %v110
  %v301 = vmul.f32 %v268, %v110
  %v302 = vmul.f32 %v270, %v110
  %v303 = vadd.f32 %v271, 1e-12
  %v304 = vadd.f32 %v272, 1e-12
  %v305 = vadd.f32 %v273, 1e-12
  %v306 = vadd.f32 %v274, 1e-12
  %v307 = vadd.f32 %v275, 1e-12
  %v308 = vadd.f32 %v276, 1e-12
  %v309 = vadd.f32 %v277, 1e-12
  %v310 = vadd.f32 %v278, 1e-12
  %v311 = vadd.f32 %v279, 1e-12
  %v312 = vadd.f32 %v280, 1e-12
  %v313 = vadd.f32 %v281, 1e-12
  %v314 = vadd.f32 %v282, 1e-12
  %v315 = vadd.f32 %v283, 1e-12
  %v316 = vadd.f32 %v284, 1e-12
  %v317 = vadd.f32 %v285, 1e-12
  %v318 = vadd.f32 %v286, 1e-12
  %v319 = vadd.f32 %v287, 1e-12
  %v320 = vadd.f32 %v288, 1e-12
  %v321 = vadd.f32 %v289, 1e-12
  %v322 = vadd.f32 %v290, 1e-12
  %v323 = vadd.f32 %v291, 1e-12
  %v324 = vadd.f32 %v292, 1e-12
  %v325 = vadd.f32 %v293, 1e-12
  %v326 = vadd.f32 %v294, 1e-12
  %v327 = vadd.f32 %v295, 1e-12
  %v328 = vadd.f32 %v296, 1e-12
  %v329 = vadd.f32 %v297, 1e-12
  %v330 = vadd.f32 %v298, 1e-12
  %v331 = vadd.f32 %v299, 1e-12
  %v332 = vadd.f32 %v300, 1e-12
  %v333 = vadd.f32 %v301, 1e-12
  %v334 = vadd.f32 %v302, 1e-12
  %v335 = vrsqrt.pop %v303
  %v336 = vrsqrt.pop %v304
  %v337 = vrsqrt.pop %v305
  %v338 = vrsqrt.pop %v306
  %v339 = vrsqrt.pop %v307
  %v340 = vrsqrt.pop %v308
  %v341 = vrsqrt.pop %v309
  %v342 = vrsqrt.pop %v310
  %v343 = vrsqrt.pop %v311
  %v344 = vrsqrt.pop %v312
  %v345 = vrsqrt.pop %v313
  %v346 = vrsqrt.pop %v314
  %v347 = vrsqrt.pop %v315
  %v348 = vrsqrt.pop %v316
  %v349 = vrsqrt.pop %v317
  %v350 = vrsqrt.pop %v318
  %v351 = vrsqrt.pop %v319
  %v352 = vrsqrt.pop %v320
  %v353 = vrsqrt.pop %v321
  %v354 = vrsqrt.pop %v322
  %v355 = vrsqrt.pop %v323
  %v356 = vrsqrt.pop %v324
  %v357 = vrsqrt.pop %v325
  %v358 = vrsqrt.pop %v326
  %v359 = vrsqrt.pop %v327
  %v360 = vrsqrt.pop %v328
  %v361 = vrsqrt.pop %v329
  %v362 = vrsqrt.pop %v330
  %v363 = vrsqrt.pop %v331
  %v364 = vrsqrt.pop %v332
  %v365 = vrsqrt.pop %v333
  %v366 = vrsqrt.pop %v334
  %v367 = vmul.f32 %v143, %v335
  %v368 = vmul.f32 %v144, %v336
  %v369 = vmul.f32 %v145, %v337
  %v370 = vmul.f32 %v146, %v338
  %v371 = vmul.f32 %v147, %v339
  %v372 = vmul.f32 %v148, %v340
  %v373 = vmul.f32 %v149, %v341
  %v374 = vmul.f32 %v150, %v342
  %v375 = vmul.f32 %v151, %v343
  %v376 = vmul.f32 %v152, %v344
  %v377 = vmul.f32 %v153, %v345
  %v378 = vmul.f32 %v154, %v346
  %v379 = vmul.f32 %v155, %v347
  %v380 = vmul.f32 %v156, %v348
  %v381 = vmul.f32 %v157, %v349
  %v382 = vmul.f32 %v158, %v350
  %v383 = vmul.f32 %v159, %v351
  %v384 = vmul.f32 %v160, %v352
  %v385 = vmul.f32 %v161, %v353
  %v386 = vmul.f32 %v162, %v354
  %v387 = vmul.f32 %v163, %v355
  %v388 = vmul.f32 %v164, %v356
  %v389 = vmul.f32 %v165, %v357
  %v390 = vmul.f32 %v166, %v358
  %v391 = vmul.f32 %v167, %v359
  %v392 = vmul.f32 %v168, %v360
  %v393 = vmul.f32 %v169, %v361
  %v394 = vmul.f32 %v170, %v362
  %v395 = vmul.f32 %v171, %v363
  %v396 = vmul.f32 %v172, %v364
  %v397 = vmul.f32 %v173, %v365
  %v398 = vmul.f32 %v174, %v366
  %v399 = vld [vmem:[%s1] sm:$0x1]
  %v401 = vlaneseq
  %v402 = vshrl.u32 %v401, 7
  %v403 = vsub.s32 0, %v402
  %v404 = vrot.slane %v399, %v403
  %v406 = vmul.f32 %v367, %v404
  %v407 = vmul.f32 %v368, %v404
  %v408 = vmul.f32 %v369, %v404
  %v409 = vmul.f32 %v370, %v404
  %v410 = vmul.f32 %v371, %v404
  %v411 = vmul.f32 %v372, %v404
  %v412 = vmul.f32 %v373, %v404
  %v413 = vmul.f32 %v374, %v404
  %v414 = vmul.f32 %v375, %v404
  %v415 = vmul.f32 %v376, %v404
  %v416 = vmul.f32 %v377, %v404
  %v417 = vmul.f32 %v378, %v404
  %v418 = vmul.f32 %v379, %v404
  %v419 = vmul.f32 %v380, %v404
  %v420 = vmul.f32 %v381, %v404
  %v421 = vmul.f32 %v382, %v404
  %v422 = vmul.f32 %v383, %v404
  %v423 = vmul.f32 %v384, %v404
  %v424 = vmul.f32 %v385, %v404
  %v425 = vmul.f32 %v386, %v404
  %v426 = vmul.f32 %v387, %v404
  %v427 = vmul.f32 %v388, %v404
  %v428 = vmul.f32 %v389, %v404
  %v429 = vmul.f32 %v390, %v404
  %v430 = vmul.f32 %v391, %v404
  %v431 = vmul.f32 %v392, %v404
  %v432 = vmul.f32 %v393, %v404
  %v433 = vmul.f32 %v394, %v404
  %v434 = vmul.f32 %v395, %v404
  %v435 = vmul.f32 %v396, %v404
  %v436 = vmul.f32 %v397, %v404
  %v437 = vmul.f32 %v398, %v404
  %v438 = vld [vmem:[%s2] sm:$0x1]
  %v440 = vlaneseq
  %v441 = vshrl.u32 %v440, 7
  %v442 = vsub.s32 0, %v441
  %v443 = vrot.slane %v438, %v442
  %v445 = vadd.f32 %v406, %v443
  %v446 = vadd.f32 %v407, %v443
  %v447 = vadd.f32 %v408, %v443
  %v448 = vadd.f32 %v409, %v443
  %v449 = vadd.f32 %v410, %v443
  %v450 = vadd.f32 %v411, %v443
  %v451 = vadd.f32 %v412, %v443
  %v452 = vadd.f32 %v413, %v443
  %v453 = vadd.f32 %v414, %v443
  %v454 = vadd.f32 %v415, %v443
  %v455 = vadd.f32 %v416, %v443
  %v456 = vadd.f32 %v417, %v443
  %v457 = vadd.f32 %v418, %v443
  %v458 = vadd.f32 %v419, %v443
  %v459 = vadd.f32 %v420, %v443
  %v460 = vadd.f32 %v421, %v443
  %v461 = vadd.f32 %v422, %v443
  %v462 = vadd.f32 %v423, %v443
  %v463 = vadd.f32 %v424, %v443
  %v464 = vadd.f32 %v425, %v443
  %v465 = vadd.f32 %v426, %v443
  %v466 = vadd.f32 %v427, %v443
  %v467 = vadd.f32 %v428, %v443
  %v468 = vadd.f32 %v429, %v443
  %v469 = vadd.f32 %v430, %v443
  %v470 = vadd.f32 %v431, %v443
  %v471 = vadd.f32 %v432, %v443
  %v472 = vadd.f32 %v433, %v443
  %v473 = vadd.f32 %v434, %v443
  %v474 = vadd.f32 %v435, %v443
  %v475 = vadd.f32 %v436, %v443
  %v476 = vadd.f32 %v437, %v443
  %v477 = vpack.c.bf16 %v446, %v445
  %v478 = vpack.c.bf16 %v448, %v447
  %v479 = vpack.c.bf16 %v450, %v449
  %v480 = vpack.c.bf16 %v452, %v451
  %v481 = vpack.c.bf16 %v454, %v453
  %v482 = vpack.c.bf16 %v456, %v455
  %v483 = vpack.c.bf16 %v458, %v457
  %v484 = vpack.c.bf16 %v460, %v459
  %v485 = vpack.c.bf16 %v462, %v461
  %v486 = vpack.c.bf16 %v464, %v463
  %v487 = vpack.c.bf16 %v466, %v465
  %v488 = vpack.c.bf16 %v468, %v467
  %v489 = vpack.c.bf16 %v470, %v469
  %v490 = vpack.c.bf16 %v472, %v471
  %v491 = vpack.c.bf16 %v474, %v473
  %v492 = vpack.c.bf16 %v476, %v475
  %v509 = vunpack.c.l.b16 %v477
  %v510 = vunpack.c.h.b16 %v477
  %v511 = vunpack.c.l.b16 %v478
  %v512 = vunpack.c.h.b16 %v478
  %v513 = vunpack.c.l.b16 %v479
  %v514 = vunpack.c.h.b16 %v479
  %v515 = vunpack.c.l.b16 %v480
  %v516 = vunpack.c.h.b16 %v480
  %v517 = vunpack.c.l.b16 %v481
  %v518 = vunpack.c.h.b16 %v481
  %v519 = vunpack.c.l.b16 %v482
  %v520 = vunpack.c.h.b16 %v482
  %v521 = vunpack.c.l.b16 %v483
  %v522 = vunpack.c.h.b16 %v483
  %v523 = vunpack.c.l.b16 %v484
  %v524 = vunpack.c.h.b16 %v484
  %v525 = vunpack.c.l.b16 %v485
  %v526 = vunpack.c.h.b16 %v485
  %v527 = vunpack.c.l.b16 %v486
  %v528 = vunpack.c.h.b16 %v486
  %v529 = vunpack.c.l.b16 %v487
  %v530 = vunpack.c.h.b16 %v487
  %v531 = vunpack.c.l.b16 %v488
  %v532 = vunpack.c.h.b16 %v488
  %v533 = vunpack.c.l.b16 %v489
  %v534 = vunpack.c.h.b16 %v489
  %v535 = vunpack.c.l.b16 %v490
  %v536 = vunpack.c.h.b16 %v490
  %v537 = vunpack.c.l.b16 %v491
  %v538 = vunpack.c.h.b16 %v491
  %v539 = vunpack.c.l.b16 %v492
  %v540 = vunpack.c.h.b16 %v492
  %v541 = vpack.c.b16 %v509, %v509
  %v542 = vpack.c.b16 %v510, %v510
  %v543 = vpack.c.b16 %v511, %v511
  %v544 = vpack.c.b16 %v512, %v512
  %v545 = vpack.c.b16 %v513, %v513
  %v546 = vpack.c.b16 %v514, %v514
  %v547 = vpack.c.b16 %v515, %v515
  %v548 = vpack.c.b16 %v516, %v516
  %v549 = vpack.c.b16 %v517, %v517
  %v550 = vpack.c.b16 %v518, %v518
  %v551 = vpack.c.b16 %v519, %v519
  %v552 = vpack.c.b16 %v520, %v520
  %v553 = vpack.c.b16 %v521, %v521
  %v554 = vpack.c.b16 %v522, %v522
  %v555 = vpack.c.b16 %v523, %v523
  %v556 = vpack.c.b16 %v524, %v524
  %v557 = vpack.c.b16 %v525, %v525
  %v558 = vpack.c.b16 %v526, %v526
  %v559 = vpack.c.b16 %v527, %v527
  %v560 = vpack.c.b16 %v528, %v528
  %v561 = vpack.c.b16 %v529, %v529
  %v562 = vpack.c.b16 %v530, %v530
  %v563 = vpack.c.b16 %v531, %v531
  %v564 = vpack.c.b16 %v532, %v532
  %v565 = vpack.c.b16 %v533, %v533
  %v566 = vpack.c.b16 %v534, %v534
  %v567 = vpack.c.b16 %v535, %v535
  %v568 = vpack.c.b16 %v536, %v536
  %v569 = vpack.c.b16 %v537, %v537
  %v570 = vpack.c.b16 %v538, %v538
  %v571 = vpack.c.b16 %v539, %v539
  %v572 = vpack.c.b16 %v540, %v540
  %605 = vst [vmem:[%s3] sm:$0xf] %v541
  %606 = vst [vmem:[%s3 + $0x4] sm:$0xf] %v542
  %607 = vst [vmem:[%s3 + $0x8] sm:$0xf] %v543
  %608 = vst [vmem:[%s3 + $0xc] sm:$0xf] %v544
  %609 = vst [vmem:[%s3 + $0x10] sm:$0xf] %v545
  %610 = vst [vmem:[%s3 + $0x14] sm:$0xf] %v546
  %611 = vst [vmem:[%s3 + $0x18] sm:$0xf] %v547
  %612 = vst [vmem:[%s3 + $0x1c] sm:$0xf] %v548
  %613 = vst [vmem:[%s3 + $0x20] sm:$0xf] %v549
  %614 = vst [vmem:[%s3 + $0x24] sm:$0xf] %v550
  %615 = vst [vmem:[%s3 + $0x28] sm:$0xf] %v551
  %616 = vst [vmem:[%s3 + $0x2c] sm:$0xf] %v552
  %617 = vst [vmem:[%s3 + $0x30] sm:$0xf] %v553
  %618 = vst [vmem:[%s3 + $0x34] sm:$0xf] %v554
  %619 = vst [vmem:[%s3 + $0x38] sm:$0xf] %v555
  %620 = vst [vmem:[%s3 + $0x3c] sm:$0xf] %v556
  %621 = vst [vmem:[%s3 + $0x40] sm:$0xf] %v557
  %622 = vst [vmem:[%s3 + $0x44] sm:$0xf] %v558
  %623 = vst [vmem:[%s3 + $0x48] sm:$0xf] %v559
  %624 = vst [vmem:[%s3 + $0x4c] sm:$0xf] %v560
  %625 = vst [vmem:[%s3 + $0x50] sm:$0xf] %v561
  %626 = vst [vmem:[%s3 + $0x54] sm:$0xf] %v562
  %627 = vst [vmem:[%s3 + $0x58] sm:$0xf] %v563
  %628 = vst [vmem:[%s3 + $0x5c] sm:$0xf] %v564
  %629 = vst [vmem:[%s3 + $0x60] sm:$0xf] %v565
  %630 = vst [vmem:[%s3 + $0x64] sm:$0xf] %v566
  %631 = vst [vmem:[%s3 + $0x68] sm:$0xf] %v567
  %632 = vst [vmem:[%s3 + $0x6c] sm:$0xf] %v568
  %633 = vst [vmem:[%s3 + $0x70] sm:$0xf] %v569
  %634 = vst [vmem:[%s3 + $0x74] sm:$0xf] %v570
  %635 = vst [vmem:[%s3 + $0x78] sm:$0xf] %v571
  %636 = vst [vmem:[%s3 + $0x7c] sm:$0xf] %v572
  // Predicated region
  $region14: #{bert_encoder_forward.9} parent=0 // pred_check
    _
  $region15: #{bert_encoder_forward.9} parent=0 // pred_check_branch
    %638 = sbr.rel (0) target = $region17
  $region16: #{bert_encoder_forward.9} parent=0 // pred_region
    _
  $region17: #{bert_encoder_forward.9} parent=0 // pred_fallthru
    _
  // Predicated region
  $region18: #{bert_encoder_forward.9} parent=0 // pred_check
    _
  $region19: #{bert_encoder_forward.9} parent=0 // pred_check_branch
    %640 = sbr.rel (0) target = $region21
  $region20: #{bert_encoder_forward.9} parent=0 // pred_region
    _
  $region21: #{bert_encoder_forward.9} parent=0 // pred_fallthru
    _

// kernel: bert_encoder_forward.10
$region0: #{bert_encoder_forward.10}
  #allocation0 [shape = 'u32[]', space=smem, size = 0x4, offset = 0x4, fixed_abs, tag = 'smem constant byte address 0x4 - core index']
  #allocation1 [shape = 'u32[144,128]{1,0:T(1,128)}', space=vmem, size = 0x12000, scoped, tag = 'internal scratch']
  #allocation2 [shape = 'f32[256,128]{1,0:T(8,128)}', space=vmem, size = 0x20000, scoped, tag = 'scratch operand']
  %s0 = inlined_call_operand.vmem [shape: bf16[256,128], index: 0, kind: input, shape index: {}]
  %s1 = inlined_call_operand.vmem [shape: bf16[128,384], index: 1, kind: input, shape index: {}]
  %s2 = inlined_call_operand.vmem [shape: f32[1,384], index: 2, kind: input, shape index: {}]
  %s3 = inlined_call_operand.vmem [shape: bf16[256,384], index: 3, kind: output, shape index: {}]
  %s4 = sld [smem:[#allocation0]]
  $region131: #{bert_encoder_forward.10} parent=0
    _
  %s6 = ssub.s32 1, %s4
  %s7 = scalar_select 0, %s6, %s4
  $region1: #{bert_encoder_forward.10} parent=0
    #allocation3 [shape = 'u8[65536]{0}', space=vmem, size = 0x10000, scoped, tag = 'input window, operand 1']
    #allocation4 [shape = 'u8[131072]{0}', space=vmem, size = 0x20000, scoped, tag = 'output window, operand 0']
    loop: start=0, step=1, limit=5
    $region2: #{bert_encoder_forward.10} parent=1 // loop_pre_header
      _
    $region3: #{bert_encoder_forward.10} parent=1 // loop_header
      %s9 = sphi 0, %s13
      %p10 = scmp.ge.s32.totalorder %s9, 5
      %s16 = sphi 0, %s35
      %s17 = sphi 0, %s31
      %s18 = sphi 0, %s27
      %s19 = sphi 0, %s16
      %s20 = sphi 0, %s17
      %s21 = sphi 0, %s18
      %s22 = sphi 0, %s19
      %s23 = sphi 0, %s20
      %s24 = sphi 0, %s21
      %s40 = sphi 0, %s42
      %s43 = sphi 0, %s40
      %s44 = sphi 0, %s43
      %s60 = sphi 0, %s44
      %s68 = sphi 0, %s70
      %s71 = sphi 0, %s68
      %s72 = sphi 0, %s71
      %s88 = sphi 0, %s72
      %s94 = sphi 0, %s96
      %s97 = sphi 0, %s94
      %s98 = sphi 0, %s97
      %s114 = sphi 0, %s98
      %s122 = sphi 0, %s124
      %s125 = sphi 0, %s122
      %s126 = sphi 0, %s125
      %s142 = sphi 0, %s126
    $region4: #{bert_encoder_forward.10} parent=1 // loop_header_branch
      %12 = sbr.rel (%p10) target = $region8
    $region5: #{bert_encoder_forward.10} parent=1 // loop_body
      %s14 = ssub.s32 %s9, 1
      %s15 = ssub.s32 %s9, 2
      %s25 = sadd.s32 1, %s18
      %p26 = scmp.ge.s32.totalorder %s25, 1
      %s27 = scalar_select %p26, 0, %s25
      %s28 = sadd.s32 1, %s17
      %s29 = scalar_select %p26, %s28, %s17
      %p30 = scmp.ge.s32.totalorder %s29, 3
      %s31 = scalar_select %p30, 0, %s29
      %s32 = sadd.s32 1, %s16
      %s33 = scalar_select %p30, %s32, %s16
      %p34 = scmp.ge.s32.totalorder %s33, 1
      %s35 = scalar_select %p34, 0, %s33
      %s36 = ssub.s32 %s16, %s35
      %s37 = ssub.s32 %s18, %s27
      %s38 = sor.u32 %s36, %s37
      %p39 = scmp.eq.s32.totalorder %s38, 0
      %s41 = sadd.s32 %s40, 1
      %s42 = scalar_select %p39, %s40, %s41
      %p45 = pneg %p39
      %p46 = scmp.eq.s32.totalorder %s9, 2
      %p47 = por %p45, %p46
      %p48 = scmp.ne.s32.totalorder %s40, %s43
      %p49 = scmp.eq.s32.totalorder %s9, 0
      %p50 = por %p48, %p49
      %p51 = scmp.ne.s32.totalorder %s40, %s43
      %p52 = scmp.eq.s32.totalorder %s14, 2
      %p53 = por %p51, %p52
      %p54 = scmp.ne.s32.totalorder %s43, %s44
      %p55 = scmp.eq.s32.totalorder %s14, 0
      %p56 = por %p54, %p55
      %p57 = scmp.ne.s32.totalorder %s43, %s44
      %p58 = scmp.eq.s32.totalorder %s15, 2
      %p59 = por %p57, %p58
      %p61 = scmp.ne.s32.totalorder %s44, %s60
      %p62 = scmp.eq.s32.totalorder %s15, 0
      %p63 = por %p61, %p62
      %s64 = ssub.s32 %s18, %s27
      %s65 = ssub.s32 %s17, %s31
      %s66 = sor.u32 %s64, %s65
      %p67 = scmp.eq.s32.totalorder %s66, 0
      %s69 = sadd.s32 %s68, 1
      %s70 = scalar_select %p67, %s68, %s69
      %p73 = pneg %p67
      %p74 = scmp.eq.s32.totalorder %s9, 2
      %p75 = por %p73, %p74
      %p76 = scmp.ne.s32.totalorder %s68, %s71
      %p77 = scmp.eq.s32.totalorder %s9, 0
      %p78 = por %p76, %p77
      %p79 = scmp.ne.s32.totalorder %s68, %s71
      %p80 = scmp.eq.s32.totalorder %s14, 2
      %p81 = por %p79, %p80
      %p82 = scmp.ne.s32.totalorder %s71, %s72
      %p83 = scmp.eq.s32.totalorder %s14, 0
      %p84 = por %p82, %p83
      %p85 = scmp.ne.s32.totalorder %s71, %s72
      %p86 = scmp.eq.s32.totalorder %s15, 2
      %p87 = por %p85, %p86
      %p89 = scmp.ne.s32.totalorder %s72, %s88
      %p90 = scmp.eq.s32.totalorder %s15, 0
      %p91 = por %p89, %p90
      %s92 = ssub.s32 %s17, %s31
      %p93 = scmp.eq.s32.totalorder %s92, 0
      %s95 = sadd.s32 %s94, 1
      %s96 = scalar_select %p93, %s94, %s95
      %p99 = pneg %p93
      %p100 = scmp.eq.s32.totalorder %s9, 2
      %p101 = por %p99, %p100
      %p102 = scmp.ne.s32.totalorder %s94, %s97
      %p103 = scmp.eq.s32.totalorder %s9, 0
      %p104 = por %p102, %p103
      %p105 = scmp.ne.s32.totalorder %s94, %s97
      %p106 = scmp.eq.s32.totalorder %s14, 2
      %p107 = por %p105, %p106
      %p108 = scmp.ne.s32.totalorder %s97, %s98
      %p109 = scmp.eq.s32.totalorder %s14, 0
      %p110 = por %p108, %p109
      %p111 = scmp.ne.s32.totalorder %s97, %s98
      %p112 = scmp.eq.s32.totalorder %s15, 2
      %p113 = por %p111, %p112
      %p115 = scmp.ne.s32.totalorder %s98, %s114
      %p116 = scmp.eq.s32.totalorder %s15, 0
      %p117 = por %p115, %p116
      %s118 = ssub.s32 %s16, %s35
      %s119 = ssub.s32 %s17, %s31
      %s120 = sor.u32 %s118, %s119
      %p121 = scmp.eq.s32.totalorder %s120, 0
      %s123 = sadd.s32 %s122, 1
      %s124 = scalar_select %p121, %s122, %s123
      %p127 = pneg %p121
      %p128 = scmp.eq.s32.totalorder %s9, 2
      %p129 = por %p127, %p128
      %p130 = scmp.ne.s32.totalorder %s122, %s125
      %p131 = scmp.eq.s32.totalorder %s9, 0
      %p132 = por %p130, %p131
      %p133 = scmp.ne.s32.totalorder %s122, %s125
      %p134 = scmp.eq.s32.totalorder %s14, 2
      %p135 = por %p133, %p134
      %p136 = scmp.ne.s32.totalorder %s125, %s126
      %p137 = scmp.eq.s32.totalorder %s14, 0
      %p138 = por %p136, %p137
      %p139 = scmp.ne.s32.totalorder %s125, %s126
      %p140 = scmp.eq.s32.totalorder %s15, 2
      %p141 = por %p139, %p140
      %p143 = scmp.ne.s32.totalorder %s126, %s142
      %p144 = scmp.eq.s32.totalorder %s15, 0
      %p145 = por %p143, %p144
      %p146 = scmp.le.s32.totalorder 1, %s9
      %p147 = scmp.lt.s32.totalorder %s9, 4
      %p148 = pnand %p146, %p147
      %p149 = pneg %p148
      // Predicated region
      $region9: #{bert_encoder_forward.10} parent=5 // pred_check
        _
      $region10: #{bert_encoder_forward.10} parent=5 // pred_check_branch
        %151 = sbr.rel (%p148) target = $region12
      $region11: #{bert_encoder_forward.10} parent=5 // pred_region
        %s152 = ssub.s32 %s9, 1
        // Predicated region
        $region13: #{bert_encoder_forward.10} parent=11 // pred_check
          %p153 = pneg %p56
        $region14: #{bert_encoder_forward.10} parent=11 // pred_check_branch
          %155 = sbr.rel (%p153) target = $region16
        $region15: #{bert_encoder_forward.10} parent=11 // pred_region
          %s156 = smul.u32 32, %s19
          %p157 = scmp.lt.s32.totalorder %s156, 31
          %s158 = scalar_select %p157, %s156, 31
          %p159 = scmp.lt.s32.totalorder %s21, 0
          %s160 = scalar_select %p159, %s21, 0
          %s161 = sadd.s32 %s160, %s158
          %s162 = smul.addr %s161, 4
          %s163 = scalar_lea.vmem %s0, %s162
          %s164 = smul.u32 32, %s19
        $region16: #{bert_encoder_forward.10} parent=11 // pred_fallthru
          _
      $region12: #{bert_encoder_forward.10} parent=5 // pred_fallthru
        _
      %p165 = scmp.lt.s32.totalorder %s9, 3
      // Predicated region
      $region17: #{bert_encoder_forward.10} parent=5 // pred_check
        %p166 = pneg %p165
      $region18: #{bert_encoder_forward.10} parent=5 // pred_check_branch
        %168 = sbr.rel (%p166) target = $region20
      $region19: #{bert_encoder_forward.10} parent=5 // pred_region
        // Predicated region
        $region21: #{bert_encoder_forward.10} parent=19 // pred_check
          %p169 = pneg %p78
        $region22: #{bert_encoder_forward.10} parent=19 // pred_check_branch
          %171 = sbr.rel (%p169) target = $region24
        $region23: #{bert_encoder_forward.10} parent=19 // pred_region
          %s172 = sand.u32 %s68, 1
          %s173 = sand.u32 %s68, 1
          %s174 = smul.addr %s173, 64
          %s175 = scalar_lea.vmem [#allocation3], %s174
          %s176 = smul.u32 16, %s18
          %s177 = smul.addr %s176, 3
          %s178 = sadd.s32 %s17, %s177
          %s179 = smul.addr %s178, 4
          %s180 = scalar_lea.vmem %s1, %s179
          // Predicated region
          $region25: #{bert_encoder_forward.10} parent=23 // pred_check
            _
          $region26: #{bert_encoder_forward.10} parent=23 // pred_check_branch
            %182 = sbr.rel (0) target = $region28
          $region27: #{bert_encoder_forward.10} parent=23 // pred_region
            // Predicated region
            $region29: #{bert_encoder_forward.10} parent=27 // pred_check
              _
            $region30: #{bert_encoder_forward.10} parent=27 // pred_check_branch
              %184 = sbr.rel target = $region32
            $region31: #{bert_encoder_forward.10} parent=27 // pred_region
              // Predicated region
              $region44: #{bert_encoder_forward.10} parent=31 // pred_check
                _
              $region45: #{bert_encoder_forward.10} parent=31 // pred_check_branch
                %229 = sbr.rel (0) target = $region47
              $region46: #{bert_encoder_forward.10} parent=31 // pred_region
                loop: start=0, step=1, limit=1
                $region48: #{bert_encoder_forward.10} parent=46 // loop_pre_header
                  _
                $region49: #{bert_encoder_forward.10} parent=46 // loop_header
                  %s231 = sphi 0, %s235
                  %p232 = scmp.ge.s32.totalorder %s231, 1
                  %s236 = sphi %s180, %s180
                  %s237 = sphi %s175, %s175
                $region50: #{bert_encoder_forward.10} parent=46 // loop_header_branch
                  %234 = sbr.rel (%p232) target = $region54
                $region51: #{bert_encoder_forward.10} parent=46 // loop_body
                  _
                $region52: #{bert_encoder_forward.10} parent=46 // loop_footer
                  %s235 = sadd.s32 1, %s231
                $region53: #{bert_encoder_forward.10} parent=46 // loop_footer_branch
                  %230 = sbr.rel target = $region49
                $region54: #{bert_encoder_forward.10} parent=46 // loop_exit
                  _
                loop: start=0, step=1, limit=1
                $region55: #{bert_encoder_forward.10} parent=46 // loop_pre_header
                  _
                $region56: #{bert_encoder_forward.10} parent=46 // loop_header
                  %s240 = sphi 0, %s244
                  %p241 = scmp.ge.s32.totalorder %s240, 1
                  %s245 = sphi %s180, %s180
                  %s246 = sphi %s175, %s175
                $region57: #{bert_encoder_forward.10} parent=46 // loop_header_branch
                  %243 = sbr.rel (%p241) target = $region61
                $region58: #{bert_encoder_forward.10} parent=46 // loop_body
                  %v247 = vld [vmem:[%s245] sm:$0xf]
                  %248 = vst [vmem:[%s246] sm:$0xf] %v247
                  %v249 = vld [vmem:[%s245 + $0xc] sm:$0xf]
                  %250 = vst [vmem:[%s246 + $0x4] sm:$0xf] %v249
                  %v251 = vld [vmem:[%s245 + $0x18] sm:$0xf]
                  %252 = vst [vmem:[%s246 + $0x8] sm:$0xf] %v251
                  %v253 = vld [vmem:[%s245 + $0x24] sm:$0xf]
                  %254 = vst [vmem:[%s246 + $0xc] sm:$0xf] %v253
                  %v255 = vld [vmem:[%s245 + $0x30] sm:$0xf]
                  %256 = vst [vmem:[%s246 + $0x10] sm:$0xf] %v255
                  %v257 = vld [vmem:[%s245 + $0x3c] sm:$0xf]
                  %258 = vst [vmem:[%s246 + $0x14] sm:$0xf] %v257
                  %v259 = vld [vmem:[%s245 + $0x48] sm:$0xf]
                  %260 = vst [vmem:[%s246 + $0x18] sm:$0xf] %v259
                  %v261 = vld [vmem:[%s245 + $0x54] sm:$0xf]
                  %262 = vst [vmem:[%s246 + $0x1c] sm:$0xf] %v261
                  %v263 = vld [vmem:[%s245 + $0x60] sm:$0xf]
                  %264 = vst [vmem:[%s246 + $0x20] sm:$0xf] %v263
                  %v265 = vld [vmem:[%s245 + $0x6c] sm:$0xf]
                  %266 = vst [vmem:[%s246 + $0x24] sm:$0xf] %v265
                  %v267 = vld [vmem:[%s245 + $0x78] sm:$0xf]
                  %268 = vst [vmem:[%s246 + $0x28] sm:$0xf] %v267
                  %v269 = vld [vmem:[%s245 + $0x84] sm:$0xf]
                  %270 = vst [vmem:[%s246 + $0x2c] sm:$0xf] %v269
                  %v271 = vld [vmem:[%s245 + $0x90] sm:$0xf]
                  %272 = vst [vmem:[%s246 + $0x30] sm:$0xf] %v271
                  %v273 = vld [vmem:[%s245 + $0x9c] sm:$0xf]
                  %274 = vst [vmem:[%s246 + $0x34] sm:$0xf] %v273
                  %v275 = vld [vmem:[%s245 + $0xa8] sm:$0xf]
                  %276 = vst [vmem:[%s246 + $0x38] sm:$0xf] %v275
                  %v277 = vld [vmem:[%s245 + $0xb4] sm:$0xf]
                  %278 = vst [vmem:[%s246 + $0x3c] sm:$0xf] %v277
                $region59: #{bert_encoder_forward.10} parent=46 // loop_footer
                  %s244 = sadd.s32 1, %s240
                $region60: #{bert_encoder_forward.10} parent=46 // loop_footer_branch
                  %239 = sbr.rel target = $region56
                $region61: #{bert_encoder_forward.10} parent=46 // loop_exit
                  _
              $region47: #{bert_encoder_forward.10} parent=31 // pred_fallthru
                _
            $region32: #{bert_encoder_forward.10} parent=27 // pred_fallthru
              _
            // Predicated region
            $region33: #{bert_encoder_forward.10} parent=27 // pred_check
              _
            $region34: #{bert_encoder_forward.10} parent=27 // pred_check_branch
              %186 = sbr.rel (0) target = $region36
            $region35: #{bert_encoder_forward.10} parent=27 // pred_region
              loop: start=0, step=1, limit=1
              $region37: #{bert_encoder_forward.10} parent=35 // loop_pre_header
                _
              $region38: #{bert_encoder_forward.10} parent=35 // loop_header
                %s189 = sphi 0, %s193
                %p190 = scmp.ge.s32.totalorder %s189, 1
                %s194 = sphi %s180, %s180
                %s195 = sphi %s175, %s175
              $region39: #{bert_encoder_forward.10} parent=35 // loop_header_branch
                %192 = sbr.rel (%p190) target = $region43
              $region40: #{bert_encoder_forward.10} parent=35 // loop_body
                %v196 = vld [vmem:[%s194] sm:$0xf]
                %197 = vst [vmem:[%s195] sm:$0xf] %v196
                %v198 = vld [vmem:[%s194 + $0xc] sm:$0xf]
                %199 = vst [vmem:[%s195 + $0x4] sm:$0xf] %v198
                %v200 = vld [vmem:[%s194 + $0x18] sm:$0xf]
                %201 = vst [vmem:[%s195 + $0x8] sm:$0xf] %v200
                %v202 = vld [vmem:[%s194 + $0x24] sm:$0xf]
                %203 = vst [vmem:[%s195 + $0xc] sm:$0xf] %v202
                %v204 = vld [vmem:[%s194 + $0x30] sm:$0xf]
                %205 = vst [vmem:[%s195 + $0x10] sm:$0xf] %v204
                %v206 = vld [vmem:[%s194 + $0x3c] sm:$0xf]
                %207 = vst [vmem:[%s195 + $0x14] sm:$0xf] %v206
                %v208 = vld [vmem:[%s194 + $0x48] sm:$0xf]
                %209 = vst [vmem:[%s195 + $0x18] sm:$0xf] %v208
                %v210 = vld [vmem:[%s194 + $0x54] sm:$0xf]
                %211 = vst [vmem:[%s195 + $0x1c] sm:$0xf] %v210
                %v212 = vld [vmem:[%s194 + $0x60] sm:$0xf]
                %213 = vst [vmem:[%s195 + $0x20] sm:$0xf] %v212
                %v214 = vld [vmem:[%s194 + $0x6c] sm:$0xf]
                %215 = vst [vmem:[%s195 + $0x24] sm:$0xf] %v214
                %v216 = vld [vmem:[%s194 + $0x78] sm:$0xf]
                %217 = vst [vmem:[%s195 + $0x28] sm:$0xf] %v216
                %v218 = vld [vmem:[%s194 + $0x84] sm:$0xf]
                %219 = vst [vmem:[%s195 + $0x2c] sm:$0xf] %v218
                %v220 = vld [vmem:[%s194 + $0x90] sm:$0xf]
                %221 = vst [vmem:[%s195 + $0x30] sm:$0xf] %v220
                %v222 = vld [vmem:[%s194 + $0x9c] sm:$0xf]
                %223 = vst [vmem:[%s195 + $0x34] sm:$0xf] %v222
                %v224 = vld [vmem:[%s194 + $0xa8] sm:$0xf]
                %225 = vst [vmem:[%s195 + $0x38] sm:$0xf] %v224
                %v226 = vld [vmem:[%s194 + $0xb4] sm:$0xf]
                %227 = vst [vmem:[%s195 + $0x3c] sm:$0xf] %v226
              $region41: #{bert_encoder_forward.10} parent=35 // loop_footer
                %s193 = sadd.s32 1, %s189
              $region42: #{bert_encoder_forward.10} parent=35 // loop_footer_branch
                %188 = sbr.rel target = $region38
              $region43: #{bert_encoder_forward.10} parent=35 // loop_exit
                _
            $region36: #{bert_encoder_forward.10} parent=27 // pred_fallthru
              _
          $region28: #{bert_encoder_forward.10} parent=23 // pred_fallthru
            _
          %279 = vnop
        $region24: #{bert_encoder_forward.10} parent=19 // pred_fallthru
          _
        // Predicated region
        $region62: #{bert_encoder_forward.10} parent=19 // pred_check
          %p280 = pneg %p104
        $region63: #{bert_encoder_forward.10} parent=19 // pred_check_branch
          %282 = sbr.rel (%p280) target = $region65
        $region64: #{bert_encoder_forward.10} parent=19 // pred_region
          %p283 = scmp.lt.s32.totalorder %s17, 2
          %s284 = scalar_select %p283, %s17, 2
          %s285 = scalar_lea.vmem %s2, %s284
        $region65: #{bert_encoder_forward.10} parent=19 // pred_fallthru
          _
      $region20: #{bert_encoder_forward.10} parent=5 // pred_fallthru
        _
      %p286 = scmp.le.s32.totalorder 1, %s9
      %p287 = scmp.lt.s32.totalorder %s9, 4
      %p288 = pnand %p286, %p287
      %p289 = pneg %p288
      // Predicated region
      $region66: #{bert_encoder_forward.10} parent=5 // pred_check
        _
      $region67: #{bert_encoder_forward.10} parent=5 // pred_check_branch
        %291 = sbr.rel (%p288) target = $region69
      $region68: #{bert_encoder_forward.10} parent=5 // pred_region
        %s292 = ssub.s32 %s9, 1
        %s293 = sand.u32 %s71, 1
        %s294 = sand.u32 %s71, 1
        %s295 = smul.addr %s294, 64
        %s296 = scalar_lea.vmem [#allocation3], %s295
        // Predicated region
        $region70: #{bert_encoder_forward.10} parent=68 // pred_check
          %p297 = pneg %p84
        $region71: #{bert_encoder_forward.10} parent=68 // pred_check_branch
          %299 = sbr.rel (%p297) target = $region73
        $region72: #{bert_encoder_forward.10} parent=68 // pred_region
          _
        $region73: #{bert_encoder_forward.10} parent=68 // pred_fallthru
          _
        %s300 = smul.u32 32, %s19
        %p301 = scmp.lt.s32.totalorder %s300, 31
        %s302 = scalar_select %p301, %s300, 31
        %p303 = scmp.lt.s32.totalorder %s21, 0
        %s304 = scalar_select %p303, %s21, 0
        %s305 = sadd.s32 %s304, %s302
        %s306 = smul.addr %s305, 4
        %s307 = scalar_lea.vmem %s0, %s306
        %p308 = pneg %p56
        %p309 = pneg %p53
        %s310 = sand.u32 %s71, 1
        %s311 = sand.u32 %s71, 1
        %s312 = smul.addr %s311, 64
        %s313 = scalar_lea.vmem [#allocation3], %s312
        %p314 = pneg %p84
        %p315 = pneg %p81
        %p316 = scmp.lt.s32.totalorder %s20, 2
        %s317 = scalar_select %p316, %s20, 2
        %s318 = scalar_lea.vmem %s2, %s317
        %p319 = pneg %p110
        %p320 = pneg %p107
        %p321 = pneg %p138
        %p322 = pneg %p135
        %s323 = sand.u32 %s125, 1
        %s324 = sand.u32 %s125, 1
        %s325 = smul.addr %s324, 128
        %s326 = scalar_lea.vmem [#allocation4], %s325
        %s327 = smul.u32 32, %s19
        %p328 = scmp.lt.s32.totalorder %s327, 31
        %s329 = scalar_select %p328, %s327, 31
        %p330 = scmp.lt.s32.totalorder %s21, 0
        %s331 = scalar_select %p330, %s21, 0
        %s332 = sadd.s32 %s331, %s329
        %s333 = smul.addr %s332, 4
        %s334 = scalar_lea.vmem %s0, %s333
        %s335 = smul.u32 32, %s19
        %s336 = smul.u32 16, %s21
        %p337 = scmp.lt.s32.totalorder %s20, 2
        %s338 = scalar_select %p337, %s20, 2
        %s339 = scalar_lea.vmem %s2, %s338
        %s340 = smul.u32 32, %s19
        %p342 = scmp.eq.s32.totalorder %s21, 0
        // Predicated region
        $region74: #{bert_encoder_forward.10} parent=68 // pred_check
          %p343 = pneg %p342
        $region75: #{bert_encoder_forward.10} parent=68 // pred_check_branch
          %345 = sbr.rel (%p343) target = $region77
        $region76: #{bert_encoder_forward.10} parent=68 // pred_region
          %346 = vst [vmem:[#allocation2] sm:$0xff] 0.0
          %347 = vst [vmem:[#allocation2 + $0x8] sm:$0xff] 0.0
          %348 = vst [vmem:[#allocation2 + $0x10] sm:$0xff] 0.0
          %349 = vst [vmem:[#allocation2 + $0x18] sm:$0xff] 0.0
          %350 = vst [vmem:[#allocation2 + $0x20] sm:$0xff] 0.0
          %351 = vst [vmem:[#allocation2 + $0x28] sm:$0xff] 0.0
          %352 = vst [vmem:[#allocation2 + $0x30] sm:$0xff] 0.0
          %353 = vst [vmem:[#allocation2 + $0x38] sm:$0xff] 0.0
          %354 = vst [vmem:[#allocation2 + $0x40] sm:$0xff] 0.0
          %355 = vst [vmem:[#allocation2 + $0x48] sm:$0xff] 0.0
          %356 = vst [vmem:[#allocation2 + $0x50] sm:$0xff] 0.0
          %357 = vst [vmem:[#allocation2 + $0x58] sm:$0xff] 0.0
          %358 = vst [vmem:[#allocation2 + $0x60] sm:$0xff] 0.0
          %359 = vst [vmem:[#allocation2 + $0x68] sm:$0xff] 0.0
          %360 = vst [vmem:[#allocation2 + $0x70] sm:$0xff] 0.0
          %361 = vst [vmem:[#allocation2 + $0x78] sm:$0xff] 0.0
          %362 = vst [vmem:[#allocation2 + $0x80] sm:$0xff] 0.0
          %363 = vst [vmem:[#allocation2 + $0x88] sm:$0xff] 0.0
          %364 = vst [vmem:[#allocation2 + $0x90] sm:$0xff] 0.0
          %365 = vst [vmem:[#allocation2 + $0x98] sm:$0xff] 0.0
          %366 = vst [vmem:[#allocation2 + $0xa0] sm:$0xff] 0.0
          %367 = vst [vmem:[#allocation2 + $0xa8] sm:$0xff] 0.0
          %368 = vst [vmem:[#allocation2 + $0xb0] sm:$0xff] 0.0
          %369 = vst [vmem:[#allocation2 + $0xb8] sm:$0xff] 0.0
          %370 = vst [vmem:[#allocation2 + $0xc0] sm:$0xff] 0.0
          %371 = vst [vmem:[#allocation2 + $0xc8] sm:$0xff] 0.0
          %372 = vst [vmem:[#allocation2 + $0xd0] sm:$0xff] 0.0
          %373 = vst [vmem:[#allocation2 + $0xd8] sm:$0xff] 0.0
          %374 = vst [vmem:[#allocation2 + $0xe0] sm:$0xff] 0.0
          %375 = vst [vmem:[#allocation2 + $0xe8] sm:$0xff] 0.0
          %376 = vst [vmem:[#allocation2 + $0xf0] sm:$0xff] 0.0
          %377 = vst [vmem:[#allocation2 + $0xf8] sm:$0xff] 0.0
        $region77: #{bert_encoder_forward.10} parent=68 // pred_fallthru
          _
        %v378 = vld [vmem:[#allocation2] sm:$0xff]
        %v379 = vld [vmem:[#allocation2 + $0x8] sm:$0xff]
        %v380 = vld [vmem:[#allocation2 + $0x10] sm:$0xff]
        %v381 = vld [vmem:[#allocation2 + $0x18] sm:$0xff]
        %v382 = vld [vmem:[#allocation2 + $0x20] sm:$0xff]
        %v383 = vld [vmem:[#allocation2 + $0x28] sm:$0xff]
        %v384 = vld [vmem:[#allocation2 + $0x30] sm:$0xff]
        %v385 = vld [vmem:[#allocation2 + $0x38] sm:$0xff]
        %v386 = vld [vmem:[#allocation2 + $0x40] sm:$0xff]
        %v387 = vld [vmem:[#allocation2 + $0x48] sm:$0xff]
        %v388 = vld [vmem:[#allocation2 + $0x50] sm:$0xff]
        %v389 = vld [vmem:[#allocation2 + $0x58] sm:$0xff]
        %v390 = vld [vmem:[#allocation2 + $0x60] sm:$0xff]
        %v391 = vld [vmem:[#allocation2 + $0x68] sm:$0xff]
        %v392 = vld [vmem:[#allocation2 + $0x70] sm:$0xff]
        %v393 = vld [vmem:[#allocation2 + $0x78] sm:$0xff]
        %v394 = vld [vmem:[#allocation2 + $0x80] sm:$0xff]
        %v395 = vld [vmem:[#allocation2 + $0x88] sm:$0xff]
        %v396 = vld [vmem:[#allocation2 + $0x90] sm:$0xff]
        %v397 = vld [vmem:[#allocation2 + $0x98] sm:$0xff]
        %v398 = vld [vmem:[#allocation2 + $0xa0] sm:$0xff]
        %v399 = vld [vmem:[#allocation2 + $0xa8] sm:$0xff]
        %v400 = vld [vmem:[#allocation2 + $0xb0] sm:$0xff]
        %v401 = vld [vmem:[#allocation2 + $0xb8] sm:$0xff]
        %v402 = vld [vmem:[#allocation2 + $0xc0] sm:$0xff]
        %v403 = vld [vmem:[#allocation2 + $0xc8] sm:$0xff]
        %v404 = vld [vmem:[#allocation2 + $0xd0] sm:$0xff]
        %v405 = vld [vmem:[#allocation2 + $0xd8] sm:$0xff]
        %v406 = vld [vmem:[#allocation2 + $0xe0] sm:$0xff]
        %v407 = vld [vmem:[#allocation2 + $0xe8] sm:$0xff]
        %v408 = vld [vmem:[#allocation2 + $0xf0] sm:$0xff]
        %v409 = vld [vmem:[#allocation2 + $0xf8] sm:$0xff]
        %v410 = vld [vmem:[%s334] sm:$0xf]
        %v411 = vld [vmem:[%s334 + $0x4] sm:$0xf]
        %v412 = vld [vmem:[%s334 + $0x8] sm:$0xf]
        %v413 = vld [vmem:[%s334 + $0xc] sm:$0xf]
        %v414 = vld [vmem:[%s334 + $0x10] sm:$0xf]
        %v415 = vld [vmem:[%s334 + $0x14] sm:$0xf]
        %v416 = vld [vmem:[%s334 + $0x18] sm:$0xf]
        %v417 = vld [vmem:[%s334 + $0x1c] sm:$0xf]
        %v418 = vld [vmem:[%s334 + $0x20] sm:$0xf]
        %v419 = vld [vmem:[%s334 + $0x24] sm:$0xf]
        %v420 = vld [vmem:[%s334 + $0x28] sm:$0xf]
        %v421 = vld [vmem:[%s334 + $0x2c] sm:$0xf]
        %v422 = vld [vmem:[%s334 + $0x30] sm:$0xf]
        %v423 = vld [vmem:[%s334 + $0x34] sm:$0xf]
        %v424 = vld [vmem:[%s334 + $0x38] sm:$0xf]
        %v425 = vld [vmem:[%s334 + $0x3c] sm:$0xf]
        %v426 = vld [vmem:[%s334 + $0x40] sm:$0xf]
        %v427 = vld [vmem:[%s334 + $0x44] sm:$0xf]
        %v428 = vld [vmem:[%s334 + $0x48] sm:$0xf]
        %v429 = vld [vmem:[%s334 + $0x4c] sm:$0xf]
        %v430 = vld [vmem:[%s334 + $0x50] sm:$0xf]
        %v431 = vld [vmem:[%s334 + $0x54] sm:$0xf]
        %v432 = vld [vmem:[%s334 + $0x58] sm:$0xf]
        %v433 = vld [vmem:[%s334 + $0x5c] sm:$0xf]
        %v434 = vld [vmem:[%s334 + $0x60] sm:$0xf]
        %v435 = vld [vmem:[%s334 + $0x64] sm:$0xf]
        %v436 = vld [vmem:[%s334 + $0x68] sm:$0xf]
        %v437 = vld [vmem:[%s334 + $0x6c] sm:$0xf]
        %v438 = vld [vmem:[%s334 + $0x70] sm:$0xf]
        %v439 = vld [vmem:[%s334 + $0x74] sm:$0xf]
        %v440 = vld [vmem:[%s334 + $0x78] sm:$0xf]
        %v441 = vld [vmem:[%s334 + $0x7c] sm:$0xf]
        %v442 = vld [vmem:[%s296] sm:$0xf]
        %v443 = vld [vmem:[%s296 + $0x4] sm:$0xf]
        %v444 = vld [vmem:[%s296 + $0x8] sm:$0xf]
        %v445 = vld [vmem:[%s296 + $0xc] sm:$0xf]
        %v446 = vld [vmem:[%s296 + $0x10] sm:$0xf]
        %v447 = vld [vmem:[%s296 + $0x14] sm:$0xf]
        %v448 = vld [vmem:[%s296 + $0x18] sm:$0xf]
        %v449 = vld [vmem:[%s296 + $0x1c] sm:$0xf]
        %v450 = vld [vmem:[%s296 + $0x20] sm:$0xf]
        %v451 = vld [vmem:[%s296 + $0x24] sm:$0xf]
        %v452 = vld [vmem:[%s296 + $0x28] sm:$0xf]
        %v453 = vld [vmem:[%s296 + $0x2c] sm:$0xf]
        %v454 = vld [vmem:[%s296 + $0x30] sm:$0xf]
        %v455 = vld [vmem:[%s296 + $0x34] sm:$0xf]
        %v456 = vld [vmem:[%s296 + $0x38] sm:$0xf]
        %v457 = vld [vmem:[%s296 + $0x3c] sm:$0xf]
        %v490 = vunpack.c.l.b16 %v410
        %v491 = vunpack.c.l.b16 %v411
        %v492 = vunpack.c.l.b16 %v412
        %v493 = vunpack.c.l.b16 %v413
        %v494 = vunpack.c.l.b16 %v414
        %v495 = vunpack.c.l.b16 %v415
        %v496 = vunpack.c.l.b16 %v416
        %v497 = vunpack.c.l.b16 %v417
        %v498 = vunpack.c.l.b16 %v418
        %v499 = vunpack.c.l.b16 %v419
        %v500 = vunpack.c.l.b16 %v420
        %v501 = vunpack.c.l.b16 %v421
        %v502 = vunpack.c.l.b16 %v422
        %v503 = vunpack.c.l.b16 %v423
        %v504 = vunpack.c.l.b16 %v424
        %v505 = vunpack.c.l.b16 %v425
        %v506 = vunpack.c.l.b16 %v426
        %v507 = vunpack.c.l.b16 %v427
        %v508 = vunpack.c.l.b16 %v428
        %v509 = vunpack.c.l.b16 %v429
        %v510 = vunpack.c.l.b16 %v430
        %v511 = vunpack.c.l.b16 %v431
        %v512 = vunpack.c.l.b16 %v432
        %v513 = vunpack.c.l.b16 %v433
        %v514 = vunpack.c.l.b16 %v434
        %v515 = vunpack.c.l.b16 %v435
        %v516 = vunpack.c.l.b16 %v436
        %v517 = vunpack.c.l.b16 %v437
        %v518 = vunpack.c.l.b16 %v438
        %v519 = vunpack.c.l.b16 %v439
        %v520 = vunpack.c.l.b16 %v440
        %v521 = vunpack.c.l.b16 %v441
        %v522 = vpack.c.b16 %v491, %v490
        %v523 = vpack.c.b16 %v493, %v492
        %v524 = vpack.c.b16 %v495, %v494
        %v525 = vpack.c.b16 %v497, %v496
        %v526 = vpack.c.b16 %v499, %v498
        %v527 = vpack.c.b16 %v501, %v500
        %v528 = vpack.c.b16 %v503, %v502
        %v529 = vpack.c.b16 %v505, %v504
        %v530 = vpack.c.b16 %v507, %v506
        %v531 = vpack.c.b16 %v509, %v508
        %v532 = vpack.c.b16 %v511, %v510
        %v533 = vpack.c.b16 %v513, %v512
        %v534 = vpack.c.b16 %v515, %v514
        %v535 = vpack.c.b16 %v517, %v516
        %v536 = vpack.c.b16 %v519, %v518
        %v537 = vpack.c.b16 %v521, %v520
        %v570 = vunpack.c.l.b16 %v442
        %v571 = vunpack.c.l.b16 %v443
        %v572 = vunpack.c.l.b16 %v444
        %v573 = vunpack.c.l.b16 %v445
        %v574 = vunpack.c.l.b16 %v446
        %v575 = vunpack.c.l.b16 %v447
        %v576 = vunpack.c.l.b16 %v448
        %v577 = vunpack.c.l.b16 %v449
        %v578 = vunpack.c.l.b16 %v450
        %v579 = vunpack.c.l.b16 %v451
        %v580 = vunpack.c.l.b16 %v452
        %v581 = vunpack.c.l.b16 %v453
        %v582 = vunpack.c.l.b16 %v454
        %v583 = vunpack.c.l.b16 %v455
        %v584 = vunpack.c.l.b16 %v456
        %v585 = vunpack.c.l.b16 %v457
        %v586 = vpack.c.b16 %v571, %v570
        %v587 = vpack.c.b16 %v573, %v572
        %v588 = vpack.c.b16 %v575, %v574
        %v589 = vpack.c.b16 %v577, %v576
        %v590 = vpack.c.b16 %v579, %v578
        %v591 = vpack.c.b16 %v581, %v580
        %v592 = vpack.c.b16 %v583, %v582
        %v593 = vpack.c.b16 %v585, %v584
        %602 = vmatprep.subr.bf16.mxu0 0
        %603 = vmatpush1.bf16.msra.mxu0 %v586
        %604 = vmatprep.subr.bf16.mxu0 0
        %605 = vmatpush1.bf16.msra.mxu0 %v587
        %606 = vmatprep.subr.bf16.mxu0 0
        %607 = vmatpush1.bf16.msra.mxu0 %v588
        %608 = vmatprep.subr.bf16.mxu0 0
        %609 = vmatpush1.bf16.msra.mxu0 %v589
        %610 = vmatprep.subr.bf16.mxu0 0
        %611 = vmatpush1.bf16.msra.mxu0 %v590
        %612 = vmatprep.subr.bf16.mxu0 0
        %613 = vmatpush1.bf16.msra.mxu0 %v591
        %614 = vmatprep.subr.bf16.mxu0 0
        %615 = vmatpush1.bf16.msra.mxu0 %v592
        %616 = vmatprep.subr.bf16.mxu0 0
        %617 = vmatpush1.bf16.msra.mxu0 %v593
        %618 = vmatprep.subr.bf16.mxu0 0
        %619 = vmatpush1.bf16.msra.mxu0 0
        %620 = vmatprep.subr.bf16.mxu0 0
        %621 = vmatpush1.bf16.msra.mxu0 0
        %622 = vmatprep.subr.bf16.mxu0 0
        %623 = vmatpush1.bf16.msra.mxu0 0
        %624 = vmatprep.subr.bf16.mxu0 0
        %625 = vmatpush1.bf16.msra.mxu0 0
        %626 = vmatprep.subr.bf16.mxu0 0
        %627 = vmatpush1.bf16.msra.mxu0 0
        %628 = vmatprep.subr.bf16.mxu0 0
        %629 = vmatpush1.bf16.msra.mxu0 0
        %630 = vmatprep.subr.bf16.mxu0 0
        %631 = vmatpush1.bf16.msra.mxu0 0
        %632 = vmatprep.subr.bf16.mxu0 0
        %633 = vmatpush1.bf16.msra.mxu0 0
        %634 = vmatprep.mubr.bf16.mxu0 0
        %635 = vmatmul.mubr.bf16.gmra.mrb[0].mxu0 %v522
        %v636 = vpop.f32.mrb[0].mxu0
        %v637 = vadd.f32 0.0, %v636
        %v638 = vpop.f32.mrb[0].mxu0
        %v639 = vpop.f32.mrb[0].mxu0
        %v640 = vadd.f32 0.0, %v639
        %v641 = vpop.f32.mrb[0].mxu0
        %642 = vmatprep.mubr.bf16.mxu0 0
        %643 = vmatmul.mubr.bf16.gmra.mrb[0].mxu0 %v523
        %v644 = vpop.f32.mrb[0].mxu0
        %v645 = vadd.f32 0.0, %v644
        %v646 = vpop.f32.mrb[0].mxu0
        %v647 = vpop.f32.mrb[0].mxu0
        %v648 = vadd.f32 0.0, %v647
        %v649 = vpop.f32.mrb[0].mxu0
        %650 = vmatprep.mubr.bf16.mxu0 0
        %651 = vmatmul.mubr.bf16.gmra.mrb[0].mxu0 %v524
        %v652 = vpop.f32.mrb[0].mxu0
        %v653 = vadd.f32 0.0, %v652
        %v654 = vpop.f32.mrb[0].mxu0
        %v655 = vpop.f32.mrb[0].mxu0
        %v656 = vadd.f32 0.0, %v655
        %v657 = vpop.f32.mrb[0].mxu0
        %658 = vmatprep.mubr.bf16.mxu0 0
        %659 = vmatmul.mubr.bf16.gmra.mrb[0].mxu0 %v525
        %v660 = vpop.f32.mrb[0].mxu0
        %v661 = vadd.f32 0.0, %v660
        %v662 = vpop.f32.mrb[0].mxu0
        %v663 = vpop.f32.mrb[0].mxu0
        %v664 = vadd.f32 0.0, %v663
        %v665 = vpop.f32.mrb[0].mxu0
        %666 = vmatprep.mubr.bf16.mxu0 0
        %667 = vmatmul.mubr.bf16.gmra.mrb[0].mxu0 %v526
        %v668 = vpop.f32.mrb[0].mxu0
        %v669 = vadd.f32 0.0, %v668
        %v670 = vpop.f32.mrb[0].mxu0
        %v671 = vpop.f32.mrb[0].mxu0
        %v672 = vadd.f32 0.0, %v671
        %v673 = vpop.f32.mrb[0].mxu0
        %674 = vmatprep.mubr.bf16.mxu0 0
        %675 = vmatmul.mubr.bf16.gmra.mrb[0].mxu0 %v527
        %v676 = vpop.f32.mrb[0].mxu0
        %v677 = vadd.f32 0.0, %v676
        %v678 = vpop.f32.mrb[0].mxu0
        %v679 = vpop.f32.mrb[0].mxu0
        %v680 = vadd.f32 0.0, %v679
        %v681 = vpop.f32.mrb[0].mxu0
        %682 = vmatprep.mubr.bf16.mxu0 0
        %683 = vmatmul.mubr.bf16.gmra.mrb[0].mxu0 %v528
        %v684 = vpop.f32.mrb[0].mxu0
        %v685 = vadd.f32 0.0, %v684
        %v686 = vpop.f32.mrb[0].mxu0
        %v687 = vpop.f32.mrb[0].mxu0
        %v688 = vadd.f32 0.0, %v687
        %v689 = vpop.f32.mrb[0].mxu0
        %690 = vmatprep.mubr.bf16.mxu0 0
        %691 = vmatmul.mubr.bf16.gmra.mrb[0].mxu0 %v529
        %v692 = vpop.f32.mrb[0].mxu0
        %v693 = vadd.f32 0.0, %v692
        %v694 = vpop.f32.mrb[0].mxu0
        %v695 = vpop.f32.mrb[0].mxu0
        %v696 = vadd.f32 0.0, %v695
        %v697 = vpop.f32.mrb[0].mxu0
        %698 = vmatprep.mubr.bf16.mxu0 0
        %699 = vmatmul.mubr.bf16.gmra.mrb[0].mxu0 %v530
        %v700 = vpop.f32.mrb[0].mxu0
        %v701 = vadd.f32 0.0, %v700
        %v702 = vpop.f32.mrb[0].mxu0
        %v703 = vpop.f32.mrb[0].mxu0
        %v704 = vadd.f32 0.0, %v703
        %v705 = vpop.f32.mrb[0].mxu0
        %706 = vmatprep.mubr.bf16.mxu0 0
        %707 = vmatmul.mubr.bf16.gmra.mrb[0].mxu0 %v531
        %v708 = vpop.f32.mrb[0].mxu0
        %v709 = vadd.f32 0.0, %v708
        %v710 = vpop.f32.mrb[0].mxu0
        %v711 = vpop.f32.mrb[0].mxu0
        %v712 = vadd.f32 0.0, %v711
        %v713 = vpop.f32.mrb[0].mxu0
        %714 = vmatprep.mubr.bf16.mxu0 0
        %715 = vmatmul.mubr.bf16.gmra.mrb[0].mxu0 %v532
        %v716 = vpop.f32.mrb[0].mxu0
        %v717 = vadd.f32 0.0, %v716
        %v718 = vpop.f32.mrb[0].mxu0
        %v719 = vpop.f32.mrb[0].mxu0
        %v720 = vadd.f32 0.0, %v719
        %v721 = vpop.f32.mrb[0].mxu0
        %722 = vmatprep.mubr.bf16.mxu0 0
        %723 = vmatmul.mubr.bf16.gmra.mrb[0].mxu0 %v533
        %v724 = vpop.f32.mrb[0].mxu0
        %v725 = vadd.f32 0.0, %v724
        %v726 = vpop.f32.mrb[0].mxu0
        %v727 = vpop.f32.mrb[0].mxu0
        %v728 = vadd.f32 0.0, %v727
        %v729 = vpop.f32.mrb[0].mxu0
        %730 = vmatprep.mubr.bf16.mxu0 0
        %731 = vmatmul.mubr.bf16.gmra.mrb[0].mxu0 %v534
        %v732 = vpop.f32.mrb[0].mxu0
        %v733 = vadd.f32 0.0, %v732
        %v734 = vpop.f32.mrb[0].mxu0
        %v735 = vpop.f32.mrb[0].mxu0
        %v736 = vadd.f32 0.0, %v735
        %v737 = vpop.f32.mrb[0].mxu0
        %738 = vmatprep.mubr.bf16.mxu0 0
        %739 = vmatmul.mubr.bf16.gmra.mrb[0].mxu0 %v535
        %v740 = vpop.f32.mrb[0].mxu0
        %v741 = vadd.f32 0.0, %v740
        %v742 = vpop.f32.mrb[0].mxu0
        %v743 = vpop.f32.mrb[0].mxu0
        %v744 = vadd.f32 0.0, %v743
        %v745 = vpop.f32.mrb[0].mxu0
        %746 = vmatprep.mubr.bf16.mxu0 0
        %747 = vmatmul.mubr.bf16.gmra.mrb[0].mxu0 %v536
        %v748 = vpop.f32.mrb[0].mxu0
        %v749 = vadd.f32 0.0, %v748
        %v750 = vpop.f32.mrb[0].mxu0
        %v751 = vpop.f32.mrb[0].mxu0
        %v752 = vadd.f32 0.0, %v751
        %v753 = vpop.f32.mrb[0].mxu0
        %754 = vmatprep.mubr.bf16.mxu0 0
        %755 = vmatmul.mubr.bf16.gmra.mrb[0].mxu0 %v537
        %v756 = vpop.f32.mrb[0].mxu0
        %v757 = vadd.f32 0.0, %v756
        %v758 = vpop.f32.mrb[0].mxu0
        %v759 = vpop.f32.mrb[0].mxu0
        %v760 = vadd.f32 0.0, %v759
        %v761 = vpop.f32.mrb[0].mxu0
        %762 = vdwg.mxu0
        %v763 = vadd.f32 %v378, %v637
        %v764 = vadd.f32 %v379, %v640
        %v765 = vadd.f32 %v380, %v645
        %v766 = vadd.f32 %v381, %v648
        %v767 = vadd.f32 %v382, %v653
        %v768 = vadd.f32 %v383, %v656
        %v769 = vadd.f32 %v384, %v661
        %v770 = vadd.f32 %v385, %v664
        %v771 = vadd.f32 %v386, %v669
        %v772 = vadd.f32 %v387, %v672
        %v773 = vadd.f32 %v388, %v677
        %v774 = vadd.f32 %v389, %v680
        %v775 = vadd.f32 %v390, %v685
        %v776 = vadd.f32 %v391, %v688
        %v777 = vadd.f32 %v392, %v693
        %v778 = vadd.f32 %v393, %v696
        %v779 = vadd.f32 %v394, %v701
        %v780 = vadd.f32 %v395, %v704
        %v781 = vadd.f32 %v396, %v709
        %v782 = vadd.f32 %v397, %v712
        %v783 = vadd.f32 %v398, %v717
        %v784 = vadd.f32 %v399, %v720
        %v785 = vadd.f32 %v400, %v725
        %v786 = vadd.f32 %v401, %v728
        %v787 = vadd.f32 %v402, %v733
        %v788 = vadd.f32 %v403, %v736
        %v789 = vadd.f32 %v404, %v741
        %v790 = vadd.f32 %v405, %v744
        %v791 = vadd.f32 %v406, %v749
        %v792 = vadd.f32 %v407, %v752
        %v793 = vadd.f32 %v408, %v757
        %v794 = vadd.f32 %v409, %v760
        %795 = vst [vmem:[#allocation2] sm:$0xff] %v763
        %796 = vst [vmem:[#allocation2 + $0x8] sm:$0xff] %v764
        %797 = vst [vmem:[#allocation2 + $0x10] sm:$0xff] %v765
        %798 = vst [vmem:[#allocation2 + $0x18] sm:$0xff] %v766
        %799 = vst [vmem:[#allocation2 + $0x20] sm:$0xff] %v767
        %800 = vst [vmem:[#allocation2 + $0x28] sm:$0xff] %v768
        %801 = vst [vmem:[#allocation2 + $0x30] sm:$0xff] %v769
        %802 = vst [vmem:[#allocation2 + $0x38] sm:$0xff] %v770
        %803 = vst [vmem:[#allocation2 + $0x40] sm:$0xff] %v771
        %804 = vst [vmem:[#allocation2 + $0x48] sm:$0xff] %v772
        %805 = vst [vmem:[#allocation2 + $0x50] sm:$0xff] %v773
        %806 = vst [vmem:[#allocation2 + $0x58] sm:$0xff] %v774
        %807 = vst [vmem:[#allocation2 + $0x60] sm:$0xff] %v775
        %808 = vst [vmem:[#allocation2 + $0x68] sm:$0xff] %v776
        %809 = vst [vmem:[#allocation2 + $0x70] sm:$0xff] %v777
        %810 = vst [vmem:[#allocation2 + $0x78] sm:$0xff] %v778
        %811 = vst [vmem:[#allocation2 + $0x80] sm:$0xff] %v779
        %812 = vst [vmem:[#allocation2 + $0x88] sm:$0xff] %v780
        %813 = vst [vmem:[#allocation2 + $0x90] sm:$0xff] %v781
        %814 = vst [vmem:[#allocation2 + $0x98] sm:$0xff] %v782
        %815 = vst [vmem:[#allocation2 + $0xa0] sm:$0xff] %v783
        %816 = vst [vmem:[#allocation2 + $0xa8] sm:$0xff] %v784
        %817 = vst [vmem:[#allocation2 + $0xb0] sm:$0xff] %v785
        %818 = vst [vmem:[#allocation2 + $0xb8] sm:$0xff] %v786
        %819 = vst [vmem:[#allocation2 + $0xc0] sm:$0xff] %v787
        %820 = vst [vmem:[#allocation2 + $0xc8] sm:$0xff] %v788
        %821 = vst [vmem:[#allocation2 + $0xd0] sm:$0xff] %v789
        %822 = vst [vmem:[#allocation2 + $0xd8] sm:$0xff] %v790
        %823 = vst [vmem:[#allocation2 + $0xe0] sm:$0xff] %v791
        %824 = vst [vmem:[#allocation2 + $0xe8] sm:$0xff] %v792
        %825 = vst [vmem:[#allocation2 + $0xf0] sm:$0xff] %v793
        %826 = vst [vmem:[#allocation2 + $0xf8] sm:$0xff] %v794
        // Predicated region
        $region78: #{bert_encoder_forward.10} parent=68 // pred_check
          %p827 = pneg %p342
        $region79: #{bert_encoder_forward.10} parent=68 // pred_check_branch
          %829 = sbr.rel (%p827) target = $region81
        $region80: #{bert_encoder_forward.10} parent=68 // pred_region
          %v830 = vld [vmem:[#allocation2] sm:$0xff]
          %v831 = vld [vmem:[#allocation2 + $0x8] sm:$0xff]
          %v832 = vld [vmem:[#allocation2 + $0x10] sm:$0xff]
          %v833 = vld [vmem:[#allocation2 + $0x18] sm:$0xff]
          %v834 = vld [vmem:[#allocation2 + $0x20] sm:$0xff]
          %v835 = vld [vmem:[#allocation2 + $0x28] sm:$0xff]
          %v836 = vld [vmem:[#allocation2 + $0x30] sm:$0xff]
          %v837 = vld [vmem:[#allocation2 + $0x38] sm:$0xff]
          %v838 = vld [vmem:[#allocation2 + $0x40] sm:$0xff]
          %v839 = vld [vmem:[#allocation2 + $0x48] sm:$0xff]
          %v840 = vld [vmem:[#allocation2 + $0x50] sm:$0xff]
          %v841 = vld [vmem:[#allocation2 + $0x58] sm:$0xff]
          %v842 = vld [vmem:[#allocation2 + $0x60] sm:$0xff]
          %v843 = vld [vmem:[#allocation2 + $0x68] sm:$0xff]
          %v844 = vld [vmem:[#allocation2 + $0x70] sm:$0xff]
          %v845 = vld [vmem:[#allocation2 + $0x78] sm:$0xff]
          %v846 = vld [vmem:[#allocation2 + $0x80] sm:$0xff]
          %v847 = vld [vmem:[#allocation2 + $0x88] sm:$0xff]
          %v848 = vld [vmem:[#allocation2 + $0x90] sm:$0xff]
          %v849 = vld [vmem:[#allocation2 + $0x98] sm:$0xff]
          %v850 = vld [vmem:[#allocation2 + $0xa0] sm:$0xff]
          %v851 = vld [vmem:[#allocation2 + $0xa8] sm:$0xff]
          %v852 = vld [vmem:[#allocation2 + $0xb0] sm:$0xff]
          %v853 = vld [vmem:[#allocation2 + $0xb8] sm:$0xff]
          %v854 = vld [vmem:[#allocation2 + $0xc0] sm:$0xff]
          %v855 = vld [vmem:[#allocation2 + $0xc8] sm:$0xff]
          %v856 = vld [vmem:[#allocation2 + $0xd0] sm:$0xff]
          %v857 = vld [vmem:[#allocation2 + $0xd8] sm:$0xff]
          %v858 = vld [vmem:[#allocation2 + $0xe0] sm:$0xff]
          %v859 = vld [vmem:[#allocation2 + $0xe8] sm:$0xff]
          %v860 = vld [vmem:[#allocation2 + $0xf0] sm:$0xff]
          %v861 = vld [vmem:[#allocation2 + $0xf8] sm:$0xff]
          %v862 = vld [vmem:[%s339] sm:$0x1]
          %v864 = vlaneseq
          %v865 = vshrl.u32 %v864, 7
          %v866 = vsub.s32 0, %v865
          %v867 = vrot.slane %v862, %v866
          %v869 = vadd.f32 %v830, %v867
          %v870 = vadd.f32 %v831, %v867
          %v871 = vadd.f32 %v832, %v867
          %v872 = vadd.f32 %v833, %v867
          %v873 = vadd.f32 %v834, %v867
          %v874 = vadd.f32 %v835, %v867
          %v875 = vadd.f32 %v836, %v867
          %v876 = vadd.f32 %v837, %v867
          %v877 = vadd.f32 %v838, %v867
          %v878 = vadd.f32 %v839, %v867
          %v879 = vadd.f32 %v840, %v867
          %v880 = vadd.f32 %v841, %v867
          %v881 = vadd.f32 %v842, %v867
          %v882 = vadd.f32 %v843, %v867
          %v883 = vadd.f32 %v844, %v867
          %v884 = vadd.f32 %v845, %v867
          %v885 = vadd.f32 %v846, %v867
          %v886 = vadd.f32 %v847, %v867
          %v887 = vadd.f32 %v848, %v867
          %v888 = vadd.f32 %v849, %v867
          %v889 = vadd.f32 %v850, %v867
          %v890 = vadd.f32 %v851, %v867
          %v891 = vadd.f32 %v852, %v867
          %v892 = vadd.f32 %v853, %v867
          %v893 = vadd.f32 %v854, %v867
          %v894 = vadd.f32 %v855, %v867
          %v895 = vadd.f32 %v856, %v867
          %v896 = vadd.f32 %v857, %v867
          %v897 = vadd.f32 %v858, %v867
          %v898 = vadd.f32 %v859, %v867
          %v899 = vadd.f32 %v860, %v867
          %v900 = vadd.f32 %v861, %v867
          %v901 = vpack.c.bf16 %v870, %v869
          %v902 = vpack.c.bf16 %v872, %v871
          %v903 = vpack.c.bf16 %v874, %v873
          %v904 = vpack.c.bf16 %v876, %v875
          %v905 = vpack.c.bf16 %v878, %v877
          %v906 = vpack.c.bf16 %v880, %v879
          %v907 = vpack.c.bf16 %v882, %v881
          %v908 = vpack.c.bf16 %v884, %v883
          %v909 = vpack.c.bf16 %v886, %v885
          %v910 = vpack.c.bf16 %v888, %v887
          %v911 = vpack.c.bf16 %v890, %v889
          %v912 = vpack.c.bf16 %v892, %v891
          %v913 = vpack.c.bf16 %v894, %v893
          %v914 = vpack.c.bf16 %v896, %v895
          %v915 = vpack.c.bf16 %v898, %v897
          %v916 = vpack.c.bf16 %v900, %v899
          %v933 = vunpack.c.l.b16 %v901
          %v934 = vunpack.c.h.b16 %v901
          %v935 = vunpack.c.l.b16 %v902
          %v936 = vunpack.c.h.b16 %v902
          %v937 = vunpack.c.l.b16 %v903
          %v938 = vunpack.c.h.b16 %v903
          %v939 = vunpack.c.l.b16 %v904
          %v940 = vunpack.c.h.b16 %v904
          %v941 = vunpack.c.l.b16 %v905
          %v942 = vunpack.c.h.b16 %v905
          %v943 = vunpack.c.l.b16 %v906
          %v944 = vunpack.c.h.b16 %v906
          %v945 = vunpack.c.l.b16 %v907
          %v946 = vunpack.c.h.b16 %v907
          %v947 = vunpack.c.l.b16 %v908
          %v948 = vunpack.c.h.b16 %v908
          %v949 = vunpack.c.l.b16 %v909
          %v950 = vunpack.c.h.b16 %v909
          %v951 = vunpack.c.l.b16 %v910
          %v952 = vunpack.c.h.b16 %v910
          %v953 = vunpack.c.l.b16 %v911
          %v954 = vunpack.c.h.b16 %v911
          %v955 = vunpack.c.l.b16 %v912
          %v956 = vunpack.c.h.b16 %v912
          %v957 = vunpack.c.l.b16 %v913
          %v958 = vunpack.c.h.b16 %v913
          %v959 = vunpack.c.l.b16 %v914
          %v960 = vunpack.c.h.b16 %v914
          %v961 = vunpack.c.l.b16 %v915
          %v962 = vunpack.c.h.b16 %v915
          %v963 = vunpack.c.l.b16 %v916
          %v964 = vunpack.c.h.b16 %v916
          %v965 = vpack.c.b16 %v933, %v933
          %v966 = vpack.c.b16 %v934, %v934
          %v967 = vpack.c.b16 %v935, %v935
          %v968 = vpack.c.b16 %v936, %v936
          %v969 = vpack.c.b16 %v937, %v937
          %v970 = vpack.c.b16 %v938, %v938
          %v971 = vpack.c.b16 %v939, %v939
          %v972 = vpack.c.b16 %v940, %v940
          %v973 = vpack.c.b16 %v941, %v941
          %v974 = vpack.c.b16 %v942, %v942
          %v975 = vpack.c.b16 %v943, %v943
          %v976 = vpack.c.b16 %v944, %v944
          %v977 = vpack.c.b16 %v945, %v945
          %v978 = vpack.c.b16 %v946, %v946
          %v979 = vpack.c.b16 %v947, %v947
          %v980 = vpack.c.b16 %v948, %v948
          %v981 = vpack.c.b16 %v949, %v949
          %v982 = vpack.c.b16 %v950, %v950
          %v983 = vpack.c.b16 %v951, %v951
          %v984 = vpack.c.b16 %v952, %v952
          %v985 = vpack.c.b16 %v953, %v953
          %v986 = vpack.c.b16 %v954, %v954
          %v987 = vpack.c.b16 %v955, %v955
          %v988 = vpack.c.b16 %v956, %v956
          %v989 = vpack.c.b16 %v957, %v957
          %v990 = vpack.c.b16 %v958, %v958
          %v991 = vpack.c.b16 %v959, %v959
          %v992 = vpack.c.b16 %v960, %v960
          %v993 = vpack.c.b16 %v961, %v961
          %v994 = vpack.c.b16 %v962, %v962
          %v995 = vpack.c.b16 %v963, %v963
          %v996 = vpack.c.b16 %v964, %v964
          %1029 = vst [vmem:[%s326] sm:$0xf] %v965
          %1030 = vst [vmem:[%s326 + $0x4] sm:$0xf] %v966
          %1031 = vst [vmem:[%s326 + $0x8] sm:$0xf] %v967
          %1032 = vst [vmem:[%s326 + $0xc] sm:$0xf] %v968
          %1033 = vst [vmem:[%s326 + $0x10] sm:$0xf] %v969
          %1034 = vst [vmem:[%s326 + $0x14] sm:$0xf] %v970
          %1035 = vst [vmem:[%s326 + $0x18] sm:$0xf] %v971
          %1036 = vst [vmem:[%s326 + $0x1c] sm:$0xf] %v972
          %1037 = vst [vmem:[%s326 + $0x20] sm:$0xf] %v973
          %1038 = vst [vmem:[%s326 + $0x24] sm:$0xf] %v974
          %1039 = vst [vmem:[%s326 + $0x28] sm:$0xf] %v975
          %1040 = vst [vmem:[%s326 + $0x2c] sm:$0xf] %v976
          %1041 = vst [vmem:[%s326 + $0x30] sm:$0xf] %v977
          %1042 = vst [vmem:[%s326 + $0x34] sm:$0xf] %v978
          %1043 = vst [vmem:[%s326 + $0x38] sm:$0xf] %v979
          %1044 = vst [vmem:[%s326 + $0x3c] sm:$0xf] %v980
          %1045 = vst [vmem:[%s326 + $0x40] sm:$0xf] %v981
          %1046 = vst [vmem:[%s326 + $0x44] sm:$0xf] %v982
          %1047 = vst [vmem:[%s326 + $0x48] sm:$0xf] %v983
          %1048 = vst [vmem:[%s326 + $0x4c] sm:$0xf] %v984
          %1049 = vst [vmem:[%s326 + $0x50] sm:$0xf] %v985
          %1050 = vst [vmem:[%s326 + $0x54] sm:$0xf] %v986
          %1051 = vst [vmem:[%s326 + $0x58] sm:$0xf] %v987
          %1052 = vst [vmem:[%s326 + $0x5c] sm:$0xf] %v988
          %1053 = vst [vmem:[%s326 + $0x60] sm:$0xf] %v989
          %1054 = vst [vmem:[%s326 + $0x64] sm:$0xf] %v990
          %1055 = vst [vmem:[%s326 + $0x68] sm:$0xf] %v991
          %1056 = vst [vmem:[%s326 + $0x6c] sm:$0xf] %v992
          %1057 = vst [vmem:[%s326 + $0x70] sm:$0xf] %v993
          %1058 = vst [vmem:[%s326 + $0x74] sm:$0xf] %v994
          %1059 = vst [vmem:[%s326 + $0x78] sm:$0xf] %v995
          %1060 = vst [vmem:[%s326 + $0x7c] sm:$0xf] %v996
        $region81: #{bert_encoder_forward.10} parent=68 // pred_fallthru
          _
        %s1061 = sand.u32 %s125, 1
        %s1062 = sand.u32 %s125, 1
        %s1063 = smul.addr %s1062, 128
        %s1064 = scalar_lea.vmem [#allocation4], %s1063
        // Predicated region
        $region82: #{bert_encoder_forward.10} parent=68 // pred_check
          %p1065 = pneg %p135
        $region83: #{bert_encoder_forward.10} parent=68 // pred_check_branch
          %1067 = sbr.rel (%p1065) target = $region85
        $region84: #{bert_encoder_forward.10} parent=68 // pred_region
          %s1068 = smul.u32 32, %s19
          %s1069 = smul.addr %s1068, 3
          %s1070 = sadd.s32 %s20, %s1069
          %s1071 = smul.addr %s1070, 4
          %s1072 = scalar_lea.vmem %s3, %s1071
          // Predicated region
          $region86: #{bert_encoder_forward.10} parent=84 // pred_check
            _
          $region87: #{bert_encoder_forward.10} parent=84 // pred_check_branch
            %1074 = sbr.rel (0) target = $region89
          $region88: #{bert_encoder_forward.10} parent=84 // pred_region
            // Predicated region
            $region90: #{bert_encoder_forward.10} parent=88 // pred_check
              _
            $region91: #{bert_encoder_forward.10} parent=88 // pred_check_branch
              %1076 = sbr.rel target = $region93
            $region92: #{bert_encoder_forward.10} parent=88 // pred_region
              // Predicated region
              $region105: #{bert_encoder_forward.10} parent=92 // pred_check
                _
              $region106: #{bert_encoder_forward.10} parent=92 // pred_check_branch
                %1153 = sbr.rel (0) target = $region108
              $region107: #{bert_encoder_forward.10} parent=92 // pred_region
                loop: start=0, step=1, limit=1
                $region109: #{bert_encoder_forward.10} parent=107 // loop_pre_header
                  _
                $region110: #{bert_encoder_forward.10} parent=107 // loop_header
                  %s1155 = sphi 0, %s1159
                  %p1156 = scmp.ge.s32.totalorder %s1155, 1
                  %s1160 = sphi %s1064, %s1064
                  %s1161 = sphi %s1072, %s1072
                $region111: #{bert_encoder_forward.10} parent=107 // loop_header_branch
                  %1158 = sbr.rel (%p1156) target = $region115
                $region112: #{bert_encoder_forward.10} parent=107 // loop_body
                  _
                $region113: #{bert_encoder_forward.10} parent=107 // loop_footer
                  %s1159 = sadd.s32 1, %s1155
                $region114: #{bert_encoder_forward.10} parent=107 // loop_footer_branch
                  %1154 = sbr.rel target = $region110
                $region115: #{bert_encoder_forward.10} parent=107 // loop_exit
                  _
                loop: start=0, step=1, limit=1
                $region116: #{bert_encoder_forward.10} parent=107 // loop_pre_header
                  _
                $region117: #{bert_encoder_forward.10} parent=107 // loop_header
                  %s1164 = sphi 0, %s1168
                  %p1165 = scmp.ge.s32.totalorder %s1164, 1
                  %s1169 = sphi %s1064, %s1064
                  %s1170 = sphi %s1072, %s1072
                $region118: #{bert_encoder_forward.10} parent=107 // loop_header_branch
                  %1167 = sbr.rel (%p1165) target = $region122
                $region119: #{bert_encoder_forward.10} parent=107 // loop_body
                  %v1171 = vld [vmem:[%s1169] sm:$0xf]
                  %1172 = vst [vmem:[%s1170] sm:$0xf] %v1171
                  %v1173 = vld [vmem:[%s1169 + $0x4] sm:$0xf]
                  %1174 = vst [vmem:[%s1170 + $0xc] sm:$0xf] %v1173
                  %v1175 = vld [vmem:[%s1169 + $0x8] sm:$0xf]
                  %1176 = vst [vmem:[%s1170 + $0x18] sm:$0xf] %v1175
                  %v1177 = vld [vmem:[%s1169 + $0xc] sm:$0xf]
                  %1178 = vst [vmem:[%s1170 + $0x24] sm:$0xf] %v1177
                  %v1179 = vld [vmem:[%s1169 + $0x10] sm:$0xf]
                  %1180 = vst [vmem:[%s1170 + $0x30] sm:$0xf] %v1179
                  %v1181 = vld [vmem:[%s1169 + $0x14] sm:$0xf]
                  %1182 = vst [vmem:[%s1170 + $0x3c] sm:$0xf] %v1181
                  %v1183 = vld [vmem:[%s1169 + $0x18] sm:$0xf]
                  %1184 = vst [vmem:[%s1170 + $0x48] sm:$0xf] %v1183
                  %v1185 = vld [vmem:[%s1169 + $0x1c] sm:$0xf]
                  %1186 = vst [vmem:[%s1170 + $0x54] sm:$0xf] %v1185
                  %v1187 = vld [vmem:[%s1169 + $0x20] sm:$0xf]
                  %1188 = vst [vmem:[%s1170 + $0x60] sm:$0xf] %v1187
                  %v1189 = vld [vmem:[%s1169 + $0x24] sm:$0xf]
                  %1190 = vst [vmem:[%s1170 + $0x6c] sm:$0xf] %v1189
                  %v1191 = vld [vmem:[%s1169 + $0x28] sm:$0xf]
                  %1192 = vst [vmem:[%s1170 + $0x78] sm:$0xf] %v1191
                  %v1193 = vld [vmem:[%s1169 + $0x2c] sm:$0xf]
                  %1194 = vst [vmem:[%s1170 + $0x84] sm:$0xf] %v1193
                  %v1195 = vld [vmem:[%s1169 + $0x30] sm:$0xf]
                  %1196 = vst [vmem:[%s1170 + $0x90] sm:$0xf] %v1195
                  %v1197 = vld [vmem:[%s1169 + $0x34] sm:$0xf]
                  %1198 = vst [vmem:[%s1170 + $0x9c] sm:$0xf] %v1197
                  %v1199 = vld [vmem:[%s1169 + $0x38] sm:$0xf]
                  %1200 = vst [vmem:[%s1170 + $0xa8] sm:$0xf] %v1199
                  %v1201 = vld [vmem:[%s1169 + $0x3c] sm:$0xf]
                  %1202 = vst [vmem:[%s1170 + $0xb4] sm:$0xf] %v1201
                  %v1203 = vld [vmem:[%s1169 + $0x40] sm:$0xf]
                  %1204 = vst [vmem:[%s1170 + $0xc0] sm:$0xf] %v1203
                  %v1205 = vld [vmem:[%s1169 + $0x44] sm:$0xf]
                  %1206 = vst [vmem:[%s1170 + $0xcc] sm:$0xf] %v1205
                  %v1207 = vld [vmem:[%s1169 + $0x48] sm:$0xf]
                  %1208 = vst [vmem:[%s1170 + $0xd8] sm:$0xf] %v1207
                  %v1209 = vld [vmem:[%s1169 + $0x4c] sm:$0xf]
                  %1210 = vst [vmem:[%s1170 + $0xe4] sm:$0xf] %v1209
                  %v1211 = vld [vmem:[%s1169 + $0x50] sm:$0xf]
                  %1212 = vst [vmem:[%s1170 + $0xf0] sm:$0xf] %v1211
                  %v1213 = vld [vmem:[%s1169 + $0x54] sm:$0xf]
                  %1214 = vst [vmem:[%s1170 + $0xfc] sm:$0xf] %v1213
                  %v1215 = vld [vmem:[%s1169 + $0x58] sm:$0xf]
                  %1216 = vst [vmem:[%s1170 + $0x108] sm:$0xf] %v1215
                  %v1217 = vld [vmem:[%s1169 + $0x5c] sm:$0xf]
                  %1218 = vst [vmem:[%s1170 + $0x114] sm:$0xf] %v1217
                  %v1219 = vld [vmem:[%s1169 + $0x60] sm:$0xf]
                  %1220 = vst [vmem:[%s1170 + $0x120] sm:$0xf] %v1219
                  %v1221 = vld [vmem:[%s1169 + $0x64] sm:$0xf]
                  %1222 = vst [vmem:[%s1170 + $0x12c] sm:$0xf] %v1221
                  %v1223 = vld [vmem:[%s1169 + $0x68] sm:$0xf]
                  %1224 = vst [vmem:[%s1170 + $0x138] sm:$0xf] %v1223
                  %v1225 = vld [vmem:[%s1169 + $0x6c] sm:$0xf]
                  %1226 = vst [vmem:[%s1170 + $0x144] sm:$0xf] %v1225
                  %v1227 = vld [vmem:[%s1169 + $0x70] sm:$0xf]
                  %1228 = vst [vmem:[%s1170 + $0x150] sm:$0xf] %v1227
                  %v1229 = vld [vmem:[%s1169 + $0x74] sm:$0xf]
                  %1230 = vst [vmem:[%s1170 + $0x15c] sm:$0xf] %v1229
                  %v1231 = vld [vmem:[%s1169 + $0x78] sm:$0xf]
                  %1232 = vst [vmem:[%s1170 + $0x168] sm:$0xf] %v1231
                  %v1233 = vld [vmem:[%s1169 + $0x7c] sm:$0xf]
                  %1234 = vst [vmem:[%s1170 + $0x174] sm:$0xf] %v1233
                $region120: #{bert_encoder_forward.10} parent=107 // loop_footer
                  %s1168 = sadd.s32 1, %s1164
                $region121: #{bert_encoder_forward.10} parent=107 // loop_footer_branch
                  %1163 = sbr.rel target = $region117
                $region122: #{bert_encoder_forward.10} parent=107 // loop_exit
                  _
              $region108: #{bert_encoder_forward.10} parent=92 // pred_fallthru
                _
            $region93: #{bert_encoder_forward.10} parent=88 // pred_fallthru
              _
            // Predicated region
            $region94: #{bert_encoder_forward.10} parent=88 // pred_check
              _
            $region95: #{bert_encoder_forward.10} parent=88 // pred_check_branch
              %1078 = sbr.rel (0) target = $region97
            $region96: #{bert_encoder_forward.10} parent=88 // pred_region
              loop: start=0, step=1, limit=1
              $region98: #{bert_encoder_forward.10} parent=96 // loop_pre_header
                _
              $region99: #{bert_encoder_forward.10} parent=96 // loop_header
                %s1081 = sphi 0, %s1085
                %p1082 = scmp.ge.s32.totalorder %s1081, 1
                %s1086 = sphi %s1064, %s1064
                %s1087 = sphi %s1072, %s1072
              $region100: #{bert_encoder_forward.10} parent=96 // loop_header_branch
                %1084 = sbr.rel (%p1082) target = $region104
              $region101: #{bert_encoder_forward.10} parent=96 // loop_body
                %v1088 = vld [vmem:[%s1086] sm:$0xf]
                %1089 = vst [vmem:[%s1087] sm:$0xf] %v1088
                %v1090 = vld [vmem:[%s1086 + $0x4] sm:$0xf]
                %1091 = vst [vmem:[%s1087 + $0xc] sm:$0xf] %v1090
                %v1092 = vld [vmem:[%s1086 + $0x8] sm:$0xf]
                %1093 = vst [vmem:[%s1087 + $0x18] sm:$0xf] %v1092
                %v1094 = vld [vmem:[%s1086 + $0xc] sm:$0xf]
                %1095 = vst [vmem:[%s1087 + $0x24] sm:$0xf] %v1094
                %v1096 = vld [vmem:[%s1086 + $0x10] sm:$0xf]
                %1097 = vst [vmem:[%s1087 + $0x30] sm:$0xf] %v1096
                %v1098 = vld [vmem:[%s1086 + $0x14] sm:$0xf]
                %1099 = vst [vmem:[%s1087 + $0x3c] sm:$0xf] %v1098
                %v1100 = vld [vmem:[%s1086 + $0x18] sm:$0xf]
                %1101 = vst [vmem:[%s1087 + $0x48] sm:$0xf] %v1100
                %v1102 = vld [vmem:[%s1086 + $0x1c] sm:$0xf]
                %1103 = vst [vmem:[%s1087 + $0x54] sm:$0xf] %v1102
                %v1104 = vld [vmem:[%s1086 + $0x20] sm:$0xf]
                %1105 = vst [vmem:[%s1087 + $0x60] sm:$0xf] %v1104
                %v1106 = vld [vmem:[%s1086 + $0x24] sm:$0xf]
                %1107 = vst [vmem:[%s1087 + $0x6c] sm:$0xf] %v1106
                %v1108 = vld [vmem:[%s1086 + $0x28] sm:$0xf]
                %1109 = vst [vmem:[%s1087 + $0x78] sm:$0xf] %v1108
                %v1110 = vld [vmem:[%s1086 + $0x2c] sm:$0xf]
                %1111 = vst [vmem:[%s1087 + $0x84] sm:$0xf] %v1110
                %v1112 = vld [vmem:[%s1086 + $0x30] sm:$0xf]
                %1113 = vst [vmem:[%s1087 + $0x90] sm:$0xf] %v1112
                %v1114 = vld [vmem:[%s1086 + $0x34] sm:$0xf]
                %1115 = vst [vmem:[%s1087 + $0x9c] sm:$0xf] %v1114
                %v1116 = vld [vmem:[%s1086 + $0x38] sm:$0xf]
                %1117 = vst [vmem:[%s1087 + $0xa8] sm:$0xf] %v1116
                %v1118 = vld [vmem:[%s1086 + $0x3c] sm:$0xf]
                %1119 = vst [vmem:[%s1087 + $0xb4] sm:$0xf] %v1118
                %v1120 = vld [vmem:[%s1086 + $0x40] sm:$0xf]
                %1121 = vst [vmem:[%s1087 + $0xc0] sm:$0xf] %v1120
                %v1122 = vld [vmem:[%s1086 + $0x44] sm:$0xf]
                %1123 = vst [vmem:[%s1087 + $0xcc] sm:$0xf] %v1122
                %v1124 = vld [vmem:[%s1086 + $0x48] sm:$0xf]
                %1125 = vst [vmem:[%s1087 + $0xd8] sm:$0xf] %v1124
                %v1126 = vld [vmem:[%s1086 + $0x4c] sm:$0xf]
                %1127 = vst [vmem:[%s1087 + $0xe4] sm:$0xf] %v1126
                %v1128 = vld [vmem:[%s1086 + $0x50] sm:$0xf]
                %1129 = vst [vmem:[%s1087 + $0xf0] sm:$0xf] %v1128
                %v1130 = vld [vmem:[%s1086 + $0x54] sm:$0xf]
                %1131 = vst [vmem:[%s1087 + $0xfc] sm:$0xf] %v1130
                %v1132 = vld [vmem:[%s1086 + $0x58] sm:$0xf]
                %1133 = vst [vmem:[%s1087 + $0x108] sm:$0xf] %v1132
                %v1134 = vld [vmem:[%s1086 + $0x5c] sm:$0xf]
                %1135 = vst [vmem:[%s1087 + $0x114] sm:$0xf] %v1134
                %v1136 = vld [vmem:[%s1086 + $0x60] sm:$0xf]
                %1137 = vst [vmem:[%s1087 + $0x120] sm:$0xf] %v1136
                %v1138 = vld [vmem:[%s1086 + $0x64] sm:$0xf]
                %1139 = vst [vmem:[%s1087 + $0x12c] sm:$0xf] %v1138
                %v1140 = vld [vmem:[%s1086 + $0x68] sm:$0xf]
                %1141 = vst [vmem:[%s1087 + $0x138] sm:$0xf] %v1140
                %v1142 = vld [vmem:[%s1086 + $0x6c] sm:$0xf]
                %1143 = vst [vmem:[%s1087 + $0x144] sm:$0xf] %v1142
                %v1144 = vld [vmem:[%s1086 + $0x70] sm:$0xf]
                %1145 = vst [vmem:[%s1087 + $0x150] sm:$0xf] %v1144
                %v1146 = vld [vmem:[%s1086 + $0x74] sm:$0xf]
                %1147 = vst [vmem:[%s1087 + $0x15c] sm:$0xf] %v1146
                %v1148 = vld [vmem:[%s1086 + $0x78] sm:$0xf]
                %1149 = vst [vmem:[%s1087 + $0x168] sm:$0xf] %v1148
                %v1150 = vld [vmem:[%s1086 + $0x7c] sm:$0xf]
                %1151 = vst [vmem:[%s1087 + $0x174] sm:$0xf] %v1150
              $region102: #{bert_encoder_forward.10} parent=96 // loop_footer
                %s1085 = sadd.s32 1, %s1081
              $region103: #{bert_encoder_forward.10} parent=96 // loop_footer_branch
                %1080 = sbr.rel target = $region99
              $region104: #{bert_encoder_forward.10} parent=96 // loop_exit
                _
            $region97: #{bert_encoder_forward.10} parent=88 // pred_fallthru
              _
          $region89: #{bert_encoder_forward.10} parent=84 // pred_fallthru
            _
          %1235 = vnop
        $region85: #{bert_encoder_forward.10} parent=68 // pred_fallthru
          _
      $region69: #{bert_encoder_forward.10} parent=5 // pred_fallthru
        _
      %p1236 = scmp.le.s32.totalorder 2, %s9
      // Predicated region
      $region123: #{bert_encoder_forward.10} parent=5 // pred_check
        %p1237 = pneg %p1236
      $region124: #{bert_encoder_forward.10} parent=5 // pred_check_branch
        %1239 = sbr.rel (%p1237) target = $region126
      $region125: #{bert_encoder_forward.10} parent=5 // pred_region
        %s1240 = ssub.s32 %s9, 2
        // Predicated region
        $region127: #{bert_encoder_forward.10} parent=125 // pred_check
          %p1241 = pneg %p141
        $region128: #{bert_encoder_forward.10} parent=125 // pred_check_branch
          %1243 = sbr.rel (%p1241) target = $region130
        $region129: #{bert_encoder_forward.10} parent=125 // pred_region
          %s1244 = sand.u32 %s126, 1
          %s1245 = sand.u32 %s126, 1
          %s1246 = smul.addr %s1245, 128
          %s1247 = scalar_lea.vmem [#allocation4], %s1246
        $region130: #{bert_encoder_forward.10} parent=125 // pred_fallthru
          _
      $region126: #{bert_encoder_forward.10} parent=5 // pred_fallthru
        _
    $region6: #{bert_encoder_forward.10} parent=1 // loop_footer
      %s13 = sadd.s32 1, %s9
    $region7: #{bert_encoder_forward.10} parent=1 // loop_footer_branch
      %8 = sbr.rel target = $region3
    $region8: #{bert_encoder_forward.10} parent=1 // loop_exit
      _

// kernel: bert_encoder_forward.12
$region0: #{bert_encoder_forward.12}
  #allocation0 [shape = 'u32[]', space=smem, size = 0x4, offset = 0x4, fixed_abs, tag = 'smem constant byte address 0x4 - core index']
  #allocation1 [shape = 'u32[144,128]{1,0:T(1,128)}', space=vmem, size = 0x12000, scoped, tag = 'internal scratch']
  #allocation2 [shape = 'f32[256,128]{1,0:T(8,128)}', space=vmem, size = 0x20000, scoped, tag = 'scratch operand']
  %s0 = inlined_call_operand.vmem [shape: bf16[256,128], index: 0, kind: input, shape index: {}]
  %s1 = inlined_call_operand.vmem [shape: bf16[128,128], index: 1, kind: input, shape index: {}]
  %s2 = inlined_call_operand.vmem [shape: f32[1,128], index: 2, kind: input, shape index: {}]
  %s3 = inlined_call_operand.vmem [shape: bf16[256,128], index: 3, kind: input, shape index: {}]
  %s4 = inlined_call_operand.vmem [shape: f32[1,128], index: 4, kind: input, shape index: {}]
  %s5 = inlined_call_operand.vmem [shape: f32[1,128], index: 5, kind: input, shape index: {}]
  %s6 = inlined_call_operand.vmem [shape: bf16[256,128], index: 6, kind: output, shape index: {}]
  %s7 = sld [smem:[#allocation0]]
  $region42: #{bert_encoder_forward.12} parent=0
    _
  %s9 = ssub.s32 1, %s7
  %s10 = scalar_select 0, %s9, %s7
  // Predicated region
  $region2: #{bert_encoder_forward.12} parent=0 // pred_check
    _
  $region3: #{bert_encoder_forward.12} parent=0 // pred_check_branch
    %12 = sbr.rel (0) target = $region5
  $region4: #{bert_encoder_forward.12} parent=0 // pred_region
    _
  $region5: #{bert_encoder_forward.12} parent=0 // pred_fallthru
    _
  // Predicated region
  $region6: #{bert_encoder_forward.12} parent=0 // pred_check
    _
  $region7: #{bert_encoder_forward.12} parent=0 // pred_check_branch
    %14 = sbr.rel (0) target = $region9
  $region8: #{bert_encoder_forward.12} parent=0 // pred_region
    _
  $region9: #{bert_encoder_forward.12} parent=0 // pred_fallthru
    _
  // Predicated region
  $region10: #{bert_encoder_forward.12} parent=0 // pred_check
    _
  $region11: #{bert_encoder_forward.12} parent=0 // pred_check_branch
    %16 = sbr.rel (0) target = $region13
  $region12: #{bert_encoder_forward.12} parent=0 // pred_region
    _
  $region13: #{bert_encoder_forward.12} parent=0 // pred_fallthru
    _
  // Predicated region
  $region14: #{bert_encoder_forward.12} parent=0 // pred_check
    _
  $region15: #{bert_encoder_forward.12} parent=0 // pred_check_branch
    %18 = sbr.rel (0) target = $region17
  $region16: #{bert_encoder_forward.12} parent=0 // pred_region
    _
  $region17: #{bert_encoder_forward.12} parent=0 // pred_fallthru
    _
  // Predicated region
  $region18: #{bert_encoder_forward.12} parent=0 // pred_check
    _
  $region19: #{bert_encoder_forward.12} parent=0 // pred_check_branch
    %20 = sbr.rel (0) target = $region21
  $region20: #{bert_encoder_forward.12} parent=0 // pred_region
    _
  $region21: #{bert_encoder_forward.12} parent=0 // pred_fallthru
    _
  // Predicated region
  $region22: #{bert_encoder_forward.12} parent=0 // pred_check
    _
  $region23: #{bert_encoder_forward.12} parent=0 // pred_check_branch
    %22 = sbr.rel (0) target = $region25
  $region24: #{bert_encoder_forward.12} parent=0 // pred_region
    _
  $region25: #{bert_encoder_forward.12} parent=0 // pred_fallthru
    _
  %p24 = scmp.eq.s32.totalorder 0, 0
  // Predicated region
  $region26: #{bert_encoder_forward.12} parent=0 // pred_check
    %p25 = pneg %p24
  $region27: #{bert_encoder_forward.12} parent=0 // pred_check_branch
    %27 = sbr.rel (%p25) target = $region29
  $region28: #{bert_encoder_forward.12} parent=0 // pred_region
    %28 = vst [vmem:[#allocation2] sm:$0xff] 0.0
    %29 = vst [vmem:[#allocation2 + $0x8] sm:$0xff] 0.0
    %30 = vst [vmem:[#allocation2 + $0x10] sm:$0xff] 0.0
    %31 = vst [vmem:[#allocation2 + $0x18] sm:$0xff] 0.0
    %32 = vst [vmem:[#allocation2 + $0x20] sm:$0xff] 0.0
    %33 = vst [vmem:[#allocation2 + $0x28] sm:$0xff] 0.0
    %34 = vst [vmem:[#allocation2 + $0x30] sm:$0xff] 0.0
    %35 = vst [vmem:[#allocation2 + $0x38] sm:$0xff] 0.0
    %36 = vst [vmem:[#allocation2 + $0x40] sm:$0xff] 0.0
    %37 = vst [vmem:[#allocation2 + $0x48] sm:$0xff] 0.0
    %38 = vst [vmem:[#allocation2 + $0x50] sm:$0xff] 0.0
    %39 = vst [vmem:[#allocation2 + $0x58] sm:$0xff] 0.0
    %40 = vst [vmem:[#allocation2 + $0x60] sm:$0xff] 0.0
    %41 = vst [vmem:[#allocation2 + $0x68] sm:$0xff] 0.0
    %42 = vst [vmem:[#allocation2 + $0x70] sm:$0xff] 0.0
    %43 = vst [vmem:[#allocation2 + $0x78] sm:$0xff] 0.0
    %44 = vst [vmem:[#allocation2 + $0x80] sm:$0xff] 0.0
    %45 = vst [vmem:[#allocation2 + $0x88] sm:$0xff] 0.0
    %46 = vst [vmem:[#allocation2 + $0x90] sm:$0xff] 0.0
    %47 = vst [vmem:[#allocation2 + $0x98] sm:$0xff] 0.0
    %48 = vst [vmem:[#allocation2 + $0xa0] sm:$0xff] 0.0
    %49 = vst [vmem:[#allocation2 + $0xa8] sm:$0xff] 0.0
    %50 = vst [vmem:[#allocation2 + $0xb0] sm:$0xff] 0.0
    %51 = vst [vmem:[#allocation2 + $0xb8] sm:$0xff] 0.0
    %52 = vst [vmem:[#allocation2 + $0xc0] sm:$0xff] 0.0
    %53 = vst [vmem:[#allocation2 + $0xc8] sm:$0xff] 0.0
    %54 = vst [vmem:[#allocation2 + $0xd0] sm:$0xff] 0.0
    %55 = vst [vmem:[#allocation2 + $0xd8] sm:$0xff] 0.0
    %56 = vst [vmem:[#allocation2 + $0xe0] sm:$0xff] 0.0
    %57 = vst [vmem:[#allocation2 + $0xe8] sm:$0xff] 0.0
    %58 = vst [vmem:[#allocation2 + $0xf0] sm:$0xff] 0.0
    %59 = vst [vmem:[#allocation2 + $0xf8] sm:$0xff] 0.0
  $region29: #{bert_encoder_forward.12} parent=0 // pred_fallthru
    _
  %v60 = vld [vmem:[#allocation2] sm:$0xff]
  %v61 = vld [vmem:[#allocation2 + $0x8] sm:$0xff]
  %v62 = vld [vmem:[#allocation2 + $0x10] sm:$0xff]
  %v63 = vld [vmem:[#allocation2 + $0x18] sm:$0xff]
  %v64 = vld [vmem:[#allocation2 + $0x20] sm:$0xff]
  %v65 = vld [vmem:[#allocation2 + $0x28] sm:$0xff]
  %v66 = vld [vmem:[#allocation2 + $0x30] sm:$0xff]
  %v67 = vld [vmem:[#allocation2 + $0x38] sm:$0xff]
  %v68 = vld [vmem:[#allocation2 + $0x40] sm:$0xff]
  %v69 = vld [vmem:[#allocation2 + $0x48] sm:$0xff]
  %v70 = vld [vmem:[#allocation2 + $0x50] sm:$0xff]
  %v71 = vld [vmem:[#allocation2 + $0x58] sm:$0xff]
  %v72 = vld [vmem:[#allocation2 + $0x60] sm:$0xff]
  %v73 = vld [vmem:[#allocation2 + $0x68] sm:$0xff]
  %v74 = vld [vmem:[#allocation2 + $0x70] sm:$0xff]
  %v75 = vld [vmem:[#allocation2 + $0x78] sm:$0xff]
  %v76 = vld [vmem:[#allocation2 + $0x80] sm:$0xff]
  %v77 = vld [vmem:[#allocation2 + $0x88] sm:$0xff]
  %v78 = vld [vmem:[#allocation2 + $0x90] sm:$0xff]
  %v79 = vld [vmem:[#allocation2 + $0x98] sm:$0xff]
  %v80 = vld [vmem:[#allocation2 + $0xa0] sm:$0xff]
  %v81 = vld [vmem:[#allocation2 + $0xa8] sm:$0xff]
  %v82 = vld [vmem:[#allocation2 + $0xb0] sm:$0xff]
  %v83 = vld [vmem:[#allocation2 + $0xb8] sm:$0xff]
  %v84 = vld [vmem:[#allocation2 + $0xc0] sm:$0xff]
  %v85 = vld [vmem:[#allocation2 + $0xc8] sm:$0xff]
  %v86 = vld [vmem:[#allocation2 + $0xd0] sm:$0xff]
  %v87 = vld [vmem:[#allocation2 + $0xd8] sm:$0xff]
  %v88 = vld [vmem:[#allocation2 + $0xe0] sm:$0xff]
  %v89 = vld [vmem:[#allocation2 + $0xe8] sm:$0xff]
  %v90 = vld [vmem:[#allocation2 + $0xf0] sm:$0xff]
  %v91 = vld [vmem:[#allocation2 + $0xf8] sm:$0xff]
  %v92 = vld [vmem:[%s0] sm:$0xf]
  %v93 = vld [vmem:[%s0 + $0x4] sm:$0xf]
  %v94 = vld [vmem:[%s0 + $0x8] sm:$0xf]
  %v95 = vld [vmem:[%s0 + $0xc] sm:$0xf]
  %v96 = vld [vmem:[%s0 + $0x10] sm:$0xf]
  %v97 = vld [vmem:[%s0 + $0x14] sm:$0xf]
  %v98 = vld [vmem:[%s0 + $0x18] sm:$0xf]
  %v99 = vld [vmem:[%s0 + $0x1c] sm:$0xf]
  %v100 = vld [vmem:[%s0 + $0x20] sm:$0xf]
  %v101 = vld [vmem:[%s0 + $0x24] sm:$0xf]
  %v102 = vld [vmem:[%s0 + $0x28] sm:$0xf]
  %v103 = vld [vmem:[%s0 + $0x2c] sm:$0xf]
  %v104 = vld [vmem:[%s0 + $0x30] sm:$0xf]
  %v105 = vld [vmem:[%s0 + $0x34] sm:$0xf]
  %v106 = vld [vmem:[%s0 + $0x38] sm:$0xf]
  %v107 = vld [vmem:[%s0 + $0x3c] sm:$0xf]
  %v108 = vld [vmem:[%s0 + $0x40] sm:$0xf]
  %v109 = vld [vmem:[%s0 + $0x44] sm:$0xf]
  %v110 = vld [vmem:[%s0 + $0x48] sm:$0xf]
  %v111 = vld [vmem:[%s0 + $0x4c] sm:$0xf]
  %v112 = vld [vmem:[%s0 + $0x50] sm:$0xf]
  %v113 = vld [vmem:[%s0 + $0x54] sm:$0xf]
  %v114 = vld [vmem:[%s0 + $0x58] sm:$0xf]
  %v115 = vld [vmem:[%s0 + $0x5c] sm:$0xf]
  %v116 = vld [vmem:[%s0 + $0x60] sm:$0xf]
  %v117 = vld [vmem:[%s0 + $0x64] sm:$0xf]
  %v118 = vld [vmem:[%s0 + $0x68] sm:$0xf]
  %v119 = vld [vmem:[%s0 + $0x6c] sm:$0xf]
  %v120 = vld [vmem:[%s0 + $0x70] sm:$0xf]
  %v121 = vld [vmem:[%s0 + $0x74] sm:$0xf]
  %v122 = vld [vmem:[%s0 + $0x78] sm:$0xf]
  %v123 = vld [vmem:[%s0 + $0x7c] sm:$0xf]
  %v124 = vld [vmem:[%s1] sm:$0xf]
  %v125 = vld [vmem:[%s1 + $0x4] sm:$0xf]
  %v126 = vld [vmem:[%s1 + $0x8] sm:$0xf]
  %v127 = vld [vmem:[%s1 + $0xc] sm:$0xf]
  %v128 = vld [vmem:[%s1 + $0x10] sm:$0xf]
  %v129 = vld [vmem:[%s1 + $0x14] sm:$0xf]
  %v130 = vld [vmem:[%s1 + $0x18] sm:$0xf]
  %v131 = vld [vmem:[%s1 + $0x1c] sm:$0xf]
  %v132 = vld [vmem:[%s1 + $0x20] sm:$0xf]
  %v133 = vld [vmem:[%s1 + $0x24] sm:$0xf]
  %v134 = vld [vmem:[%s1 + $0x28] sm:$0xf]
  %v135 = vld [vmem:[%s1 + $0x2c] sm:$0xf]
  %v136 = vld [vmem:[%s1 + $0x30] sm:$0xf]
  %v137 = vld [vmem:[%s1 + $0x34] sm:$0xf]
  %v138 = vld [vmem:[%s1 + $0x38] sm:$0xf]
  %v139 = vld [vmem:[%s1 + $0x3c] sm:$0xf]
  %v172 = vunpack.c.l.b16 %v92
  %v173 = vunpack.c.l.b16 %v93
  %v174 = vunpack.c.l.b16 %v94
  %v175 = vunpack.c.l.b16 %v95
  %v176 = vunpack.c.l.b16 %v96
  %v177 = vunpack.c.l.b16 %v97
  %v178 = vunpack.c.l.b16 %v98
  %v179 = vunpack.c.l.b16 %v99
  %v180 = vunpack.c.l.b16 %v100
  %v181 = vunpack.c.l.b16 %v101
  %v182 = vunpack.c.l.b16 %v102
  %v183 = vunpack.c.l.b16 %v103
  %v184 = vunpack.c.l.b16 %v104
  %v185 = vunpack.c.l.b16 %v105
  %v186 = vunpack.c.l.b16 %v106
  %v187 = vunpack.c.l.b16 %v107
  %v188 = vunpack.c.l.b16 %v108
  %v189 = vunpack.c.l.b16 %v109
  %v190 = vunpack.c.l.b16 %v110
  %v191 = vunpack.c.l.b16 %v111
  %v192 = vunpack.c.l.b16 %v112
  %v193 = vunpack.c.l.b16 %v113
  %v194 = vunpack.c.l.b16 %v114
  %v195 = vunpack.c.l.b16 %v115
  %v196 = vunpack.c.l.b16 %v116
  %v197 = vunpack.c.l.b16 %v117
  %v198 = vunpack.c.l.b16 %v118
  %v199 = vunpack.c.l.b16 %v119
  %v200 = vunpack.c.l.b16 %v120
  %v201 = vunpack.c.l.b16 %v121
  %v202 = vunpack.c.l.b16 %v122
  %v203 = vunpack.c.l.b16 %v123
  %v204 = vpack.c.b16 %v173, %v172
  %v205 = vpack.c.b16 %v175, %v174
  %v206 = vpack.c.b16 %v177, %v176
  %v207 = vpack.c.b16 %v179, %v178
  %v208 = vpack.c.b16 %v181, %v180
  %v209 = vpack.c.b16 %v183, %v182
  %v210 = vpack.c.b16 %v185, %v184
  %v211 = vpack.c.b16 %v187, %v186
  %v212 = vpack.c.b16 %v189, %v188
  %v213 = vpack.c.b16 %v191, %v190
  %v214 = vpack.c.b16 %v193, %v192
  %v215 = vpack.c.b16 %v195, %v194
  %v216 = vpack.c.b16 %v197, %v196
  %v217 = vpack.c.b16 %v199, %v198
  %v218 = vpack.c.b16 %v201, %v200
  %v219 = vpack.c.b16 %v203, %v202
  %v252 = vunpack.c.l.b16 %v124
  %v253 = vunpack.c.l.b16 %v125
  %v254 = vunpack.c.l.b16 %v126
  %v255 = vunpack.c.l.b16 %v127
  %v256 = vunpack.c.l.b16 %v128
  %v257 = vunpack.c.l.b16 %v129
  %v258 = vunpack.c.l.b16 %v130
  %v259 = vunpack.c.l.b16 %v131
  %v260 = vunpack.c.l.b16 %v132
  %v261 = vunpack.c.l.b16 %v133
  %v262 = vunpack.c.l.b16 %v134
  %v263 = vunpack.c.l.b16 %v135
  %v264 = vunpack.c.l.b16 %v136
  %v265 = vunpack.c.l.b16 %v137
  %v266 = vunpack.c.l.b16 %v138
  %v267 = vunpack.c.l.b16 %v139
  %v268 = vpack.c.b16 %v253, %v252
  %v269 = vpack.c.b16 %v255, %v254
  %v270 = vpack.c.b16 %v257, %v256
  %v271 = vpack.c.b16 %v259, %v258
  %v272 = vpack.c.b16 %v261, %v260
  %v273 = vpack.c.b16 %v263, %v262
  %v274 = vpack.c.b16 %v265, %v264
  %v275 = vpack.c.b16 %v267, %v266
  %284 = vmatprep.subr.bf16.mxu0 0
  %285 = vmatpush1.bf16.msra.mxu0 %v268
  %286 = vmatprep.subr.bf16.mxu0 0
  %287 = vmatpush1.bf16.msra.mxu0 %v269
  %288 = vmatprep.subr.bf16.mxu0 0
  %289 = vmatpush1.bf16.msra.mxu0 %v270
  %290 = vmatprep.subr.bf16.mxu0 0
  %291 = vmatpush1.bf16.msra.mxu0 %v271
  %292 = vmatprep.subr.bf16.mxu0 0
  %293 = vmatpush1.bf16.msra.mxu0 %v272
  %294 = vmatprep.subr.bf16.mxu0 0
  %295 = vmatpush1.bf16.msra.mxu0 %v273
  %296 = vmatprep.subr.bf16.mxu0 0
  %297 = vmatpush1.bf16.msra.mxu0 %v274
  %298 = vmatprep.subr.bf16.mxu0 0
  %299 = vmatpush1.bf16.msra.mxu0 %v275
  %300 = vmatprep.subr.bf16.mxu0 0
  %301 = vmatpush1.bf16.msra.mxu0 0
  %302 = vmatprep.subr.bf16.mxu0 0
  %303 = vmatpush1.bf16.msra.mxu0 0
  %304 = vmatprep.subr.bf16.mxu0 0
  %305 = vmatpush1.bf16.msra.mxu0 0
  %306 = vmatprep.subr.bf16.mxu0 0
  %307 = vmatpush1.bf16.msra.mxu0 0
  %308 = vmatprep.subr.bf16.mxu0 0
  %309 = vmatpush1.bf16.msra.mxu0 0
  %310 = vmatprep.subr.bf16.mxu0 0
  %311 = vmatpush1.bf16.msra.mxu0 0
  %312 = vmatprep.subr.bf16.mxu0 0
  %313 = vmatpush1.bf16.msra.mxu0 0
  %314 = vmatprep.subr.bf16.mxu0 0
  %315 = vmatpush1.bf16.msra.mxu0 0
  %316 = vmatprep.mubr.bf16.mxu0 0
  %317 = vmatmul.mubr.bf16.gmra.mrb[0].mxu0 %v204
  %v318 = vpop.f32.mrb[0].mxu0
  %v319 = vadd.f32 0.0, %v318
  %v320 = vpop.f32.mrb[0].mxu0
  %v321 = vpop.f32.mrb[0].mxu0
  %v322 = vadd.f32 0.0, %v321
  %v323 = vpop.f32.mrb[0].mxu0
  %324 = vmatprep.mubr.bf16.mxu0 0
  %325 = vmatmul.mubr.bf16.gmra.mrb[0].mxu0 %v205
  %v326 = vpop.f32.mrb[0].mxu0
  %v327 = vadd.f32 0.0, %v326
  %v328 = vpop.f32.mrb[0].mxu0
  %v329 = vpop.f32.mrb[0].mxu0
  %v330 = vadd.f32 0.0, %v329
  %v331 = vpop.f32.mrb[0].mxu0
  %332 = vmatprep.mubr.bf16.mxu0 0
  %333 = vmatmul.mubr.bf16.gmra.mrb[0].mxu0 %v206
  %v334 = vpop.f32.mrb[0].mxu0
  %v335 = vadd.f32 0.0, %v334
  %v336 = vpop.f32.mrb[0].mxu0
  %v337 = vpop.f32.mrb[0].mxu0
  %v338 = vadd.f32 0.0, %v337
  %v339 = vpop.f32.mrb[0].mxu0
  %340 = vmatprep.mubr.bf16.mxu0 0
  %341 = vmatmul.mubr.bf16.gmra.mrb[0].mxu0 %v207
  %v342 = vpop.f32.mrb[0].mxu0
  %v343 = vadd.f32 0.0, %v342
  %v344 = vpop.f32.mrb[0].mxu0
  %v345 = vpop.f32.mrb[0].mxu0
  %v346 = vadd.f32 0.0, %v345
  %v347 = vpop.f32.mrb[0].mxu0
  %348 = vmatprep.mubr.bf16.mxu0 0
  %349 = vmatmul.mubr.bf16.gmra.mrb[0].mxu0 %v208
  %v350 = vpop.f32.mrb[0].mxu0
  %v351 = vadd.f32 0.0, %v350
  %v352 = vpop.f32.mrb[0].mxu0
  %v353 = vpop.f32.mrb[0].mxu0
  %v354 = vadd.f32 0.0, %v353
  %v355 = vpop.f32.mrb[0].mxu0
  %356 = vmatprep.mubr.bf16.mxu0 0
  %357 = vmatmul.mubr.bf16.gmra.mrb[0].mxu0 %v209
  %v358 = vpop.f32.mrb[0].mxu0
  %v359 = vadd.f32 0.0, %v358
  %v360 = vpop.f32.mrb[0].mxu0
  %v361 = vpop.f32.mrb[0].mxu0
  %v362 = vadd.f32 0.0, %v361
  %v363 = vpop.f32.mrb[0].mxu0
  %364 = vmatprep.mubr.bf16.mxu0 0
  %365 = vmatmul.mubr.bf16.gmra.mrb[0].mxu0 %v210
  %v366 = vpop.f32.mrb[0].mxu0
  %v367 = vadd.f32 0.0, %v366
  %v368 = vpop.f32.mrb[0].mxu0
  %v369 = vpop.f32.mrb[0].mxu0
  %v370 = vadd.f32 0.0, %v369
  %v371 = vpop.f32.mrb[0].mxu0
  %372 = vmatprep.mubr.bf16.mxu0 0
  %373 = vmatmul.mubr.bf16.gmra.mrb[0].mxu0 %v211
  %v374 = vpop.f32.mrb[0].mxu0
  %v375 = vadd.f32 0.0, %v374
  %v376 = vpop.f32.mrb[0].mxu0
  %v377 = vpop.f32.mrb[0].mxu0
  %v378 = vadd.f32 0.0, %v377
  %v379 = vpop.f32.mrb[0].mxu0
  %380 = vmatprep.mubr.bf16.mxu0 0
  %381 = vmatmul.mubr.bf16.gmra.mrb[0].mxu0 %v212
  %v382 = vpop.f32.mrb[0].mxu0
  %v383 = vadd.f32 0.0, %v382
  %v384 = vpop.f32.mrb[0].mxu0
  %v385 = vpop.f32.mrb[0].mxu0
  %v386 = vadd.f32 0.0, %v385
  %v387 = vpop.f32.mrb[0].mxu0
  %388 = vmatprep.mubr.bf16.mxu0 0
  %389 = vmatmul.mubr.bf16.gmra.mrb[0].mxu0 %v213
  %v390 = vpop.f32.mrb[0].mxu0
  %v391 = vadd.f32 0.0, %v390
  %v392 = vpop.f32.mrb[0].mxu0
  %v393 = vpop.f32.mrb[0].mxu0
  %v394 = vadd.f32 0.0, %v393
  %v395 = vpop.f32.mrb[0].mxu0
  %396 = vmatprep.mubr.bf16.mxu0 0
  %397 = vmatmul.mubr.bf16.gmra.mrb[0].mxu0 %v214
  %v398 = vpop.f32.mrb[0].mxu0
  %v399 = vadd.f32 0.0, %v398
  %v400 = vpop.f32.mrb[0].mxu0
  %v401 = vpop.f32.mrb[0].mxu0
  %v402 = vadd.f32 0.0, %v401
  %v403 = vpop.f32.mrb[0].mxu0
  %404 = vmatprep.mubr.bf16.mxu0 0
  %405 = vmatmul.mubr.bf16.gmra.mrb[0].mxu0 %v215
  %v406 = vpop.f32.mrb[0].mxu0
  %v407 = vadd.f32 0.0, %v406
  %v408 = vpop.f32.mrb[0].mxu0
  %v409 = vpop.f32.mrb[0].mxu0
  %v410 = vadd.f32 0.0, %v409
  %v411 = vpop.f32.mrb[0].mxu0
  %412 = vmatprep.mubr.bf16.mxu0 0
  %413 = vmatmul.mubr.bf16.gmra.mrb[0].mxu0 %v216
  %v414 = vpop.f32.mrb[0].mxu0
  %v415 = vadd.f32 0.0, %v414
  %v416 = vpop.f32.mrb[0].mxu0
  %v417 = vpop.f32.mrb[0].mxu0
  %v418 = vadd.f32 0.0, %v417
  %v419 = vpop.f32.mrb[0].mxu0
  %420 = vmatprep.mubr.bf16.mxu0 0
  %421 = vmatmul.mubr.bf16.gmra.mrb[0].mxu0 %v217
  %v422 = vpop.f32.mrb[0].mxu0
  %v423 = vadd.f32 0.0, %v422
  %v424 = vpop.f32.mrb[0].mxu0
  %v425 = vpop.f32.mrb[0].mxu0
  %v426 = vadd.f32 0.0, %v425
  %v427 = vpop.f32.mrb[0].mxu0
  %428 = vmatprep.mubr.bf16.mxu0 0
  %429 = vmatmul.mubr.bf16.gmra.mrb[0].mxu0 %v218
  %v430 = vpop.f32.mrb[0].mxu0
  %v431 = vadd.f32 0.0, %v430
  %v432 = vpop.f32.mrb[0].mxu0
  %v433 = vpop.f32.mrb[0].mxu0
  %v434 = vadd.f32 0.0, %v433
  %v435 = vpop.f32.mrb[0].mxu0
  %436 = vmatprep.mubr.bf16.mxu0 0
  %437 = vmatmul.mubr.bf16.gmra.mrb[0].mxu0 %v219
  %v438 = vpop.f32.mrb[0].mxu0
  %v439 = vadd.f32 0.0, %v438
  %v440 = vpop.f32.mrb[0].mxu0
  %v441 = vpop.f32.mrb[0].mxu0
  %v442 = vadd.f32 0.0, %v441
  %v443 = vpop.f32.mrb[0].mxu0
  %444 = vdwg.mxu0
  %v445 = vadd.f32 %v60, %v319
  %v446 = vadd.f32 %v61, %v322
  %v447 = vadd.f32 %v62, %v327
  %v448 = vadd.f32 %v63, %v330
  %v449 = vadd.f32 %v64, %v335
  %v450 = vadd.f32 %v65, %v338
  %v451 = vadd.f32 %v66, %v343
  %v452 = vadd.f32 %v67, %v346
  %v453 = vadd.f32 %v68, %v351
  %v454 = vadd.f32 %v69, %v354
  %v455 = vadd.f32 %v70, %v359
  %v456 = vadd.f32 %v71, %v362
  %v457 = vadd.f32 %v72, %v367
  %v458 = vadd.f32 %v73, %v370
  %v459 = vadd.f32 %v74, %v375
  %v460 = vadd.f32 %v75, %v378
  %v461 = vadd.f32 %v76, %v383
  %v462 = vadd.f32 %v77, %v386
  %v463 = vadd.f32 %v78, %v391
  %v464 = vadd.f32 %v79, %v394
  %v465 = vadd.f32 %v80, %v399
  %v466 = vadd.f32 %v81, %v402
  %v467 = vadd.f32 %v82, %v407
  %v468 = vadd.f32 %v83, %v410
  %v469 = vadd.f32 %v84, %v415
  %v470 = vadd.f32 %v85, %v418
  %v471 = vadd.f32 %v86, %v423
  %v472 = vadd.f32 %v87, %v426
  %v473 = vadd.f32 %v88, %v431
  %v474 = vadd.f32 %v89, %v434
  %v475 = vadd.f32 %v90, %v439
  %v476 = vadd.f32 %v91, %v442
  %477 = vst [vmem:[#allocation2] sm:$0xff] %v445
  %478 = vst [vmem:[#allocation2 + $0x8] sm:$0xff] %v446
  %479 = vst [vmem:[#allocation2 + $0x10] sm:$0xff] %v447
  %480 = vst [vmem:[#allocation2 + $0x18] sm:$0xff] %v448
  %481 = vst [vmem:[#allocation2 + $0x20] sm:$0xff] %v449
  %482 = vst [vmem:[#allocation2 + $0x28] sm:$0xff] %v450
  %483 = vst [vmem:[#allocation2 + $0x30] sm:$0xff] %v451
  %484 = vst [vmem:[#allocation2 + $0x38] sm:$0xff] %v452
  %485 = vst [vmem:[#allocation2 + $0x40] sm:$0xff] %v453
  %486 = vst [vmem:[#allocation2 + $0x48] sm:$0xff] %v454
  %487 = vst [vmem:[#allocation2 + $0x50] sm:$0xff] %v455
  %488 = vst [vmem:[#allocation2 + $0x58] sm:$0xff] %v456
  %489 = vst [vmem:[#allocation2 + $0x60] sm:$0xff] %v457
  %490 = vst [vmem:[#allocation2 + $0x68] sm:$0xff] %v458
  %491 = vst [vmem:[#allocation2 + $0x70] sm:$0xff] %v459
  %492 = vst [vmem:[#allocation2 + $0x78] sm:$0xff] %v460
  %493 = vst [vmem:[#allocation2 + $0x80] sm:$0xff] %v461
  %494 = vst [vmem:[#allocation2 + $0x88] sm:$0xff] %v462
  %495 = vst [vmem:[#allocation2 + $0x90] sm:$0xff] %v463
  %496 = vst [vmem:[#allocation2 + $0x98] sm:$0xff] %v464
  %497 = vst [vmem:[#allocation2 + $0xa0] sm:$0xff] %v465
  %498 = vst [vmem:[#allocation2 + $0xa8] sm:$0xff] %v466
  %499 = vst [vmem:[#allocation2 + $0xb0] sm:$0xff] %v467
  %500 = vst [vmem:[#allocation2 + $0xb8] sm:$0xff] %v468
  %501 = vst [vmem:[#allocation2 + $0xc0] sm:$0xff] %v469
  %502 = vst [vmem:[#allocation2 + $0xc8] sm:$0xff] %v470
  %503 = vst [vmem:[#allocation2 + $0xd0] sm:$0xff] %v471
  %504 = vst [vmem:[#allocation2 + $0xd8] sm:$0xff] %v472
  %505 = vst [vmem:[#allocation2 + $0xe0] sm:$0xff] %v473
  %506 = vst [vmem:[#allocation2 + $0xe8] sm:$0xff] %v474
  %507 = vst [vmem:[#allocation2 + $0xf0] sm:$0xff] %v475
  %508 = vst [vmem:[#allocation2 + $0xf8] sm:$0xff] %v476
  // Predicated region
  $region30: #{bert_encoder_forward.12} parent=0 // pred_check
    %p509 = pneg %p24
  $region31: #{bert_encoder_forward.12} parent=0 // pred_check_branch
    %511 = sbr.rel (%p509) target = $region33
  $region32: #{bert_encoder_forward.12} parent=0 // pred_region
    %v512 = vld [vmem:[#allocation2] sm:$0xff]
    %v513 = vld [vmem:[#allocation2 + $0x8] sm:$0xff]
    %v514 = vld [vmem:[#allocation2 + $0x10] sm:$0xff]
    %v515 = vld [vmem:[#allocation2 + $0x18] sm:$0xff]
    %v516 = vld [vmem:[#allocation2 + $0x20] sm:$0xff]
    %v517 = vld [vmem:[#allocation2 + $0x28] sm:$0xff]
    %v518 = vld [vmem:[#allocation2 + $0x30] sm:$0xff]
    %v519 = vld [vmem:[#allocation2 + $0x38] sm:$0xff]
    %v520 = vld [vmem:[#allocation2 + $0x40] sm:$0xff]
    %v521 = vld [vmem:[#allocation2 + $0x48] sm:$0xff]
    %v522 = vld [vmem:[#allocation2 + $0x50] sm:$0xff]
    %v523 = vld [vmem:[#allocation2 + $0x58] sm:$0xff]
    %v524 = vld [vmem:[#allocation2 + $0x60] sm:$0xff]
    %v525 = vld [vmem:[#allocation2 + $0x68] sm:$0xff]
    %v526 = vld [vmem:[#allocation2 + $0x70] sm:$0xff]
    %v527 = vld [vmem:[#allocation2 + $0x78] sm:$0xff]
    %v528 = vld [vmem:[#allocation2 + $0x80] sm:$0xff]
    %v529 = vld [vmem:[#allocation2 + $0x88] sm:$0xff]
    %v530 = vld [vmem:[#allocation2 + $0x90] sm:$0xff]
    %v531 = vld [vmem:[#allocation2 + $0x98] sm:$0xff]
    %v532 = vld [vmem:[#allocation2 + $0xa0] sm:$0xff]
    %v533 = vld [vmem:[#allocation2 + $0xa8] sm:$0xff]
    %v534 = vld [vmem:[#allocation2 + $0xb0] sm:$0xff]
    %v535 = vld [vmem:[#allocation2 + $0xb8] sm:$0xff]
    %v536 = vld [vmem:[#allocation2 + $0xc0] sm:$0xff]
    %v537 = vld [vmem:[#allocation2 + $0xc8] sm:$0xff]
    %v538 = vld [vmem:[#allocation2 + $0xd0] sm:$0xff]
    %v539 = vld [vmem:[#allocation2 + $0xd8] sm:$0xff]
    %v540 = vld [vmem:[#allocation2 + $0xe0] sm:$0xff]
    %v541 = vld [vmem:[#allocation2 + $0xe8] sm:$0xff]
    %v542 = vld [vmem:[#allocation2 + $0xf0] sm:$0xff]
    %v543 = vld [vmem:[#allocation2 + $0xf8] sm:$0xff]
    %v544 = vld [vmem:[%s2] sm:$0x1]
    %v546 = vlaneseq
    %v547 = vshrl.u32 %v546, 7
    %v548 = vsub.s32 0, %v547
    %v549 = vrot.slane %v544, %v548
    %v551 = vadd.f32 %v512, %v549
    %v552 = vadd.f32 %v513, %v549
    %v553 = vadd.f32 %v514, %v549
    %v554 = vadd.f32 %v515, %v549
    %v555 = vadd.f32 %v516, %v549
    %v556 = vadd.f32 %v517, %v549
    %v557 = vadd.f32 %v518, %v549
    %v558 = vadd.f32 %v519, %v549
    %v559 = vadd.f32 %v520, %v549
    %v560 = vadd.f32 %v521, %v549
    %v561 = vadd.f32 %v522, %v549
    %v562 = vadd.f32 %v523, %v549
    %v563 = vadd.f32 %v524, %v549
    %v564 = vadd.f32 %v525, %v549
    %v565 = vadd.f32 %v526, %v549
    %v566 = vadd.f32 %v527, %v549
    %v567 = vadd.f32 %v528, %v549
    %v568 = vadd.f32 %v529, %v549
    %v569 = vadd.f32 %v530, %v549
    %v570 = vadd.f32 %v531, %v549
    %v571 = vadd.f32 %v532, %v549
    %v572 = vadd.f32 %v533, %v549
    %v573 = vadd.f32 %v534, %v549
    %v574 = vadd.f32 %v535, %v549
    %v575 = vadd.f32 %v536, %v549
    %v576 = vadd.f32 %v537, %v549
    %v577 = vadd.f32 %v538, %v549
    %v578 = vadd.f32 %v539, %v549
    %v579 = vadd.f32 %v540, %v549
    %v580 = vadd.f32 %v541, %v549
    %v581 = vadd.f32 %v542, %v549
    %v582 = vadd.f32 %v543, %v549
    %v583 = vld [vmem:[%s3] sm:$0xf]
    %v584 = vld [vmem:[%s3 + $0x4] sm:$0xf]
    %v585 = vld [vmem:[%s3 + $0x8] sm:$0xf]
    %v586 = vld [vmem:[%s3 + $0xc] sm:$0xf]
    %v587 = vld [vmem:[%s3 + $0x10] sm:$0xf]
    %v588 = vld [vmem:[%s3 + $0x14] sm:$0xf]
    %v589 = vld [vmem:[%s3 + $0x18] sm:$0xf]
    %v590 = vld [vmem:[%s3 + $0x1c] sm:$0xf]
    %v591 = vld [vmem:[%s3 + $0x20] sm:$0xf]
    %v592 = vld [vmem:[%s3 + $0x24] sm:$0xf]
    %v593 = vld [vmem:[%s3 + $0x28] sm:$0xf]
    %v594 = vld [vmem:[%s3 + $0x2c] sm:$0xf]
    %v595 = vld [vmem:[%s3 + $0x30] sm:$0xf]
    %v596 = vld [vmem:[%s3 + $0x34] sm:$0xf]
    %v597 = vld [vmem:[%s3 + $0x38] sm:$0xf]
    %v598 = vld [vmem:[%s3 + $0x3c] sm:$0xf]
    %v599 = vld [vmem:[%s3 + $0x40] sm:$0xf]
    %v600 = vld [vmem:[%s3 + $0x44] sm:$0xf]
    %v601 = vld [vmem:[%s3 + $0x48] sm:$0xf]
    %v602 = vld [vmem:[%s3 + $0x4c] sm:$0xf]
    %v603 = vld [vmem:[%s3 + $0x50] sm:$0xf]
    %v604 = vld [vmem:[%s3 + $0x54] sm:$0xf]
    %v605 = vld [vmem:[%s3 + $0x58] sm:$0xf]
    %v606 = vld [vmem:[%s3 + $0x5c] sm:$0xf]
    %v607 = vld [vmem:[%s3 + $0x60] sm:$0xf]
    %v608 = vld [vmem:[%s3 + $0x64] sm:$0xf]
    %v609 = vld [vmem:[%s3 + $0x68] sm:$0xf]
    %v610 = vld [vmem:[%s3 + $0x6c] sm:$0xf]
    %v611 = vld [vmem:[%s3 + $0x70] sm:$0xf]
    %v612 = vld [vmem:[%s3 + $0x74] sm:$0xf]
    %v613 = vld [vmem:[%s3 + $0x78] sm:$0xf]
    %v614 = vld [vmem:[%s3 + $0x7c] sm:$0xf]
    %v615 = vunpack.c.l.bf16 %v583
    %v616 = vunpack.c.l.bf16 %v584
    %v617 = vunpack.c.l.bf16 %v585
    %v618 = vunpack.c.l.bf16 %v586
    %v619 = vunpack.c.l.bf16 %v587
    %v620 = vunpack.c.l.bf16 %v588
    %v621 = vunpack.c.l.bf16 %v589
    %v622 = vunpack.c.l.bf16 %v590
    %v623 = vunpack.c.l.bf16 %v591
    %v624 = vunpack.c.l.bf16 %v592
    %v625 = vunpack.c.l.bf16 %v593
    %v626 = vunpack.c.l.bf16 %v594
    %v627 = vunpack.c.l.bf16 %v595
    %v628 = vunpack.c.l.bf16 %v596
    %v629 = vunpack.c.l.bf16 %v597
    %v630 = vunpack.c.l.bf16 %v598
    %v631 = vunpack.c.l.bf16 %v599
    %v632 = vunpack.c.l.bf16 %v600
    %v633 = vunpack.c.l.bf16 %v601
    %v634 = vunpack.c.l.bf16 %v602
    %v635 = vunpack.c.l.bf16 %v603
    %v636 = vunpack.c.l.bf16 %v604
    %v637 = vunpack.c.l.bf16 %v605
    %v638 = vunpack.c.l.bf16 %v606
    %v639 = vunpack.c.l.bf16 %v607
    %v640 = vunpack.c.l.bf16 %v608
    %v641 = vunpack.c.l.bf16 %v609
    %v642 = vunpack.c.l.bf16 %v610
    %v643 = vunpack.c.l.bf16 %v611
    %v644 = vunpack.c.l.bf16 %v612
    %v645 = vunpack.c.l.bf16 %v613
    %v646 = vunpack.c.l.bf16 %v614
    %v647 = vadd.f32 %v551, %v615
    %v648 = vadd.f32 %v552, %v616
    %v649 = vadd.f32 %v553, %v617
    %v650 = vadd.f32 %v554, %v618
    %v651 = vadd.f32 %v555, %v619
    %v652 = vadd.f32 %v556, %v620
    %v653 = vadd.f32 %v557, %v621
    %v654 = vadd.f32 %v558, %v622
    %v655 = vadd.f32 %v559, %v623
    %v656 = vadd.f32 %v560, %v624
    %v657 = vadd.f32 %v561, %v625
    %v658 = vadd.f32 %v562, %v626
    %v659 = vadd.f32 %v563, %v627
    %v660 = vadd.f32 %v564, %v628
    %v661 = vadd.f32 %v565, %v629
    %v662 = vadd.f32 %v566, %v630
    %v663 = vadd.f32 %v567, %v631
    %v664 = vadd.f32 %v568, %v632
    %v665 = vadd.f32 %v569, %v633
    %v666 = vadd.f32 %v570, %v634
    %v667 = vadd.f32 %v571, %v635
    %v668 = vadd.f32 %v572, %v636
    %v669 = vadd.f32 %v573, %v637
    %v670 = vadd.f32 %v574, %v638
    %v671 = vadd.f32 %v575, %v639
    %v672 = vadd.f32 %v576, %v640
    %v673 = vadd.f32 %v577, %v641
    %v674 = vadd.f32 %v578, %v642
    %v675 = vadd.f32 %v579, %v643
    %v676 = vadd.f32 %v580, %v644
    %v677 = vadd.f32 %v581, %v645
    %v678 = vadd.f32 %v582, %v646
    %679 = vadd.xlane.f32.xlu0 %v647
    %v680 = vpop.xlane.xlu0 %679
    %681 = vadd.xlane.f32.xlu0 %v648
    %v682 = vpop.xlane.xlu0 %681
    %683 = vadd.xlane.f32.xlu0 %v649
    %v684 = vpop.xlane.xlu0 %683
    %685 = vadd.xlane.f32.xlu0 %v650
    %v686 = vpop.xlane.xlu0 %685
    %687 = vadd.xlane.f32.xlu0 %v651
    %v688 = vpop.xlane.xlu0 %687
    %689 = vadd.xlane.f32.xlu0 %v652
    %v690 = vpop.xlane.xlu0 %689
    %691 = vadd.xlane.f32.xlu0 %v653
    %v692 = vpop.xlane.xlu0 %691
    %693 = vadd.xlane.f32.xlu0 %v654
    %v694 = vpop.xlane.xlu0 %693
    %695 = vadd.xlane.f32.xlu0 %v655
    %v696 = vpop.xlane.xlu0 %695
    %697 = vadd.xlane.f32.xlu0 %v656
    %v698 = vpop.xlane.xlu0 %697
    %699 = vadd.xlane.f32.xlu0 %v657
    %v700 = vpop.xlane.xlu0 %699
    %701 = vadd.xlane.f32.xlu0 %v658
    %v702 = vpop.xlane.xlu0 %701
    %703 = vadd.xlane.f32.xlu0 %v659
    %v704 = vpop.xlane.xlu0 %703
    %705 = vadd.xlane.f32.xlu0 %v660
    %v706 = vpop.xlane.xlu0 %705
    %707 = vadd.xlane.f32.xlu0 %v661
    %v708 = vpop.xlane.xlu0 %707
    %709 = vadd.xlane.f32.xlu0 %v662
    %v710 = vpop.xlane.xlu0 %709
    %711 = vadd.xlane.f32.xlu0 %v663
    %v712 = vpop.xlane.xlu0 %711
    %713 = vadd.xlane.f32.xlu0 %v664
    %v714 = vpop.xlane.xlu0 %713
    %715 = vadd.xlane.f32.xlu0 %v665
    %v716 = vpop.xlane.xlu0 %715
    %717 = vadd.xlane.f32.xlu0 %v666
    %v718 = vpop.xlane.xlu0 %717
    %719 = vadd.xlane.f32.xlu0 %v667
    %v720 = vpop.xlane.xlu0 %719
    %721 = vadd.xlane.f32.xlu0 %v668
    %v722 = vpop.xlane.xlu0 %721
    %723 = vadd.xlane.f32.xlu0 %v669
    %v724 = vpop.xlane.xlu0 %723
    %725 = vadd.xlane.f32.xlu0 %v670
    %v726 = vpop.xlane.xlu0 %725
    %727 = vadd.xlane.f32.xlu0 %v671
    %v728 = vpop.xlane.xlu0 %727
    %729 = vadd.xlane.f32.xlu0 %v672
    %v730 = vpop.xlane.xlu0 %729
    %731 = vadd.xlane.f32.xlu0 %v673
    %v732 = vpop.xlane.xlu0 %731
    %733 = vadd.xlane.f32.xlu0 %v674
    %v734 = vpop.xlane.xlu0 %733
    %735 = vadd.xlane.f32.xlu0 %v675
    %v736 = vpop.xlane.xlu0 %735
    %737 = vadd.xlane.f32.xlu0 %v676
    %v738 = vpop.xlane.xlu0 %737
    %739 = vadd.xlane.f32.xlu0 %v677
    %v740 = vpop.xlane.xlu0 %739
    %741 = vadd.xlane.f32.xlu0 %v678
    %v742 = vpop.xlane.xlu0 %741
    %v743 = vrcp.pop 128.0
    %v744 = vmul.f32 %v680, %v743
    %v745 = vmul.f32 %v682, %v743
    %v746 = vmul.f32 %v684, %v743
    %v747 = vmul.f32 %v686, %v743
    %v748 = vmul.f32 %v688, %v743
    %v749 = vmul.f32 %v690, %v743
    %v750 = vmul.f32 %v692, %v743
    %v751 = vmul.f32 %v694, %v743
    %v752 = vmul.f32 %v696, %v743
    %v753 = vmul.f32 %v698, %v743
    %v754 = vmul.f32 %v700, %v743
    %v755 = vmul.f32 %v702, %v743
    %v756 = vmul.f32 %v704, %v743
    %v757 = vmul.f32 %v706, %v743
    %v758 = vmul.f32 %v708, %v743
    %v759 = vmul.f32 %v710, %v743
    %v760 = vmul.f32 %v712, %v743
    %v761 = vmul.f32 %v714, %v743
    %v762 = vmul.f32 %v716, %v743
    %v763 = vmul.f32 %v718, %v743
    %v764 = vmul.f32 %v720, %v743
    %v765 = vmul.f32 %v722, %v743
    %v766 = vmul.f32 %v724, %v743
    %v767 = vmul.f32 %v726, %v743
    %v768 = vmul.f32 %v728, %v743
    %v769 = vmul.f32 %v730, %v743
    %v770 = vmul.f32 %v732, %v743
    %v771 = vmul.f32 %v734, %v743
    %v772 = vmul.f32 %v736, %v743
    %v773 = vmul.f32 %v738, %v743
    %v774 = vmul.f32 %v740, %v743
    %v775 = vmul.f32 %v742, %v743
    %v776 = vsub.f32 %v647, %v744
    %v777 = vsub.f32 %v648, %v745
    %v778 = vsub.f32 %v649, %v746
    %v779 = vsub.f32 %v650, %v747
    %v780 = vsub.f32 %v651, %v748
    %v781 = vsub.f32 %v652, %v749
    %v782 = vsub.f32 %v653, %v750
    %v783 = vsub.f32 %v654, %v751
    %v784 = vsub.f32 %v655, %v752
    %v785 = vsub.f32 %v656, %v753
    %v786 = vsub.f32 %v657, %v754
    %v787 = vsub.f32 %v658, %v755
    %v788 = vsub.f32 %v659, %v756
    %v789 = vsub.f32 %v660, %v757
    %v790 = vsub.f32 %v661, %v758
    %v791 = vsub.f32 %v662, %v759
    %v792 = vsub.f32 %v663, %v760
    %v793 = vsub.f32 %v664, %v761
    %v794 = vsub.f32 %v665, %v762
    %v795 = vsub.f32 %v666, %v763
    %v796 = vsub.f32 %v667, %v764
    %v797 = vsub.f32 %v668, %v765
    %v798 = vsub.f32 %v669, %v766
    %v799 = vsub.f32 %v670, %v767
    %v800 = vsub.f32 %v671, %v768
    %v801 = vsub.f32 %v672, %v769
    %v802 = vsub.f32 %v673, %v770
    %v803 = vsub.f32 %v674, %v771
    %v804 = vsub.f32 %v675, %v772
    %v805 = vsub.f32 %v676, %v773
    %v806 = vsub.f32 %v677, %v774
    %v807 = vsub.f32 %v678, %v775
    %v808 = vmul.f32 %v776, %v776
    %v809 = vmul.f32 %v777, %v777
    %v810 = vmul.f32 %v778, %v778
    %v811 = vmul.f32 %v779, %v779
    %v812 = vmul.f32 %v780, %v780
    %v813 = vmul.f32 %v781, %v781
    %v814 = vmul.f32 %v782, %v782
    %v815 = vmul.f32 %v783, %v783
    %v816 = vmul.f32 %v784, %v784
    %v817 = vmul.f32 %v785, %v785
    %v818 = vmul.f32 %v786, %v786
    %v819 = vmul.f32 %v787, %v787
    %v820 = vmul.f32 %v788, %v788
    %v821 = vmul.f32 %v789, %v789
    %v822 = vmul.f32 %v790, %v790
    %v823 = vmul.f32 %v791, %v791
    %v824 = vmul.f32 %v792, %v792
    %v825 = vmul.f32 %v793, %v793
    %v826 = vmul.f32 %v794, %v794
    %v827 = vmul.f32 %v795, %v795
    %v828 = vmul.f32 %v796, %v796
    %v829 = vmul.f32 %v797, %v797
    %v830 = vmul.f32 %v798, %v798
    %v831 = vmul.f32 %v799, %v799
    %v832 = vmul.f32 %v800, %v800
    %v833 = vmul.f32 %v801, %v801
    %v834 = vmul.f32 %v802, %v802
    %v835 = vmul.f32 %v803, %v803
    %v836 = vmul.f32 %v804, %v804
    %v837 = vmul.f32 %v805, %v805
    %v838 = vmul.f32 %v806, %v806
    %v839 = vmul.f32 %v807, %v807
    %840 = vadd.xlane.f32.xlu0 %v808
    %v841 = vpop.xlane.xlu0 %840
    %842 = vadd.xlane.f32.xlu0 %v809
    %v843 = vpop.xlane.xlu0 %842
    %844 = vadd.xlane.f32.xlu0 %v810
    %v845 = vpop.xlane.xlu0 %844
    %846 = vadd.xlane.f32.xlu0 %v811
    %v847 = vpop.xlane.xlu0 %846
    %848 = vadd.xlane.f32.xlu0 %v812
    %v849 = vpop.xlane.xlu0 %848
    %850 = vadd.xlane.f32.xlu0 %v813
    %v851 = vpop.xlane.xlu0 %850
    %852 = vadd.xlane.f32.xlu0 %v814
    %v853 = vpop.xlane.xlu0 %852
    %854 = vadd.xlane.f32.xlu0 %v815
    %v855 = vpop.xlane.xlu0 %854
    %856 = vadd.xlane.f32.xlu0 %v816
    %v857 = vpop.xlane.xlu0 %856
    %858 = vadd.xlane.f32.xlu0 %v817
    %v859 = vpop.xlane.xlu0 %858
    %860 = vadd.xlane.f32.xlu0 %v818
    %v861 = vpop.xlane.xlu0 %860
    %862 = vadd.xlane.f32.xlu0 %v819
    %v863 = vpop.xlane.xlu0 %862
    %864 = vadd.xlane.f32.xlu0 %v820
    %v865 = vpop.xlane.xlu0 %864
    %866 = vadd.xlane.f32.xlu0 %v821
    %v867 = vpop.xlane.xlu0 %866
    %868 = vadd.xlane.f32.xlu0 %v822
    %v869 = vpop.xlane.xlu0 %868
    %870 = vadd.xlane.f32.xlu0 %v823
    %v871 = vpop.xlane.xlu0 %870
    %872 = vadd.xlane.f32.xlu0 %v824
    %v873 = vpop.xlane.xlu0 %872
    %874 = vadd.xlane.f32.xlu0 %v825
    %v875 = vpop.xlane.xlu0 %874
    %876 = vadd.xlane.f32.xlu0 %v826
    %v877 = vpop.xlane.xlu0 %876
    %878 = vadd.xlane.f32.xlu0 %v827
    %v879 = vpop.xlane.xlu0 %878
    %880 = vadd.xlane.f32.xlu0 %v828
    %v881 = vpop.xlane.xlu0 %880
    %882 = vadd.xlane.f32.xlu0 %v829
    %v883 = vpop.xlane.xlu0 %882
    %884 = vadd.xlane.f32.xlu0 %v830
    %v885 = vpop.xlane.xlu0 %884
    %886 = vadd.xlane.f32.xlu0 %v831
    %v887 = vpop.xlane.xlu0 %886
    %888 = vadd.xlane.f32.xlu0 %v832
    %v889 = vpop.xlane.xlu0 %888
    %890 = vadd.xlane.f32.xlu0 %v833
    %v891 = vpop.xlane.xlu0 %890
    %892 = vadd.xlane.f32.xlu0 %v834
    %v893 = vpop.xlane.xlu0 %892
    %894 = vadd.xlane.f32.xlu0 %v835
    %v895 = vpop.xlane.xlu0 %894
    %896 = vadd.xlane.f32.xlu0 %v836
    %v897 = vpop.xlane.xlu0 %896
    %898 = vadd.xlane.f32.xlu0 %v837
    %v899 = vpop.xlane.xlu0 %898
    %900 = vadd.xlane.f32.xlu0 %v838
    %v901 = vpop.xlane.xlu0 %900
    %902 = vadd.xlane.f32.xlu0 %v839
    %v903 = vpop.xlane.xlu0 %902
    %v904 = vmul.f32 %v841, %v743
    %v905 = vmul.f32 %v843, %v743
    %v906 = vmul.f32 %v845, %v743
    %v907 = vmul.f32 %v847, %v743
    %v908 = vmul.f32 %v849, %v743
    %v909 = vmul.f32 %v851, %v743
    %v910 = vmul.f32 %v853, %v743
    %v911 = vmul.f32 %v855, %v743
    %v912 = vmul.f32 %v857, %v743
    %v913 = vmul.f32 %v859, %v743
    %v914 = vmul.f32 %v861, %v743
    %v915 = vmul.f32 %v863, %v743
    %v916 = vmul.f32 %v865, %v743
    %v917 = vmul.f32 %v867, %v743
    %v918 = vmul.f32 %v869, %v743
    %v919 = vmul.f32 %v871, %v743
    %v920 = vmul.f32 %v873, %v743
    %v921 = vmul.f32 %v875, %v743
    %v922 = vmul.f32 %v877, %v743
    %v923 = vmul.f32 %v879, %v743
    %v924 = vmul.f32 %v881, %v743
    %v925 = vmul.f32 %v883, %v743
    %v926 = vmul.f32 %v885, %v743
    %v927 = vmul.f32 %v887, %v743
    %v928 = vmul.f32 %v889, %v743
    %v929 = vmul.f32 %v891, %v743
    %v930 = vmul.f32 %v893, %v743
    %v931 = vmul.f32 %v895, %v743
    %v932 = vmul.f32 %v897, %v743
    %v933 = vmul.f32 %v899, %v743
    %v934 = vmul.f32 %v901, %v743
    %v935 = vmul.f32 %v903, %v743
    %v936 = vadd.f32 %v904, 1e-12
    %v937 = vadd.f32 %v905, 1e-12
    %v938 = vadd.f32 %v906, 1e-12
    %v939 = vadd.f32 %v907, 1e-12
    %v940 = vadd.f32 %v908, 1e-12
    %v941 = vadd.f32 %v909, 1e-12
    %v942 = vadd.f32 %v910, 1e-12
    %v943 = vadd.f32 %v911, 1e-12
    %v944 = vadd.f32 %v912, 1e-12
    %v945 = vadd.f32 %v913, 1e-12
    %v946 = vadd.f32 %v914, 1e-12
    %v947 = vadd.f32 %v915, 1e-12
    %v948 = vadd.f32 %v916, 1e-12
    %v949 = vadd.f32 %v917, 1e-12
    %v950 = vadd.f32 %v918, 1e-12
    %v951 = vadd.f32 %v919, 1e-12
    %v952 = vadd.f32 %v920, 1e-12
    %v953 = vadd.f32 %v921, 1e-12
    %v954 = vadd.f32 %v922, 1e-12
    %v955 = vadd.f32 %v923, 1e-12
    %v956 = vadd.f32 %v924, 1e-12
    %v957 = vadd.f32 %v925, 1e-12
    %v958 = vadd.f32 %v926, 1e-12
    %v959 = vadd.f32 %v927, 1e-12
    %v960 = vadd.f32 %v928, 1e-12
    %v961 = vadd.f32 %v929, 1e-12
    %v962 = vadd.f32 %v930, 1e-12
    %v963 = vadd.f32 %v931, 1e-12
    %v964 = vadd.f32 %v932, 1e-12
    %v965 = vadd.f32 %v933, 1e-12
    %v966 = vadd.f32 %v934, 1e-12
    %v967 = vadd.f32 %v935, 1e-12
    %v968 = vrsqrt.pop %v936
    %v969 = vrsqrt.pop %v937
    %v970 = vrsqrt.pop %v938
    %v971 = vrsqrt.pop %v939
    %v972 = vrsqrt.pop %v940
    %v973 = vrsqrt.pop %v941
    %v974 = vrsqrt.pop %v942
    %v975 = vrsqrt.pop %v943
    %v976 = vrsqrt.pop %v944
    %v977 = vrsqrt.pop %v945
    %v978 = vrsqrt.pop %v946
    %v979 = vrsqrt.pop %v947
    %v980 = vrsqrt.pop %v948
    %v981 = vrsqrt.pop %v949
    %v982 = vrsqrt.pop %v950
    %v983 = vrsqrt.pop %v951
    %v984 = vrsqrt.pop %v952
    %v985 = vrsqrt.pop %v953
    %v986 = vrsqrt.pop %v954
    %v987 = vrsqrt.pop %v955
    %v988 = vrsqrt.pop %v956
    %v989 = vrsqrt.pop %v957
    %v990 = vrsqrt.pop %v958
    %v991 = vrsqrt.pop %v959
    %v992 = vrsqrt.pop %v960
    %v993 = vrsqrt.pop %v961
    %v994 = vrsqrt.pop %v962
    %v995 = vrsqrt.pop %v963
    %v996 = vrsqrt.pop %v964
    %v997 = vrsqrt.pop %v965
    %v998 = vrsqrt.pop %v966
    %v999 = vrsqrt.pop %v967
    %v1000 = vmul.f32 %v776, %v968
    %v1001 = vmul.f32 %v777, %v969
    %v1002 = vmul.f32 %v778, %v970
    %v1003 = vmul.f32 %v779, %v971
    %v1004 = vmul.f32 %v780, %v972
    %v1005 = vmul.f32 %v781, %v973
    %v1006 = vmul.f32 %v782, %v974
    %v1007 = vmul.f32 %v783, %v975
    %v1008 = vmul.f32 %v784, %v976
    %v1009 = vmul.f32 %v785, %v977
    %v1010 = vmul.f32 %v786, %v978
    %v1011 = vmul.f32 %v787, %v979
    %v1012 = vmul.f32 %v788, %v980
    %v1013 = vmul.f32 %v789, %v981
    %v1014 = vmul.f32 %v790, %v982
    %v1015 = vmul.f32 %v791, %v983
    %v1016 = vmul.f32 %v792, %v984
    %v1017 = vmul.f32 %v793, %v985
    %v1018 = vmul.f32 %v794, %v986
    %v1019 = vmul.f32 %v795, %v987
    %v1020 = vmul.f32 %v796, %v988
    %v1021 = vmul.f32 %v797, %v989
    %v1022 = vmul.f32 %v798, %v990
    %v1023 = vmul.f32 %v799, %v991
    %v1024 = vmul.f32 %v800, %v992
    %v1025 = vmul.f32 %v801, %v993
    %v1026 = vmul.f32 %v802, %v994
    %v1027 = vmul.f32 %v803, %v995
    %v1028 = vmul.f32 %v804, %v996
    %v1029 = vmul.f32 %v805, %v997
    %v1030 = vmul.f32 %v806, %v998
    %v1031 = vmul.f32 %v807, %v999
    %v1032 = vld [vmem:[%s4] sm:$0x1]
    %v1034 = vlaneseq
    %v1035 = vshrl.u32 %v1034, 7
    %v1036 = vsub.s32 0, %v1035
    %v1037 = vrot.slane %v1032, %v1036
    %v1039 = vmul.f32 %v1000, %v1037
    %v1040 = vmul.f32 %v1001, %v1037
    %v1041 = vmul.f32 %v1002, %v1037
    %v1042 = vmul.f32 %v1003, %v1037
    %v1043 = vmul.f32 %v1004, %v1037
    %v1044 = vmul.f32 %v1005, %v1037
    %v1045 = vmul.f32 %v1006, %v1037
    %v1046 = vmul.f32 %v1007, %v1037
    %v1047 = vmul.f32 %v1008, %v1037
    %v1048 = vmul.f32 %v1009, %v1037
    %v1049 = vmul.f32 %v1010, %v1037
    %v1050 = vmul.f32 %v1011, %v1037
    %v1051 = vmul.f32 %v1012, %v1037
    %v1052 = vmul.f32 %v1013, %v1037
    %v1053 = vmul.f32 %v1014, %v1037
    %v1054 = vmul.f32 %v1015, %v1037
    %v1055 = vmul.f32 %v1016, %v1037
    %v1056 = vmul.f32 %v1017, %v1037
    %v1057 = vmul.f32 %v1018, %v1037
    %v1058 = vmul.f32 %v1019, %v1037
    %v1059 = vmul.f32 %v1020, %v1037
    %v1060 = vmul.f32 %v1021, %v1037
    %v1061 = vmul.f32 %v1022, %v1037
    %v1062 = vmul.f32 %v1023, %v1037
    %v1063 = vmul.f32 %v1024, %v1037
    %v1064 = vmul.f32 %v1025, %v1037
    %v1065 = vmul.f32 %v1026, %v1037
    %v1066 = vmul.f32 %v1027, %v1037
    %v1067 = vmul.f32 %v1028, %v1037
    %v1068 = vmul.f32 %v1029, %v1037
    %v1069 = vmul.f32 %v1030, %v1037
    %v1070 = vmul.f32 %v1031, %v1037
    %v1071 = vld [vmem:[%s5] sm:$0x1]
    %v1073 = vlaneseq
    %v1074 = vshrl.u32 %v1073, 7
    %v1075 = vsub.s32 0, %v1074
    %v1076 = vrot.slane %v1071, %v1075
    %v1078 = vadd.f32 %v1039, %v1076
    %v1079 = vadd.f32 %v1040, %v1076
    %v1080 = vadd.f32 %v1041, %v1076
    %v1081 = vadd.f32 %v1042, %v1076
    %v1082 = vadd.f32 %v1043, %v1076
    %v1083 = vadd.f32 %v1044, %v1076
    %v1084 = vadd.f32 %v1045, %v1076
    %v1085 = vadd.f32 %v1046, %v1076
    %v1086 = vadd.f32 %v1047, %v1076
    %v1087 = vadd.f32 %v1048, %v1076
    %v1088 = vadd.f32 %v1049, %v1076
    %v1089 = vadd.f32 %v1050, %v1076
    %v1090 = vadd.f32 %v1051, %v1076
    %v1091 = vadd.f32 %v1052, %v1076
    %v1092 = vadd.f32 %v1053, %v1076
    %v1093 = vadd.f32 %v1054, %v1076
    %v1094 = vadd.f32 %v1055, %v1076
    %v1095 = vadd.f32 %v1056, %v1076
    %v1096 = vadd.f32 %v1057, %v1076
    %v1097 = vadd.f32 %v1058, %v1076
    %v1098 = vadd.f32 %v1059, %v1076
    %v1099 = vadd.f32 %v1060, %v1076
    %v1100 = vadd.f32 %v1061, %v1076
    %v1101 = vadd.f32 %v1062, %v1076
    %v1102 = vadd.f32 %v1063, %v1076
    %v1103 = vadd.f32 %v1064, %v1076
    %v1104 = vadd.f32 %v1065, %v1076
    %v1105 = vadd.f32 %v1066, %v1076
    %v1106 = vadd.f32 %v1067, %v1076
    %v1107 = vadd.f32 %v1068, %v1076
    %v1108 = vadd.f32 %v1069, %v1076
    %v1109 = vadd.f32 %v1070, %v1076
    %v1110 = vpack.c.bf16 %v1079, %v1078
    %v1111 = vpack.c.bf16 %v1081, %v1080
    %v1112 = vpack.c.bf16 %v1083, %v1082
    %v1113 = vpack.c.bf16 %v1085, %v1084
    %v1114 = vpack.c.bf16 %v1087, %v1086
    %v1115 = vpack.c.bf16 %v1089, %v1088
    %v1116 = vpack.c.bf16 %v1091, %v1090
    %v1117 = vpack.c.bf16 %v1093, %v1092
    %v1118 = vpack.c.bf16 %v1095, %v1094
    %v1119 = vpack.c.bf16 %v1097, %v1096
    %v1120 = vpack.c.bf16 %v1099, %v1098
    %v1121 = vpack.c.bf16 %v1101, %v1100
    %v1122 = vpack.c.bf16 %v1103, %v1102
    %v1123 = vpack.c.bf16 %v1105, %v1104
    %v1124 = vpack.c.bf16 %v1107, %v1106
    %v1125 = vpack.c.bf16 %v1109, %v1108
    %v1142 = vunpack.c.l.b16 %v1110
    %v1143 = vunpack.c.h.b16 %v1110
    %v1144 = vunpack.c.l.b16 %v1111
    %v1145 = vunpack.c.h.b16 %v1111
    %v1146 = vunpack.c.l.b16 %v1112
    %v1147 = vunpack.c.h.b16 %v1112
    %v1148 = vunpack.c.l.b16 %v1113
    %v1149 = vunpack.c.h.b16 %v1113
    %v1150 = vunpack.c.l.b16 %v1114
    %v1151 = vunpack.c.h.b16 %v1114
    %v1152 = vunpack.c.l.b16 %v1115
    %v1153 = vunpack.c.h.b16 %v1115
    %v1154 = vunpack.c.l.b16 %v1116
    %v1155 = vunpack.c.h.b16 %v1116
    %v1156 = vunpack.c.l.b16 %v1117
    %v1157 = vunpack.c.h.b16 %v1117
    %v1158 = vunpack.c.l.b16 %v1118
    %v1159 = vunpack.c.h.b16 %v1118
    %v1160 = vunpack.c.l.b16 %v1119
    %v1161 = vunpack.c.h.b16 %v1119
    %v1162 = vunpack.c.l.b16 %v1120
    %v1163 = vunpack.c.h.b16 %v1120
    %v1164 = vunpack.c.l.b16 %v1121
    %v1165 = vunpack.c.h.b16 %v1121
    %v1166 = vunpack.c.l.b16 %v1122
    %v1167 = vunpack.c.h.b16 %v1122
    %v1168 = vunpack.c.l.b16 %v1123
    %v1169 = vunpack.c.h.b16 %v1123
    %v1170 = vunpack.c.l.b16 %v1124
    %v1171 = vunpack.c.h.b16 %v1124
    %v1172 = vunpack.c.l.b16 %v1125
    %v1173 = vunpack.c.h.b16 %v1125
    %v1174 = vpack.c.b16 %v1142, %v1142
    %v1175 = vpack.c.b16 %v1143, %v1143
    %v1176 = vpack.c.b16 %v1144, %v1144
    %v1177 = vpack.c.b16 %v1145, %v1145
    %v1178 = vpack.c.b16 %v1146, %v1146
    %v1179 = vpack.c.b16 %v1147, %v1147
    %v1180 = vpack.c.b16 %v1148, %v1148
    %v1181 = vpack.c.b16 %v1149, %v1149
    %v1182 = vpack.c.b16 %v1150, %v1150
    %v1183 = vpack.c.b16 %v1151, %v1151
    %v1184 = vpack.c.b16 %v1152, %v1152
    %v1185 = vpack.c.b16 %v1153, %v1153
    %v1186 = vpack.c.b16 %v1154, %v1154
    %v1187 = vpack.c.b16 %v1155, %v1155
    %v1188 = vpack.c.b16 %v1156, %v1156
    %v1189 = vpack.c.b16 %v1157, %v1157
    %v1190 = vpack.c.b16 %v1158, %v1158
    %v1191 = vpack.c.b16 %v1159, %v1159
    %v1192 = vpack.c.b16 %v1160, %v1160
    %v1193 = vpack.c.b16 %v1161, %v1161
    %v1194 = vpack.c.b16 %v1162, %v1162
    %v1195 = vpack.c.b16 %v1163, %v1163
    %v1196 = vpack.c.b16 %v1164, %v1164
    %v1197 = vpack.c.b16 %v1165, %v1165
    %v1198 = vpack.c.b16 %v1166, %v1166
    %v1199 = vpack.c.b16 %v1167, %v1167
    %v1200 = vpack.c.b16 %v1168, %v1168
    %v1201 = vpack.c.b16 %v1169, %v1169
    %v1202 = vpack.c.b16 %v1170, %v1170
    %v1203 = vpack.c.b16 %v1171, %v1171
    %v1204 = vpack.c.b16 %v1172, %v1172
    %v1205 = vpack.c.b16 %v1173, %v1173
    %1238 = vst [vmem:[%s6] sm:$0xf] %v1174
    %1239 = vst [vmem:[%s6 + $0x4] sm:$0xf] %v1175
    %1240 = vst [vmem:[%s6 + $0x8] sm:$0xf] %v1176
    %1241 = vst [vmem:[%s6 + $0xc] sm:$0xf] %v1177
    %1242 = vst [vmem:[%s6 + $0x10] sm:$0xf] %v1178
    %1243 = vst [vmem:[%s6 + $0x14] sm:$0xf] %v1179
    %1244 = vst [vmem:[%s6 + $0x18] sm:$0xf] %v1180
    %1245 = vst [vmem:[%s6 + $0x1c] sm:$0xf] %v1181
    %1246 = vst [vmem:[%s6 + $0x20] sm:$0xf] %v1182
    %1247 = vst [vmem:[%s6 + $0x24] sm:$0xf] %v1183
    %1248 = vst [vmem:[%s6 + $0x28] sm:$0xf] %v1184
    %1249 = vst [vmem:[%s6 + $0x2c] sm:$0xf] %v1185
    %1250 = vst [vmem:[%s6 + $0x30] sm:$0xf] %v1186
    %1251 = vst [vmem:[%s6 + $0x34] sm:$0xf] %v1187
    %1252 = vst [vmem:[%s6 + $0x38] sm:$0xf] %v1188
    %1253 = vst [vmem:[%s6 + $0x3c] sm:$0xf] %v1189
    %1254 = vst [vmem:[%s6 + $0x40] sm:$0xf] %v1190
    %1255 = vst [vmem:[%s6 + $0x44] sm:$0xf] %v1191
    %1256 = vst [vmem:[%s6 + $0x48] sm:$0xf] %v1192
    %1257 = vst [vmem:[%s6 + $0x4c] sm:$0xf] %v1193
    %1258 = vst [vmem:[%s6 + $0x50] sm:$0xf] %v1194
    %1259 = vst [vmem:[%s6 + $0x54] sm:$0xf] %v1195
    %1260 = vst [vmem:[%s6 + $0x58] sm:$0xf] %v1196
    %1261 = vst [vmem:[%s6 + $0x5c] sm:$0xf] %v1197
    %1262 = vst [vmem:[%s6 + $0x60] sm:$0xf] %v1198
    %1263 = vst [vmem:[%s6 + $0x64] sm:$0xf] %v1199
    %1264 = vst [vmem:[%s6 + $0x68] sm:$0xf] %v1200
    %1265 = vst [vmem:[%s6 + $0x6c] sm:$0xf] %v1201
    %1266 = vst [vmem:[%s6 + $0x70] sm:$0xf] %v1202
    %1267 = vst [vmem:[%s6 + $0x74] sm:$0xf] %v1203
    %1268 = vst [vmem:[%s6 + $0x78] sm:$0xf] %v1204
    %1269 = vst [vmem:[%s6 + $0x7c] sm:$0xf] %v1205
  $region33: #{bert_encoder_forward.12} parent=0 // pred_fallthru
    _
  // Predicated region
  $region34: #{bert_encoder_forward.12} parent=0 // pred_check
    _
  $region35: #{bert_encoder_forward.12} parent=0 // pred_check_branch
    %1271 = sbr.rel (0) target = $region37
  $region36: #{bert_encoder_forward.12} parent=0 // pred_region
    _
  $region37: #{bert_encoder_forward.12} parent=0 // pred_fallthru
    _
  // Predicated region
  $region38: #{bert_encoder_forward.12} parent=0 // pred_check
    _
  $region39: #{bert_encoder_forward.12} parent=0 // pred_check_branch
    %1273 = sbr.rel (0) target = $region41
  $region40: #{bert_encoder_forward.12} parent=0 // pred_region
    _
  $region41: #{bert_encoder_forward.12} parent=0 // pred_fallthru
    _

// kernel: bert_encoder_forward.11
$region0: #{bert_encoder_forward.11}
  #allocation0 [shape = 'u32[]', space=smem, size = 0x4, offset = 0x4, fixed_abs, tag = 'smem constant byte address 0x4 - core index']
  #allocation1 [shape = 'u32[144,128]{1,0:T(1,128)}', space=vmem, size = 0x12000, scoped, tag = 'internal scratch']
  %s0 = inlined_call_operand.vmem [shape: bf16[2,128,384], index: 0, kind: input, shape index: {}]
  %s1 = inlined_call_operand.vmem [shape: f32[2,1,128], index: 1, kind: input, shape index: {}]
  %s2 = inlined_call_operand.vmem [shape: bf16[2,128,128], index: 2, kind: output, shape index: {}]
  %s3 = sld [smem:[#allocation0]]
  $region41: #{bert_encoder_forward.11} parent=0
    _
  %s5 = ssub.s32 1, %s3
  %s6 = scalar_select 0, %s5, %s3
  loop: start=0, step=1, limit=4
  $region2: #{bert_encoder_forward.11} parent=0 // loop_pre_header
    _
  $region3: #{bert_encoder_forward.11} parent=0 // loop_header
    %s8 = sphi 0, %s12
    %p9 = scmp.ge.s32.totalorder %s8, 4
    %s15 = sphi 0, %s27
    %s16 = sphi 0, %s23
    %s17 = sphi 0, %s15
    %s18 = sphi 0, %s16
    %s19 = sphi 0, %s17
    %s20 = sphi 0, %s18
    %s32 = sphi 0, %s34
    %s35 = sphi 0, %s32
    %s36 = sphi 0, %s35
    %s52 = sphi 0, %s36
    %s58 = sphi 0, %s60
    %s61 = sphi 0, %s58
    %s62 = sphi 0, %s61
    %s78 = sphi 0, %s62
    %s86 = sphi 0, %s88
    %s89 = sphi 0, %s86
    %s90 = sphi 0, %s89
    %s106 = sphi 0, %s90
  $region4: #{bert_encoder_forward.11} parent=0 // loop_header_branch
    %11 = sbr.rel (%p9) target = $region8
  $region5: #{bert_encoder_forward.11} parent=0 // loop_body
    %s13 = ssub.s32 %s8, 1
    %s14 = ssub.s32 %s8, 2
    %s21 = sadd.s32 1, %s16
    %p22 = scmp.ge.s32.totalorder %s21, 1
    %s23 = scalar_select %p22, 0, %s21
    %s24 = sadd.s32 1, %s15
    %s25 = scalar_select %p22, %s24, %s15
    %p26 = scmp.ge.s32.totalorder %s25, 2
    %s27 = scalar_select %p26, 0, %s25
    %s28 = ssub.s32 %s15, %s27
    %s29 = ssub.s32 %s16, %s23
    %s30 = sor.u32 %s28, %s29
    %p31 = scmp.eq.s32.totalorder %s30, 0
    %s33 = sadd.s32 %s32, 1
    %s34 = scalar_select %p31, %s32, %s33
    %p37 = pneg %p31
    %p38 = scmp.eq.s32.totalorder %s8, 1
    %p39 = por %p37, %p38
    %p40 = scmp.ne.s32.totalorder %s32, %s35
    %p41 = scmp.eq.s32.totalorder %s8, 0
    %p42 = por %p40, %p41
    %p43 = scmp.ne.s32.totalorder %s32, %s35
    %p44 = scmp.eq.s32.totalorder %s13, 1
    %p45 = por %p43, %p44
    %p46 = scmp.ne.s32.totalorder %s35, %s36
    %p47 = scmp.eq.s32.totalorder %s13, 0
    %p48 = por %p46, %p47
    %p49 = scmp.ne.s32.totalorder %s35, %s36
    %p50 = scmp.eq.s32.totalorder %s14, 1
    %p51 = por %p49, %p50
    %p53 = scmp.ne.s32.totalorder %s36, %s52
    %p54 = scmp.eq.s32.totalorder %s14, 0
    %p55 = por %p53, %p54
    %s56 = ssub.s32 %s15, %s27
    %p57 = scmp.eq.s32.totalorder %s56, 0
    %s59 = sadd.s32 %s58, 1
    %s60 = scalar_select %p57, %s58, %s59
    %p63 = pneg %p57
    %p64 = scmp.eq.s32.totalorder %s8, 1
    %p65 = por %p63, %p64
    %p66 = scmp.ne.s32.totalorder %s58, %s61
    %p67 = scmp.eq.s32.totalorder %s8, 0
    %p68 = por %p66, %p67
    %p69 = scmp.ne.s32.totalorder %s58, %s61
    %p70 = scmp.eq.s32.totalorder %s13, 1
    %p71 = por %p69, %p70
    %p72 = scmp.ne.s32.totalorder %s61, %s62
    %p73 = scmp.eq.s32.totalorder %s13, 0
    %p74 = por %p72, %p73
    %p75 = scmp.ne.s32.totalorder %s61, %s62
    %p76 = scmp.eq.s32.totalorder %s14, 1
    %p77 = por %p75, %p76
    %p79 = scmp.ne.s32.totalorder %s62, %s78
    %p80 = scmp.eq.s32.totalorder %s14, 0
    %p81 = por %p79, %p80
    %s82 = ssub.s32 %s15, %s27
    %s83 = ssub.s32 %s16, %s23
    %s84 = sor.u32 %s82, %s83
    %p85 = scmp.eq.s32.totalorder %s84, 0
    %s87 = sadd.s32 %s86, 1
    %s88 = scalar_select %p85, %s86, %s87
    %p91 = pneg %p85
    %p92 = scmp.eq.s32.totalorder %s8, 1
    %p93 = por %p91, %p92
    %p94 = scmp.ne.s32.totalorder %s86, %s89
    %p95 = scmp.eq.s32.totalorder %s8, 0
    %p96 = por %p94, %p95
    %p97 = scmp.ne.s32.totalorder %s86, %s89
    %p98 = scmp.eq.s32.totalorder %s13, 1
    %p99 = por %p97, %p98
    %p100 = scmp.ne.s32.totalorder %s89, %s90
    %p101 = scmp.eq.s32.totalorder %s13, 0
    %p102 = por %p100, %p101
    %p103 = scmp.ne.s32.totalorder %s89, %s90
    %p104 = scmp.eq.s32.totalorder %s14, 1
    %p105 = por %p103, %p104
    %p107 = scmp.ne.s32.totalorder %s90, %s106
    %p108 = scmp.eq.s32.totalorder %s14, 0
    %p109 = por %p107, %p108
    %p110 = scmp.le.s32.totalorder 1, %s8
    %p111 = scmp.lt.s32.totalorder %s8, 3
    %p112 = pnand %p110, %p111
    %p113 = pneg %p112
    // Predicated region
    $region9: #{bert_encoder_forward.11} parent=5 // pred_check
      _
    $region10: #{bert_encoder_forward.11} parent=5 // pred_check_branch
      %115 = sbr.rel (%p112) target = $region12
    $region11: #{bert_encoder_forward.11} parent=5 // pred_region
      %s116 = ssub.s32 %s8, 1
    $region12: #{bert_encoder_forward.11} parent=5 // pred_fallthru
      _
    %p117 = scmp.lt.s32.totalorder %s8, 2
    // Predicated region
    $region13: #{bert_encoder_forward.11} parent=5 // pred_check
      %p118 = pneg %p117
    $region14: #{bert_encoder_forward.11} parent=5 // pred_check_branch
      %120 = sbr.rel (%p118) target = $region16
    $region15: #{bert_encoder_forward.11} parent=5 // pred_region
      // Predicated region
      $region17: #{bert_encoder_forward.11} parent=15 // pred_check
        %p121 = pneg %p42
      $region18: #{bert_encoder_forward.11} parent=15 // pred_check_branch
        %123 = sbr.rel (%p121) target = $region20
      $region19: #{bert_encoder_forward.11} parent=15 // pred_region
        %s124 = smul.u32 3, %s16
        %p125 = scmp.lt.s32.totalorder %s15, 1
        %s126 = scalar_select %p125, %s15, 1
        %p127 = scmp.lt.s32.totalorder %s124, 2
        %s128 = scalar_select %p127, %s124, 2
        %s129 = smul.addr %s126, 48
        %s130 = sadd.s32 %s128, %s129
        %s131 = smul.addr %s130, 4
        %s132 = scalar_lea.vmem %s0, %s131
        %s133 = smul.u32 3, %s16
      $region20: #{bert_encoder_forward.11} parent=15 // pred_fallthru
        _
      // Predicated region
      $region21: #{bert_encoder_forward.11} parent=15 // pred_check
        %p134 = pneg %p68
      $region22: #{bert_encoder_forward.11} parent=15 // pred_check_branch
        %136 = sbr.rel (%p134) target = $region24
      $region23: #{bert_encoder_forward.11} parent=15 // pred_region
        %p137 = scmp.lt.s32.totalorder %s15, 1
        %s138 = scalar_select %p137, %s15, 1
        %s139 = scalar_lea.vmem %s1, %s138
      $region24: #{bert_encoder_forward.11} parent=15 // pred_fallthru
        _
    $region16: #{bert_encoder_forward.11} parent=5 // pred_fallthru
      _
    %p140 = scmp.le.s32.totalorder 1, %s8
    %p141 = scmp.lt.s32.totalorder %s8, 3
    %p142 = pnand %p140, %p141
    %p143 = pneg %p142
    // Predicated region
    $region25: #{bert_encoder_forward.11} parent=5 // pred_check
      _
    $region26: #{bert_encoder_forward.11} parent=5 // pred_check_branch
      %145 = sbr.rel (%p142) target = $region28
    $region27: #{bert_encoder_forward.11} parent=5 // pred_region
      %s146 = ssub.s32 %s8, 1
      %s147 = smul.u32 3, %s18
      %p148 = scmp.lt.s32.totalorder %s17, 1
      %s149 = scalar_select %p148, %s17, 1
      %p150 = scmp.lt.s32.totalorder %s147, 2
      %s151 = scalar_select %p150, %s147, 2
      %s152 = smul.addr %s149, 48
      %s153 = sadd.s32 %s151, %s152
      %s154 = smul.addr %s153, 4
      %s155 = scalar_lea.vmem %s0, %s154
      %p156 = pneg %p48
      %p157 = pneg %p45
      %p158 = scmp.lt.s32.totalorder %s17, 1
      %s159 = scalar_select %p158, %s17, 1
      %s160 = scalar_lea.vmem %s1, %s159
      %p161 = pneg %p74
      %p162 = pneg %p71
      %p163 = pneg %p102
      %p164 = pneg %p99
      %p165 = scmp.lt.s32.totalorder %s17, 1
      %s166 = scalar_select %p165, %s17, 1
      %p167 = scmp.lt.s32.totalorder %s18, 0
      %s168 = scalar_select %p167, %s18, 0
      %s169 = smul.addr %s166, 16
      %s170 = sadd.s32 %s168, %s169
      %s171 = smul.addr %s170, 4
      %s172 = scalar_lea.vmem %s2, %s171
      %s173 = smul.u32 3, %s18
      %p174 = scmp.lt.s32.totalorder %s17, 1
      %s175 = scalar_select %p174, %s17, 1
      %p176 = scmp.lt.s32.totalorder %s173, 2
      %s177 = scalar_select %p176, %s173, 2
      %s178 = smul.addr %s175, 48
      %s179 = sadd.s32 %s177, %s178
      %s180 = smul.addr %s179, 4
      %s181 = scalar_lea.vmem %s0, %s180
      %s182 = smul.u32 3, %s18
      %p183 = scmp.lt.s32.totalorder %s17, 1
      %s184 = scalar_select %p183, %s17, 1
      %s185 = scalar_lea.vmem %s1, %s184
      %p186 = scmp.lt.s32.totalorder %s17, 1
      %s187 = scalar_select %p186, %s17, 1
      %p188 = scmp.lt.s32.totalorder %s18, 0
      %s189 = scalar_select %p188, %s18, 0
      %s190 = smul.addr %s187, 16
      %s191 = sadd.s32 %s189, %s190
      %s192 = smul.addr %s191, 4
      %s193 = scalar_lea.vmem %s2, %s192
      %v195 = vld [vmem:[%s185] sm:$0x1]
      %v197 = vlaneseq
      %v198 = vshrl.u32 %v197, 7
      %v199 = vsub.s32 0, %v198
      %v200 = vrot.slane %v195, %v199
      %v202 = vld [vmem:[%s181] sm:$0xf]
      %v203 = vld [vmem:[%s181 + $0xc] sm:$0xf]
      %v204 = vld [vmem:[%s181 + $0x18] sm:$0xf]
      %v205 = vld [vmem:[%s181 + $0x24] sm:$0xf]
      %v206 = vld [vmem:[%s181 + $0x30] sm:$0xf]
      %v207 = vld [vmem:[%s181 + $0x3c] sm:$0xf]
      %v208 = vld [vmem:[%s181 + $0x48] sm:$0xf]
      %v209 = vld [vmem:[%s181 + $0x54] sm:$0xf]
      %v210 = vld [vmem:[%s181 + $0x60] sm:$0xf]
      %v211 = vld [vmem:[%s181 + $0x6c] sm:$0xf]
      %v212 = vld [vmem:[%s181 + $0x78] sm:$0xf]
      %v213 = vld [vmem:[%s181 + $0x84] sm:$0xf]
      %v214 = vld [vmem:[%s181 + $0x90] sm:$0xf]
      %v215 = vld [vmem:[%s181 + $0x9c] sm:$0xf]
      %v216 = vld [vmem:[%s181 + $0xa8] sm:$0xf]
      %v217 = vld [vmem:[%s181 + $0xb4] sm:$0xf]
      %v218 = vld [vmem:[%s181 + $0x4] sm:$0xf]
      %v219 = vld [vmem:[%s181 + $0x10] sm:$0xf]
      %v220 = vld [vmem:[%s181 + $0x1c] sm:$0xf]
      %v221 = vld [vmem:[%s181 + $0x28] sm:$0xf]
      %v222 = vld [vmem:[%s181 + $0x34] sm:$0xf]
      %v223 = vld [vmem:[%s181 + $0x40] sm:$0xf]
      %v224 = vld [vmem:[%s181 + $0x4c] sm:$0xf]
      %v225 = vld [vmem:[%s181 + $0x58] sm:$0xf]
      %v226 = vld [vmem:[%s181 + $0x64] sm:$0xf]
      %v227 = vld [vmem:[%s181 + $0x70] sm:$0xf]
      %v228 = vld [vmem:[%s181 + $0x7c] sm:$0xf]
      %v229 = vld [vmem:[%s181 + $0x88] sm:$0xf]
      %v230 = vld [vmem:[%s181 + $0x94] sm:$0xf]
      %v231 = vld [vmem:[%s181 + $0xa0] sm:$0xf]
      %v232 = vld [vmem:[%s181 + $0xac] sm:$0xf]
      %v233 = vld [vmem:[%s181 + $0xb8] sm:$0xf]
      %v234 = vld [vmem:[%s181 + $0x8] sm:$0xf]
      %v235 = vld [vmem:[%s181 + $0x14] sm:$0xf]
      %v236 = vld [vmem:[%s181 + $0x20] sm:$0xf]
      %v237 = vld [vmem:[%s181 + $0x2c] sm:$0xf]
      %v238 = vld [vmem:[%s181 + $0x38] sm:$0xf]
      %v239 = vld [vmem:[%s181 + $0x44] sm:$0xf]
      %v240 = vld [vmem:[%s181 + $0x50] sm:$0xf]
      %v241 = vld [vmem:[%s181 + $0x5c] sm:$0xf]
      %v242 = vld [vmem:[%s181 + $0x68] sm:$0xf]
      %v243 = vld [vmem:[%s181 + $0x74] sm:$0xf]
      %v244 = vld [vmem:[%s181 + $0x80] sm:$0xf]
      %v245 = vld [vmem:[%s181 + $0x8c] sm:$0xf]
      %v246 = vld [vmem:[%s181 + $0x98] sm:$0xf]
      %v247 = vld [vmem:[%s181 + $0xa4] sm:$0xf]
      %v248 = vld [vmem:[%s181 + $0xb0] sm:$0xf]
      %v249 = vld [vmem:[%s181 + $0xbc] sm:$0xf]
      %v266 = vunpack.c.l.b16 %v202
      %v267 = vunpack.c.l.b16 %v203
      %v268 = vunpack.c.l.b16 %v204
      %v269 = vunpack.c.l.b16 %v205
      %v270 = vunpack.c.l.b16 %v206
      %v271 = vunpack.c.l.b16 %v207
      %v272 = vunpack.c.l.b16 %v208
      %v273 = vunpack.c.l.b16 %v209
      %v274 = vunpack.c.l.b16 %v210
      %v275 = vunpack.c.l.b16 %v211
      %v276 = vunpack.c.l.b16 %v212
      %v277 = vunpack.c.l.b16 %v213
      %v278 = vunpack.c.l.b16 %v214
      %v279 = vunpack.c.l.b16 %v215
      %v280 = vunpack.c.l.b16 %v216
      %v281 = vunpack.c.l.b16 %v217
      %v282 = vpack.c.b16 %v267, %v266
      %v283 = vpack.c.b16 %v269, %v268
      %v284 = vpack.c.b16 %v271, %v270
      %v285 = vpack.c.b16 %v273, %v272
      %v286 = vpack.c.b16 %v275, %v274
      %v287 = vpack.c.b16 %v277, %v276
      %v288 = vpack.c.b16 %v279, %v278
      %v289 = vpack.c.b16 %v281, %v280
      %v306 = vunpack.c.l.b16 %v218
      %v307 = vunpack.c.l.b16 %v219
      %v308 = vunpack.c.l.b16 %v220
      %v309 = vunpack.c.l.b16 %v221
      %v310 = vunpack.c.l.b16 %v222
      %v311 = vunpack.c.l.b16 %v223
      %v312 = vunpack.c.l.b16 %v224
      %v313 = vunpack.c.l.b16 %v225
      %v314 = vunpack.c.l.b16 %v226
      %v315 = vunpack.c.l.b16 %v227
      %v316 = vunpack.c.l.b16 %v228
      %v317 = vunpack.c.l.b16 %v229
      %v318 = vunpack.c.l.b16 %v230
      %v319 = vunpack.c.l.b16 %v231
      %v320 = vunpack.c.l.b16 %v232
      %v321 = vunpack.c.l.b16 %v233
      %v322 = vpack.c.b16 %v307, %v306
      %v323 = vpack.c.b16 %v309, %v308
      %v324 = vpack.c.b16 %v311, %v310
      %v325 = vpack.c.b16 %v313, %v312
      %v326 = vpack.c.b16 %v315, %v314
      %v327 = vpack.c.b16 %v317, %v316
      %v328 = vpack.c.b16 %v319, %v318
      %v329 = vpack.c.b16 %v321, %v320
      %vm330 = vcmask 261120
      %v332 = vsel %vm330, %v282, 0
      %v335 = vsel %vm330, %v283, 0
      %v338 = vsel %vm330, %v284, 0
      %v341 = vsel %vm330, %v285, 0
      %v344 = vsel %vm330, %v286, 0
      %v347 = vsel %vm330, %v287, 0
      %v350 = vsel %vm330, %v288, 0
      %v353 = vsel %vm330, %v289, 0
      %v356 = vsel %vm330, %v322, 0
      %v359 = vsel %vm330, %v323, 0
      %v362 = vsel %vm330, %v324, 0
      %v365 = vsel %vm330, %v325, 0
      %v368 = vsel %vm330, %v326, 0
      %v371 = vsel %vm330, %v327, 0
      %v374 = vsel %vm330, %v328, 0
      %v377 = vsel %vm330, %v329, 0
      %379 = vmatprep.subr.bf16.mxu0 0
      %380 = vmatpush1.bf16.xpose.msra.mxu0 %v356
      %381 = vmatprep.subr.bf16.mxu0 0
      %382 = vmatpush1.bf16.xpose.msra.mxu0 %v359
      %383 = vmatprep.subr.bf16.mxu0 0
      %384 = vmatpush1.bf16.xpose.msra.mxu0 %v362
      %385 = vmatprep.subr.bf16.mxu0 0
      %386 = vmatpush1.bf16.xpose.msra.mxu0 %v365
      %387 = vmatprep.subr.bf16.mxu0 0
      %388 = vmatpush1.bf16.xpose.msra.mxu0 %v368
      %389 = vmatprep.subr.bf16.mxu0 0
      %390 = vmatpush1.bf16.xpose.msra.mxu0 %v371
      %391 = vmatprep.subr.bf16.mxu0 0
      %392 = vmatpush1.bf16.xpose.msra.mxu0 %v374
      %393 = vmatprep.subr.bf16.mxu0 0
      %394 = vmatpush1.bf16.xpose.msra.mxu0 %v377
      %395 = vmatprep.subr.bf16.mxu0 0
      %396 = vmatpush1.bf16.xpose.msra.mxu0 0
      %397 = vmatprep.subr.bf16.mxu0 0
      %398 = vmatpush1.bf16.xpose.msra.mxu0 0
      %399 = vmatprep.subr.bf16.mxu0 0
      %400 = vmatpush1.bf16.xpose.msra.mxu0 0
      %401 = vmatprep.subr.bf16.mxu0 0
      %402 = vmatpush1.bf16.xpose.msra.mxu0 0
      %403 = vmatprep.subr.bf16.mxu0 0
      %404 = vmatpush1.bf16.xpose.msra.mxu0 0
      %405 = vmatprep.subr.bf16.mxu0 0
      %406 = vmatpush1.bf16.xpose.msra.mxu0 0
      %407 = vmatprep.subr.bf16.mxu0 0
      %408 = vmatpush1.bf16.xpose.msra.mxu0 0
      %409 = vmatprep.subr.bf16.mxu0 0
      %410 = vmatpush1.bf16.xpose.msra.mxu0 0
      %411 = vmatprep.mubr.bf16.mxu0 0
      %412 = vmatmul.mubr.bf16.gmra.mrb[0].mxu0 %v332
      %v413 = vpop.f32.mrb[0].mxu0
      %v414 = vadd.f32 %v200, %v413
      %v415 = vpop.f32.mrb[0].mxu0
      %v416 = vpop.f32.mrb[0].mxu0
      %v417 = vadd.f32 %v200, %v416
      %v418 = vpop.f32.mrb[0].mxu0
      %419 = vmatprep.mubr.bf16.mxu0 0
      %420 = vmatmul.mubr.bf16.gmra.mrb[0].mxu0 %v335
      %v421 = vpop.f32.mrb[0].mxu0
      %v422 = vadd.f32 %v200, %v421
      %v423 = vpop.f32.mrb[0].mxu0
      %v424 = vpop.f32.mrb[0].mxu0
      %v425 = vadd.f32 %v200, %v424
      %v426 = vpop.f32.mrb[0].mxu0
      %427 = vmatprep.mubr.bf16.mxu0 0
      %428 = vmatmul.mubr.bf16.gmra.mrb[0].mxu0 %v338
      %v429 = vpop.f32.mrb[0].mxu0
      %v430 = vadd.f32 %v200, %v429
      %v431 = vpop.f32.mrb[0].mxu0
      %v432 = vpop.f32.mrb[0].mxu0
      %v433 = vadd.f32 %v200, %v432
      %v434 = vpop.f32.mrb[0].mxu0
      %435 = vmatprep.mubr.bf16.mxu0 0
      %436 = vmatmul.mubr.bf16.gmra.mrb[0].mxu0 %v341
      %v437 = vpop.f32.mrb[0].mxu0
      %v438 = vadd.f32 %v200, %v437
      %v439 = vpop.f32.mrb[0].mxu0
      %v440 = vpop.f32.mrb[0].mxu0
      %v441 = vadd.f32 %v200, %v440
      %v442 = vpop.f32.mrb[0].mxu0
      %443 = vmatprep.mubr.bf16.mxu0 0
      %444 = vmatmul.mubr.bf16.gmra.mrb[0].mxu0 %v344
      %v445 = vpop.f32.mrb[0].mxu0
      %v446 = vadd.f32 %v200, %v445
      %v447 = vpop.f32.mrb[0].mxu0
      %v448 = vpop.f32.mrb[0].mxu0
      %v449 = vadd.f32 %v200, %v448
      %v450 = vpop.f32.mrb[0].mxu0
      %451 = vmatprep.mubr.bf16.mxu0 0
      %452 = vmatmul.mubr.bf16.gmra.mrb[0].mxu0 %v347
      %v453 = vpop.f32.mrb[0].mxu0
      %v454 = vadd.f32 %v200, %v453
      %v455 = vpop.f32.mrb[0].mxu0
      %v456 = vpop.f32.mrb[0].mxu0
      %v457 = vadd.f32 %v200, %v456
      %v458 = vpop.f32.mrb[0].mxu0
      %459 = vmatprep.mubr.bf16.mxu0 0
      %460 = vmatmul.mubr.bf16.gmra.mrb[0].mxu0 %v350
      %v461 = vpop.f32.mrb[0].mxu0
      %v462 = vadd.f32 %v200, %v461
      %v463 = vpop.f32.mrb[0].mxu0
      %v464 = vpop.f32.mrb[0].mxu0
      %v465 = vadd.f32 %v200, %v464
      %v466 = vpop.f32.mrb[0].mxu0
      %467 = vmatprep.mubr.bf16.mxu0 0
      %468 = vmatmul.mubr.bf16.gmra.mrb[0].mxu0 %v353
      %v469 = vpop.f32.mrb[0].mxu0
      %v470 = vadd.f32 %v200, %v469
      %v471 = vpop.f32.mrb[0].mxu0
      %v472 = vpop.f32.mrb[0].mxu0
      %v473 = vadd.f32 %v200, %v472
      %v474 = vpop.f32.mrb[0].mxu0
      %475 = vdwg.mxu0
      %476 = vmax.xlane.f32.xlu0 %v414
      %v477 = vpop.xlane.xlu0 %476
      %478 = vmax.xlane.f32.xlu0 %v417
      %v479 = vpop.xlane.xlu0 %478
      %480 = vmax.xlane.f32.xlu0 %v422
      %v481 = vpop.xlane.xlu0 %480
      %482 = vmax.xlane.f32.xlu0 %v425
      %v483 = vpop.xlane.xlu0 %482
      %484 = vmax.xlane.f32.xlu0 %v430
      %v485 = vpop.xlane.xlu0 %484
      %486 = vmax.xlane.f32.xlu0 %v433
      %v487 = vpop.xlane.xlu0 %486
      %488 = vmax.xlane.f32.xlu0 %v438
      %v489 = vpop.xlane.xlu0 %488
      %490 = vmax.xlane.f32.xlu0 %v441
      %v491 = vpop.xlane.xlu0 %490
      %492 = vmax.xlane.f32.xlu0 %v446
      %v493 = vpop.xlane.xlu0 %492
      %494 = vmax.xlane.f32.xlu0 %v449
      %v495 = vpop.xlane.xlu0 %494
      %496 = vmax.xlane.f32.xlu0 %v454
      %v497 = vpop.xlane.xlu0 %496
      %498 = vmax.xlane.f32.xlu0 %v457
      %v499 = vpop.xlane.xlu0 %498
      %500 = vmax.xlane.f32.xlu0 %v462
      %v501 = vpop.xlane.xlu0 %500
      %502 = vmax.xlane.f32.xlu0 %v465
      %v503 = vpop.xlane.xlu0 %502
      %504 = vmax.xlane.f32.xlu0 %v470
      %v505 = vpop.xlane.xlu0 %504
      %506 = vmax.xlane.f32.xlu0 %v473
      %v507 = vpop.xlane.xlu0 %506
      %v508 = vsub.f32 %v414, %v477
      %v509 = vsub.f32 %v417, %v479
      %v510 = vsub.f32 %v422, %v481
      %v511 = vsub.f32 %v425, %v483
      %v512 = vsub.f32 %v430, %v485
      %v513 = vsub.f32 %v433, %v487
      %v514 = vsub.f32 %v438, %v489
      %v515 = vsub.f32 %v441, %v491
      %v516 = vsub.f32 %v446, %v493
      %v517 = vsub.f32 %v449, %v495
      %v518 = vsub.f32 %v454, %v497
      %v519 = vsub.f32 %v457, %v499
      %v520 = vsub.f32 %v462, %v501
      %v521 = vsub.f32 %v465, %v503
      %v522 = vsub.f32 %v470, %v505
      %v523 = vsub.f32 %v473, %v507
      %v524 = vmul.f32 %v508, 1.442695
      %v525 = vpow.pop %v524
      %v526 = vmul.f32 %v509, 1.442695
      %v527 = vpow.pop %v526
      %v528 = vmul.f32 %v510, 1.442695
      %v529 = vpow.pop %v528
      %v530 = vmul.f32 %v511, 1.442695
      %v531 = vpow.pop %v530
      %v532 = vmul.f32 %v512, 1.442695
      %v533 = vpow.pop %v532
      %v534 = vmul.f32 %v513, 1.442695
      %v535 = vpow.pop %v534
      %v536 = vmul.f32 %v514, 1.442695
      %v537 = vpow.pop %v536
      %v538 = vmul.f32 %v515, 1.442695
      %v539 = vpow.pop %v538
      %v540 = vmul.f32 %v516, 1.442695
      %v541 = vpow.pop %v540
      %v542 = vmul.f32 %v517, 1.442695
      %v543 = vpow.pop %v542
      %v544 = vmul.f32 %v518, 1.442695
      %v545 = vpow.pop %v544
      %v546 = vmul.f32 %v519, 1.442695
      %v547 = vpow.pop %v546
      %v548 = vmul.f32 %v520, 1.442695
      %v549 = vpow.pop %v548
      %v550 = vmul.f32 %v521, 1.442695
      %v551 = vpow.pop %v550
      %v552 = vmul.f32 %v522, 1.442695
      %v553 = vpow.pop %v552
      %v554 = vmul.f32 %v523, 1.442695
      %v555 = vpow.pop %v554
      %556 = vadd.xlane.f32.xlu0 %v525
      %v557 = vpop.xlane.xlu0 %556
      %558 = vadd.xlane.f32.xlu0 %v527
      %v559 = vpop.xlane.xlu0 %558
      %560 = vadd.xlane.f32.xlu0 %v529
      %v561 = vpop.xlane.xlu0 %560
      %562 = vadd.xlane.f32.xlu0 %v531
      %v563 = vpop.xlane.xlu0 %562
      %564 = vadd.xlane.f32.xlu0 %v533
      %v565 = vpop.xlane.xlu0 %564
      %566 = vadd.xlane.f32.xlu0 %v535
      %v567 = vpop.xlane.xlu0 %566
      %568 = vadd.xlane.f32.xlu0 %v537
      %v569 = vpop.xlane.xlu0 %568
      %570 = vadd.xlane.f32.xlu0 %v539
      %v571 = vpop.xlane.xlu0 %570
      %572 = vadd.xlane.f32.xlu0 %v541
      %v573 = vpop.xlane.xlu0 %572
      %574 = vadd.xlane.f32.xlu0 %v543
      %v575 = vpop.xlane.xlu0 %574
      %576 = vadd.xlane.f32.xlu0 %v545
      %v577 = vpop.xlane.xlu0 %576
      %578 = vadd.xlane.f32.xlu0 %v547
      %v579 = vpop.xlane.xlu0 %578
      %580 = vadd.xlane.f32.xlu0 %v549
      %v581 = vpop.xlane.xlu0 %580
      %582 = vadd.xlane.f32.xlu0 %v551
      %v583 = vpop.xlane.xlu0 %582
      %584 = vadd.xlane.f32.xlu0 %v553
      %v585 = vpop.xlane.xlu0 %584
      %586 = vadd.xlane.f32.xlu0 %v555
      %v587 = vpop.xlane.xlu0 %586
      %v588 = vpack.c.bf16 %v527, %v525
      %v589 = vpack.c.bf16 %v531, %v529
      %v590 = vpack.c.bf16 %v535, %v533
      %v591 = vpack.c.bf16 %v539, %v537
      %v592 = vpack.c.bf16 %v543, %v541
      %v593 = vpack.c.bf16 %v547, %v545
      %v594 = vpack.c.bf16 %v551, %v549
      %v595 = vpack.c.bf16 %v555, %v553
      %v612 = vunpack.c.l.b16 %v234
      %v613 = vunpack.c.l.b16 %v235
      %v614 = vunpack.c.l.b16 %v236
      %v615 = vunpack.c.l.b16 %v237
      %v616 = vunpack.c.l.b16 %v238
      %v617 = vunpack.c.l.b16 %v239
      %v618 = vunpack.c.l.b16 %v240
      %v619 = vunpack.c.l.b16 %v241
      %v620 = vunpack.c.l.b16 %v242
      %v621 = vunpack.c.l.b16 %v243
      %v622 = vunpack.c.l.b16 %v244
      %v623 = vunpack.c.l.b16 %v245
      %v624 = vunpack.c.l.b16 %v246
      %v625 = vunpack.c.l.b16 %v247
      %v626 = vunpack.c.l.b16 %v248
      %v627 = vunpack.c.l.b16 %v249
      %v628 = vpack.c.b16 %v613, %v612
      %v629 = vpack.c.b16 %v615, %v614
      %v630 = vpack.c.b16 %v617, %v616
      %v631 = vpack.c.b16 %v619, %v618
      %v632 = vpack.c.b16 %v621, %v620
      %v633 = vpack.c.b16 %v623, %v622
      %v634 = vpack.c.b16 %v625, %v624
      %v635 = vpack.c.b16 %v627, %v626
      %644 = vmatprep.subr.bf16.mxu0 0
      %645 = vmatpush1.bf16.msra.mxu0 %v628
      %646 = vmatprep.subr.bf16.mxu0 0
      %647 = vmatpush1.bf16.msra.mxu0 %v629
      %648 = vmatprep.subr.bf16.mxu0 0
      %649 = vmatpush1.bf16.msra.mxu0 %v630
      %650 = vmatprep.subr.bf16.mxu0 0
      %651 = vmatpush1.bf16.msra.mxu0 %v631
      %652 = vmatprep.subr.bf16.mxu0 0
      %653 = vmatpush1.bf16.msra.mxu0 %v632
      %654 = vmatprep.subr.bf16.mxu0 0
      %655 = vmatpush1.bf16.msra.mxu0 %v633
      %656 = vmatprep.subr.bf16.mxu0 0
      %657 = vmatpush1.bf16.msra.mxu0 %v634
      %658 = vmatprep.subr.bf16.mxu0 0
      %659 = vmatpush1.bf16.msra.mxu0 %v635
      %660 = vmatprep.subr.bf16.mxu0 0
      %661 = vmatpush1.bf16.msra.mxu0 0
      %662 = vmatprep.subr.bf16.mxu0 0
      %663 = vmatpush1.bf16.msra.mxu0 0
      %664 = vmatprep.subr.bf16.mxu0 0
      %665 = vmatpush1.bf16.msra.mxu0 0
      %666 = vmatprep.subr.bf16.mxu0 0
      %667 = vmatpush1.bf16.msra.mxu0 0
      %668 = vmatprep.subr.bf16.mxu0 0
      %669 = vmatpush1.bf16.msra.mxu0 0
      %670 = vmatprep.subr.bf16.mxu0 0
      %671 = vmatpush1.bf16.msra.mxu0 0
      %672 = vmatprep.subr.bf16.mxu0 0
      %673 = vmatpush1.bf16.msra.mxu0 0
      %674 = vmatprep.subr.bf16.mxu0 0
      %675 = vmatpush1.bf16.msra.mxu0 0
      %676 = vmatprep.mubr.bf16.mxu0 0
      %677 = vmatmul.mubr.bf16.gmra.mrb[0].mxu0 %v588
      %v678 = vpop.f32.mrb[0].mxu0
      %v679 = vadd.f32 0.0, %v678
      %v680 = vpop.f32.mrb[0].mxu0
      %v681 = vpop.f32.mrb[0].mxu0
      %v682 = vadd.f32 0.0, %v681
      %v683 = vpop.f32.mrb[0].mxu0
      %684 = vmatprep.mubr.bf16.mxu0 0
      %685 = vmatmul.mubr.bf16.gmra.mrb[0].mxu0 %v589
      %v686 = vpop.f32.mrb[0].mxu0
      %v687 = vadd.f32 0.0, %v686
      %v688 = vpop.f32.mrb[0].mxu0
      %v689 = vpop.f32.mrb[0].mxu0
      %v690 = vadd.f32 0.0, %v689
      %v691 = vpop.f32.mrb[0].mxu0
      %692 = vmatprep.mubr.bf16.mxu0 0
      %693 = vmatmul.mubr.bf16.gmra.mrb[0].mxu0 %v590
      %v694 = vpop.f32.mrb[0].mxu0
      %v695 = vadd.f32 0.0, %v694
      %v696 = vpop.f32.mrb[0].mxu0
      %v697 = vpop.f32.mrb[0].mxu0
      %v698 = vadd.f32 0.0, %v697
      %v699 = vpop.f32.mrb[0].mxu0
      %700 = vmatprep.mubr.bf16.mxu0 0
      %701 = vmatmul.mubr.bf16.gmra.mrb[0].mxu0 %v591
      %v702 = vpop.f32.mrb[0].mxu0
      %v703 = vadd.f32 0.0, %v702
      %v704 = vpop.f32.mrb[0].mxu0
      %v705 = vpop.f32.mrb[0].mxu0
      %v706 = vadd.f32 0.0, %v705
      %v707 = vpop.f32.mrb[0].mxu0
      %708 = vmatprep.mubr.bf16.mxu0 0
      %709 = vmatmul.mubr.bf16.gmra.mrb[0].mxu0 %v592
      %v710 = vpop.f32.mrb[0].mxu0
      %v711 = vadd.f32 0.0, %v710
      %v712 = vpop.f32.mrb[0].mxu0
      %v713 = vpop.f32.mrb[0].mxu0
      %v714 = vadd.f32 0.0, %v713
      %v715 = vpop.f32.mrb[0].mxu0
      %716 = vmatprep.mubr.bf16.mxu0 0
      %717 = vmatmul.mubr.bf16.gmra.mrb[0].mxu0 %v593
      %v718 = vpop.f32.mrb[0].mxu0
      %v719 = vadd.f32 0.0, %v718
      %v720 = vpop.f32.mrb[0].mxu0
      %v721 = vpop.f32.mrb[0].mxu0
      %v722 = vadd.f32 0.0, %v721
      %v723 = vpop.f32.mrb[0].mxu0
      %724 = vmatprep.mubr.bf16.mxu0 0
      %725 = vmatmul.mubr.bf16.gmra.mrb[0].mxu0 %v594
      %v726 = vpop.f32.mrb[0].mxu0
      %v727 = vadd.f32 0.0, %v726
      %v728 = vpop.f32.mrb[0].mxu0
      %v729 = vpop.f32.mrb[0].mxu0
      %v730 = vadd.f32 0.0, %v729
      %v731 = vpop.f32.mrb[0].mxu0
      %732 = vmatprep.mubr.bf16.mxu0 0
      %733 = vmatmul.mubr.bf16.gmra.mrb[0].mxu0 %v595
      %v734 = vpop.f32.mrb[0].mxu0
      %v735 = vadd.f32 0.0, %v734
      %v736 = vpop.f32.mrb[0].mxu0
      %v737 = vpop.f32.mrb[0].mxu0
      %v738 = vadd.f32 0.0, %v737
      %v739 = vpop.f32.mrb[0].mxu0
      %740 = vdwg.mxu0
      %v741 = vrcp.pop %v557
      %v742 = vrcp.pop %v559
      %v743 = vrcp.pop %v561
      %v744 = vrcp.pop %v563
      %v745 = vrcp.pop %v565
      %v746 = vrcp.pop %v567
      %v747 = vrcp.pop %v569
      %v748 = vrcp.pop %v571
      %v749 = vrcp.pop %v573
      %v750 = vrcp.pop %v575
      %v751 = vrcp.pop %v577
      %v752 = vrcp.pop %v579
      %v753 = vrcp.pop %v581
      %v754 = vrcp.pop %v583
      %v755 = vrcp.pop %v585
      %v756 = vrcp.pop %v587
      %v757 = vmul.f32 %v679, %v741
      %v758 = vmul.f32 %v682, %v742
      %v759 = vmul.f32 %v687, %v743
      %v760 = vmul.f32 %v690, %v744
      %v761 = vmul.f32 %v695, %v745
      %v762 = vmul.f32 %v698, %v746
      %v763 = vmul.f32 %v703, %v747
      %v764 = vmul.f32 %v706, %v748
      %v765 = vmul.f32 %v711, %v749
      %v766 = vmul.f32 %v714, %v750
      %v767 = vmul.f32 %v719, %v751
      %v768 = vmul.f32 %v722, %v752
      %v769 = vmul.f32 %v727, %v753
      %v770 = vmul.f32 %v730, %v754
      %v771 = vmul.f32 %v735, %v755
      %v772 = vmul.f32 %v738, %v756
      %v773 = vpack.c.bf16 %v758, %v757
      %v774 = vpack.c.bf16 %v760, %v759
      %v775 = vpack.c.bf16 %v762, %v761
      %v776 = vpack.c.bf16 %v764, %v763
      %v777 = vpack.c.bf16 %v766, %v765
      %v778 = vpack.c.bf16 %v768, %v767
      %v779 = vpack.c.bf16 %v770, %v769
      %v780 = vpack.c.bf16 %v772, %v771
      %781 = vrot.lane.b32.xlu0 %v282, 96
      %v782 = vpop.permute.xlu0 %781
      %783 = vrot.lane.b32.xlu0 %v283, 96
      %v784 = vpop.permute.xlu0 %783
      %785 = vrot.lane.b32.xlu0 %v284, 96
      %v786 = vpop.permute.xlu0 %785
      %787 = vrot.lane.b32.xlu0 %v285, 96
      %v788 = vpop.permute.xlu0 %787
      %789 = vrot.lane.b32.xlu0 %v286, 96
      %v790 = vpop.permute.xlu0 %789
      %791 = vrot.lane.b32.xlu0 %v287, 96
      %v792 = vpop.permute.xlu0 %791
      %793 = vrot.lane.b32.xlu0 %v288, 96
      %v794 = vpop.permute.xlu0 %793
      %795 = vrot.lane.b32.xlu0 %v289, 96
      %v796 = vpop.permute.xlu0 %795
      %797 = vrot.lane.b32.xlu0 %v322, 96
      %v798 = vpop.permute.xlu0 %797
      %799 = vrot.lane.b32.xlu0 %v323, 96
      %v800 = vpop.permute.xlu0 %799
      %801 = vrot.lane.b32.xlu0 %v324, 96
      %v802 = vpop.permute.xlu0 %801
      %803 = vrot.lane.b32.xlu0 %v325, 96
      %v804 = vpop.permute.xlu0 %803
      %805 = vrot.lane.b32.xlu0 %v326, 96
      %v806 = vpop.permute.xlu0 %805
      %807 = vrot.lane.b32.xlu0 %v327, 96
      %v808 = vpop.permute.xlu0 %807
      %809 = vrot.lane.b32.xlu0 %v328, 96
      %v810 = vpop.permute.xlu0 %809
      %811 = vrot.lane.b32.xlu0 %v329, 96
      %v812 = vpop.permute.xlu0 %811
      %v814 = vsel %vm330, %v782, 0
      %v817 = vsel %vm330, %v784, 0
      %v820 = vsel %vm330, %v786, 0
      %v823 = vsel %vm330, %v788, 0
      %v826 = vsel %vm330, %v790, 0
      %v829 = vsel %vm330, %v792, 0
      %v832 = vsel %vm330, %v794, 0
      %v835 = vsel %vm330, %v796, 0
      %v838 = vsel %vm330, %v798, 0
      %v841 = vsel %vm330, %v800, 0
      %v844 = vsel %vm330, %v802, 0
      %v847 = vsel %vm330, %v804, 0
      %v850 = vsel %vm330, %v806, 0
      %v853 = vsel %vm330, %v808, 0
      %v856 = vsel %vm330, %v810, 0
      %v859 = vsel %vm330, %v812, 0
      %861 = vmatprep.subr.bf16.mxu0 0
      %862 = vmatpush1.bf16.xpose.msra.mxu0 %v838
      %863 = vmatprep.subr.bf16.mxu0 0
      %864 = vmatpush1.bf16.xpose.msra.mxu0 %v841
      %865 = vmatprep.subr.bf16.mxu0 0
      %866 = vmatpush1.bf16.xpose.msra.mxu0 %v844
      %867 = vmatprep.subr.bf16.mxu0 0
      %868 = vmatpush1.bf16.xpose.msra.mxu0 %v847
      %869 = vmatprep.subr.bf16.mxu0 0
      %870 = vmatpush1.bf16.xpose.msra.mxu0 %v850
      %871 = vmatprep.subr.bf16.mxu0 0
      %872 = vmatpush1.bf16.xpose.msra.mxu0 %v853
      %873 = vmatprep.subr.bf16.mxu0 0
      %874 = vmatpush1.bf16.xpose.msra.mxu0 %v856
      %875 = vmatprep.subr.bf16.mxu0 0
      %876 = vmatpush1.bf16.xpose.msra.mxu0 %v859
      %877 = vmatprep.subr.bf16.mxu0 0
      %878 = vmatpush1.bf16.xpose.msra.mxu0 0
      %879 = vmatprep.subr.bf16.mxu0 0
      %880 = vmatpush1.bf16.xpose.msra.mxu0 0
      %881 = vmatprep.subr.bf16.mxu0 0
      %882 = vmatpush1.bf16.xpose.msra.mxu0 0
      %883 = vmatprep.subr.bf16.mxu0 0
      %884 = vmatpush1.bf16.xpose.msra.mxu0 0
      %885 = vmatprep.subr.bf16.mxu0 0
      %886 = vmatpush1.bf16.xpose.msra.mxu0 0
      %887 = vmatprep.subr.bf16.mxu0 0
      %888 = vmatpush1.bf16.xpose.msra.mxu0 0
      %889 = vmatprep.subr.bf16.mxu0 0
      %890 = vmatpush1.bf16.xpose.msra.mxu0 0
      %891 = vmatprep.subr.bf16.mxu0 0
      %892 = vmatpush1.bf16.xpose.msra.mxu0 0
      %893 = vmatprep.mubr.bf16.mxu0 0
      %894 = vmatmul.mubr.bf16.gmra.mrb[0].mxu0 %v814
      %v895 = vpop.f32.mrb[0].mxu0
      %v896 = vadd.f32 %v200, %v895
      %v897 = vpop.f32.mrb[0].mxu0
      %v898 = vpop.f32.mrb[0].mxu0
      %v899 = vadd.f32 %v200, %v898
      %v900 = vpop.f32.mrb[0].mxu0
      %901 = vmatprep.mubr.bf16.mxu0 0
      %902 = vmatmul.mubr.bf16.gmra.mrb[0].mxu0 %v817
      %v903 = vpop.f32.mrb[0].mxu0
      %v904 = vadd.f32 %v200, %v903
      %v905 = vpop.f32.mrb[0].mxu0
      %v906 = vpop.f32.mrb[0].mxu0
      %v907 = vadd.f32 %v200, %v906
      %v908 = vpop.f32.mrb[0].mxu0
      %909 = vmatprep.mubr.bf16.mxu0 0
      %910 = vmatmul.mubr.bf16.gmra.mrb[0].mxu0 %v820
      %v911 = vpop.f32.mrb[0].mxu0
      %v912 = vadd.f32 %v200, %v911
      %v913 = vpop.f32.mrb[0].mxu0
      %v914 = vpop.f32.mrb[0].mxu0
      %v915 = vadd.f32 %v200, %v914
      %v916 = vpop.f32.mrb[0].mxu0
      %917 = vmatprep.mubr.bf16.mxu0 0
      %918 = vmatmul.mubr.bf16.gmra.mrb[0].mxu0 %v823
      %v919 = vpop.f32.mrb[0].mxu0
      %v920 = vadd.f32 %v200, %v919
      %v921 = vpop.f32.mrb[0].mxu0
      %v922 = vpop.f32.mrb[0].mxu0
      %v923 = vadd.f32 %v200, %v922
      %v924 = vpop.f32.mrb[0].mxu0
      %925 = vmatprep.mubr.bf16.mxu0 0
      %926 = vmatmul.mubr.bf16.gmra.mrb[0].mxu0 %v826
      %v927 = vpop.f32.mrb[0].mxu0
      %v928 = vadd.f32 %v200, %v927
      %v929 = vpop.f32.mrb[0].mxu0
      %v930 = vpop.f32.mrb[0].mxu0
      %v931 = vadd.f32 %v200, %v930
      %v932 = vpop.f32.mrb[0].mxu0
      %933 = vmatprep.mubr.bf16.mxu0 0
      %934 = vmatmul.mubr.bf16.gmra.mrb[0].mxu0 %v829
      %v935 = vpop.f32.mrb[0].mxu0
      %v936 = vadd.f32 %v200, %v935
      %v937 = vpop.f32.mrb[0].mxu0
      %v938 = vpop.f32.mrb[0].mxu0
      %v939 = vadd.f32 %v200, %v938
      %v940 = vpop.f32.mrb[0].mxu0
      %941 = vmatprep.mubr.bf16.mxu0 0
      %942 = vmatmul.mubr.bf16.gmra.mrb[0].mxu0 %v832
      %v943 = vpop.f32.mrb[0].mxu0
      %v944 = vadd.f32 %v200, %v943
      %v945 = vpop.f32.mrb[0].mxu0
      %v946 = vpop.f32.mrb[0].mxu0
      %v947 = vadd.f32 %v200, %v946
      %v948 = vpop.f32.mrb[0].mxu0
      %949 = vmatprep.mubr.bf16.mxu0 0
      %950 = vmatmul.mubr.bf16.gmra.mrb[0].mxu0 %v835
      %v951 = vpop.f32.mrb[0].mxu0
      %v952 = vadd.f32 %v200, %v951
      %v953 = vpop.f32.mrb[0].mxu0
      %v954 = vpop.f32.mrb[0].mxu0
      %v955 = vadd.f32 %v200, %v954
      %v956 = vpop.f32.mrb[0].mxu0
      %957 = vdwg.mxu0
      %958 = vmax.xlane.f32.xlu0 %v896
      %v959 = vpop.xlane.xlu0 %958
      %960 = vmax.xlane.f32.xlu0 %v899
      %v961 = vpop.xlane.xlu0 %960
      %962 = vmax.xlane.f32.xlu0 %v904
      %v963 = vpop.xlane.xlu0 %962
      %964 = vmax.xlane.f32.xlu0 %v907
      %v965 = vpop.xlane.xlu0 %964
      %966 = vmax.xlane.f32.xlu0 %v912
      %v967 = vpop.xlane.xlu0 %966
      %968 = vmax.xlane.f32.xlu0 %v915
      %v969 = vpop.xlane.xlu0 %968
      %970 = vmax.xlane.f32.xlu0 %v920
      %v971 = vpop.xlane.xlu0 %970
      %972 = vmax.xlane.f32.xlu0 %v923
      %v973 = vpop.xlane.xlu0 %972
      %974 = vmax.xlane.f32.xlu0 %v928
      %v975 = vpop.xlane.xlu0 %974
      %976 = vmax.xlane.f32.xlu0 %v931
      %v977 = vpop.xlane.xlu0 %976
      %978 = vmax.xlane.f32.xlu0 %v936
      %v979 = vpop.xlane.xlu0 %978
      %980 = vmax.xlane.f32.xlu0 %v939
      %v981 = vpop.xlane.xlu0 %980
      %982 = vmax.xlane.f32.xlu0 %v944
      %v983 = vpop.xlane.xlu0 %982
      %984 = vmax.xlane.f32.xlu0 %v947
      %v985 = vpop.xlane.xlu0 %984
      %986 = vmax.xlane.f32.xlu0 %v952
      %v987 = vpop.xlane.xlu0 %986
      %988 = vmax.xlane.f32.xlu0 %v955
      %v989 = vpop.xlane.xlu0 %988
      %v990 = vsub.f32 %v896, %v959
      %v991 = vsub.f32 %v899, %v961
      %v992 = vsub.f32 %v904, %v963
      %v993 = vsub.f32 %v907, %v965
      %v994 = vsub.f32 %v912, %v967
      %v995 = vsub.f32 %v915, %v969
      %v996 = vsub.f32 %v920, %v971
      %v997 = vsub.f32 %v923, %v973
      %v998 = vsub.f32 %v928, %v975
      %v999 = vsub.f32 %v931, %v977
      %v1000 = vsub.f32 %v936, %v979
      %v1001 = vsub.f32 %v939, %v981
      %v1002 = vsub.f32 %v944, %v983
      %v1003 = vsub.f32 %v947, %v985
      %v1004 = vsub.f32 %v952, %v987
      %v1005 = vsub.f32 %v955, %v989
      %v1006 = vmul.f32 %v990, 1.442695
      %v1007 = vpow.pop %v1006
      %v1008 = vmul.f32 %v991, 1.442695
      %v1009 = vpow.pop %v1008
      %v1010 = vmul.f32 %v992, 1.442695
      %v1011 = vpow.pop %v1010
      %v1012 = vmul.f32 %v993, 1.442695
      %v1013 = vpow.pop %v1012
      %v1014 = vmul.f32 %v994, 1.442695
      %v1015 = vpow.pop %v1014
      %v1016 = vmul.f32 %v995, 1.442695
      %v1017 = vpow.pop %v1016
      %v1018 = vmul.f32 %v996, 1.442695
      %v1019 = vpow.pop %v1018
      %v1020 = vmul.f32 %v997, 1.442695
      %v1021 = vpow.pop %v1020
      %v1022 = vmul.f32 %v998, 1.442695
      %v1023 = vpow.pop %v1022
      %v1024 = vmul.f32 %v999, 1.442695
      %v1025 = vpow.pop %v1024
      %v1026 = vmul.f32 %v1000, 1.442695
      %v1027 = vpow.pop %v1026
      %v1028 = vmul.f32 %v1001, 1.442695
      %v1029 = vpow.pop %v1028
      %v1030 = vmul.f32 %v1002, 1.442695
      %v1031 = vpow.pop %v1030
      %v1032 = vmul.f32 %v1003, 1.442695
      %v1033 = vpow.pop %v1032
      %v1034 = vmul.f32 %v1004, 1.442695
      %v1035 = vpow.pop %v1034
      %v1036 = vmul.f32 %v1005, 1.442695
      %v1037 = vpow.pop %v1036
      %1038 = vadd.xlane.f32.xlu0 %v1007
      %v1039 = vpop.xlane.xlu0 %1038
      %1040 = vadd.xlane.f32.xlu0 %v1009
      %v1041 = vpop.xlane.xlu0 %1040
      %1042 = vadd.xlane.f32.xlu0 %v1011
      %v1043 = vpop.xlane.xlu0 %1042
      %1044 = vadd.xlane.f32.xlu0 %v1013
      %v1045 = vpop.xlane.xlu0 %1044
      %1046 = vadd.xlane.f32.xlu0 %v1015
      %v1047 = vpop.xlane.xlu0 %1046
      %1048 = vadd.xlane.f32.xlu0 %v1017
      %v1049 = vpop.xlane.xlu0 %1048
      %1050 = vadd.xlane.f32.xlu0 %v1019
      %v1051 = vpop.xlane.xlu0 %1050
      %1052 = vadd.xlane.f32.xlu0 %v1021
      %v1053 = vpop.xlane.xlu0 %1052
      %1054 = vadd.xlane.f32.xlu0 %v1023
      %v1055 = vpop.xlane.xlu0 %1054
      %1056 = vadd.xlane.f32.xlu0 %v1025
      %v1057 = vpop.xlane.xlu0 %1056
      %1058 = vadd.xlane.f32.xlu0 %v1027
      %v1059 = vpop.xlane.xlu0 %1058
      %1060 = vadd.xlane.f32.xlu0 %v1029
      %v1061 = vpop.xlane.xlu0 %1060
      %1062 = vadd.xlane.f32.xlu0 %v1031
      %v1063 = vpop.xlane.xlu0 %1062
      %1064 = vadd.xlane.f32.xlu0 %v1033
      %v1065 = vpop.xlane.xlu0 %1064
      %1066 = vadd.xlane.f32.xlu0 %v1035
      %v1067 = vpop.xlane.xlu0 %1066
      %1068 = vadd.xlane.f32.xlu0 %v1037
      %v1069 = vpop.xlane.xlu0 %1068
      %v1070 = vpack.c.bf16 %v1009, %v1007
      %v1071 = vpack.c.bf16 %v1013, %v1011
      %v1072 = vpack.c.bf16 %v1017, %v1015
      %v1073 = vpack.c.bf16 %v1021, %v1019
      %v1074 = vpack.c.bf16 %v1025, %v1023
      %v1075 = vpack.c.bf16 %v1029, %v1027
      %v1076 = vpack.c.bf16 %v1033, %v1031
      %v1077 = vpack.c.bf16 %v1037, %v1035
      %1078 = vrot.lane.b32.xlu0 %v628, 96
      %v1079 = vpop.permute.xlu0 %1078
      %1080 = vrot.lane.b32.xlu0 %v629, 96
      %v1081 = vpop.permute.xlu0 %1080
      %1082 = vrot.lane.b32.xlu0 %v630, 96
      %v1083 = vpop.permute.xlu0 %1082
      %1084 = vrot.lane.b32.xlu0 %v631, 96
      %v1085 = vpop.permute.xlu0 %1084
      %1086 = vrot.lane.b32.xlu0 %v632, 96
      %v1087 = vpop.permute.xlu0 %1086
      %1088 = vrot.lane.b32.xlu0 %v633, 96
      %v1089 = vpop.permute.xlu0 %1088
      %1090 = vrot.lane.b32.xlu0 %v634, 96
      %v1091 = vpop.permute.xlu0 %1090
      %1092 = vrot.lane.b32.xlu0 %v635, 96
      %v1093 = vpop.permute.xlu0 %1092
      %1102 = vmatprep.subr.bf16.mxu0 0
      %1103 = vmatpush1.bf16.msra.mxu0 %v1079
      %1104 = vmatprep.subr.bf16.mxu0 0
      %1105 = vmatpush1.bf16.msra.mxu0 %v1081
      %1106 = vmatprep.subr.bf16.mxu0 0
      %1107 = vmatpush1.bf16.msra.mxu0 %v1083
      %1108 = vmatprep.subr.bf16.mxu0 0
      %1109 = vmatpush1.bf16.msra.mxu0 %v1085
      %1110 = vmatprep.subr.bf16.mxu0 0
      %1111 = vmatpush1.bf16.msra.mxu0 %v1087
      %1112 = vmatprep.subr.bf16.mxu0 0
      %1113 = vmatpush1.bf16.msra.mxu0 %v1089
      %1114 = vmatprep.subr.bf16.mxu0 0
      %1115 = vmatpush1.bf16.msra.mxu0 %v1091
      %1116 = vmatprep.subr.bf16.mxu0 0
      %1117 = vmatpush1.bf16.msra.mxu0 %v1093
      %1118 = vmatprep.subr.bf16.mxu0 0
      %1119 = vmatpush1.bf16.msra.mxu0 0
      %1120 = vmatprep.subr.bf16.mxu0 0
      %1121 = vmatpush1.bf16.msra.mxu0 0
      %1122 = vmatprep.subr.bf16.mxu0 0
      %1123 = vmatpush1.bf16.msra.mxu0 0
      %1124 = vmatprep.subr.bf16.mxu0 0
      %1125 = vmatpush1.bf16.msra.mxu0 0
      %1126 = vmatprep.subr.bf16.mxu0 0
      %1127 = vmatpush1.bf16.msra.mxu0 0
      %1128 = vmatprep.subr.bf16.mxu0 0
      %1129 = vmatpush1.bf16.msra.mxu0 0
      %1130 = vmatprep.subr.bf16.mxu0 0
      %1131 = vmatpush1.bf16.msra.mxu0 0
      %1132 = vmatprep.subr.bf16.mxu0 0
      %1133 = vmatpush1.bf16.msra.mxu0 0
      %1134 = vmatprep.mubr.bf16.mxu0 0
      %1135 = vmatmul.mubr.bf16.gmra.mrb[0].mxu0 %v1070
      %v1136 = vpop.f32.mrb[0].mxu0
      %v1137 = vadd.f32 0.0, %v1136
      %v1138 = vpop.f32.mrb[0].mxu0
      %v1139 = vpop.f32.mrb[0].mxu0
      %v1140 = vadd.f32 0.0, %v1139
      %v1141 = vpop.f32.mrb[0].mxu0
      %1142 = vmatprep.mubr.bf16.mxu0 0
      %1143 = vmatmul.mubr.bf16.gmra.mrb[0].mxu0 %v1071
      %v1144 = vpop.f32.mrb[0].mxu0
      %v1145 = vadd.f32 0.0, %v1144
      %v1146 = vpop.f32.mrb[0].mxu0
      %v1147 = vpop.f32.mrb[0].mxu0
      %v1148 = vadd.f32 0.0, %v1147
      %v1149 = vpop.f32.mrb[0].mxu0
      %1150 = vmatprep.mubr.bf16.mxu0 0
      %1151 = vmatmul.mubr.bf16.gmra.mrb[0].mxu0 %v1072
      %v1152 = vpop.f32.mrb[0].mxu0
      %v1153 = vadd.f32 0.0, %v1152
      %v1154 = vpop.f32.mrb[0].mxu0
      %v1155 = vpop.f32.mrb[0].mxu0
      %v1156 = vadd.f32 0.0, %v1155
      %v1157 = vpop.f32.mrb[0].mxu0
      %1158 = vmatprep.mubr.bf16.mxu0 0
      %1159 = vmatmul.mubr.bf16.gmra.mrb[0].mxu0 %v1073
      %v1160 = vpop.f32.mrb[0].mxu0
      %v1161 = vadd.f32 0.0, %v1160
      %v1162 = vpop.f32.mrb[0].mxu0
      %v1163 = vpop.f32.mrb[0].mxu0
      %v1164 = vadd.f32 0.0, %v1163
      %v1165 = vpop.f32.mrb[0].mxu0
      %1166 = vmatprep.mubr.bf16.mxu0 0
      %1167 = vmatmul.mubr.bf16.gmra.mrb[0].mxu0 %v1074
      %v1168 = vpop.f32.mrb[0].mxu0
      %v1169 = vadd.f32 0.0, %v1168
      %v1170 = vpop.f32.mrb[0].mxu0
      %v1171 = vpop.f32.mrb[0].mxu0
      %v1172 = vadd.f32 0.0, %v1171
      %v1173 = vpop.f32.mrb[0].mxu0
      %1174 = vmatprep.mubr.bf16.mxu0 0
      %1175 = vmatmul.mubr.bf16.gmra.mrb[0].mxu0 %v1075
      %v1176 = vpop.f32.mrb[0].mxu0
      %v1177 = vadd.f32 0.0, %v1176
      %v1178 = vpop.f32.mrb[0].mxu0
      %v1179 = vpop.f32.mrb[0].mxu0
      %v1180 = vadd.f32 0.0, %v1179
      %v1181 = vpop.f32.mrb[0].mxu0
      %1182 = vmatprep.mubr.bf16.mxu0 0
      %1183 = vmatmul.mubr.bf16.gmra.mrb[0].mxu0 %v1076
      %v1184 = vpop.f32.mrb[0].mxu0
      %v1185 = vadd.f32 0.0, %v1184
      %v1186 = vpop.f32.mrb[0].mxu0
      %v1187 = vpop.f32.mrb[0].mxu0
      %v1188 = vadd.f32 0.0, %v1187
      %v1189 = vpop.f32.mrb[0].mxu0
      %1190 = vmatprep.mubr.bf16.mxu0 0
      %1191 = vmatmul.mubr.bf16.gmra.mrb[0].mxu0 %v1077
      %v1192 = vpop.f32.mrb[0].mxu0
      %v1193 = vadd.f32 0.0, %v1192
      %v1194 = vpop.f32.mrb[0].mxu0
      %v1195 = vpop.f32.mrb[0].mxu0
      %v1196 = vadd.f32 0.0, %v1195
      %v1197 = vpop.f32.mrb[0].mxu0
      %1198 = vdwg.mxu0
      %v1199 = vrcp.pop %v1039
      %v1200 = vrcp.pop %v1041
      %v1201 = vrcp.pop %v1043
      %v1202 = vrcp.pop %v1045
      %v1203 = vrcp.pop %v1047
      %v1204 = vrcp.pop %v1049
      %v1205 = vrcp.pop %v1051
      %v1206 = vrcp.pop %v1053
      %v1207 = vrcp.pop %v1055
      %v1208 = vrcp.pop %v1057
      %v1209 = vrcp.pop %v1059
      %v1210 = vrcp.pop %v1061
      %v1211 = vrcp.pop %v1063
      %v1212 = vrcp.pop %v1065
      %v1213 = vrcp.pop %v1067
      %v1214 = vrcp.pop %v1069
      %v1215 = vmul.f32 %v1137, %v1199
      %v1216 = vmul.f32 %v1140, %v1200
      %v1217 = vmul.f32 %v1145, %v1201
      %v1218 = vmul.f32 %v1148, %v1202
      %v1219 = vmul.f32 %v1153, %v1203
      %v1220 = vmul.f32 %v1156, %v1204
      %v1221 = vmul.f32 %v1161, %v1205
      %v1222 = vmul.f32 %v1164, %v1206
      %v1223 = vmul.f32 %v1169, %v1207
      %v1224 = vmul.f32 %v1172, %v1208
      %v1225 = vmul.f32 %v1177, %v1209
      %v1226 = vmul.f32 %v1180, %v1210
      %v1227 = vmul.f32 %v1185, %v1211
      %v1228 = vmul.f32 %v1188, %v1212
      %v1229 = vmul.f32 %v1193, %v1213
      %v1230 = vmul.f32 %v1196, %v1214
      %v1231 = vpack.c.bf16 %v1216, %v1215
      %v1232 = vpack.c.bf16 %v1218, %v1217
      %v1233 = vpack.c.bf16 %v1220, %v1219
      %v1234 = vpack.c.bf16 %v1222, %v1221
      %v1235 = vpack.c.bf16 %v1224, %v1223
      %v1236 = vpack.c.bf16 %v1226, %v1225
      %v1237 = vpack.c.bf16 %v1228, %v1227
      %v1238 = vpack.c.bf16 %v1230, %v1229
      %1239 = vrot.lane.b32.xlu0 %v282, 64
      %v1240 = vpop.permute.xlu0 %1239
      %1241 = vrot.lane.b32.xlu0 %v283, 64
      %v1242 = vpop.permute.xlu0 %1241
      %1243 = vrot.lane.b32.xlu0 %v284, 64
      %v1244 = vpop.permute.xlu0 %1243
      %1245 = vrot.lane.b32.xlu0 %v285, 64
      %v1246 = vpop.permute.xlu0 %1245
      %1247 = vrot.lane.b32.xlu0 %v286, 64
      %v1248 = vpop.permute.xlu0 %1247
      %1249 = vrot.lane.b32.xlu0 %v287, 64
      %v1250 = vpop.permute.xlu0 %1249
      %1251 = vrot.lane.b32.xlu0 %v288, 64
      %v1252 = vpop.permute.xlu0 %1251
      %1253 = vrot.lane.b32.xlu0 %v289, 64
      %v1254 = vpop.permute.xlu0 %1253
      %1255 = vrot.lane.b32.xlu0 %v322, 64
      %v1256 = vpop.permute.xlu0 %1255
      %1257 = vrot.lane.b32.xlu0 %v323, 64
      %v1258 = vpop.permute.xlu0 %1257
      %1259 = vrot.lane.b32.xlu0 %v324, 64
      %v1260 = vpop.permute.xlu0 %1259
      %1261 = vrot.lane.b32.xlu0 %v325, 64
      %v1262 = vpop.permute.xlu0 %1261
      %1263 = vrot.lane.b32.xlu0 %v326, 64
      %v1264 = vpop.permute.xlu0 %1263
      %1265 = vrot.lane.b32.xlu0 %v327, 64
      %v1266 = vpop.permute.xlu0 %1265
      %1267 = vrot.lane.b32.xlu0 %v328, 64
      %v1268 = vpop.permute.xlu0 %1267
      %1269 = vrot.lane.b32.xlu0 %v329, 64
      %v1270 = vpop.permute.xlu0 %1269
      %v1272 = vsel %vm330, %v1240, 0
      %v1275 = vsel %vm330, %v1242, 0
      %v1278 = vsel %vm330, %v1244, 0
      %v1281 = vsel %vm330, %v1246, 0
      %v1284 = vsel %vm330, %v1248, 0
      %v1287 = vsel %vm330, %v1250, 0
      %v1290 = vsel %vm330, %v1252, 0
      %v1293 = vsel %vm330, %v1254, 0
      %v1296 = vsel %vm330, %v1256, 0
      %v1299 = vsel %vm330, %v1258, 0
      %v1302 = vsel %vm330, %v1260, 0
      %v1305 = vsel %vm330, %v1262, 0
      %v1308 = vsel %vm330, %v1264, 0
      %v1311 = vsel %vm330, %v1266, 0
      %v1314 = vsel %vm330, %v1268, 0
      %v1317 = vsel %vm330, %v1270, 0
      %1319 = vmatprep.subr.bf16.mxu0 0
      %1320 = vmatpush1.bf16.xpose.msra.mxu0 %v1296
      %1321 = vmatprep.subr.bf16.mxu0 0
      %1322 = vmatpush1.bf16.xpose.msra.mxu0 %v1299
      %1323 = vmatprep.subr.bf16.mxu0 0
      %1324 = vmatpush1.bf16.xpose.msra.mxu0 %v1302
      %1325 = vmatprep.subr.bf16.mxu0 0
      %1326 = vmatpush1.bf16.xpose.msra.mxu0 %v1305
      %1327 = vmatprep.subr.bf16.mxu0 0
      %1328 = vmatpush1.bf16.xpose.msra.mxu0 %v1308
      %1329 = vmatprep.subr.bf16.mxu0 0
      %1330 = vmatpush1.bf16.xpose.msra.mxu0 %v1311
      %1331 = vmatprep.subr.bf16.mxu0 0
      %1332 = vmatpush1.bf16.xpose.msra.mxu0 %v1314
      %1333 = vmatprep.subr.bf16.mxu0 0
      %1334 = vmatpush1.bf16.xpose.msra.mxu0 %v1317
      %1335 = vmatprep.subr.bf16.mxu0 0
      %1336 = vmatpush1.bf16.xpose.msra.mxu0 0
      %1337 = vmatprep.subr.bf16.mxu0 0
      %1338 = vmatpush1.bf16.xpose.msra.mxu0 0
      %1339 = vmatprep.subr.bf16.mxu0 0
      %1340 = vmatpush1.bf16.xpose.msra.mxu0 0
      %1341 = vmatprep.subr.bf16.mxu0 0
      %1342 = vmatpush1.bf16.xpose.msra.mxu0 0
      %1343 = vmatprep.subr.bf16.mxu0 0
      %1344 = vmatpush1.bf16.xpose.msra.mxu0 0
      %1345 = vmatprep.subr.bf16.mxu0 0
      %1346 = vmatpush1.bf16.xpose.msra.mxu0 0
      %1347 = vmatprep.subr.bf16.mxu0 0
      %1348 = vmatpush1.bf16.xpose.msra.mxu0 0
      %1349 = vmatprep.subr.bf16.mxu0 0
      %1350 = vmatpush1.bf16.xpose.msra.mxu0 0
      %1351 = vmatprep.mubr.bf16.mxu0 0
      %1352 = vmatmul.mubr.bf16.gmra.mrb[0].mxu0 %v1272
      %v1353 = vpop.f32.mrb[0].mxu0
      %v1354 = vadd.f32 %v200, %v1353
      %v1355 = vpop.f32.mrb[0].mxu0
      %v1356 = vpop.f32.mrb[0].mxu0
      %v1357 = vadd.f32 %v200, %v1356
      %v1358 = vpop.f32.mrb[0].mxu0
      %1359 = vmatprep.mubr.bf16.mxu0 0
      %1360 = vmatmul.mubr.bf16.gmra.mrb[0].mxu0 %v1275
      %v1361 = vpop.f32.mrb[0].mxu0
      %v1362 = vadd.f32 %v200, %v1361
      %v1363 = vpop.f32.mrb[0].mxu0
      %v1364 = vpop.f32.mrb[0].mxu0
      %v1365 = vadd.f32 %v200, %v1364
      %v1366 = vpop.f32.mrb[0].mxu0
      %1367 = vmatprep.mubr.bf16.mxu0 0
      %1368 = vmatmul.mubr.bf16.gmra.mrb[0].mxu0 %v1278
      %v1369 = vpop.f32.mrb[0].mxu0
      %v1370 = vadd.f32 %v200, %v1369
      %v1371 = vpop.f32.mrb[0].mxu0
      %v1372 = vpop.f32.mrb[0].mxu0
      %v1373 = vadd.f32 %v200, %v1372
      %v1374 = vpop.f32.mrb[0].mxu0
      %1375 = vmatprep.mubr.bf16.mxu0 0
      %1376 = vmatmul.mubr.bf16.gmra.mrb[0].mxu0 %v1281
      %v1377 = vpop.f32.mrb[0].mxu0
      %v1378 = vadd.f32 %v200, %v1377
      %v1379 = vpop.f32.mrb[0].mxu0
      %v1380 = vpop.f32.mrb[0].mxu0
      %v1381 = vadd.f32 %v200, %v1380
      %v1382 = vpop.f32.mrb[0].mxu0
      %1383 = vmatprep.mubr.bf16.mxu0 0
      %1384 = vmatmul.mubr.bf16.gmra.mrb[0].mxu0 %v1284
      %v1385 = vpop.f32.mrb[0].mxu0
      %v1386 = vadd.f32 %v200, %v1385
      %v1387 = vpop.f32.mrb[0].mxu0
      %v1388 = vpop.f32.mrb[0].mxu0
      %v1389 = vadd.f32 %v200, %v1388
      %v1390 = vpop.f32.mrb[0].mxu0
      %1391 = vmatprep.mubr.bf16.mxu0 0
      %1392 = vmatmul.mubr.bf16.gmra.mrb[0].mxu0 %v1287
      %v1393 = vpop.f32.mrb[0].mxu0
      %v1394 = vadd.f32 %v200, %v1393
      %v1395 = vpop.f32.mrb[0].mxu0
      %v1396 = vpop.f32.mrb[0].mxu0
      %v1397 = vadd.f32 %v200, %v1396
      %v1398 = vpop.f32.mrb[0].mxu0
      %1399 = vmatprep.mubr.bf16.mxu0 0
      %1400 = vmatmul.mubr.bf16.gmra.mrb[0].mxu0 %v1290
      %v1401 = vpop.f32.mrb[0].mxu0
      %v1402 = vadd.f32 %v200, %v1401
      %v1403 = vpop.f32.mrb[0].mxu0
      %v1404 = vpop.f32.mrb[0].mxu0
      %v1405 = vadd.f32 %v200, %v1404
      %v1406 = vpop.f32.mrb[0].mxu0
      %1407 = vmatprep.mubr.bf16.mxu0 0
      %1408 = vmatmul.mubr.bf16.gmra.mrb[0].mxu0 %v1293
      %v1409 = vpop.f32.mrb[0].mxu0
      %v1410 = vadd.f32 %v200, %v1409
      %v1411 = vpop.f32.mrb[0].mxu0
      %v1412 = vpop.f32.mrb[0].mxu0
      %v1413 = vadd.f32 %v200, %v1412
      %v1414 = vpop.f32.mrb[0].mxu0
      %1415 = vdwg.mxu0
      %1416 = vmax.xlane.f32.xlu0 %v1354
      %v1417 = vpop.xlane.xlu0 %1416
      %1418 = vmax.xlane.f32.xlu0 %v1357
      %v1419 = vpop.xlane.xlu0 %1418
      %1420 = vmax.xlane.f32.xlu0 %v1362
      %v1421 = vpop.xlane.xlu0 %1420
      %1422 = vmax.xlane.f32.xlu0 %v1365
      %v1423 = vpop.xlane.xlu0 %1422
      %1424 = vmax.xlane.f32.xlu0 %v1370
      %v1425 = vpop.xlane.xlu0 %1424
      %1426 = vmax.xlane.f32.xlu0 %v1373
      %v1427 = vpop.xlane.xlu0 %1426
      %1428 = vmax.xlane.f32.xlu0 %v1378
      %v1429 = vpop.xlane.xlu0 %1428
      %1430 = vmax.xlane.f32.xlu0 %v1381
      %v1431 = vpop.xlane.xlu0 %1430
      %1432 = vmax.xlane.f32.xlu0 %v1386
      %v1433 = vpop.xlane.xlu0 %1432
      %1434 = vmax.xlane.f32.xlu0 %v1389
      %v1435 = vpop.xlane.xlu0 %1434
      %1436 = vmax.xlane.f32.xlu0 %v1394
      %v1437 = vpop.xlane.xlu0 %1436
      %1438 = vmax.xlane.f32.xlu0 %v1397
      %v1439 = vpop.xlane.xlu0 %1438
      %1440 = vmax.xlane.f32.xlu0 %v1402
      %v1441 = vpop.xlane.xlu0 %1440
      %1442 = vmax.xlane.f32.xlu0 %v1405
      %v1443 = vpop.xlane.xlu0 %1442
      %1444 = vmax.xlane.f32.xlu0 %v1410
      %v1445 = vpop.xlane.xlu0 %1444
      %1446 = vmax.xlane.f32.xlu0 %v1413
      %v1447 = vpop.xlane.xlu0 %1446
      %v1448 = vsub.f32 %v1354, %v1417
      %v1449 = vsub.f32 %v1357, %v1419
      %v1450 = vsub.f32 %v1362, %v1421
      %v1451 = vsub.f32 %v1365, %v1423
      %v1452 = vsub.f32 %v1370, %v1425
      %v1453 = vsub.f32 %v1373, %v1427
      %v1454 = vsub.f32 %v1378, %v1429
      %v1455 = vsub.f32 %v1381, %v1431
      %v1456 = vsub.f32 %v1386, %v1433
      %v1457 = vsub.f32 %v1389, %v1435
      %v1458 = vsub.f32 %v1394, %v1437
      %v1459 = vsub.f32 %v1397, %v1439
      %v1460 = vsub.f32 %v1402, %v1441
      %v1461 = vsub.f32 %v1405, %v1443
      %v1462 = vsub.f32 %v1410, %v1445
      %v1463 = vsub.f32 %v1413, %v1447
      %v1464 = vmul.f32 %v1448, 1.442695
      %v1465 = vpow.pop %v1464
      %v1466 = vmul.f32 %v1449, 1.442695
      %v1467 = vpow.pop %v1466
      %v1468 = vmul.f32 %v1450, 1.442695
      %v1469 = vpow.pop %v1468
      %v1470 = vmul.f32 %v1451, 1.442695
      %v1471 = vpow.pop %v1470
      %v1472 = vmul.f32 %v1452, 1.442695
      %v1473 = vpow.pop %v1472
      %v1474 = vmul.f32 %v1453, 1.442695
      %v1475 = vpow.pop %v1474
      %v1476 = vmul.f32 %v1454, 1.442695
      %v1477 = vpow.pop %v1476
      %v1478 = vmul.f32 %v1455, 1.442695
      %v1479 = vpow.pop %v1478
      %v1480 = vmul.f32 %v1456, 1.442695
      %v1481 = vpow.pop %v1480
      %v1482 = vmul.f32 %v1457, 1.442695
      %v1483 = vpow.pop %v1482
      %v1484 = vmul.f32 %v1458, 1.442695
      %v1485 = vpow.pop %v1484
      %v1486 = vmul.f32 %v1459, 1.442695
      %v1487 = vpow.pop %v1486
      %v1488 = vmul.f32 %v1460, 1.442695
      %v1489 = vpow.pop %v1488
      %v1490 = vmul.f32 %v1461, 1.442695
      %v1491 = vpow.pop %v1490
      %v1492 = vmul.f32 %v1462, 1.442695
      %v1493 = vpow.pop %v1492
      %v1494 = vmul.f32 %v1463, 1.442695
      %v1495 = vpow.pop %v1494
      %1496 = vadd.xlane.f32.xlu0 %v1465
      %v1497 = vpop.xlane.xlu0 %1496
      %1498 = vadd.xlane.f32.xlu0 %v1467
      %v1499 = vpop.xlane.xlu0 %1498
      %1500 = vadd.xlane.f32.xlu0 %v1469
      %v1501 = vpop.xlane.xlu0 %1500
      %1502 = vadd.xlane.f32.xlu0 %v1471
      %v1503 = vpop.xlane.xlu0 %1502
      %1504 = vadd.xlane.f32.xlu0 %v1473
      %v1505 = vpop.xlane.xlu0 %1504
      %1506 = vadd.xlane.f32.xlu0 %v1475
      %v1507 = vpop.xlane.xlu0 %1506
      %1508 = vadd.xlane.f32.xlu0 %v1477
      %v1509 = vpop.xlane.xlu0 %1508
      %1510 = vadd.xlane.f32.xlu0 %v1479
      %v1511 = vpop.xlane.xlu0 %1510
      %1512 = vadd.xlane.f32.xlu0 %v1481
      %v1513 = vpop.xlane.xlu0 %1512
      %1514 = vadd.xlane.f32.xlu0 %v1483
      %v1515 = vpop.xlane.xlu0 %1514
      %1516 = vadd.xlane.f32.xlu0 %v1485
      %v1517 = vpop.xlane.xlu0 %1516
      %1518 = vadd.xlane.f32.xlu0 %v1487
      %v1519 = vpop.xlane.xlu0 %1518
      %1520 = vadd.xlane.f32.xlu0 %v1489
      %v1521 = vpop.xlane.xlu0 %1520
      %1522 = vadd.xlane.f32.xlu0 %v1491
      %v1523 = vpop.xlane.xlu0 %1522
      %1524 = vadd.xlane.f32.xlu0 %v1493
      %v1525 = vpop.xlane.xlu0 %1524
      %1526 = vadd.xlane.f32.xlu0 %v1495
      %v1527 = vpop.xlane.xlu0 %1526
      %v1528 = vpack.c.bf16 %v1467, %v1465
      %v1529 = vpack.c.bf16 %v1471, %v1469
      %v1530 = vpack.c.bf16 %v1475, %v1473
      %v1531 = vpack.c.bf16 %v1479, %v1477
      %v1532 = vpack.c.bf16 %v1483, %v1481
      %v1533 = vpack.c.bf16 %v1487, %v1485
      %v1534 = vpack.c.bf16 %v1491, %v1489
      %v1535 = vpack.c.bf16 %v1495, %v1493
      %1536 = vrot.lane.b32.xlu0 %v628, 64
      %v1537 = vpop.permute.xlu0 %1536
      %1538 = vrot.lane.b32.xlu0 %v629, 64
      %v1539 = vpop.permute.xlu0 %1538
      %1540 = vrot.lane.b32.xlu0 %v630, 64
      %v1541 = vpop.permute.xlu0 %1540
      %1542 = vrot.lane.b32.xlu0 %v631, 64
      %v1543 = vpop.permute.xlu0 %1542
      %1544 = vrot.lane.b32.xlu0 %v632, 64
      %v1545 = vpop.permute.xlu0 %1544
      %1546 = vrot.lane.b32.xlu0 %v633, 64
      %v1547 = vpop.permute.xlu0 %1546
      %1548 = vrot.lane.b32.xlu0 %v634, 64
      %v1549 = vpop.permute.xlu0 %1548
      %1550 = vrot.lane.b32.xlu0 %v635, 64
      %v1551 = vpop.permute.xlu0 %1550
      %1560 = vmatprep.subr.bf16.mxu0 0
      %1561 = vmatpush1.bf16.msra.mxu0 %v1537
      %1562 = vmatprep.subr.bf16.mxu0 0
      %1563 = vmatpush1.bf16.msra.mxu0 %v1539
      %1564 = vmatprep.subr.bf16.mxu0 0
      %1565 = vmatpush1.bf16.msra.mxu0 %v1541
      %1566 = vmatprep.subr.bf16.mxu0 0
      %1567 = vmatpush1.bf16.msra.mxu0 %v1543
      %1568 = vmatprep.subr.bf16.mxu0 0
      %1569 = vmatpush1.bf16.msra.mxu0 %v1545
      %1570 = vmatprep.subr.bf16.mxu0 0
      %1571 = vmatpush1.bf16.msra.mxu0 %v1547
      %1572 = vmatprep.subr.bf16.mxu0 0
      %1573 = vmatpush1.bf16.msra.mxu0 %v1549
      %1574 = vmatprep.subr.bf16.mxu0 0
      %1575 = vmatpush1.bf16.msra.mxu0 %v1551
      %1576 = vmatprep.subr.bf16.mxu0 0
      %1577 = vmatpush1.bf16.msra.mxu0 0
      %1578 = vmatprep.subr.bf16.mxu0 0
      %1579 = vmatpush1.bf16.msra.mxu0 0
      %1580 = vmatprep.subr.bf16.mxu0 0
      %1581 = vmatpush1.bf16.msra.mxu0 0
      %1582 = vmatprep.subr.bf16.mxu0 0
      %1583 = vmatpush1.bf16.msra.mxu0 0
      %1584 = vmatprep.subr.bf16.mxu0 0
      %1585 = vmatpush1.bf16.msra.mxu0 0
      %1586 = vmatprep.subr.bf16.mxu0 0
      %1587 = vmatpush1.bf16.msra.mxu0 0
      %1588 = vmatprep.subr.bf16.mxu0 0
      %1589 = vmatpush1.bf16.msra.mxu0 0
      %1590 = vmatprep.subr.bf16.mxu0 0
      %1591 = vmatpush1.bf16.msra.mxu0 0
      %1592 = vmatprep.mubr.bf16.mxu0 0
      %1593 = vmatmul.mubr.bf16.gmra.mrb[0].mxu0 %v1528
      %v1594 = vpop.f32.mrb[0].mxu0
      %v1595 = vadd.f32 0.0, %v1594
      %v1596 = vpop.f32.mrb[0].mxu0
      %v1597 = vpop.f32.mrb[0].mxu0
      %v1598 = vadd.f32 0.0, %v1597
      %v1599 = vpop.f32.mrb[0].mxu0
      %1600 = vmatprep.mubr.bf16.mxu0 0
      %1601 = vmatmul.mubr.bf16.gmra.mrb[0].mxu0 %v1529
      %v1602 = vpop.f32.mrb[0].mxu0
      %v1603 = vadd.f32 0.0, %v1602
      %v1604 = vpop.f32.mrb[0].mxu0
      %v1605 = vpop.f32.mrb[0].mxu0
      %v1606 = vadd.f32 0.0, %v1605
      %v1607 = vpop.f32.mrb[0].mxu0
      %1608 = vmatprep.mubr.bf16.mxu0 0
      %1609 = vmatmul.mubr.bf16.gmra.mrb[0].mxu0 %v1530
      %v1610 = vpop.f32.mrb[0].mxu0
      %v1611 = vadd.f32 0.0, %v1610
      %v1612 = vpop.f32.mrb[0].mxu0
      %v1613 = vpop.f32.mrb[0].mxu0
      %v1614 = vadd.f32 0.0, %v1613
      %v1615 = vpop.f32.mrb[0].mxu0
      %1616 = vmatprep.mubr.bf16.mxu0 0
      %1617 = vmatmul.mubr.bf16.gmra.mrb[0].mxu0 %v1531
      %v1618 = vpop.f32.mrb[0].mxu0
      %v1619 = vadd.f32 0.0, %v1618
      %v1620 = vpop.f32.mrb[0].mxu0
      %v1621 = vpop.f32.mrb[0].mxu0
      %v1622 = vadd.f32 0.0, %v1621
      %v1623 = vpop.f32.mrb[0].mxu0
      %1624 = vmatprep.mubr.bf16.mxu0 0
      %1625 = vmatmul.mubr.bf16.gmra.mrb[0].mxu0 %v1532
      %v1626 = vpop.f32.mrb[0].mxu0
      %v1627 = vadd.f32 0.0, %v1626
      %v1628 = vpop.f32.mrb[0].mxu0
      %v1629 = vpop.f32.mrb[0].mxu0
      %v1630 = vadd.f32 0.0, %v1629
      %v1631 = vpop.f32.mrb[0].mxu0
      %1632 = vmatprep.mubr.bf16.mxu0 0
      %1633 = vmatmul.mubr.bf16.gmra.mrb[0].mxu0 %v1533
      %v1634 = vpop.f32.mrb[0].mxu0
      %v1635 = vadd.f32 0.0, %v1634
      %v1636 = vpop.f32.mrb[0].mxu0
      %v1637 = vpop.f32.mrb[0].mxu0
      %v1638 = vadd.f32 0.0, %v1637
      %v1639 = vpop.f32.mrb[0].mxu0
      %1640 = vmatprep.mubr.bf16.mxu0 0
      %1641 = vmatmul.mubr.bf16.gmra.mrb[0].mxu0 %v1534
      %v1642 = vpop.f32.mrb[0].mxu0
      %v1643 = vadd.f32 0.0, %v1642
      %v1644 = vpop.f32.mrb[0].mxu0
      %v1645 = vpop.f32.mrb[0].mxu0
      %v1646 = vadd.f32 0.0, %v1645
      %v1647 = vpop.f32.mrb[0].mxu0
      %1648 = vmatprep.mubr.bf16.mxu0 0
      %1649 = vmatmul.mubr.bf16.gmra.mrb[0].mxu0 %v1535
      %v1650 = vpop.f32.mrb[0].mxu0
      %v1651 = vadd.f32 0.0, %v1650
      %v1652 = vpop.f32.mrb[0].mxu0
      %v1653 = vpop.f32.mrb[0].mxu0
      %v1654 = vadd.f32 0.0, %v1653
      %v1655 = vpop.f32.mrb[0].mxu0
      %1656 = vdwg.mxu0
      %v1657 = vrcp.pop %v1497
      %v1658 = vrcp.pop %v1499
      %v1659 = vrcp.pop %v1501
      %v1660 = vrcp.pop %v1503
      %v1661 = vrcp.pop %v1505
      %v1662 = vrcp.pop %v1507
      %v1663 = vrcp.pop %v1509
      %v1664 = vrcp.pop %v1511
      %v1665 = vrcp.pop %v1513
      %v1666 = vrcp.pop %v1515
      %v1667 = vrcp.pop %v1517
      %v1668 = vrcp.pop %v1519
      %v1669 = vrcp.pop %v1521
      %v1670 = vrcp.pop %v1523
      %v1671 = vrcp.pop %v1525
      %v1672 = vrcp.pop %v1527
      %v1673 = vmul.f32 %v1595, %v1657
      %v1674 = vmul.f32 %v1598, %v1658
      %v1675 = vmul.f32 %v1603, %v1659
      %v1676 = vmul.f32 %v1606, %v1660
      %v1677 = vmul.f32 %v1611, %v1661
      %v1678 = vmul.f32 %v1614, %v1662
      %v1679 = vmul.f32 %v1619, %v1663
      %v1680 = vmul.f32 %v1622, %v1664
      %v1681 = vmul.f32 %v1627, %v1665
      %v1682 = vmul.f32 %v1630, %v1666
      %v1683 = vmul.f32 %v1635, %v1667
      %v1684 = vmul.f32 %v1638, %v1668
      %v1685 = vmul.f32 %v1643, %v1669
      %v1686 = vmul.f32 %v1646, %v1670
      %v1687 = vmul.f32 %v1651, %v1671
      %v1688 = vmul.f32 %v1654, %v1672
      %v1689 = vpack.c.bf16 %v1674, %v1673
      %v1690 = vpack.c.bf16 %v1676, %v1675
      %v1691 = vpack.c.bf16 %v1678, %v1677
      %v1692 = vpack.c.bf16 %v1680, %v1679
      %v1693 = vpack.c.bf16 %v1682, %v1681
      %v1694 = vpack.c.bf16 %v1684, %v1683
      %v1695 = vpack.c.bf16 %v1686, %v1685
      %v1696 = vpack.c.bf16 %v1688, %v1687
      %1697 = vrot.lane.b32.xlu0 %v282, 32
      %v1698 = vpop.permute.xlu0 %1697
      %1699 = vrot.lane.b32.xlu0 %v283, 32
      %v1700 = vpop.permute.xlu0 %1699
      %1701 = vrot.lane.b32.xlu0 %v284, 32
      %v1702 = vpop.permute.xlu0 %1701
      %1703 = vrot.lane.b32.xlu0 %v285, 32
      %v1704 = vpop.permute.xlu0 %1703
      %1705 = vrot.lane.b32.xlu0 %v286, 32
      %v1706 = vpop.permute.xlu0 %1705
      %1707 = vrot.lane.b32.xlu0 %v287, 32
      %v1708 = vpop.permute.xlu0 %1707
      %1709 = vrot.lane.b32.xlu0 %v288, 32
      %v1710 = vpop.permute.xlu0 %1709
      %1711 = vrot.lane.b32.xlu0 %v289, 32
      %v1712 = vpop.permute.xlu0 %1711
      %1713 = vrot.lane.b32.xlu0 %v322, 32
      %v1714 = vpop.permute.xlu0 %1713
      %1715 = vrot.lane.b32.xlu0 %v323, 32
      %v1716 = vpop.permute.xlu0 %1715
      %1717 = vrot.lane.b32.xlu0 %v324, 32
      %v1718 = vpop.permute.xlu0 %1717
      %1719 = vrot.lane.b32.xlu0 %v325, 32
      %v1720 = vpop.permute.xlu0 %1719
      %1721 = vrot.lane.b32.xlu0 %v326, 32
      %v1722 = vpop.permute.xlu0 %1721
      %1723 = vrot.lane.b32.xlu0 %v327, 32
      %v1724 = vpop.permute.xlu0 %1723
      %1725 = vrot.lane.b32.xlu0 %v328, 32
      %v1726 = vpop.permute.xlu0 %1725
      %1727 = vrot.lane.b32.xlu0 %v329, 32
      %v1728 = vpop.permute.xlu0 %1727
      %v1730 = vsel %vm330, %v1698, 0
      %v1733 = vsel %vm330, %v1700, 0
      %v1736 = vsel %vm330, %v1702, 0
      %v1739 = vsel %vm330, %v1704, 0
      %v1742 = vsel %vm330, %v1706, 0
      %v1745 = vsel %vm330, %v1708, 0
      %v1748 = vsel %vm330, %v1710, 0
      %v1751 = vsel %vm330, %v1712, 0
      %v1754 = vsel %vm330, %v1714, 0
      %v1757 = vsel %vm330, %v1716, 0
      %v1760 = vsel %vm330, %v1718, 0
      %v1763 = vsel %vm330, %v1720, 0
      %v1766 = vsel %vm330, %v1722, 0
      %v1769 = vsel %vm330, %v1724, 0
      %v1772 = vsel %vm330, %v1726, 0
      %v1775 = vsel %vm330, %v1728, 0
      %1777 = vmatprep.subr.bf16.mxu0 0
      %1778 = vmatpush1.bf16.xpose.msra.mxu0 %v1754
      %1779 = vmatprep.subr.bf16.mxu0 0
      %1780 = vmatpush1.bf16.xpose.msra.mxu0 %v1757
      %1781 = vmatprep.subr.bf16.mxu0 0
      %1782 = vmatpush1.bf16.xpose.msra.mxu0 %v1760
      %1783 = vmatprep.subr.bf16.mxu0 0
      %1784 = vmatpush1.bf16.xpose.msra.mxu0 %v1763
      %1785 = vmatprep.subr.bf16.mxu0 0
      %1786 = vmatpush1.bf16.xpose.msra.mxu0 %v1766
      %1787 = vmatprep.subr.bf16.mxu0 0
      %1788 = vmatpush1.bf16.xpose.msra.mxu0 %v1769
      %1789 = vmatprep.subr.bf16.mxu0 0
      %1790 = vmatpush1.bf16.xpose.msra.mxu0 %v1772
      %1791 = vmatprep.subr.bf16.mxu0 0
      %1792 = vmatpush1.bf16.xpose.msra.mxu0 %v1775
      %1793 = vmatprep.subr.bf16.mxu0 0
      %1794 = vmatpush1.bf16.xpose.msra.mxu0 0
      %1795 = vmatprep.subr.bf16.mxu0 0
      %1796 = vmatpush1.bf16.xpose.msra.mxu0 0
      %1797 = vmatprep.subr.bf16.mxu0 0
      %1798 = vmatpush1.bf16.xpose.msra.mxu0 0
      %1799 = vmatprep.subr.bf16.mxu0 0
      %1800 = vmatpush1.bf16.xpose.msra.mxu0 0
      %1801 = vmatprep.subr.bf16.mxu0 0
      %1802 = vmatpush1.bf16.xpose.msra.mxu0 0
      %1803 = vmatprep.subr.bf16.mxu0 0
      %1804 = vmatpush1.bf16.xpose.msra.mxu0 0
      %1805 = vmatprep.subr.bf16.mxu0 0
      %1806 = vmatpush1.bf16.xpose.msra.mxu0 0
      %1807 = vmatprep.subr.bf16.mxu0 0
      %1808 = vmatpush1.bf16.xpose.msra.mxu0 0
      %1809 = vmatprep.mubr.bf16.mxu0 0
      %1810 = vmatmul.mubr.bf16.gmra.mrb[0].mxu0 %v1730
      %v1811 = vpop.f32.mrb[0].mxu0
      %v1812 = vadd.f32 %v200, %v1811
      %v1813 = vpop.f32.mrb[0].mxu0
      %v1814 = vpop.f32.mrb[0].mxu0
      %v1815 = vadd.f32 %v200, %v1814
      %v1816 = vpop.f32.mrb[0].mxu0
      %1817 = vmatprep.mubr.bf16.mxu0 0
      %1818 = vmatmul.mubr.bf16.gmra.mrb[0].mxu0 %v1733
      %v1819 = vpop.f32.mrb[0].mxu0
      %v1820 = vadd.f32 %v200, %v1819
      %v1821 = vpop.f32.mrb[0].mxu0
      %v1822 = vpop.f32.mrb[0].mxu0
      %v1823 = vadd.f32 %v200, %v1822
      %v1824 = vpop.f32.mrb[0].mxu0
      %1825 = vmatprep.mubr.bf16.mxu0 0
      %1826 = vmatmul.mubr.bf16.gmra.mrb[0].mxu0 %v1736
      %v1827 = vpop.f32.mrb[0].mxu0
      %v1828 = vadd.f32 %v200, %v1827
      %v1829 = vpop.f32.mrb[0].mxu0
      %v1830 = vpop.f32.mrb[0].mxu0
      %v1831 = vadd.f32 %v200, %v1830
      %v1832 = vpop.f32.mrb[0].mxu0
      %1833 = vmatprep.mubr.bf16.mxu0 0
      %1834 = vmatmul.mubr.bf16.gmra.mrb[0].mxu0 %v1739
      %v1835 = vpop.f32.mrb[0].mxu0
      %v1836 = vadd.f32 %v200, %v1835
      %v1837 = vpop.f32.mrb[0].mxu0
      %v1838 = vpop.f32.mrb[0].mxu0
      %v1839 = vadd.f32 %v200, %v1838
      %v1840 = vpop.f32.mrb[0].mxu0
      %1841 = vmatprep.mubr.bf16.mxu0 0
      %1842 = vmatmul.mubr.bf16.gmra.mrb[0].mxu0 %v1742
      %v1843 = vpop.f32.mrb[0].mxu0
      %v1844 = vadd.f32 %v200, %v1843
      %v1845 = vpop.f32.mrb[0].mxu0
      %v1846 = vpop.f32.mrb[0].mxu0
      %v1847 = vadd.f32 %v200, %v1846
      %v1848 = vpop.f32.mrb[0].mxu0
      %1849 = vmatprep.mubr.bf16.mxu0 0
      %1850 = vmatmul.mubr.bf16.gmra.mrb[0].mxu0 %v1745
      %v1851 = vpop.f32.mrb[0].mxu0
      %v1852 = vadd.f32 %v200, %v1851
      %v1853 = vpop.f32.mrb[0].mxu0
      %v1854 = vpop.f32.mrb[0].mxu0
      %v1855 = vadd.f32 %v200, %v1854
      %v1856 = vpop.f32.mrb[0].mxu0
      %1857 = vmatprep.mubr.bf16.mxu0 0
      %1858 = vmatmul.mubr.bf16.gmra.mrb[0].mxu0 %v1748
      %v1859 = vpop.f32.mrb[0].mxu0
      %v1860 = vadd.f32 %v200, %v1859
      %v1861 = vpop.f32.mrb[0].mxu0
      %v1862 = vpop.f32.mrb[0].mxu0
      %v1863 = vadd.f32 %v200, %v1862
      %v1864 = vpop.f32.mrb[0].mxu0
      %1865 = vmatprep.mubr.bf16.mxu0 0
      %1866 = vmatmul.mubr.bf16.gmra.mrb[0].mxu0 %v1751
      %v1867 = vpop.f32.mrb[0].mxu0
      %v1868 = vadd.f32 %v200, %v1867
      %v1869 = vpop.f32.mrb[0].mxu0
      %v1870 = vpop.f32.mrb[0].mxu0
      %v1871 = vadd.f32 %v200, %v1870
      %v1872 = vpop.f32.mrb[0].mxu0
      %1873 = vdwg.mxu0
      %1874 = vmax.xlane.f32.xlu0 %v1812
      %v1875 = vpop.xlane.xlu0 %1874
      %1876 = vmax.xlane.f32.xlu0 %v1815
      %v1877 = vpop.xlane.xlu0 %1876
      %1878 = vmax.xlane.f32.xlu0 %v1820
      %v1879 = vpop.xlane.xlu0 %1878
      %1880 = vmax.xlane.f32.xlu0 %v1823
      %v1881 = vpop.xlane.xlu0 %1880
      %1882 = vmax.xlane.f32.xlu0 %v1828
      %v1883 = vpop.xlane.xlu0 %1882
      %1884 = vmax.xlane.f32.xlu0 %v1831
      %v1885 = vpop.xlane.xlu0 %1884
      %1886 = vmax.xlane.f32.xlu0 %v1836
      %v1887 = vpop.xlane.xlu0 %1886
      %1888 = vmax.xlane.f32.xlu0 %v1839
      %v1889 = vpop.xlane.xlu0 %1888
      %1890 = vmax.xlane.f32.xlu0 %v1844
      %v1891 = vpop.xlane.xlu0 %1890
      %1892 = vmax.xlane.f32.xlu0 %v1847
      %v1893 = vpop.xlane.xlu0 %1892
      %1894 = vmax.xlane.f32.xlu0 %v1852
      %v1895 = vpop.xlane.xlu0 %1894
      %1896 = vmax.xlane.f32.xlu0 %v1855
      %v1897 = vpop.xlane.xlu0 %1896
      %1898 = vmax.xlane.f32.xlu0 %v1860
      %v1899 = vpop.xlane.xlu0 %1898
      %1900 = vmax.xlane.f32.xlu0 %v1863
      %v1901 = vpop.xlane.xlu0 %1900
      %1902 = vmax.xlane.f32.xlu0 %v1868
      %v1903 = vpop.xlane.xlu0 %1902
      %1904 = vmax.xlane.f32.xlu0 %v1871
      %v1905 = vpop.xlane.xlu0 %1904
      %v1906 = vsub.f32 %v1812, %v1875
      %v1907 = vsub.f32 %v1815, %v1877
      %v1908 = vsub.f32 %v1820, %v1879
      %v1909 = vsub.f32 %v1823, %v1881
      %v1910 = vsub.f32 %v1828, %v1883
      %v1911 = vsub.f32 %v1831, %v1885
      %v1912 = vsub.f32 %v1836, %v1887
      %v1913 = vsub.f32 %v1839, %v1889
      %v1914 = vsub.f32 %v1844, %v1891
      %v1915 = vsub.f32 %v1847, %v1893
      %v1916 = vsub.f32 %v1852, %v1895
      %v1917 = vsub.f32 %v1855, %v1897
      %v1918 = vsub.f32 %v1860, %v1899
      %v1919 = vsub.f32 %v1863, %v1901
      %v1920 = vsub.f32 %v1868, %v1903
      %v1921 = vsub.f32 %v1871, %v1905
      %v1922 = vmul.f32 %v1906, 1.442695
      %v1923 = vpow.pop %v1922
      %v1924 = vmul.f32 %v1907, 1.442695
      %v1925 = vpow.pop %v1924
      %v1926 = vmul.f32 %v1908, 1.442695
      %v1927 = vpow.pop %v1926
      %v1928 = vmul.f32 %v1909, 1.442695
      %v1929 = vpow.pop %v1928
      %v1930 = vmul.f32 %v1910, 1.442695
      %v1931 = vpow.pop %v1930
      %v1932 = vmul.f32 %v1911, 1.442695
      %v1933 = vpow.pop %v1932
      %v1934 = vmul.f32 %v1912, 1.442695
      %v1935 = vpow.pop %v1934
      %v1936 = vmul.f32 %v1913, 1.442695
      %v1937 = vpow.pop %v1936
      %v1938 = vmul.f32 %v1914, 1.442695
      %v1939 = vpow.pop %v1938
      %v1940 = vmul.f32 %v1915, 1.442695
      %v1941 = vpow.pop %v1940
      %v1942 = vmul.f32 %v1916, 1.442695
      %v1943 = vpow.pop %v1942
      %v1944 = vmul.f32 %v1917, 1.442695
      %v1945 = vpow.pop %v1944
      %v1946 = vmul.f32 %v1918, 1.442695
      %v1947 = vpow.pop %v1946
      %v1948 = vmul.f32 %v1919, 1.442695
      %v1949 = vpow.pop %v1948
      %v1950 = vmul.f32 %v1920, 1.442695
      %v1951 = vpow.pop %v1950
      %v1952 = vmul.f32 %v1921, 1.442695
      %v1953 = vpow.pop %v1952
      %1954 = vadd.xlane.f32.xlu0 %v1923
      %v1955 = vpop.xlane.xlu0 %1954
      %1956 = vadd.xlane.f32.xlu0 %v1925
      %v1957 = vpop.xlane.xlu0 %1956
      %1958 = vadd.xlane.f32.xlu0 %v1927
      %v1959 = vpop.xlane.xlu0 %1958
      %1960 = vadd.xlane.f32.xlu0 %v1929
      %v1961 = vpop.xlane.xlu0 %1960
      %1962 = vadd.xlane.f32.xlu0 %v1931
      %v1963 = vpop.xlane.xlu0 %1962
      %1964 = vadd.xlane.f32.xlu0 %v1933
      %v1965 = vpop.xlane.xlu0 %1964
      %1966 = vadd.xlane.f32.xlu0 %v1935
      %v1967 = vpop.xlane.xlu0 %1966
      %1968 = vadd.xlane.f32.xlu0 %v1937
      %v1969 = vpop.xlane.xlu0 %1968
      %1970 = vadd.xlane.f32.xlu0 %v1939
      %v1971 = vpop.xlane.xlu0 %1970
      %1972 = vadd.xlane.f32.xlu0 %v1941
      %v1973 = vpop.xlane.xlu0 %1972
      %1974 = vadd.xlane.f32.xlu0 %v1943
      %v1975 = vpop.xlane.xlu0 %1974
      %1976 = vadd.xlane.f32.xlu0 %v1945
      %v1977 = vpop.xlane.xlu0 %1976
      %1978 = vadd.xlane.f32.xlu0 %v1947
      %v1979 = vpop.xlane.xlu0 %1978
      %1980 = vadd.xlane.f32.xlu0 %v1949
      %v1981 = vpop.xlane.xlu0 %1980
      %1982 = vadd.xlane.f32.xlu0 %v1951
      %v1983 = vpop.xlane.xlu0 %1982
      %1984 = vadd.xlane.f32.xlu0 %v1953
      %v1985 = vpop.xlane.xlu0 %1984
      %v1986 = vpack.c.bf16 %v1925, %v1923
      %v1987 = vpack.c.bf16 %v1929, %v1927
      %v1988 = vpack.c.bf16 %v1933, %v1931
      %v1989 = vpack.c.bf16 %v1937, %v1935
      %v1990 = vpack.c.bf16 %v1941, %v1939
      %v1991 = vpack.c.bf16 %v1945, %v1943
      %v1992 = vpack.c.bf16 %v1949, %v1947
      %v1993 = vpack.c.bf16 %v1953, %v1951
      %1994 = vrot.lane.b32.xlu0 %v628, 32
      %v1995 = vpop.permute.xlu0 %1994
      %1996 = vrot.lane.b32.xlu0 %v629, 32
      %v1997 = vpop.permute.xlu0 %1996
      %1998 = vrot.lane.b32.xlu0 %v630, 32
      %v1999 = vpop.permute.xlu0 %1998
      %2000 = vrot.lane.b32.xlu0 %v631, 32
      %v2001 = vpop.permute.xlu0 %2000
      %2002 = vrot.lane.b32.xlu0 %v632, 32
      %v2003 = vpop.permute.xlu0 %2002
      %2004 = vrot.lane.b32.xlu0 %v633, 32
      %v2005 = vpop.permute.xlu0 %2004
      %2006 = vrot.lane.b32.xlu0 %v634, 32
      %v2007 = vpop.permute.xlu0 %2006
      %2008 = vrot.lane.b32.xlu0 %v635, 32
      %v2009 = vpop.permute.xlu0 %2008
      %2018 = vmatprep.subr.bf16.mxu0 0
      %2019 = vmatpush1.bf16.msra.mxu0 %v1995
      %2020 = vmatprep.subr.bf16.mxu0 0
      %2021 = vmatpush1.bf16.msra.mxu0 %v1997
      %2022 = vmatprep.subr.bf16.mxu0 0
      %2023 = vmatpush1.bf16.msra.mxu0 %v1999
      %2024 = vmatprep.subr.bf16.mxu0 0
      %2025 = vmatpush1.bf16.msra.mxu0 %v2001
      %2026 = vmatprep.subr.bf16.mxu0 0
      %2027 = vmatpush1.bf16.msra.mxu0 %v2003
      %2028 = vmatprep.subr.bf16.mxu0 0
      %2029 = vmatpush1.bf16.msra.mxu0 %v2005
      %2030 = vmatprep.subr.bf16.mxu0 0
      %2031 = vmatpush1.bf16.msra.mxu0 %v2007
      %2032 = vmatprep.subr.bf16.mxu0 0
      %2033 = vmatpush1.bf16.msra.mxu0 %v2009
      %2034 = vmatprep.subr.bf16.mxu0 0
      %2035 = vmatpush1.bf16.msra.mxu0 0
      %2036 = vmatprep.subr.bf16.mxu0 0
      %2037 = vmatpush1.bf16.msra.mxu0 0
      %2038 = vmatprep.subr.bf16.mxu0 0
      %2039 = vmatpush1.bf16.msra.mxu0 0
      %2040 = vmatprep.subr.bf16.mxu0 0
      %2041 = vmatpush1.bf16.msra.mxu0 0
      %2042 = vmatprep.subr.bf16.mxu0 0
      %2043 = vmatpush1.bf16.msra.mxu0 0
      %2044 = vmatprep.subr.bf16.mxu0 0
      %2045 = vmatpush1.bf16.msra.mxu0 0
      %2046 = vmatprep.subr.bf16.mxu0 0
      %2047 = vmatpush1.bf16.msra.mxu0 0
      %2048 = vmatprep.subr.bf16.mxu0 0
      %2049 = vmatpush1.bf16.msra.mxu0 0
      %2050 = vmatprep.mubr.bf16.mxu0 0
      %2051 = vmatmul.mubr.bf16.gmra.mrb[0].mxu0 %v1986
      %v2052 = vpop.f32.mrb[0].mxu0
      %v2053 = vadd.f32 0.0, %v2052
      %v2054 = vpop.f32.mrb[0].mxu0
      %v2055 = vpop.f32.mrb[0].mxu0
      %v2056 = vadd.f32 0.0, %v2055
      %v2057 = vpop.f32.mrb[0].mxu0
      %2058 = vmatprep.mubr.bf16.mxu0 0
      %2059 = vmatmul.mubr.bf16.gmra.mrb[0].mxu0 %v1987
      %v2060 = vpop.f32.mrb[0].mxu0
      %v2061 = vadd.f32 0.0, %v2060
      %v2062 = vpop.f32.mrb[0].mxu0
      %v2063 = vpop.f32.mrb[0].mxu0
      %v2064 = vadd.f32 0.0, %v2063
      %v2065 = vpop.f32.mrb[0].mxu0
      %2066 = vmatprep.mubr.bf16.mxu0 0
      %2067 = vmatmul.mubr.bf16.gmra.mrb[0].mxu0 %v1988
      %v2068 = vpop.f32.mrb[0].mxu0
      %v2069 = vadd.f32 0.0, %v2068
      %v2070 = vpop.f32.mrb[0].mxu0
      %v2071 = vpop.f32.mrb[0].mxu0
      %v2072 = vadd.f32 0.0, %v2071
      %v2073 = vpop.f32.mrb[0].mxu0
      %2074 = vmatprep.mubr.bf16.mxu0 0
      %2075 = vmatmul.mubr.bf16.gmra.mrb[0].mxu0 %v1989
      %v2076 = vpop.f32.mrb[0].mxu0
      %v2077 = vadd.f32 0.0, %v2076
      %v2078 = vpop.f32.mrb[0].mxu0
      %v2079 = vpop.f32.mrb[0].mxu0
      %v2080 = vadd.f32 0.0, %v2079
      %v2081 = vpop.f32.mrb[0].mxu0
      %2082 = vmatprep.mubr.bf16.mxu0 0
      %2083 = vmatmul.mubr.bf16.gmra.mrb[0].mxu0 %v1990
      %v2084 = vpop.f32.mrb[0].mxu0
      %v2085 = vadd.f32 0.0, %v2084
      %v2086 = vpop.f32.mrb[0].mxu0
      %v2087 = vpop.f32.mrb[0].mxu0
      %v2088 = vadd.f32 0.0, %v2087
      %v2089 = vpop.f32.mrb[0].mxu0
      %2090 = vmatprep.mubr.bf16.mxu0 0
      %2091 = vmatmul.mubr.bf16.gmra.mrb[0].mxu0 %v1991
      %v2092 = vpop.f32.mrb[0].mxu0
      %v2093 = vadd.f32 0.0, %v2092
      %v2094 = vpop.f32.mrb[0].mxu0
      %v2095 = vpop.f32.mrb[0].mxu0
      %v2096 = vadd.f32 0.0, %v2095
      %v2097 = vpop.f32.mrb[0].mxu0
      %2098 = vmatprep.mubr.bf16.mxu0 0
      %2099 = vmatmul.mubr.bf16.gmra.mrb[0].mxu0 %v1992
      %v2100 = vpop.f32.mrb[0].mxu0
      %v2101 = vadd.f32 0.0, %v2100
      %v2102 = vpop.f32.mrb[0].mxu0
      %v2103 = vpop.f32.mrb[0].mxu0
      %v2104 = vadd.f32 0.0, %v2103
      %v2105 = vpop.f32.mrb[0].mxu0
      %2106 = vmatprep.mubr.bf16.mxu0 0
      %2107 = vmatmul.mubr.bf16.gmra.mrb[0].mxu0 %v1993
      %v2108 = vpop.f32.mrb[0].mxu0
      %v2109 = vadd.f32 0.0, %v2108
      %v2110 = vpop.f32.mrb[0].mxu0
      %v2111 = vpop.f32.mrb[0].mxu0
      %v2112 = vadd.f32 0.0, %v2111
      %v2113 = vpop.f32.mrb[0].mxu0
      %2114 = vdwg.mxu0
      %v2115 = vrcp.pop %v1955
      %v2116 = vrcp.pop %v1957
      %v2117 = vrcp.pop %v1959
      %v2118 = vrcp.pop %v1961
      %v2119 = vrcp.pop %v1963
      %v2120 = vrcp.pop %v1965
      %v2121 = vrcp.pop %v1967
      %v2122 = vrcp.pop %v1969
      %v2123 = vrcp.pop %v1971
      %v2124 = vrcp.pop %v1973
      %v2125 = vrcp.pop %v1975
      %v2126 = vrcp.pop %v1977
      %v2127 = vrcp.pop %v1979
      %v2128 = vrcp.pop %v1981
      %v2129 = vrcp.pop %v1983
      %v2130 = vrcp.pop %v1985
      %v2131 = vmul.f32 %v2053, %v2115
      %v2132 = vmul.f32 %v2056, %v2116
      %v2133 = vmul.f32 %v2061, %v2117
      %v2134 = vmul.f32 %v2064, %v2118
      %v2135 = vmul.f32 %v2069, %v2119
      %v2136 = vmul.f32 %v2072, %v2120
      %v2137 = vmul.f32 %v2077, %v2121
      %v2138 = vmul.f32 %v2080, %v2122
      %v2139 = vmul.f32 %v2085, %v2123
      %v2140 = vmul.f32 %v2088, %v2124
      %v2141 = vmul.f32 %v2093, %v2125
      %v2142 = vmul.f32 %v2096, %v2126
      %v2143 = vmul.f32 %v2101, %v2127
      %v2144 = vmul.f32 %v2104, %v2128
      %v2145 = vmul.f32 %v2109, %v2129
      %v2146 = vmul.f32 %v2112, %v2130
      %v2147 = vpack.c.bf16 %v2132, %v2131
      %v2148 = vpack.c.bf16 %v2134, %v2133
      %v2149 = vpack.c.bf16 %v2136, %v2135
      %v2150 = vpack.c.bf16 %v2138, %v2137
      %v2151 = vpack.c.bf16 %v2140, %v2139
      %v2152 = vpack.c.bf16 %v2142, %v2141
      %v2153 = vpack.c.bf16 %v2144, %v2143
      %v2154 = vpack.c.bf16 %v2146, %v2145
      %2163 = vrot.lane.b32.xlu0 %v1231, 32
      %v2164 = vpop.permute.xlu0 %2163
      %2165 = vrot.lane.b32.xlu0 %v1232, 32
      %v2166 = vpop.permute.xlu0 %2165
      %2167 = vrot.lane.b32.xlu0 %v1233, 32
      %v2168 = vpop.permute.xlu0 %2167
      %2169 = vrot.lane.b32.xlu0 %v1234, 32
      %v2170 = vpop.permute.xlu0 %2169
      %2171 = vrot.lane.b32.xlu0 %v1235, 32
      %v2172 = vpop.permute.xlu0 %2171
      %2173 = vrot.lane.b32.xlu0 %v1236, 32
      %v2174 = vpop.permute.xlu0 %2173
      %2175 = vrot.lane.b32.xlu0 %v1237, 32
      %v2176 = vpop.permute.xlu0 %2175
      %2177 = vrot.lane.b32.xlu0 %v1238, 32
      %v2178 = vpop.permute.xlu0 %2177
      %2187 = vrot.lane.b32.xlu0 %v1689, 64
      %v2188 = vpop.permute.xlu0 %2187
      %2189 = vrot.lane.b32.xlu0 %v1690, 64
      %v2190 = vpop.permute.xlu0 %2189
      %2191 = vrot.lane.b32.xlu0 %v1691, 64
      %v2192 = vpop.permute.xlu0 %2191
      %2193 = vrot.lane.b32.xlu0 %v1692, 64
      %v2194 = vpop.permute.xlu0 %2193
      %2195 = vrot.lane.b32.xlu0 %v1693, 64
      %v2196 = vpop.permute.xlu0 %2195
      %2197 = vrot.lane.b32.xlu0 %v1694, 64
      %v2198 = vpop.permute.xlu0 %2197
      %2199 = vrot.lane.b32.xlu0 %v1695, 64
      %v2200 = vpop.permute.xlu0 %2199
      %2201 = vrot.lane.b32.xlu0 %v1696, 64
      %v2202 = vpop.permute.xlu0 %2201
      %2211 = vrot.lane.b32.xlu0 %v2147, 96
      %v2212 = vpop.permute.xlu0 %2211
      %2213 = vrot.lane.b32.xlu0 %v2148, 96
      %v2214 = vpop.permute.xlu0 %2213
      %2215 = vrot.lane.b32.xlu0 %v2149, 96
      %v2216 = vpop.permute.xlu0 %2215
      %2217 = vrot.lane.b32.xlu0 %v2150, 96
      %v2218 = vpop.permute.xlu0 %2217
      %2219 = vrot.lane.b32.xlu0 %v2151, 96
      %v2220 = vpop.permute.xlu0 %2219
      %2221 = vrot.lane.b32.xlu0 %v2152, 96
      %v2222 = vpop.permute.xlu0 %2221
      %2223 = vrot.lane.b32.xlu0 %v2153, 96
      %v2224 = vpop.permute.xlu0 %2223
      %2225 = vrot.lane.b32.xlu0 %v2154, 96
      %v2226 = vpop.permute.xlu0 %2225
      %v2229 = vsel %vm330, %v773, %v2164
      %v2232 = vsel %vm330, %v774, %v2166
      %v2235 = vsel %vm330, %v775, %v2168
      %v2238 = vsel %vm330, %v776, %v2170
      %v2241 = vsel %vm330, %v777, %v2172
      %v2244 = vsel %vm330, %v778, %v2174
      %v2247 = vsel %vm330, %v779, %v2176
      %v2250 = vsel %vm330, %v780, %v2178
      %vm2251 = vcmask 523264
      %v2253 = vsel %vm2251, %v2229, %v2188
      %v2255 = vsel %vm2251, %v2232, %v2190
      %v2257 = vsel %vm2251, %v2235, %v2192
      %v2259 = vsel %vm2251, %v2238, %v2194
      %v2261 = vsel %vm2251, %v2241, %v2196
      %v2263 = vsel %vm2251, %v2244, %v2198
      %v2265 = vsel %vm2251, %v2247, %v2200
      %v2267 = vsel %vm2251, %v2250, %v2202
      %vm2268 = vcmask 785408
      %v2270 = vsel %vm2268, %v2253, %v2212
      %v2272 = vsel %vm2268, %v2255, %v2214
      %v2274 = vsel %vm2268, %v2257, %v2216
      %v2276 = vsel %vm2268, %v2259, %v2218
      %v2278 = vsel %vm2268, %v2261, %v2220
      %v2280 = vsel %vm2268, %v2263, %v2222
      %v2282 = vsel %vm2268, %v2265, %v2224
      %v2284 = vsel %vm2268, %v2267, %v2226
      %v2293 = vunpack.c.l.b16 %v2270
      %v2294 = vunpack.c.h.b16 %v2270
      %v2295 = vunpack.c.l.b16 %v2272
      %v2296 = vunpack.c.h.b16 %v2272
      %v2297 = vunpack.c.l.b16 %v2274
      %v2298 = vunpack.c.h.b16 %v2274
      %v2299 = vunpack.c.l.b16 %v2276
      %v2300 = vunpack.c.h.b16 %v2276
      %v2301 = vunpack.c.l.b16 %v2278
      %v2302 = vunpack.c.h.b16 %v2278
      %v2303 = vunpack.c.l.b16 %v2280
      %v2304 = vunpack.c.h.b16 %v2280
      %v2305 = vunpack.c.l.b16 %v2282
      %v2306 = vunpack.c.h.b16 %v2282
      %v2307 = vunpack.c.l.b16 %v2284
      %v2308 = vunpack.c.h.b16 %v2284
      %v2309 = vpack.c.b16 %v2293, %v2293
      %v2310 = vpack.c.b16 %v2294, %v2294
      %v2311 = vpack.c.b16 %v2295, %v2295
      %v2312 = vpack.c.b16 %v2296, %v2296
      %v2313 = vpack.c.b16 %v2297, %v2297
      %v2314 = vpack.c.b16 %v2298, %v2298
      %v2315 = vpack.c.b16 %v2299, %v2299
      %v2316 = vpack.c.b16 %v2300, %v2300
      %v2317 = vpack.c.b16 %v2301, %v2301
      %v2318 = vpack.c.b16 %v2302, %v2302
      %v2319 = vpack.c.b16 %v2303, %v2303
      %v2320 = vpack.c.b16 %v2304, %v2304
      %v2321 = vpack.c.b16 %v2305, %v2305
      %v2322 = vpack.c.b16 %v2306, %v2306
      %v2323 = vpack.c.b16 %v2307, %v2307
      %v2324 = vpack.c.b16 %v2308, %v2308
      %2341 = vst [vmem:[%s193] sm:$0xf] %v2309
      %2342 = vst [vmem:[%s193 + $0x4] sm:$0xf] %v2310
      %2343 = vst [vmem:[%s193 + $0x8] sm:$0xf] %v2311
      %2344 = vst [vmem:[%s193 + $0xc] sm:$0xf] %v2312
      %2345 = vst [vmem:[%s193 + $0x10] sm:$0xf] %v2313
      %2346 = vst [vmem:[%s193 + $0x14] sm:$0xf] %v2314
      %2347 = vst [vmem:[%s193 + $0x18] sm:$0xf] %v2315
      %2348 = vst [vmem:[%s193 + $0x1c] sm:$0xf] %v2316
      %2349 = vst [vmem:[%s193 + $0x20] sm:$0xf] %v2317
      %2350 = vst [vmem:[%s193 + $0x24] sm:$0xf] %v2318
      %2351 = vst [vmem:[%s193 + $0x28] sm:$0xf] %v2319
      %2352 = vst [vmem:[%s193 + $0x2c] sm:$0xf] %v2320
      %2353 = vst [vmem:[%s193 + $0x30] sm:$0xf] %v2321
      %2354 = vst [vmem:[%s193 + $0x34] sm:$0xf] %v2322
      %2355 = vst [vmem:[%s193 + $0x38] sm:$0xf] %v2323
      %2356 = vst [vmem:[%s193 + $0x3c] sm:$0xf] %v2324
      %p2357 = scmp.lt.s32.totalorder %s17, 1
      %s2358 = scalar_select %p2357, %s17, 1
      %p2359 = scmp.lt.s32.totalorder %s18, 0
      %s2360 = scalar_select %p2359, %s18, 0
      %s2361 = smul.addr %s2358, 16
      %s2362 = sadd.s32 %s2360, %s2361
      %s2363 = smul.addr %s2362, 4
      %s2364 = scalar_lea.vmem %s2, %s2363
      // Predicated region
      $region29: #{bert_encoder_forward.11} parent=27 // pred_check
        %p2365 = pneg %p99
      $region30: #{bert_encoder_forward.11} parent=27 // pred_check_branch
        %2367 = sbr.rel (%p2365) target = $region32
      $region31: #{bert_encoder_forward.11} parent=27 // pred_region
        _
      $region32: #{bert_encoder_forward.11} parent=27 // pred_fallthru
        _
    $region28: #{bert_encoder_forward.11} parent=5 // pred_fallthru
      _
    %p2368 = scmp.le.s32.totalorder 2, %s8
    // Predicated region
    $region33: #{bert_encoder_forward.11} parent=5 // pred_check
      %p2369 = pneg %p2368
    $region34: #{bert_encoder_forward.11} parent=5 // pred_check_branch
      %2371 = sbr.rel (%p2369) target = $region36
    $region35: #{bert_encoder_forward.11} parent=5 // pred_region
      %s2372 = ssub.s32 %s8, 2
      // Predicated region
      $region37: #{bert_encoder_forward.11} parent=35 // pred_check
        %p2373 = pneg %p105
      $region38: #{bert_encoder_forward.11} parent=35 // pred_check_branch
        %2375 = sbr.rel (%p2373) target = $region40
      $region39: #{bert_encoder_forward.11} parent=35 // pred_region
        %p2376 = scmp.lt.s32.totalorder %s19, 1
        %s2377 = scalar_select %p2376, %s19, 1
        %p2378 = scmp.lt.s32.totalorder %s20, 0
        %s2379 = scalar_select %p2378, %s20, 0
        %s2380 = smul.addr %s2377, 16
        %s2381 = sadd.s32 %s2379, %s2380
        %s2382 = smul.addr %s2381, 4
        %s2383 = scalar_lea.vmem %s2, %s2382
      $region40: #{bert_encoder_forward.11} parent=35 // pred_fallthru
        _
    $region36: #{bert_encoder_forward.11} parent=5 // pred_fallthru
      _
  $region6: #{bert_encoder_forward.11} parent=0 // loop_footer
    %s12 = sadd.s32 1, %s8
  $region7: #{bert_encoder_forward.11} parent=0 // loop_footer_branch
    %7 = sbr.rel target = $region3
  $region8: #{bert_encoder_forward.11} parent=0 // loop_exit
    _

// kernel: bert_encoder_forward.13
$region0: #{bert_encoder_forward.13}
  #allocation0 [shape = 'u32[]', space=smem, size = 0x4, offset = 0x4, fixed_abs, tag = 'smem constant byte address 0x4 - core index']
  #allocation1 [shape = 'u32[144,128]{1,0:T(1,128)}', space=vmem, size = 0x12000, scoped, tag = 'internal scratch']
  #allocation2 [shape = 'f32[256,128]{1,0:T(8,128)}', space=vmem, size = 0x20000, scoped, tag = 'scratch operand']
  %s0 = inlined_call_operand.vmem [shape: bf16[256,128], index: 0, kind: input, shape index: {}]
  %s1 = inlined_call_operand.vmem [shape: bf16[128,512], index: 1, kind: input, shape index: {}]
  %s2 = inlined_call_operand.vmem [shape: f32[1,512], index: 2, kind: input, shape index: {}]
  %s3 = inlined_call_operand.vmem [shape: bf16[512,128], index: 3, kind: input, shape index: {}]
  %s4 = inlined_call_operand.vmem [shape: f32[1,128], index: 4, kind: input, shape index: {}]
  %s5 = inlined_call_operand.vmem [shape: f32[1,128], index: 5, kind: input, shape index: {}]
  %s6 = inlined_call_operand.vmem [shape: f32[1,128], index: 6, kind: input, shape index: {}]
  %s7 = inlined_call_operand.vmem [shape: bf16[256,128], index: 7, kind: output, shape index: {}]
  %s8 = sld [smem:[#allocation0]]
  $region46: #{bert_encoder_forward.13} parent=0
    _
  %s10 = ssub.s32 1, %s8
  %s11 = scalar_select 0, %s10, %s8
  // Predicated region
  $region2: #{bert_encoder_forward.13} parent=0 // pred_check
    _
  $region3: #{bert_encoder_forward.13} parent=0 // pred_check_branch
    %13 = sbr.rel (0) target = $region5
  $region4: #{bert_encoder_forward.13} parent=0 // pred_region
    _
  $region5: #{bert_encoder_forward.13} parent=0 // pred_fallthru
    _
  // Predicated region
  $region6: #{bert_encoder_forward.13} parent=0 // pred_check
    _
  $region7: #{bert_encoder_forward.13} parent=0 // pred_check_branch
    %15 = sbr.rel (0) target = $region9
  $region8: #{bert_encoder_forward.13} parent=0 // pred_region
    _
  $region9: #{bert_encoder_forward.13} parent=0 // pred_fallthru
    _
  // Predicated region
  $region10: #{bert_encoder_forward.13} parent=0 // pred_check
    _
  $region11: #{bert_encoder_forward.13} parent=0 // pred_check_branch
    %17 = sbr.rel (0) target = $region13
  $region12: #{bert_encoder_forward.13} parent=0 // pred_region
    _
  $region13: #{bert_encoder_forward.13} parent=0 // pred_fallthru
    _
  // Predicated region
  $region14: #{bert_encoder_forward.13} parent=0 // pred_check
    _
  $region15: #{bert_encoder_forward.13} parent=0 // pred_check_branch
    %19 = sbr.rel (0) target = $region17
  $region16: #{bert_encoder_forward.13} parent=0 // pred_region
    _
  $region17: #{bert_encoder_forward.13} parent=0 // pred_fallthru
    _
  // Predicated region
  $region18: #{bert_encoder_forward.13} parent=0 // pred_check
    _
  $region19: #{bert_encoder_forward.13} parent=0 // pred_check_branch
    %21 = sbr.rel (0) target = $region21
  $region20: #{bert_encoder_forward.13} parent=0 // pred_region
    _
  $region21: #{bert_encoder_forward.13} parent=0 // pred_fallthru
    _
  // Predicated region
  $region22: #{bert_encoder_forward.13} parent=0 // pred_check
    _
  $region23: #{bert_encoder_forward.13} parent=0 // pred_check_branch
    %23 = sbr.rel (0) target = $region25
  $region24: #{bert_encoder_forward.13} parent=0 // pred_region
    _
  $region25: #{bert_encoder_forward.13} parent=0 // pred_fallthru
    _
  // Predicated region
  $region26: #{bert_encoder_forward.13} parent=0 // pred_check
    _
  $region27: #{bert_encoder_forward.13} parent=0 // pred_check_branch
    %25 = sbr.rel (0) target = $region29
  $region28: #{bert_encoder_forward.13} parent=0 // pred_region
    _
  $region29: #{bert_encoder_forward.13} parent=0 // pred_fallthru
    _
  %p27 = scmp.eq.s32.totalorder 0, 0
  // Predicated region
  $region30: #{bert_encoder_forward.13} parent=0 // pred_check
    %p28 = pneg %p27
  $region31: #{bert_encoder_forward.13} parent=0 // pred_check_branch
    %30 = sbr.rel (%p28) target = $region33
  $region32: #{bert_encoder_forward.13} parent=0 // pred_region
    %31 = vst [vmem:[#allocation2] sm:$0xff] 0.0
    %32 = vst [vmem:[#allocation2 + $0x8] sm:$0xff] 0.0
    %33 = vst [vmem:[#allocation2 + $0x10] sm:$0xff] 0.0
    %34 = vst [vmem:[#allocation2 + $0x18] sm:$0xff] 0.0
    %35 = vst [vmem:[#allocation2 + $0x20] sm:$0xff] 0.0
    %36 = vst [vmem:[#allocation2 + $0x28] sm:$0xff] 0.0
    %37 = vst [vmem:[#allocation2 + $0x30] sm:$0xff] 0.0
    %38 = vst [vmem:[#allocation2 + $0x38] sm:$0xff] 0.0
    %39 = vst [vmem:[#allocation2 + $0x40] sm:$0xff] 0.0
    %40 = vst [vmem:[#allocation2 + $0x48] sm:$0xff] 0.0
    %41 = vst [vmem:[#allocation2 + $0x50] sm:$0xff] 0.0
    %42 = vst [vmem:[#allocation2 + $0x58] sm:$0xff] 0.0
    %43 = vst [vmem:[#allocation2 + $0x60] sm:$0xff] 0.0
    %44 = vst [vmem:[#allocation2 + $0x68] sm:$0xff] 0.0
    %45 = vst [vmem:[#allocation2 + $0x70] sm:$0xff] 0.0
    %46 = vst [vmem:[#allocation2 + $0x78] sm:$0xff] 0.0
    %47 = vst [vmem:[#allocation2 + $0x80] sm:$0xff] 0.0
    %48 = vst [vmem:[#allocation2 + $0x88] sm:$0xff] 0.0
    %49 = vst [vmem:[#allocation2 + $0x90] sm:$0xff] 0.0
    %50 = vst [vmem:[#allocation2 + $0x98] sm:$0xff] 0.0
    %51 = vst [vmem:[#allocation2 + $0xa0] sm:$0xff] 0.0
    %52 = vst [vmem:[#allocation2 + $0xa8] sm:$0xff] 0.0
    %53 = vst [vmem:[#allocation2 + $0xb0] sm:$0xff] 0.0
    %54 = vst [vmem:[#allocation2 + $0xb8] sm:$0xff] 0.0
    %55 = vst [vmem:[#allocation2 + $0xc0] sm:$0xff] 0.0
    %56 = vst [vmem:[#allocation2 + $0xc8] sm:$0xff] 0.0
    %57 = vst [vmem:[#allocation2 + $0xd0] sm:$0xff] 0.0
    %58 = vst [vmem:[#allocation2 + $0xd8] sm:$0xff] 0.0
    %59 = vst [vmem:[#allocation2 + $0xe0] sm:$0xff] 0.0
    %60 = vst [vmem:[#allocation2 + $0xe8] sm:$0xff] 0.0
    %61 = vst [vmem:[#allocation2 + $0xf0] sm:$0xff] 0.0
    %62 = vst [vmem:[#allocation2 + $0xf8] sm:$0xff] 0.0
  $region33: #{bert_encoder_forward.13} parent=0 // pred_fallthru
    _
  %v63 = vld [vmem:[%s0] sm:$0xf]
  %v64 = vld [vmem:[%s0 + $0x4] sm:$0xf]
  %v65 = vld [vmem:[%s0 + $0x8] sm:$0xf]
  %v66 = vld [vmem:[%s0 + $0xc] sm:$0xf]
  %v67 = vld [vmem:[%s0 + $0x10] sm:$0xf]
  %v68 = vld [vmem:[%s0 + $0x14] sm:$0xf]
  %v69 = vld [vmem:[%s0 + $0x18] sm:$0xf]
  %v70 = vld [vmem:[%s0 + $0x1c] sm:$0xf]
  %v71 = vld [vmem:[%s0 + $0x20] sm:$0xf]
  %v72 = vld [vmem:[%s0 + $0x24] sm:$0xf]
  %v73 = vld [vmem:[%s0 + $0x28] sm:$0xf]
  %v74 = vld [vmem:[%s0 + $0x2c] sm:$0xf]
  %v75 = vld [vmem:[%s0 + $0x30] sm:$0xf]
  %v76 = vld [vmem:[%s0 + $0x34] sm:$0xf]
  %v77 = vld [vmem:[%s0 + $0x38] sm:$0xf]
  %v78 = vld [vmem:[%s0 + $0x3c] sm:$0xf]
  %v79 = vld [vmem:[%s0 + $0x40] sm:$0xf]
  %v80 = vld [vmem:[%s0 + $0x44] sm:$0xf]
  %v81 = vld [vmem:[%s0 + $0x48] sm:$0xf]
  %v82 = vld [vmem:[%s0 + $0x4c] sm:$0xf]
  %v83 = vld [vmem:[%s0 + $0x50] sm:$0xf]
  %v84 = vld [vmem:[%s0 + $0x54] sm:$0xf]
  %v85 = vld [vmem:[%s0 + $0x58] sm:$0xf]
  %v86 = vld [vmem:[%s0 + $0x5c] sm:$0xf]
  %v87 = vld [vmem:[%s0 + $0x60] sm:$0xf]
  %v88 = vld [vmem:[%s0 + $0x64] sm:$0xf]
  %v89 = vld [vmem:[%s0 + $0x68] sm:$0xf]
  %v90 = vld [vmem:[%s0 + $0x6c] sm:$0xf]
  %v91 = vld [vmem:[%s0 + $0x70] sm:$0xf]
  %v92 = vld [vmem:[%s0 + $0x74] sm:$0xf]
  %v93 = vld [vmem:[%s0 + $0x78] sm:$0xf]
  %v94 = vld [vmem:[%s0 + $0x7c] sm:$0xf]
  %v95 = vld [vmem:[%s1] sm:$0xff]
  %v96 = vld [vmem:[%s1 + $0x8] sm:$0xff]
  %v97 = vld [vmem:[%s1 + $0x10] sm:$0xff]
  %v98 = vld [vmem:[%s1 + $0x18] sm:$0xff]
  %v99 = vld [vmem:[%s1 + $0x20] sm:$0xff]
  %v100 = vld [vmem:[%s1 + $0x28] sm:$0xff]
  %v101 = vld [vmem:[%s1 + $0x30] sm:$0xff]
  %v102 = vld [vmem:[%s1 + $0x38] sm:$0xff]
  %v103 = vld [vmem:[%s1 + $0x40] sm:$0xff]
  %v104 = vld [vmem:[%s1 + $0x48] sm:$0xff]
  %v105 = vld [vmem:[%s1 + $0x50] sm:$0xff]
  %v106 = vld [vmem:[%s1 + $0x58] sm:$0xff]
  %v107 = vld [vmem:[%s1 + $0x60] sm:$0xff]
  %v108 = vld [vmem:[%s1 + $0x68] sm:$0xff]
  %v109 = vld [vmem:[%s1 + $0x70] sm:$0xff]
  %v110 = vld [vmem:[%s1 + $0x78] sm:$0xff]
  %v111 = vld [vmem:[%s1 + $0x80] sm:$0xff]
  %v112 = vld [vmem:[%s1 + $0x88] sm:$0xff]
  %v113 = vld [vmem:[%s1 + $0x90] sm:$0xff]
  %v114 = vld [vmem:[%s1 + $0x98] sm:$0xff]
  %v115 = vld [vmem:[%s1 + $0xa0] sm:$0xff]
  %v116 = vld [vmem:[%s1 + $0xa8] sm:$0xff]
  %v117 = vld [vmem:[%s1 + $0xb0] sm:$0xff]
  %v118 = vld [vmem:[%s1 + $0xb8] sm:$0xff]
  %v119 = vld [vmem:[%s1 + $0xc0] sm:$0xff]
  %v120 = vld [vmem:[%s1 + $0xc8] sm:$0xff]
  %v121 = vld [vmem:[%s1 + $0xd0] sm:$0xff]
  %v122 = vld [vmem:[%s1 + $0xd8] sm:$0xff]
  %v123 = vld [vmem:[%s1 + $0xe0] sm:$0xff]
  %v124 = vld [vmem:[%s1 + $0xe8] sm:$0xff]
  %v125 = vld [vmem:[%s1 + $0xf0] sm:$0xff]
  %v126 = vld [vmem:[%s1 + $0xf8] sm:$0xff]
  %v127 = vld [vmem:[%s2] sm:$0xf]
  %v129 = vlaneseq
  %v130 = vshrl.u32 %v129, 7
  %v131 = vsub.s32 0, %v130
  %v132 = vrot.slane %v127, %v131
  %v133 = vlaneseq
  %v134 = vshrl.u32 %v133, 7
  %v135 = vsub.s32 1, %v134
  %v136 = vrot.slane %v127, %v135
  %v137 = vlaneseq
  %v138 = vshrl.u32 %v137, 7
  %v139 = vsub.s32 2, %v138
  %v140 = vrot.slane %v127, %v139
  %v141 = vlaneseq
  %v142 = vshrl.u32 %v141, 7
  %v143 = vsub.s32 3, %v142
  %v144 = vrot.slane %v127, %v143
  %v181 = vunpack.c.l.b16 %v63
  %v182 = vunpack.c.l.b16 %v64
  %v183 = vunpack.c.l.b16 %v65
  %v184 = vunpack.c.l.b16 %v66
  %v185 = vunpack.c.l.b16 %v67
  %v186 = vunpack.c.l.b16 %v68
  %v187 = vunpack.c.l.b16 %v69
  %v188 = vunpack.c.l.b16 %v70
  %v189 = vunpack.c.l.b16 %v71
  %v190 = vunpack.c.l.b16 %v72
  %v191 = vunpack.c.l.b16 %v73
  %v192 = vunpack.c.l.b16 %v74
  %v193 = vunpack.c.l.b16 %v75
  %v194 = vunpack.c.l.b16 %v76
  %v195 = vunpack.c.l.b16 %v77
  %v196 = vunpack.c.l.b16 %v78
  %v197 = vunpack.c.l.b16 %v79
  %v198 = vunpack.c.l.b16 %v80
  %v199 = vunpack.c.l.b16 %v81
  %v200 = vunpack.c.l.b16 %v82
  %v201 = vunpack.c.l.b16 %v83
  %v202 = vunpack.c.l.b16 %v84
  %v203 = vunpack.c.l.b16 %v85
  %v204 = vunpack.c.l.b16 %v86
  %v205 = vunpack.c.l.b16 %v87
  %v206 = vunpack.c.l.b16 %v88
  %v207 = vunpack.c.l.b16 %v89
  %v208 = vunpack.c.l.b16 %v90
  %v209 = vunpack.c.l.b16 %v91
  %v210 = vunpack.c.l.b16 %v92
  %v211 = vunpack.c.l.b16 %v93
  %v212 = vunpack.c.l.b16 %v94
  %v213 = vpack.c.b16 %v182, %v181
  %v214 = vpack.c.b16 %v184, %v183
  %v215 = vpack.c.b16 %v186, %v185
  %v216 = vpack.c.b16 %v188, %v187
  %v217 = vpack.c.b16 %v190, %v189
  %v218 = vpack.c.b16 %v192, %v191
  %v219 = vpack.c.b16 %v194, %v193
  %v220 = vpack.c.b16 %v196, %v195
  %v221 = vpack.c.b16 %v198, %v197
  %v222 = vpack.c.b16 %v200, %v199
  %v223 = vpack.c.b16 %v202, %v201
  %v224 = vpack.c.b16 %v204, %v203
  %v225 = vpack.c.b16 %v206, %v205
  %v226 = vpack.c.b16 %v208, %v207
  %v227 = vpack.c.b16 %v210, %v209
  %v228 = vpack.c.b16 %v212, %v211
  %v277 = vunpack.c.l.b16 %v95
  %v278 = vunpack.c.h.b16 %v95
  %v279 = vunpack.c.l.b16 %v96
  %v280 = vunpack.c.h.b16 %v96
  %v281 = vunpack.c.l.b16 %v97
  %v282 = vunpack.c.h.b16 %v97
  %v283 = vunpack.c.l.b16 %v98
  %v284 = vunpack.c.h.b16 %v98
  %v285 = vunpack.c.l.b16 %v99
  %v286 = vunpack.c.h.b16 %v99
  %v287 = vunpack.c.l.b16 %v100
  %v288 = vunpack.c.h.b16 %v100
  %v289 = vunpack.c.l.b16 %v101
  %v290 = vunpack.c.h.b16 %v101
  %v291 = vunpack.c.l.b16 %v102
  %v292 = vunpack.c.h.b16 %v102
  %v293 = vunpack.c.l.b16 %v103
  %v294 = vunpack.c.h.b16 %v103
  %v295 = vunpack.c.l.b16 %v104
  %v296 = vunpack.c.h.b16 %v104
  %v297 = vunpack.c.l.b16 %v105
  %v298 = vunpack.c.h.b16 %v105
  %v299 = vunpack.c.l.b16 %v106
  %v300 = vunpack.c.h.b16 %v106
  %v301 = vunpack.c.l.b16 %v107
  %v302 = vunpack.c.h.b16 %v107
  %v303 = vunpack.c.l.b16 %v108
  %v304 = vunpack.c.h.b16 %v108
  %v305 = vunpack.c.l.b16 %v109
  %v306 = vunpack.c.h.b16 %v109
  %v307 = vunpack.c.l.b16 %v110
  %v308 = vunpack.c.h.b16 %v110
  %v309 = vunpack.c.l.b16 %v111
  %v310 = vunpack.c.h.b16 %v111
  %v311 = vunpack.c.l.b16 %v112
  %v312 = vunpack.c.h.b16 %v112
  %v313 = vunpack.c.l.b16 %v113
  %v314 = vunpack.c.h.b16 %v113
  %v315 = vunpack.c.l.b16 %v114
  %v316 = vunpack.c.h.b16 %v114
  %v317 = vunpack.c.l.b16 %v115
  %v318 = vunpack.c.h.b16 %v115
  %v319 = vunpack.c.l.b16 %v116
  %v320 = vunpack.c.h.b16 %v116
  %v321 = vunpack.c.l.b16 %v117
  %v322 = vunpack.c.h.b16 %v117
  %v323 = vunpack.c.l.b16 %v118
  %v324 = vunpack.c.h.b16 %v118
  %v325 = vunpack.c.l.b16 %v119
  %v326 = vunpack.c.h.b16 %v119
  %v327 = vunpack.c.l.b16 %v120
  %v328 = vunpack.c.h.b16 %v120
  %v329 = vunpack.c.l.b16 %v121
  %v330 = vunpack.c.h.b16 %v121
  %v331 = vunpack.c.l.b16 %v122
  %v332 = vunpack.c.h.b16 %v122
  %v333 = vunpack.c.l.b16 %v123
  %v334 = vunpack.c.h.b16 %v123
  %v335 = vunpack.c.l.b16 %v124
  %v336 = vunpack.c.h.b16 %v124
  %v337 = vunpack.c.l.b16 %v125
  %v338 = vunpack.c.h.b16 %v125
  %v339 = vunpack.c.l.b16 %v126
  %v340 = vunpack.c.h.b16 %v126
  %v341 = vpack.c.b16 %v281, %v277
  %v342 = vpack.c.b16 %v282, %v278
  %v343 = vpack.c.b16 %v283, %v279
  %v344 = vpack.c.b16 %v284, %v280
  %v345 = vpack.c.b16 %v289, %v285
  %v346 = vpack.c.b16 %v290, %v286
  %v347 = vpack.c.b16 %v291, %v287
  %v348 = vpack.c.b16 %v292, %v288
  %v349 = vpack.c.b16 %v297, %v293
  %v350 = vpack.c.b16 %v298, %v294
  %v351 = vpack.c.b16 %v299, %v295
  %v352 = vpack.c.b16 %v300, %v296
  %v353 = vpack.c.b16 %v305, %v301
  %v354 = vpack.c.b16 %v306, %v302
  %v355 = vpack.c.b16 %v307, %v303
  %v356 = vpack.c.b16 %v308, %v304
  %v357 = vpack.c.b16 %v313, %v309
  %v358 = vpack.c.b16 %v314, %v310
  %v359 = vpack.c.b16 %v315, %v311
  %v360 = vpack.c.b16 %v316, %v312
  %v361 = vpack.c.b16 %v321, %v317
  %v362 = vpack.c.b16 %v322, %v318
  %v363 = vpack.c.b16 %v323, %v319
  %v364 = vpack.c.b16 %v324, %v320
  %v365 = vpack.c.b16 %v329, %v325
  %v366 = vpack.c.b16 %v330, %v326
  %v367 = vpack.c.b16 %v331, %v327
  %v368 = vpack.c.b16 %v332, %v328
  %v369 = vpack.c.b16 %v337, %v333
  %v370 = vpack.c.b16 %v338, %v334
  %v371 = vpack.c.b16 %v339, %v335
  %v372 = vpack.c.b16 %v340, %v336
  %405 = vmatprep.subr.bf16.mxu0 %v342
  %406 = vmatpush1.bf16.msra.mxu0 %v341
  %407 = vmatprep.subr.bf16.mxu0 %v346
  %408 = vmatpush1.bf16.msra.mxu0 %v345
  %409 = vmatprep.subr.bf16.mxu0 %v350
  %410 = vmatpush1.bf16.msra.mxu0 %v349
  %411 = vmatprep.subr.bf16.mxu0 %v354
  %412 = vmatpush1.bf16.msra.mxu0 %v353
  %413 = vmatprep.subr.bf16.mxu0 %v358
  %414 = vmatpush1.bf16.msra.mxu0 %v357
  %415 = vmatprep.subr.bf16.mxu0 %v362
  %416 = vmatpush1.bf16.msra.mxu0 %v361
  %417 = vmatprep.subr.bf16.mxu0 %v366
  %418 = vmatpush1.bf16.msra.mxu0 %v365
  %419 = vmatprep.subr.bf16.mxu0 %v370
  %420 = vmatpush1.bf16.msra.mxu0 %v369
  %421 = vmatprep.subr.bf16.mxu0 0
  %422 = vmatpush1.bf16.msra.mxu0 0
  %423 = vmatprep.subr.bf16.mxu0 0
  %424 = vmatpush1.bf16.msra.mxu0 0
  %425 = vmatprep.subr.bf16.mxu0 0
  %426 = vmatpush1.bf16.msra.mxu0 0
  %427 = vmatprep.subr.bf16.mxu0 0
  %428 = vmatpush1.bf16.msra.mxu0 0
  %429 = vmatprep.subr.bf16.mxu0 0
  %430 = vmatpush1.bf16.msra.mxu0 0
  %431 = vmatprep.subr.bf16.mxu0 0
  %432 = vmatpush1.bf16.msra.mxu0 0
  %433 = vmatprep.subr.bf16.mxu0 0
  %434 = vmatpush1.bf16.msra.mxu0 0
  %435 = vmatprep.subr.bf16.mxu0 0
  %436 = vmatpush1.bf16.msra.mxu0 0
  %437 = vmatprep.mubr.bf16.mxu0 0
  %438 = vmatmul.mubr.bf16.gmra.mrb[0].mxu0 %v213
  %v439 = vpop.f32.mrb[0].mxu0
  %v440 = vadd.f32 %v132, %v439
  %v441 = vpop.f32.mrb[0].mxu0
  %v442 = vadd.f32 %v136, %v441
  %v443 = vpop.f32.mrb[0].mxu0
  %v444 = vadd.f32 %v132, %v443
  %v445 = vpop.f32.mrb[0].mxu0
  %v446 = vadd.f32 %v136, %v445
  %447 = vmatprep.mubr.bf16.mxu0 0
  %448 = vmatmul.mubr.bf16.gmra.mrb[0].mxu0 %v214
  %v449 = vpop.f32.mrb[0].mxu0
  %v450 = vadd.f32 %v132, %v449
  %v451 = vpop.f32.mrb[0].mxu0
  %v452 = vadd.f32 %v136, %v451
  %v453 = vpop.f32.mrb[0].mxu0
  %v454 = vadd.f32 %v132, %v453
  %v455 = vpop.f32.mrb[0].mxu0
  %v456 = vadd.f32 %v136, %v455
  %457 = vmatprep.mubr.bf16.mxu0 0
  %458 = vmatmul.mubr.bf16.gmra.mrb[0].mxu0 %v215
  %v459 = vpop.f32.mrb[0].mxu0
  %v460 = vadd.f32 %v132, %v459
  %v461 = vpop.f32.mrb[0].mxu0
  %v462 = vadd.f32 %v136, %v461
  %v463 = vpop.f32.mrb[0].mxu0
  %v464 = vadd.f32 %v132, %v463
  %v465 = vpop.f32.mrb[0].mxu0
  %v466 = vadd.f32 %v136, %v465
  %467 = vmatprep.mubr.bf16.mxu0 0
  %468 = vmatmul.mubr.bf16.gmra.mrb[0].mxu0 %v216
  %v469 = vpop.f32.mrb[0].mxu0
  %v470 = vadd.f32 %v132, %v469
  %v471 = vpop.f32.mrb[0].mxu0
  %v472 = vadd.f32 %v136, %v471
  %v473 = vpop.f32.mrb[0].mxu0
  %v474 = vadd.f32 %v132, %v473
  %v475 = vpop.f32.mrb[0].mxu0
  %v476 = vadd.f32 %v136, %v475
  %477 = vmatprep.mubr.bf16.mxu0 0
  %478 = vmatmul.mubr.bf16.gmra.mrb[0].mxu0 %v217
  %v479 = vpop.f32.mrb[0].mxu0
  %v480 = vadd.f32 %v132, %v479
  %v481 = vpop.f32.mrb[0].mxu0
  %v482 = vadd.f32 %v136, %v481
  %v483 = vpop.f32.mrb[0].mxu0
  %v484 = vadd.f32 %v132, %v483
  %v485 = vpop.f32.mrb[0].mxu0
  %v486 = vadd.f32 %v136, %v485
  %487 = vmatprep.mubr.bf16.mxu0 0
  %488 = vmatmul.mubr.bf16.gmra.mrb[0].mxu0 %v218
  %v489 = vpop.f32.mrb[0].mxu0
  %v490 = vadd.f32 %v132, %v489
  %v491 = vpop.f32.mrb[0].mxu0
  %v492 = vadd.f32 %v136, %v491
  %v493 = vpop.f32.mrb[0].mxu0
  %v494 = vadd.f32 %v132, %v493
  %v495 = vpop.f32.mrb[0].mxu0
  %v496 = vadd.f32 %v136, %v495
  %497 = vmatprep.mubr.bf16.mxu0 0
  %498 = vmatmul.mubr.bf16.gmra.mrb[0].mxu0 %v219
  %v499 = vpop.f32.mrb[0].mxu0
  %v500 = vadd.f32 %v132, %v499
  %v501 = vpop.f32.mrb[0].mxu0
  %v502 = vadd.f32 %v136, %v501
  %v503 = vpop.f32.mrb[0].mxu0
  %v504 = vadd.f32 %v132, %v503
  %v505 = vpop.f32.mrb[0].mxu0
  %v506 = vadd.f32 %v136, %v505
  %507 = vmatprep.mubr.bf16.mxu0 0
  %508 = vmatmul.mubr.bf16.gmra.mrb[0].mxu0 %v220
  %v509 = vpop.f32.mrb[0].mxu0
  %v510 = vadd.f32 %v132, %v509
  %v511 = vpop.f32.mrb[0].mxu0
  %v512 = vadd.f32 %v136, %v511
  %v513 = vpop.f32.mrb[0].mxu0
  %v514 = vadd.f32 %v132, %v513
  %v515 = vpop.f32.mrb[0].mxu0
  %v516 = vadd.f32 %v136, %v515
  %517 = vmatprep.mubr.bf16.mxu0 0
  %518 = vmatmul.mubr.bf16.gmra.mrb[0].mxu0 %v221
  %v519 = vpop.f32.mrb[0].mxu0
  %v520 = vadd.f32 %v132, %v519
  %v521 = vpop.f32.mrb[0].mxu0
  %v522 = vadd.f32 %v136, %v521
  %v523 = vpop.f32.mrb[0].mxu0
  %v524 = vadd.f32 %v132, %v523
  %v525 = vpop.f32.mrb[0].mxu0
  %v526 = vadd.f32 %v136, %v525
  %527 = vmatprep.mubr.bf16.mxu0 0
  %528 = vmatmul.mubr.bf16.gmra.mrb[0].mxu0 %v222
  %v529 = vpop.f32.mrb[0].mxu0
  %v530 = vadd.f32 %v132, %v529
  %v531 = vpop.f32.mrb[0].mxu0
  %v532 = vadd.f32 %v136, %v531
  %v533 = vpop.f32.mrb[0].mxu0
  %v534 = vadd.f32 %v132, %v533
  %v535 = vpop.f32.mrb[0].mxu0
  %v536 = vadd.f32 %v136, %v535
  %537 = vmatprep.mubr.bf16.mxu0 0
  %538 = vmatmul.mubr.bf16.gmra.mrb[0].mxu0 %v223
  %v539 = vpop.f32.mrb[0].mxu0
  %v540 = vadd.f32 %v132, %v539
  %v541 = vpop.f32.mrb[0].mxu0
  %v542 = vadd.f32 %v136, %v541
  %v543 = vpop.f32.mrb[0].mxu0
  %v544 = vadd.f32 %v132, %v543
  %v545 = vpop.f32.mrb[0].mxu0
  %v546 = vadd.f32 %v136, %v545
  %547 = vmatprep.mubr.bf16.mxu0 0
  %548 = vmatmul.mubr.bf16.gmra.mrb[0].mxu0 %v224
  %v549 = vpop.f32.mrb[0].mxu0
  %v550 = vadd.f32 %v132, %v549
  %v551 = vpop.f32.mrb[0].mxu0
  %v552 = vadd.f32 %v136, %v551
  %v553 = vpop.f32.mrb[0].mxu0
  %v554 = vadd.f32 %v132, %v553
  %v555 = vpop.f32.mrb[0].mxu0
  %v556 = vadd.f32 %v136, %v555
  %557 = vmatprep.mubr.bf16.mxu0 0
  %558 = vmatmul.mubr.bf16.gmra.mrb[0].mxu0 %v225
  %v559 = vpop.f32.mrb[0].mxu0
  %v560 = vadd.f32 %v132, %v559
  %v561 = vpop.f32.mrb[0].mxu0
  %v562 = vadd.f32 %v136, %v561
  %v563 = vpop.f32.mrb[0].mxu0
  %v564 = vadd.f32 %v132, %v563
  %v565 = vpop.f32.mrb[0].mxu0
  %v566 = vadd.f32 %v136, %v565
  %567 = vmatprep.mubr.bf16.mxu0 0
  %568 = vmatmul.mubr.bf16.gmra.mrb[0].mxu0 %v226
  %v569 = vpop.f32.mrb[0].mxu0
  %v570 = vadd.f32 %v132, %v569
  %v571 = vpop.f32.mrb[0].mxu0
  %v572 = vadd.f32 %v136, %v571
  %v573 = vpop.f32.mrb[0].mxu0
  %v574 = vadd.f32 %v132, %v573
  %v575 = vpop.f32.mrb[0].mxu0
  %v576 = vadd.f32 %v136, %v575
  %577 = vmatprep.mubr.bf16.mxu0 0
  %578 = vmatmul.mubr.bf16.gmra.mrb[0].mxu0 %v227
  %v579 = vpop.f32.mrb[0].mxu0
  %v580 = vadd.f32 %v132, %v579
  %v581 = vpop.f32.mrb[0].mxu0
  %v582 = vadd.f32 %v136, %v581
  %v583 = vpop.f32.mrb[0].mxu0
  %v584 = vadd.f32 %v132, %v583
  %v585 = vpop.f32.mrb[0].mxu0
  %v586 = vadd.f32 %v136, %v585
  %587 = vmatprep.mubr.bf16.mxu0 0
  %588 = vmatmul.mubr.bf16.gmra.mrb[0].mxu0 %v228
  %v589 = vpop.f32.mrb[0].mxu0
  %v590 = vadd.f32 %v132, %v589
  %v591 = vpop.f32.mrb[0].mxu0
  %v592 = vadd.f32 %v136, %v591
  %v593 = vpop.f32.mrb[0].mxu0
  %v594 = vadd.f32 %v132, %v593
  %v595 = vpop.f32.mrb[0].mxu0
  %v596 = vadd.f32 %v136, %v595
  %597 = vdwg.mxu0
  %598 = vmatprep.subr.bf16.mxu0 %v344
  %599 = vmatpush1.bf16.msra.mxu0 %v343
  %600 = vmatprep.subr.bf16.mxu0 %v348
  %601 = vmatpush1.bf16.msra.mxu0 %v347
  %602 = vmatprep.subr.bf16.mxu0 %v352
  %603 = vmatpush1.bf16.msra.mxu0 %v351
  %604 = vmatprep.subr.bf16.mxu0 %v356
  %605 = vmatpush1.bf16.msra.mxu0 %v355
  %606 = vmatprep.subr.bf16.mxu0 %v360
  %607 = vmatpush1.bf16.msra.mxu0 %v359
  %608 = vmatprep.subr.bf16.mxu0 %v364
  %609 = vmatpush1.bf16.msra.mxu0 %v363
  %610 = vmatprep.subr.bf16.mxu0 %v368
  %611 = vmatpush1.bf16.msra.mxu0 %v367
  %612 = vmatprep.subr.bf16.mxu0 %v372
  %613 = vmatpush1.bf16.msra.mxu0 %v371
  %614 = vmatprep.subr.bf16.mxu0 0
  %615 = vmatpush1.bf16.msra.mxu0 0
  %616 = vmatprep.subr.bf16.mxu0 0
  %617 = vmatpush1.bf16.msra.mxu0 0
  %618 = vmatprep.subr.bf16.mxu0 0
  %619 = vmatpush1.bf16.msra.mxu0 0
  %620 = vmatprep.subr.bf16.mxu0 0
  %621 = vmatpush1.bf16.msra.mxu0 0
  %622 = vmatprep.subr.bf16.mxu0 0
  %623 = vmatpush1.bf16.msra.mxu0 0
  %624 = vmatprep.subr.bf16.mxu0 0
  %625 = vmatpush1.bf16.msra.mxu0 0
  %626 = vmatprep.subr.bf16.mxu0 0
  %627 = vmatpush1.bf16.msra.mxu0 0
  %628 = vmatprep.subr.bf16.mxu0 0
  %629 = vmatpush1.bf16.msra.mxu0 0
  %630 = vmatprep.mubr.bf16.mxu0 0
  %631 = vmatmul.mubr.bf16.gmra.mrb[0].mxu0 %v213
  %v632 = vpop.f32.mrb[0].mxu0
  %v633 = vadd.f32 %v140, %v632
  %v634 = vpop.f32.mrb[0].mxu0
  %v635 = vadd.f32 %v144, %v634
  %v636 = vpop.f32.mrb[0].mxu0
  %v637 = vadd.f32 %v140, %v636
  %v638 = vpop.f32.mrb[0].mxu0
  %v639 = vadd.f32 %v144, %v638
  %640 = vmatprep.mubr.bf16.mxu0 0
  %641 = vmatmul.mubr.bf16.gmra.mrb[0].mxu0 %v214
  %v642 = vpop.f32.mrb[0].mxu0
  %v643 = vadd.f32 %v140, %v642
  %v644 = vpop.f32.mrb[0].mxu0
  %v645 = vadd.f32 %v144, %v644
  %v646 = vpop.f32.mrb[0].mxu0
  %v647 = vadd.f32 %v140, %v646
  %v648 = vpop.f32.mrb[0].mxu0
  %v649 = vadd.f32 %v144, %v648
  %650 = vmatprep.mubr.bf16.mxu0 0
  %651 = vmatmul.mubr.bf16.gmra.mrb[0].mxu0 %v215
  %v652 = vpop.f32.mrb[0].mxu0
  %v653 = vadd.f32 %v140, %v652
  %v654 = vpop.f32.mrb[0].mxu0
  %v655 = vadd.f32 %v144, %v654
  %v656 = vpop.f32.mrb[0].mxu0
  %v657 = vadd.f32 %v140, %v656
  %v658 = vpop.f32.mrb[0].mxu0
  %v659 = vadd.f32 %v144, %v658
  %660 = vmatprep.mubr.bf16.mxu0 0
  %661 = vmatmul.mubr.bf16.gmra.mrb[0].mxu0 %v216
  %v662 = vpop.f32.mrb[0].mxu0
  %v663 = vadd.f32 %v140, %v662
  %v664 = vpop.f32.mrb[0].mxu0
  %v665 = vadd.f32 %v144, %v664
  %v666 = vpop.f32.mrb[0].mxu0
  %v667 = vadd.f32 %v140, %v666
  %v668 = vpop.f32.mrb[0].mxu0
  %v669 = vadd.f32 %v144, %v668
  %670 = vmatprep.mubr.bf16.mxu0 0
  %671 = vmatmul.mubr.bf16.gmra.mrb[0].mxu0 %v217
  %v672 = vpop.f32.mrb[0].mxu0
  %v673 = vadd.f32 %v140, %v672
  %v674 = vpop.f32.mrb[0].mxu0
  %v675 = vadd.f32 %v144, %v674
  %v676 = vpop.f32.mrb[0].mxu0
  %v677 = vadd.f32 %v140, %v676
  %v678 = vpop.f32.mrb[0].mxu0
  %v679 = vadd.f32 %v144, %v678
  %680 = vmatprep.mubr.bf16.mxu0 0
  %681 = vmatmul.mubr.bf16.gmra.mrb[0].mxu0 %v218
  %v682 = vpop.f32.mrb[0].mxu0
  %v683 = vadd.f32 %v140, %v682
  %v684 = vpop.f32.mrb[0].mxu0
  %v685 = vadd.f32 %v144, %v684
  %v686 = vpop.f32.mrb[0].mxu0
  %v687 = vadd.f32 %v140, %v686
  %v688 = vpop.f32.mrb[0].mxu0
  %v689 = vadd.f32 %v144, %v688
  %690 = vmatprep.mubr.bf16.mxu0 0
  %691 = vmatmul.mubr.bf16.gmra.mrb[0].mxu0 %v219
  %v692 = vpop.f32.mrb[0].mxu0
  %v693 = vadd.f32 %v140, %v692
  %v694 = vpop.f32.mrb[0].mxu0
  %v695 = vadd.f32 %v144, %v694
  %v696 = vpop.f32.mrb[0].mxu0
  %v697 = vadd.f32 %v140, %v696
  %v698 = vpop.f32.mrb[0].mxu0
  %v699 = vadd.f32 %v144, %v698
  %700 = vmatprep.mubr.bf16.mxu0 0
  %701 = vmatmul.mubr.bf16.gmra.mrb[0].mxu0 %v220
  %v702 = vpop.f32.mrb[0].mxu0
  %v703 = vadd.f32 %v140, %v702
  %v704 = vpop.f32.mrb[0].mxu0
  %v705 = vadd.f32 %v144, %v704
  %v706 = vpop.f32.mrb[0].mxu0
  %v707 = vadd.f32 %v140, %v706
  %v708 = vpop.f32.mrb[0].mxu0
  %v709 = vadd.f32 %v144, %v708
  %710 = vmatprep.mubr.bf16.mxu0 0
  %711 = vmatmul.mubr.bf16.gmra.mrb[0].mxu0 %v221
  %v712 = vpop.f32.mrb[0].mxu0
  %v713 = vadd.f32 %v140, %v712
  %v714 = vpop.f32.mrb[0].mxu0
  %v715 = vadd.f32 %v144, %v714
  %v716 = vpop.f32.mrb[0].mxu0
  %v717 = vadd.f32 %v140, %v716
  %v718 = vpop.f32.mrb[0].mxu0
  %v719 = vadd.f32 %v144, %v718
  %720 = vmatprep.mubr.bf16.mxu0 0
  %721 = vmatmul.mubr.bf16.gmra.mrb[0].mxu0 %v222
  %v722 = vpop.f32.mrb[0].mxu0
  %v723 = vadd.f32 %v140, %v722
  %v724 = vpop.f32.mrb[0].mxu0
  %v725 = vadd.f32 %v144, %v724
  %v726 = vpop.f32.mrb[0].mxu0
  %v727 = vadd.f32 %v140, %v726
  %v728 = vpop.f32.mrb[0].mxu0
  %v729 = vadd.f32 %v144, %v728
  %730 = vmatprep.mubr.bf16.mxu0 0
  %731 = vmatmul.mubr.bf16.gmra.mrb[0].mxu0 %v223
  %v732 = vpop.f32.mrb[0].mxu0
  %v733 = vadd.f32 %v140, %v732
  %v734 = vpop.f32.mrb[0].mxu0
  %v735 = vadd.f32 %v144, %v734
  %v736 = vpop.f32.mrb[0].mxu0
  %v737 = vadd.f32 %v140, %v736
  %v738 = vpop.f32.mrb[0].mxu0
  %v739 = vadd.f32 %v144, %v738
  %740 = vmatprep.mubr.bf16.mxu0 0
  %741 = vmatmul.mubr.bf16.gmra.mrb[0].mxu0 %v224
  %v742 = vpop.f32.mrb[0].mxu0
  %v743 = vadd.f32 %v140, %v742
  %v744 = vpop.f32.mrb[0].mxu0
  %v745 = vadd.f32 %v144, %v744
  %v746 = vpop.f32.mrb[0].mxu0
  %v747 = vadd.f32 %v140, %v746
  %v748 = vpop.f32.mrb[0].mxu0
  %v749 = vadd.f32 %v144, %v748
  %750 = vmatprep.mubr.bf16.mxu0 0
  %751 = vmatmul.mubr.bf16.gmra.mrb[0].mxu0 %v225
  %v752 = vpop.f32.mrb[0].mxu0
  %v753 = vadd.f32 %v140, %v752
  %v754 = vpop.f32.mrb[0].mxu0
  %v755 = vadd.f32 %v144, %v754
  %v756 = vpop.f32.mrb[0].mxu0
  %v757 = vadd.f32 %v140, %v756
  %v758 = vpop.f32.mrb[0].mxu0
  %v759 = vadd.f32 %v144, %v758
  %760 = vmatprep.mubr.bf16.mxu0 0
  %761 = vmatmul.mubr.bf16.gmra.mrb[0].mxu0 %v226
  %v762 = vpop.f32.mrb[0].mxu0
  %v763 = vadd.f32 %v140, %v762
  %v764 = vpop.f32.mrb[0].mxu0
  %v765 = vadd.f32 %v144, %v764
  %v766 = vpop.f32.mrb[0].mxu0
  %v767 = vadd.f32 %v140, %v766
  %v768 = vpop.f32.mrb[0].mxu0
  %v769 = vadd.f32 %v144, %v768
  %770 = vmatprep.mubr.bf16.mxu0 0
  %771 = vmatmul.mubr.bf16.gmra.mrb[0].mxu0 %v227
  %v772 = vpop.f32.mrb[0].mxu0
  %v773 = vadd.f32 %v140, %v772
  %v774 = vpop.f32.mrb[0].mxu0
  %v775 = vadd.f32 %v144, %v774
  %v776 = vpop.f32.mrb[0].mxu0
  %v777 = vadd.f32 %v140, %v776
  %v778 = vpop.f32.mrb[0].mxu0
  %v779 = vadd.f32 %v144, %v778
  %780 = vmatprep.mubr.bf16.mxu0 0
  %781 = vmatmul.mubr.bf16.gmra.mrb[0].mxu0 %v228
  %v782 = vpop.f32.mrb[0].mxu0
  %v783 = vadd.f32 %v140, %v782
  %v784 = vpop.f32.mrb[0].mxu0
  %v785 = vadd.f32 %v144, %v784
  %v786 = vpop.f32.mrb[0].mxu0
  %v787 = vadd.f32 %v140, %v786
  %v788 = vpop.f32.mrb[0].mxu0
  %v789 = vadd.f32 %v144, %v788
  %790 = vdwg.mxu0
  %v791 = vmul.f32 %v440, 0.5
  %v792 = vmul.f32 %v442, 0.5
  %v793 = vmul.f32 %v633, 0.5
  %v794 = vmul.f32 %v635, 0.5
  %v795 = vmul.f32 %v444, 0.5
  %v796 = vmul.f32 %v446, 0.5
  %v797 = vmul.f32 %v637, 0.5
  %v798 = vmul.f32 %v639, 0.5
  %v799 = vmul.f32 %v450, 0.5
  %v800 = vmul.f32 %v452, 0.5
  %v801 = vmul.f32 %v643, 0.5
  %v802 = vmul.f32 %v645, 0.5
  %v803 = vmul.f32 %v454, 0.5
  %v804 = vmul.f32 %v456, 0.5
  %v805 = vmul.f32 %v647, 0.5
  %v806 = vmul.f32 %v649, 0.5
  %v807 = vmul.f32 %v460, 0.5
  %v808 = vmul.f32 %v462, 0.5
  %v809 = vmul.f32 %v653, 0.5
  %v810 = vmul.f32 %v655, 0.5
  %v811 = vmul.f32 %v464, 0.5
  %v812 = vmul.f32 %v466, 0.5
  %v813 = vmul.f32 %v657, 0.5
  %v814 = vmul.f32 %v659, 0.5
  %v815 = vmul.f32 %v470, 0.5
  %v816 = vmul.f32 %v472, 0.5
  %v817 = vmul.f32 %v663, 0.5
  %v818 = vmul.f32 %v665, 0.5
  %v819 = vmul.f32 %v474, 0.5
  %v820 = vmul.f32 %v476, 0.5
  %v821 = vmul.f32 %v667, 0.5
  %v822 = vmul.f32 %v669, 0.5
  %v823 = vmul.f32 %v480, 0.5
  %v824 = vmul.f32 %v482, 0.5
  %v825 = vmul.f32 %v673, 0.5
  %v826 = vmul.f32 %v675, 0.5
  %v827 = vmul.f32 %v484, 0.5
  %v828 = vmul.f32 %v486, 0.5
  %v829 = vmul.f32 %v677, 0.5
  %v830 = vmul.f32 %v679, 0.5
  %v831 = vmul.f32 %v490, 0.5
  %v832 = vmul.f32 %v492, 0.5
  %v833 = vmul.f32 %v683, 0.5
  %v834 = vmul.f32 %v685, 0.5
  %v835 = vmul.f32 %v494, 0.5
  %v836 = vmul.f32 %v496, 0.5
  %v837 = vmul.f32 %v687, 0.5
  %v838 = vmul.f32 %v689, 0.5
  %v839 = vmul.f32 %v500, 0.5
  %v840 = vmul.f32 %v502, 0.5
  %v841 = vmul.f32 %v693, 0.5
  %v842 = vmul.f32 %v695, 0.5
  %v843 = vmul.f32 %v504, 0.5
  %v844 = vmul.f32 %v506, 0.5
  %v845 = vmul.f32 %v697, 0.5
  %v846 = vmul.f32 %v699, 0.5
  %v847 = vmul.f32 %v510, 0.5
  %v848 = vmul.f32 %v512, 0.5
  %v849 = vmul.f32 %v703, 0.5
  %v850 = vmul.f32 %v705, 0.5
  %v851 = vmul.f32 %v514, 0.5
  %v852 = vmul.f32 %v516, 0.5
  %v853 = vmul.f32 %v707, 0.5
  %v854 = vmul.f32 %v709, 0.5
  %v855 = vmul.f32 %v520, 0.5
  %v856 = vmul.f32 %v522, 0.5
  %v857 = vmul.f32 %v713, 0.5
  %v858 = vmul.f32 %v715, 0.5
  %v859 = vmul.f32 %v524, 0.5
  %v860 = vmul.f32 %v526, 0.5
  %v861 = vmul.f32 %v717, 0.5
  %v862 = vmul.f32 %v719, 0.5
  %v863 = vmul.f32 %v530, 0.5
  %v864 = vmul.f32 %v532, 0.5
  %v865 = vmul.f32 %v723, 0.5
  %v866 = vmul.f32 %v725, 0.5
  %v867 = vmul.f32 %v534, 0.5
  %v868 = vmul.f32 %v536, 0.5
  %v869 = vmul.f32 %v727, 0.5
  %v870 = vmul.f32 %v729, 0.5
  %v871 = vmul.f32 %v540, 0.5
  %v872 = vmul.f32 %v542, 0.5
  %v873 = vmul.f32 %v733, 0.5
  %v874 = vmul.f32 %v735, 0.5
  %v875 = vmul.f32 %v544, 0.5
  %v876 = vmul.f32 %v546, 0.5
  %v877 = vmul.f32 %v737, 0.5
  %v878 = vmul.f32 %v739, 0.5
  %v879 = vmul.f32 %v550, 0.5
  %v880 = vmul.f32 %v552, 0.5
  %v881 = vmul.f32 %v743, 0.5
  %v882 = vmul.f32 %v745, 0.5
  %v883 = vmul.f32 %v554, 0.5
  %v884 = vmul.f32 %v556, 0.5
  %v885 = vmul.f32 %v747, 0.5
  %v886 = vmul.f32 %v749, 0.5
  %v887 = vmul.f32 %v560, 0.5
  %v888 = vmul.f32 %v562, 0.5
  %v889 = vmul.f32 %v753, 0.5
  %v890 = vmul.f32 %v755, 0.5
  %v891 = vmul.f32 %v564, 0.5
  %v892 = vmul.f32 %v566, 0.5
  %v893 = vmul.f32 %v757, 0.5
  %v894 = vmul.f32 %v759, 0.5
  %v895 = vmul.f32 %v570, 0.5
  %v896 = vmul.f32 %v572, 0.5
  %v897 = vmul.f32 %v763, 0.5
  %v898 = vmul.f32 %v765, 0.5
  %v899 = vmul.f32 %v574, 0.5
  %v900 = vmul.f32 %v576, 0.5
  %v901 = vmul.f32 %v767, 0.5
  %v902 = vmul.f32 %v769, 0.5
  %v903 = vmul.f32 %v580, 0.5
  %v904 = vmul.f32 %v582, 0.5
  %v905 = vmul.f32 %v773, 0.5
  %v906 = vmul.f32 %v775, 0.5
  %v907 = vmul.f32 %v584, 0.5
  %v908 = vmul.f32 %v586, 0.5
  %v909 = vmul.f32 %v777, 0.5
  %v910 = vmul.f32 %v779, 0.5
  %v911 = vmul.f32 %v590, 0.5
  %v912 = vmul.f32 %v592, 0.5
  %v913 = vmul.f32 %v783, 0.5
  %v914 = vmul.f32 %v785, 0.5
  %v915 = vmul.f32 %v594, 0.5
  %v916 = vmul.f32 %v596, 0.5
  %v917 = vmul.f32 %v787, 0.5
  %v918 = vmul.f32 %v789, 0.5
  %v919 = vmul.f32 %v440, 0.044715
  %v920 = vmul.f32 %v442, 0.044715
  %v921 = vmul.f32 %v633, 0.044715
  %v922 = vmul.f32 %v635, 0.044715
  %v923 = vmul.f32 %v444, 0.044715
  %v924 = vmul.f32 %v446, 0.044715
  %v925 = vmul.f32 %v637, 0.044715
  %v926 = vmul.f32 %v639, 0.044715
  %v927 = vmul.f32 %v450, 0.044715
  %v928 = vmul.f32 %v452, 0.044715
  %v929 = vmul.f32 %v643, 0.044715
  %v930 = vmul.f32 %v645, 0.044715
  %v931 = vmul.f32 %v454, 0.044715
  %v932 = vmul.f32 %v456, 0.044715
  %v933 = vmul.f32 %v647, 0.044715
  %v934 = vmul.f32 %v649, 0.044715
  %v935 = vmul.f32 %v460, 0.044715
  %v936 = vmul.f32 %v462, 0.044715
  %v937 = vmul.f32 %v653, 0.044715
  %v938 = vmul.f32 %v655, 0.044715
  %v939 = vmul.f32 %v464, 0.044715
  %v940 = vmul.f32 %v466, 0.044715
  %v941 = vmul.f32 %v657, 0.044715
  %v942 = vmul.f32 %v659, 0.044715
  %v943 = vmul.f32 %v470, 0.044715
  %v944 = vmul.f32 %v472, 0.044715
  %v945 = vmul.f32 %v663, 0.044715
  %v946 = vmul.f32 %v665, 0.044715
  %v947 = vmul.f32 %v474, 0.044715
  %v948 = vmul.f32 %v476, 0.044715
  %v949 = vmul.f32 %v667, 0.044715
  %v950 = vmul.f32 %v669, 0.044715
  %v951 = vmul.f32 %v480, 0.044715
  %v952 = vmul.f32 %v482, 0.044715
  %v953 = vmul.f32 %v673, 0.044715
  %v954 = vmul.f32 %v675, 0.044715
  %v955 = vmul.f32 %v484, 0.044715
  %v956 = vmul.f32 %v486, 0.044715
  %v957 = vmul.f32 %v677, 0.044715
  %v958 = vmul.f32 %v679, 0.044715
  %v959 = vmul.f32 %v490, 0.044715
  %v960 = vmul.f32 %v492, 0.044715
  %v961 = vmul.f32 %v683, 0.044715
  %v962 = vmul.f32 %v685, 0.044715
  %v963 = vmul.f32 %v494, 0.044715
  %v964 = vmul.f32 %v496, 0.044715
  %v965 = vmul.f32 %v687, 0.044715
  %v966 = vmul.f32 %v689, 0.044715
  %v967 = vmul.f32 %v500, 0.044715
  %v968 = vmul.f32 %v502, 0.044715
  %v969 = vmul.f32 %v693, 0.044715
  %v970 = vmul.f32 %v695, 0.044715
  %v971 = vmul.f32 %v504, 0.044715
  %v972 = vmul.f32 %v506, 0.044715
  %v973 = vmul.f32 %v697, 0.044715
  %v974 = vmul.f32 %v699, 0.044715
  %v975 = vmul.f32 %v510, 0.044715
  %v976 = vmul.f32 %v512, 0.044715
  %v977 = vmul.f32 %v703, 0.044715
  %v978 = vmul.f32 %v705, 0.044715
  %v979 = vmul.f32 %v514, 0.044715
  %v980 = vmul.f32 %v516, 0.044715
  %v981 = vmul.f32 %v707, 0.044715
  %v982 = vmul.f32 %v709, 0.044715
  %v983 = vmul.f32 %v520, 0.044715
  %v984 = vmul.f32 %v522, 0.044715
  %v985 = vmul.f32 %v713, 0.044715
  %v986 = vmul.f32 %v715, 0.044715
  %v987 = vmul.f32 %v524, 0.044715
  %v988 = vmul.f32 %v526, 0.044715
  %v989 = vmul.f32 %v717, 0.044715
  %v990 = vmul.f32 %v719, 0.044715
  %v991 = vmul.f32 %v530, 0.044715
  %v992 = vmul.f32 %v532, 0.044715
  %v993 = vmul.f32 %v723, 0.044715
  %v994 = vmul.f32 %v725, 0.044715
  %v995 = vmul.f32 %v534, 0.044715
  %v996 = vmul.f32 %v536, 0.044715
  %v997 = vmul.f32 %v727, 0.044715
  %v998 = vmul.f32 %v729, 0.044715
  %v999 = vmul.f32 %v540, 0.044715
  %v1000 = vmul.f32 %v542, 0.044715
  %v1001 = vmul.f32 %v733, 0.044715
  %v1002 = vmul.f32 %v735, 0.044715
  %v1003 = vmul.f32 %v544, 0.044715
  %v1004 = vmul.f32 %v546, 0.044715
  %v1005 = vmul.f32 %v737, 0.044715
  %v1006 = vmul.f32 %v739, 0.044715
  %v1007 = vmul.f32 %v550, 0.044715
  %v1008 = vmul.f32 %v552, 0.044715
  %v1009 = vmul.f32 %v743, 0.044715
  %v1010 = vmul.f32 %v745, 0.044715
  %v1011 = vmul.f32 %v554, 0.044715
  %v1012 = vmul.f32 %v556, 0.044715
  %v1013 = vmul.f32 %v747, 0.044715
  %v1014 = vmul.f32 %v749, 0.044715
  %v1015 = vmul.f32 %v560, 0.044715
  %v1016 = vmul.f32 %v562, 0.044715
  %v1017 = vmul.f32 %v753, 0.044715
  %v1018 = vmul.f32 %v755, 0.044715
  %v1019 = vmul.f32 %v564, 0.044715
  %v1020 = vmul.f32 %v566, 0.044715
  %v1021 = vmul.f32 %v757, 0.044715
  %v1022 = vmul.f32 %v759, 0.044715
  %v1023 = vmul.f32 %v570, 0.044715
  %v1024 = vmul.f32 %v572, 0.044715
  %v1025 = vmul.f32 %v763, 0.044715
  %v1026 = vmul.f32 %v765, 0.044715
  %v1027 = vmul.f32 %v574, 0.044715
  %v1028 = vmul.f32 %v576, 0.044715
  %v1029 = vmul.f32 %v767, 0.044715
  %v1030 = vmul.f32 %v769, 0.044715
  %v1031 = vmul.f32 %v580, 0.044715
  %v1032 = vmul.f32 %v582, 0.044715
  %v1033 = vmul.f32 %v773, 0.044715
  %v1034 = vmul.f32 %v775, 0.044715
  %v1035 = vmul.f32 %v584, 0.044715
  %v1036 = vmul.f32 %v586, 0.044715
  %v1037 = vmul.f32 %v777, 0.044715
  %v1038 = vmul.f32 %v779, 0.044715
  %v1039 = vmul.f32 %v590, 0.044715
  %v1040 = vmul.f32 %v592, 0.044715
  %v1041 = vmul.f32 %v783, 0.044715
  %v1042 = vmul.f32 %v785, 0.044715
  %v1043 = vmul.f32 %v594, 0.044715
  %v1044 = vmul.f32 %v596, 0.044715
  %v1045 = vmul.f32 %v787, 0.044715
  %v1046 = vmul.f32 %v789, 0.044715
  %v1047 = vmul.f32 %v919, %v440
  %v1048 = vmul.f32 %v920, %v442
  %v1049 = vmul.f32 %v921, %v633
  %v1050 = vmul.f32 %v922, %v635
  %v1051 = vmul.f32 %v923, %v444
  %v1052 = vmul.f32 %v924, %v446
  %v1053 = vmul.f32 %v925, %v637
  %v1054 = vmul.f32 %v926, %v639
  %v1055 = vmul.f32 %v927, %v450
  %v1056 = vmul.f32 %v928, %v452
  %v1057 = vmul.f32 %v929, %v643
  %v1058 = vmul.f32 %v930, %v645
  %v1059 = vmul.f32 %v931, %v454
  %v1060 = vmul.f32 %v932, %v456
  %v1061 = vmul.f32 %v933, %v647
  %v1062 = vmul.f32 %v934, %v649
  %v1063 = vmul.f32 %v935, %v460
  %v1064 = vmul.f32 %v936, %v462
  %v1065 = vmul.f32 %v937, %v653
  %v1066 = vmul.f32 %v938, %v655
  %v1067 = vmul.f32 %v939, %v464
  %v1068 = vmul.f32 %v940, %v466
  %v1069 = vmul.f32 %v941, %v657
  %v1070 = vmul.f32 %v942, %v659
  %v1071 = vmul.f32 %v943, %v470
  %v1072 = vmul.f32 %v944, %v472
  %v1073 = vmul.f32 %v945, %v663
  %v1074 = vmul.f32 %v946, %v665
  %v1075 = vmul.f32 %v947, %v474
  %v1076 = vmul.f32 %v948, %v476
  %v1077 = vmul.f32 %v949, %v667
  %v1078 = vmul.f32 %v950, %v669
  %v1079 = vmul.f32 %v951, %v480
  %v1080 = vmul.f32 %v952, %v482
  %v1081 = vmul.f32 %v953, %v673
  %v1082 = vmul.f32 %v954, %v675
  %v1083 = vmul.f32 %v955, %v484
  %v1084 = vmul.f32 %v956, %v486
  %v1085 = vmul.f32 %v957, %v677
  %v1086 = vmul.f32 %v958, %v679
  %v1087 = vmul.f32 %v959, %v490
  %v1088 = vmul.f32 %v960, %v492
  %v1089 = vmul.f32 %v961, %v683
  %v1090 = vmul.f32 %v962, %v685
  %v1091 = vmul.f32 %v963, %v494
  %v1092 = vmul.f32 %v964, %v496
  %v1093 = vmul.f32 %v965, %v687
  %v1094 = vmul.f32 %v966, %v689
  %v1095 = vmul.f32 %v967, %v500
  %v1096 = vmul.f32 %v968, %v502
  %v1097 = vmul.f32 %v969, %v693
  %v1098 = vmul.f32 %v970, %v695
  %v1099 = vmul.f32 %v971, %v504
  %v1100 = vmul.f32 %v972, %v506
  %v1101 = vmul.f32 %v973, %v697
  %v1102 = vmul.f32 %v974, %v699
  %v1103 = vmul.f32 %v975, %v510
  %v1104 = vmul.f32 %v976, %v512
  %v1105 = vmul.f32 %v977, %v703
  %v1106 = vmul.f32 %v978, %v705
  %v1107 = vmul.f32 %v979, %v514
  %v1108 = vmul.f32 %v980, %v516
  %v1109 = vmul.f32 %v981, %v707
  %v1110 = vmul.f32 %v982, %v709
  %v1111 = vmul.f32 %v983, %v520
  %v1112 = vmul.f32 %v984, %v522
  %v1113 = vmul.f32 %v985, %v713
  %v1114 = vmul.f32 %v986, %v715
  %v1115 = vmul.f32 %v987, %v524
  %v1116 = vmul.f32 %v988, %v526
  %v1117 = vmul.f32 %v989, %v717
  %v1118 = vmul.f32 %v990, %v719
  %v1119 = vmul.f32 %v991, %v530
  %v1120 = vmul.f32 %v992, %v532
  %v1121 = vmul.f32 %v993, %v723
  %v1122 = vmul.f32 %v994, %v725
  %v1123 = vmul.f32 %v995, %v534
  %v1124 = vmul.f32 %v996, %v536
  %v1125 = vmul.f32 %v997, %v727
  %v1126 = vmul.f32 %v998, %v729
  %v1127 = vmul.f32 %v999, %v540
  %v1128 = vmul.f32 %v1000, %v542
  %v1129 = vmul.f32 %v1001, %v733
  %v1130 = vmul.f32 %v1002, %v735
  %v1131 = vmul.f32 %v1003, %v544
  %v1132 = vmul.f32 %v1004, %v546
  %v1133 = vmul.f32 %v1005, %v737
  %v1134 = vmul.f32 %v1006, %v739
  %v1135 = vmul.f32 %v1007, %v550
  %v1136 = vmul.f32 %v1008, %v552
  %v1137 = vmul.f32 %v1009, %v743
  %v1138 = vmul.f32 %v1010, %v745
  %v1139 = vmul.f32 %v1011, %v554
  %v1140 = vmul.f32 %v1012, %v556
  %v1141 = vmul.f32 %v1013, %v747
  %v1142 = vmul.f32 %v1014, %v749
  %v1143 = vmul.f32 %v1015, %v560
  %v1144 = vmul.f32 %v1016, %v562
  %v1145 = vmul.f32 %v1017, %v753
  %v1146 = vmul.f32 %v1018, %v755
  %v1147 = vmul.f32 %v1019, %v564
  %v1148 = vmul.f32 %v1020, %v566
  %v1149 = vmul.f32 %v1021, %v757
  %v1150 = vmul.f32 %v1022, %v759
  %v1151 = vmul.f32 %v1023, %v570
  %v1152 = vmul.f32 %v1024, %v572
  %v1153 = vmul.f32 %v1025, %v763
  %v1154 = vmul.f32 %v1026, %v765
  %v1155 = vmul.f32 %v1027, %v574
  %v1156 = vmul.f32 %v1028, %v576
  %v1157 = vmul.f32 %v1029, %v767
  %v1158 = vmul.f32 %v1030, %v769
  %v1159 = vmul.f32 %v1031, %v580
  %v1160 = vmul.f32 %v1032, %v582
  %v1161 = vmul.f32 %v1033, %v773
  %v1162 = vmul.f32 %v1034, %v775
  %v1163 = vmul.f32 %v1035, %v584
  %v1164 = vmul.f32 %v1036, %v586
  %v1165 = vmul.f32 %v1037, %v777
  %v1166 = vmul.f32 %v1038, %v779
  %v1167 = vmul.f32 %v1039, %v590
  %v1168 = vmul.f32 %v1040, %v592
  %v1169 = vmul.f32 %v1041, %v783
  %v1170 = vmul.f32 %v1042, %v785
  %v1171 = vmul.f32 %v1043, %v594
  %v1172 = vmul.f32 %v1044, %v596
  %v1173 = vmul.f32 %v1045, %v787
  %v1174 = vmul.f32 %v1046, %v789
  %v1175 = vmul.f32 %v1047, %v440
  %v1176 = vmul.f32 %v1048, %v442
  %v1177 = vmul.f32 %v1049, %v633
  %v1178 = vmul.f32 %v1050, %v635
  %v1179 = vmul.f32 %v1051, %v444
  %v1180 = vmul.f32 %v1052, %v446
  %v1181 = vmul.f32 %v1053, %v637
  %v1182 = vmul.f32 %v1054, %v639
  %v1183 = vmul.f32 %v1055, %v450
  %v1184 = vmul.f32 %v1056, %v452
  %v1185 = vmul.f32 %v1057, %v643
  %v1186 = vmul.f32 %v1058, %v645
  %v1187 = vmul.f32 %v1059, %v454
  %v1188 = vmul.f32 %v1060, %v456
  %v1189 = vmul.f32 %v1061, %v647
  %v1190 = vmul.f32 %v1062, %v649
  %v1191 = vmul.f32 %v1063, %v460
  %v1192 = vmul.f32 %v1064, %v462
  %v1193 = vmul.f32 %v1065, %v653
  %v1194 = vmul.f32 %v1066, %v655
  %v1195 = vmul.f32 %v1067, %v464
  %v1196 = vmul.f32 %v1068, %v466
  %v1197 = vmul.f32 %v1069, %v657
  %v1198 = vmul.f32 %v1070, %v659
  %v1199 = vmul.f32 %v1071, %v470
  %v1200 = vmul.f32 %v1072, %v472
  %v1201 = vmul.f32 %v1073, %v663
  %v1202 = vmul.f32 %v1074, %v665
  %v1203 = vmul.f32 %v1075, %v474
  %v1204 = vmul.f32 %v1076, %v476
  %v1205 = vmul.f32 %v1077, %v667
  %v1206 = vmul.f32 %v1078, %v669
  %v1207 = vmul.f32 %v1079, %v480
  %v1208 = vmul.f32 %v1080, %v482
  %v1209 = vmul.f32 %v1081, %v673
  %v1210 = vmul.f32 %v1082, %v675
  %v1211 = vmul.f32 %v1083, %v484
  %v1212 = vmul.f32 %v1084, %v486
  %v1213 = vmul.f32 %v1085, %v677
  %v1214 = vmul.f32 %v1086, %v679
  %v1215 = vmul.f32 %v1087, %v490
  %v1216 = vmul.f32 %v1088, %v492
  %v1217 = vmul.f32 %v1089, %v683
  %v1218 = vmul.f32 %v1090, %v685
  %v1219 = vmul.f32 %v1091, %v494
  %v1220 = vmul.f32 %v1092, %v496
  %v1221 = vmul.f32 %v1093, %v687
  %v1222 = vmul.f32 %v1094, %v689
  %v1223 = vmul.f32 %v1095, %v500
  %v1224 = vmul.f32 %v1096, %v502
  %v1225 = vmul.f32 %v1097, %v693
  %v1226 = vmul.f32 %v1098, %v695
  %v1227 = vmul.f32 %v1099, %v504
  %v1228 = vmul.f32 %v1100, %v506
  %v1229 = vmul.f32 %v1101, %v697
  %v1230 = vmul.f32 %v1102, %v699
  %v1231 = vmul.f32 %v1103, %v510
  %v1232 = vmul.f32 %v1104, %v512
  %v1233 = vmul.f32 %v1105, %v703
  %v1234 = vmul.f32 %v1106, %v705
  %v1235 = vmul.f32 %v1107, %v514
  %v1236 = vmul.f32 %v1108, %v516
  %v1237 = vmul.f32 %v1109, %v707
  %v1238 = vmul.f32 %v1110, %v709
  %v1239 = vmul.f32 %v1111, %v520
  %v1240 = vmul.f32 %v1112, %v522
  %v1241 = vmul.f32 %v1113, %v713
  %v1242 = vmul.f32 %v1114, %v715
  %v1243 = vmul.f32 %v1115, %v524
  %v1244 = vmul.f32 %v1116, %v526
  %v1245 = vmul.f32 %v1117, %v717
  %v1246 = vmul.f32 %v1118, %v719
  %v1247 = vmul.f32 %v1119, %v530
  %v1248 = vmul.f32 %v1120, %v532
  %v1249 = vmul.f32 %v1121, %v723
  %v1250 = vmul.f32 %v1122, %v725
  %v1251 = vmul.f32 %v1123, %v534
  %v1252 = vmul.f32 %v1124, %v536
  %v1253 = vmul.f32 %v1125, %v727
  %v1254 = vmul.f32 %v1126, %v729
  %v1255 = vmul.f32 %v1127, %v540
  %v1256 = vmul.f32 %v1128, %v542
  %v1257 = vmul.f32 %v1129, %v733
  %v1258 = vmul.f32 %v1130, %v735
  %v1259 = vmul.f32 %v1131, %v544
  %v1260 = vmul.f32 %v1132, %v546
  %v1261 = vmul.f32 %v1133, %v737
  %v1262 = vmul.f32 %v1134, %v739
  %v1263 = vmul.f32 %v1135, %v550
  %v1264 = vmul.f32 %v1136, %v552
  %v1265 = vmul.f32 %v1137, %v743
  %v1266 = vmul.f32 %v1138, %v745
  %v1267 = vmul.f32 %v1139, %v554
  %v1268 = vmul.f32 %v1140, %v556
  %v1269 = vmul.f32 %v1141, %v747
  %v1270 = vmul.f32 %v1142, %v749
  %v1271 = vmul.f32 %v1143, %v560
  %v1272 = vmul.f32 %v1144, %v562
  %v1273 = vmul.f32 %v1145, %v753
  %v1274 = vmul.f32 %v1146, %v755
  %v1275 = vmul.f32 %v1147, %v564
  %v1276 = vmul.f32 %v1148, %v566
  %v1277 = vmul.f32 %v1149, %v757
  %v1278 = vmul.f32 %v1150, %v759
  %v1279 = vmul.f32 %v1151, %v570
  %v1280 = vmul.f32 %v1152, %v572
  %v1281 = vmul.f32 %v1153, %v763
  %v1282 = vmul.f32 %v1154, %v765
  %v1283 = vmul.f32 %v1155, %v574
  %v1284 = vmul.f32 %v1156, %v576
  %v1285 = vmul.f32 %v1157, %v767
  %v1286 = vmul.f32 %v1158, %v769
  %v1287 = vmul.f32 %v1159, %v580
  %v1288 = vmul.f32 %v1160, %v582
  %v1289 = vmul.f32 %v1161, %v773
  %v1290 = vmul.f32 %v1162, %v775
  %v1291 = vmul.f32 %v1163, %v584
  %v1292 = vmul.f32 %v1164, %v586
  %v1293 = vmul.f32 %v1165, %v777
  %v1294 = vmul.f32 %v1166, %v779
  %v1295 = vmul.f32 %v1167, %v590
  %v1296 = vmul.f32 %v1168, %v592
  %v1297 = vmul.f32 %v1169, %v783
  %v1298 = vmul.f32 %v1170, %v785
  %v1299 = vmul.f32 %v1171, %v594
  %v1300 = vmul.f32 %v1172, %v596
  %v1301 = vmul.f32 %v1173, %v787
  %v1302 = vmul.f32 %v1174, %v789
  %v1303 = vadd.f32 %v440, %v1175
  %v1304 = vadd.f32 %v442, %v1176
  %v1305 = vadd.f32 %v633, %v1177
  %v1306 = vadd.f32 %v635, %v1178
  %v1307 = vadd.f32 %v444, %v1179
  %v1308 = vadd.f32 %v446, %v1180
  %v1309 = vadd.f32 %v637, %v1181
  %v1310 = vadd.f32 %v639, %v1182
  %v1311 = vadd.f32 %v450, %v1183
  %v1312 = vadd.f32 %v452, %v1184
  %v1313 = vadd.f32 %v643, %v1185
  %v1314 = vadd.f32 %v645, %v1186
  %v1315 = vadd.f32 %v454, %v1187
  %v1316 = vadd.f32 %v456, %v1188
  %v1317 = vadd.f32 %v647, %v1189
  %v1318 = vadd.f32 %v649, %v1190
  %v1319 = vadd.f32 %v460, %v1191
  %v1320 = vadd.f32 %v462, %v1192
  %v1321 = vadd.f32 %v653, %v1193
  %v1322 = vadd.f32 %v655, %v1194
  %v1323 = vadd.f32 %v464, %v1195
  %v1324 = vadd.f32 %v466, %v1196
  %v1325 = vadd.f32 %v657, %v1197
  %v1326 = vadd.f32 %v659, %v1198
  %v1327 = vadd.f32 %v470, %v1199
  %v1328 = vadd.f32 %v472, %v1200
  %v1329 = vadd.f32 %v663, %v1201
  %v1330 = vadd.f32 %v665, %v1202
  %v1331 = vadd.f32 %v474, %v1203
  %v1332 = vadd.f32 %v476, %v1204
  %v1333 = vadd.f32 %v667, %v1205
  %v1334 = vadd.f32 %v669, %v1206
  %v1335 = vadd.f32 %v480, %v1207
  %v1336 = vadd.f32 %v482, %v1208
  %v1337 = vadd.f32 %v673, %v1209
  %v1338 = vadd.f32 %v675, %v1210
  %v1339 = vadd.f32 %v484, %v1211
  %v1340 = vadd.f32 %v486, %v1212
  %v1341 = vadd.f32 %v677, %v1213
  %v1342 = vadd.f32 %v679, %v1214
  %v1343 = vadd.f32 %v490, %v1215
  %v1344 = vadd.f32 %v492, %v1216
  %v1345 = vadd.f32 %v683, %v1217
  %v1346 = vadd.f32 %v685, %v1218
  %v1347 = vadd.f32 %v494, %v1219
  %v1348 = vadd.f32 %v496, %v1220
  %v1349 = vadd.f32 %v687, %v1221
  %v1350 = vadd.f32 %v689, %v1222
  %v1351 = vadd.f32 %v500, %v1223
  %v1352 = vadd.f32 %v502, %v1224
  %v1353 = vadd.f32 %v693, %v1225
  %v1354 = vadd.f32 %v695, %v1226
  %v1355 = vadd.f32 %v504, %v1227
  %v1356 = vadd.f32 %v506, %v1228
  %v1357 = vadd.f32 %v697, %v1229
  %v1358 = vadd.f32 %v699, %v1230
  %v1359 = vadd.f32 %v510, %v1231
  %v1360 = vadd.f32 %v512, %v1232
  %v1361 = vadd.f32 %v703, %v1233
  %v1362 = vadd.f32 %v705, %v1234
  %v1363 = vadd.f32 %v514, %v1235
  %v1364 = vadd.f32 %v516, %v1236
  %v1365 = vadd.f32 %v707, %v1237
  %v1366 = vadd.f32 %v709, %v1238
  %v1367 = vadd.f32 %v520, %v1239
  %v1368 = vadd.f32 %v522, %v1240
  %v1369 = vadd.f32 %v713, %v1241
  %v1370 = vadd.f32 %v715, %v1242
  %v1371 = vadd.f32 %v524, %v1243
  %v1372 = vadd.f32 %v526, %v1244
  %v1373 = vadd.f32 %v717, %v1245
  %v1374 = vadd.f32 %v719, %v1246
  %v1375 = vadd.f32 %v530, %v1247
  %v1376 = vadd.f32 %v532, %v1248
  %v1377 = vadd.f32 %v723, %v1249
  %v1378 = vadd.f32 %v725, %v1250
  %v1379 = vadd.f32 %v534, %v1251
  %v1380 = vadd.f32 %v536, %v1252
  %v1381 = vadd.f32 %v727, %v1253
  %v1382 = vadd.f32 %v729, %v1254
  %v1383 = vadd.f32 %v540, %v1255
  %v1384 = vadd.f32 %v542, %v1256
  %v1385 = vadd.f32 %v733, %v1257
  %v1386 = vadd.f32 %v735, %v1258
  %v1387 = vadd.f32 %v544, %v1259
  %v1388 = vadd.f32 %v546, %v1260
  %v1389 = vadd.f32 %v737, %v1261
  %v1390 = vadd.f32 %v739, %v1262
  %v1391 = vadd.f32 %v550, %v1263
  %v1392 = vadd.f32 %v552, %v1264
  %v1393 = vadd.f32 %v743, %v1265
  %v1394 = vadd.f32 %v745, %v1266
  %v1395 = vadd.f32 %v554, %v1267
  %v1396 = vadd.f32 %v556, %v1268
  %v1397 = vadd.f32 %v747, %v1269
  %v1398 = vadd.f32 %v749, %v1270
  %v1399 = vadd.f32 %v560, %v1271
  %v1400 = vadd.f32 %v562, %v1272
  %v1401 = vadd.f32 %v753, %v1273
  %v1402 = vadd.f32 %v755, %v1274
  %v1403 = vadd.f32 %v564, %v1275
  %v1404 = vadd.f32 %v566, %v1276
  %v1405 = vadd.f32 %v757, %v1277
  %v1406 = vadd.f32 %v759, %v1278
  %v1407 = vadd.f32 %v570, %v1279
  %v1408 = vadd.f32 %v572, %v1280
  %v1409 = vadd.f32 %v763, %v1281
  %v1410 = vadd.f32 %v765, %v1282
  %v1411 = vadd.f32 %v574, %v1283
  %v1412 = vadd.f32 %v576, %v1284
  %v1413 = vadd.f32 %v767, %v1285
  %v1414 = vadd.f32 %v769, %v1286
  %v1415 = vadd.f32 %v580, %v1287
  %v1416 = vadd.f32 %v582, %v1288
  %v1417 = vadd.f32 %v773, %v1289
  %v1418 = vadd.f32 %v775, %v1290
  %v1419 = vadd.f32 %v584, %v1291
  %v1420 = vadd.f32 %v586, %v1292
  %v1421 = vadd.f32 %v777, %v1293
  %v1422 = vadd.f32 %v779, %v1294
  %v1423 = vadd.f32 %v590, %v1295
  %v1424 = vadd.f32 %v592, %v1296
  %v1425 = vadd.f32 %v783, %v1297
  %v1426 = vadd.f32 %v785, %v1298
  %v1427 = vadd.f32 %v594, %v1299
  %v1428 = vadd.f32 %v596, %v1300
  %v1429 = vadd.f32 %v787, %v1301
  %v1430 = vadd.f32 %v789, %v1302
  %v1431 = vmul.f32 %v1303, 0.7978846
  %v1432 = vmul.f32 %v1304, 0.7978846
  %v1433 = vmul.f32 %v1305, 0.7978846
  %v1434 = vmul.f32 %v1306, 0.7978846
  %v1435 = vmul.f32 %v1307, 0.7978846
  %v1436 = vmul.f32 %v1308, 0.7978846
  %v1437 = vmul.f32 %v1309, 0.7978846
  %v1438 = vmul.f32 %v1310, 0.7978846
  %v1439 = vmul.f32 %v1311, 0.7978846
  %v1440 = vmul.f32 %v1312, 0.7978846
  %v1441 = vmul.f32 %v1313, 0.7978846
  %v1442 = vmul.f32 %v1314, 0.7978846
  %v1443 = vmul.f32 %v1315, 0.7978846
  %v1444 = vmul.f32 %v1316, 0.7978846
  %v1445 = vmul.f32 %v1317, 0.7978846
  %v1446 = vmul.f32 %v1318, 0.7978846
  %v1447 = vmul.f32 %v1319, 0.7978846
  %v1448 = vmul.f32 %v1320, 0.7978846
  %v1449 = vmul.f32 %v1321, 0.7978846
  %v1450 = vmul.f32 %v1322, 0.7978846
  %v1451 = vmul.f32 %v1323, 0.7978846
  %v1452 = vmul.f32 %v1324, 0.7978846
  %v1453 = vmul.f32 %v1325, 0.7978846
  %v1454 = vmul.f32 %v1326, 0.7978846
  %v1455 = vmul.f32 %v1327, 0.7978846
  %v1456 = vmul.f32 %v1328, 0.7978846
  %v1457 = vmul.f32 %v1329, 0.7978846
  %v1458 = vmul.f32 %v1330, 0.7978846
  %v1459 = vmul.f32 %v1331, 0.7978846
  %v1460 = vmul.f32 %v1332, 0.7978846
  %v1461 = vmul.f32 %v1333, 0.7978846
  %v1462 = vmul.f32 %v1334, 0.7978846
  %v1463 = vmul.f32 %v1335, 0.7978846
  %v1464 = vmul.f32 %v1336, 0.7978846
  %v1465 = vmul.f32 %v1337, 0.7978846
  %v1466 = vmul.f32 %v1338, 0.7978846
  %v1467 = vmul.f32 %v1339, 0.7978846
  %v1468 = vmul.f32 %v1340, 0.7978846
  %v1469 = vmul.f32 %v1341, 0.7978846
  %v1470 = vmul.f32 %v1342, 0.7978846
  %v1471 = vmul.f32 %v1343, 0.7978846
  %v1472 = vmul.f32 %v1344, 0.7978846
  %v1473 = vmul.f32 %v1345, 0.7978846
  %v1474 = vmul.f32 %v1346, 0.7978846
  %v1475 = vmul.f32 %v1347, 0.7978846
  %v1476 = vmul.f32 %v1348, 0.7978846
  %v1477 = vmul.f32 %v1349, 0.7978846
  %v1478 = vmul.f32 %v1350, 0.7978846
  %v1479 = vmul.f32 %v1351, 0.7978846
  %v1480 = vmul.f32 %v1352, 0.7978846
  %v1481 = vmul.f32 %v1353, 0.7978846
  %v1482 = vmul.f32 %v1354, 0.7978846
  %v1483 = vmul.f32 %v1355, 0.7978846
  %v1484 = vmul.f32 %v1356, 0.7978846
  %v1485 = vmul.f32 %v1357, 0.7978846
  %v1486 = vmul.f32 %v1358, 0.7978846
  %v1487 = vmul.f32 %v1359, 0.7978846
  %v1488 = vmul.f32 %v1360, 0.7978846
  %v1489 = vmul.f32 %v1361, 0.7978846
  %v1490 = vmul.f32 %v1362, 0.7978846
  %v1491 = vmul.f32 %v1363, 0.7978846
  %v1492 = vmul.f32 %v1364, 0.7978846
  %v1493 = vmul.f32 %v1365, 0.7978846
  %v1494 = vmul.f32 %v1366, 0.7978846
  %v1495 = vmul.f32 %v1367, 0.7978846
  %v1496 = vmul.f32 %v1368, 0.7978846
  %v1497 = vmul.f32 %v1369, 0.7978846
  %v1498 = vmul.f32 %v1370, 0.7978846
  %v1499 = vmul.f32 %v1371, 0.7978846
  %v1500 = vmul.f32 %v1372, 0.7978846
  %v1501 = vmul.f32 %v1373, 0.7978846
  %v1502 = vmul.f32 %v1374, 0.7978846
  %v1503 = vmul.f32 %v1375, 0.7978846
  %v1504 = vmul.f32 %v1376, 0.7978846
  %v1505 = vmul.f32 %v1377, 0.7978846
  %v1506 = vmul.f32 %v1378, 0.7978846
  %v1507 = vmul.f32 %v1379, 0.7978846
  %v1508 = vmul.f32 %v1380, 0.7978846
  %v1509 = vmul.f32 %v1381, 0.7978846
  %v1510 = vmul.f32 %v1382, 0.7978846
  %v1511 = vmul.f32 %v1383, 0.7978846
  %v1512 = vmul.f32 %v1384, 0.7978846
  %v1513 = vmul.f32 %v1385, 0.7978846
  %v1514 = vmul.f32 %v1386, 0.7978846
  %v1515 = vmul.f32 %v1387, 0.7978846
  %v1516 = vmul.f32 %v1388, 0.7978846
  %v1517 = vmul.f32 %v1389, 0.7978846
  %v1518 = vmul.f32 %v1390, 0.7978846
  %v1519 = vmul.f32 %v1391, 0.7978846
  %v1520 = vmul.f32 %v1392, 0.7978846
  %v1521 = vmul.f32 %v1393, 0.7978846
  %v1522 = vmul.f32 %v1394, 0.7978846
  %v1523 = vmul.f32 %v1395, 0.7978846
  %v1524 = vmul.f32 %v1396, 0.7978846
  %v1525 = vmul.f32 %v1397, 0.7978846
  %v1526 = vmul.f32 %v1398, 0.7978846
  %v1527 = vmul.f32 %v1399, 0.7978846
  %v1528 = vmul.f32 %v1400, 0.7978846
  %v1529 = vmul.f32 %v1401, 0.7978846
  %v1530 = vmul.f32 %v1402, 0.7978846
  %v1531 = vmul.f32 %v1403, 0.7978846
  %v1532 = vmul.f32 %v1404, 0.7978846
  %v1533 = vmul.f32 %v1405, 0.7978846
  %v1534 = vmul.f32 %v1406, 0.7978846
  %v1535 = vmul.f32 %v1407, 0.7978846
  %v1536 = vmul.f32 %v1408, 0.7978846
  %v1537 = vmul.f32 %v1409, 0.7978846
  %v1538 = vmul.f32 %v1410, 0.7978846
  %v1539 = vmul.f32 %v1411, 0.7978846
  %v1540 = vmul.f32 %v1412, 0.7978846
  %v1541 = vmul.f32 %v1413, 0.7978846
  %v1542 = vmul.f32 %v1414, 0.7978846
  %v1543 = vmul.f32 %v1415, 0.7978846
  %v1544 = vmul.f32 %v1416, 0.7978846
  %v1545 = vmul.f32 %v1417, 0.7978846
  %v1546 = vmul.f32 %v1418, 0.7978846
  %v1547 = vmul.f32 %v1419, 0.7978846
  %v1548 = vmul.f32 %v1420, 0.7978846
  %v1549 = vmul.f32 %v1421, 0.7978846
  %v1550 = vmul.f32 %v1422, 0.7978846
  %v1551 = vmul.f32 %v1423, 0.7978846
  %v1552 = vmul.f32 %v1424, 0.7978846
  %v1553 = vmul.f32 %v1425, 0.7978846
  %v1554 = vmul.f32 %v1426, 0.7978846
  %v1555 = vmul.f32 %v1427, 0.7978846
  %v1556 = vmul.f32 %v1428, 0.7978846
  %v1557 = vmul.f32 %v1429, 0.7978846
  %v1558 = vmul.f32 %v1430, 0.7978846
  %v1559 = vtanh.pop %v1431
  %v1560 = vtanh.pop %v1432
  %v1561 = vtanh.pop %v1433
  %v1562 = vtanh.pop %v1434
  %v1563 = vtanh.pop %v1435
  %v1564 = vtanh.pop %v1436
  %v1565 = vtanh.pop %v1437
  %v1566 = vtanh.pop %v1438
  %v1567 = vtanh.pop %v1439
  %v1568 = vtanh.pop %v1440
  %v1569 = vtanh.pop %v1441
  %v1570 = vtanh.pop %v1442
  %v1571 = vtanh.pop %v1443
  %v1572 = vtanh.pop %v1444
  %v1573 = vtanh.pop %v1445
  %v1574 = vtanh.pop %v1446
  %v1575 = vtanh.pop %v1447
  %v1576 = vtanh.pop %v1448
  %v1577 = vtanh.pop %v1449
  %v1578 = vtanh.pop %v1450
  %v1579 = vtanh.pop %v1451
  %v1580 = vtanh.pop %v1452
  %v1581 = vtanh.pop %v1453
  %v1582 = vtanh.pop %v1454
  %v1583 = vtanh.pop %v1455
  %v1584 = vtanh.pop %v1456
  %v1585 = vtanh.pop %v1457
  %v1586 = vtanh.pop %v1458
  %v1587 = vtanh.pop %v1459
  %v1588 = vtanh.pop %v1460
  %v1589 = vtanh.pop %v1461
  %v1590 = vtanh.pop %v1462
  %v1591 = vtanh.pop %v1463
  %v1592 = vtanh.pop %v1464
  %v1593 = vtanh.pop %v1465
  %v1594 = vtanh.pop %v1466
  %v1595 = vtanh.pop %v1467
  %v1596 = vtanh.pop %v1468
  %v1597 = vtanh.pop %v1469
  %v1598 = vtanh.pop %v1470
  %v1599 = vtanh.pop %v1471
  %v1600 = vtanh.pop %v1472
  %v1601 = vtanh.pop %v1473
  %v1602 = vtanh.pop %v1474
  %v1603 = vtanh.pop %v1475
  %v1604 = vtanh.pop %v1476
  %v1605 = vtanh.pop %v1477
  %v1606 = vtanh.pop %v1478
  %v1607 = vtanh.pop %v1479
  %v1608 = vtanh.pop %v1480
  %v1609 = vtanh.pop %v1481
  %v1610 = vtanh.pop %v1482
  %v1611 = vtanh.pop %v1483
  %v1612 = vtanh.pop %v1484
  %v1613 = vtanh.pop %v1485
  %v1614 = vtanh.pop %v1486
  %v1615 = vtanh.pop %v1487
  %v1616 = vtanh.pop %v1488
  %v1617 = vtanh.pop %v1489
  %v1618 = vtanh.pop %v1490
  %v1619 = vtanh.pop %v1491
  %v1620 = vtanh.pop %v1492
  %v1621 = vtanh.pop %v1493
  %v1622 = vtanh.pop %v1494
  %v1623 = vtanh.pop %v1495
  %v1624 = vtanh.pop %v1496
  %v1625 = vtanh.pop %v1497
  %v1626 = vtanh.pop %v1498
  %v1627 = vtanh.pop %v1499
  %v1628 = vtanh.pop %v1500
  %v1629 = vtanh.pop %v1501
  %v1630 = vtanh.pop %v1502
  %v1631 = vtanh.pop %v1503
  %v1632 = vtanh.pop %v1504
  %v1633 = vtanh.pop %v1505
  %v1634 = vtanh.pop %v1506
  %v1635 = vtanh.pop %v1507
  %v1636 = vtanh.pop %v1508
  %v1637 = vtanh.pop %v1509
  %v1638 = vtanh.pop %v1510
  %v1639 = vtanh.pop %v1511
  %v1640 = vtanh.pop %v1512
  %v1641 = vtanh.pop %v1513
  %v1642 = vtanh.pop %v1514
  %v1643 = vtanh.pop %v1515
  %v1644 = vtanh.pop %v1516
  %v1645 = vtanh.pop %v1517
  %v1646 = vtanh.pop %v1518
  %v1647 = vtanh.pop %v1519
  %v1648 = vtanh.pop %v1520
  %v1649 = vtanh.pop %v1521
  %v1650 = vtanh.pop %v1522
  %v1651 = vtanh.pop %v1523
  %v1652 = vtanh.pop %v1524
  %v1653 = vtanh.pop %v1525
  %v1654 = vtanh.pop %v1526
  %v1655 = vtanh.pop %v1527
  %v1656 = vtanh.pop %v1528
  %v1657 = vtanh.pop %v1529
  %v1658 = vtanh.pop %v1530
  %v1659 = vtanh.pop %v1531
  %v1660 = vtanh.pop %v1532
  %v1661 = vtanh.pop %v1533
  %v1662 = vtanh.pop %v1534
  %v1663 = vtanh.pop %v1535
  %v1664 = vtanh.pop %v1536
  %v1665 = vtanh.pop %v1537
  %v1666 = vtanh.pop %v1538
  %v1667 = vtanh.pop %v1539
  %v1668 = vtanh.pop %v1540
  %v1669 = vtanh.pop %v1541
  %v1670 = vtanh.pop %v1542
  %v1671 = vtanh.pop %v1543
  %v1672 = vtanh.pop %v1544
  %v1673 = vtanh.pop %v1545
  %v1674 = vtanh.pop %v1546
  %v1675 = vtanh.pop %v1547
  %v1676 = vtanh.pop %v1548
  %v1677 = vtanh.pop %v1549
  %v1678 = vtanh.pop %v1550
  %v1679 = vtanh.pop %v1551
  %v1680 = vtanh.pop %v1552
  %v1681 = vtanh.pop %v1553
  %v1682 = vtanh.pop %v1554
  %v1683 = vtanh.pop %v1555
  %v1684 = vtanh.pop %v1556
  %v1685 = vtanh.pop %v1557
  %v1686 = vtanh.pop %v1558
  %v1687 = vadd.f32 %v1559, 1.0
  %v1688 = vadd.f32 %v1560, 1.0
  %v1689 = vadd.f32 %v1561, 1.0
  %v1690 = vadd.f32 %v1562, 1.0
  %v1691 = vadd.f32 %v1563, 1.0
  %v1692 = vadd.f32 %v1564, 1.0
  %v1693 = vadd.f32 %v1565, 1.0
  %v1694 = vadd.f32 %v1566, 1.0
  %v1695 = vadd.f32 %v1567, 1.0
  %v1696 = vadd.f32 %v1568, 1.0
  %v1697 = vadd.f32 %v1569, 1.0
  %v1698 = vadd.f32 %v1570, 1.0
  %v1699 = vadd.f32 %v1571, 1.0
  %v1700 = vadd.f32 %v1572, 1.0
  %v1701 = vadd.f32 %v1573, 1.0
  %v1702 = vadd.f32 %v1574, 1.0
  %v1703 = vadd.f32 %v1575, 1.0
  %v1704 = vadd.f32 %v1576, 1.0
  %v1705 = vadd.f32 %v1577, 1.0
  %v1706 = vadd.f32 %v1578, 1.0
  %v1707 = vadd.f32 %v1579, 1.0
  %v1708 = vadd.f32 %v1580, 1.0
  %v1709 = vadd.f32 %v1581, 1.0
  %v1710 = vadd.f32 %v1582, 1.0
  %v1711 = vadd.f32 %v1583, 1.0
  %v1712 = vadd.f32 %v1584, 1.0
  %v1713 = vadd.f32 %v1585, 1.0
  %v1714 = vadd.f32 %v1586, 1.0
  %v1715 = vadd.f32 %v1587, 1.0
  %v1716 = vadd.f32 %v1588, 1.0
  %v1717 = vadd.f32 %v1589, 1.0
  %v1718 = vadd.f32 %v1590, 1.0
  %v1719 = vadd.f32 %v1591, 1.0
  %v1720 = vadd.f32 %v1592, 1.0
  %v1721 = vadd.f32 %v1593, 1.0
  %v1722 = vadd.f32 %v1594, 1.0
  %v1723 = vadd.f32 %v1595, 1.0
  %v1724 = vadd.f32 %v1596, 1.0
  %v1725 = vadd.f32 %v1597, 1.0
  %v1726 = vadd.f32 %v1598, 1.0
  %v1727 = vadd.f32 %v1599, 1.0
  %v1728 = vadd.f32 %v1600, 1.0
  %v1729 = vadd.f32 %v1601, 1.0
  %v1730 = vadd.f32 %v1602, 1.0
  %v1731 = vadd.f32 %v1603, 1.0
  %v1732 = vadd.f32 %v1604, 1.0
  %v1733 = vadd.f32 %v1605, 1.0
  %v1734 = vadd.f32 %v1606, 1.0
  %v1735 = vadd.f32 %v1607, 1.0
  %v1736 = vadd.f32 %v1608, 1.0
  %v1737 = vadd.f32 %v1609, 1.0
  %v1738 = vadd.f32 %v1610, 1.0
  %v1739 = vadd.f32 %v1611, 1.0
  %v1740 = vadd.f32 %v1612, 1.0
  %v1741 = vadd.f32 %v1613, 1.0
  %v1742 = vadd.f32 %v1614, 1.0
  %v1743 = vadd.f32 %v1615, 1.0
  %v1744 = vadd.f32 %v1616, 1.0
  %v1745 = vadd.f32 %v1617, 1.0
  %v1746 = vadd.f32 %v1618, 1.0
  %v1747 = vadd.f32 %v1619, 1.0
  %v1748 = vadd.f32 %v1620, 1.0
  %v1749 = vadd.f32 %v1621, 1.0
  %v1750 = vadd.f32 %v1622, 1.0
  %v1751 = vadd.f32 %v1623, 1.0
  %v1752 = vadd.f32 %v1624, 1.0
  %v1753 = vadd.f32 %v1625, 1.0
  %v1754 = vadd.f32 %v1626, 1.0
  %v1755 = vadd.f32 %v1627, 1.0
  %v1756 = vadd.f32 %v1628, 1.0
  %v1757 = vadd.f32 %v1629, 1.0
  %v1758 = vadd.f32 %v1630, 1.0
  %v1759 = vadd.f32 %v1631, 1.0
  %v1760 = vadd.f32 %v1632, 1.0
  %v1761 = vadd.f32 %v1633, 1.0
  %v1762 = vadd.f32 %v1634, 1.0
  %v1763 = vadd.f32 %v1635, 1.0
  %v1764 = vadd.f32 %v1636, 1.0
  %v1765 = vadd.f32 %v1637, 1.0
  %v1766 = vadd.f32 %v1638, 1.0
  %v1767 = vadd.f32 %v1639, 1.0
  %v1768 = vadd.f32 %v1640, 1.0
  %v1769 = vadd.f32 %v1641, 1.0
  %v1770 = vadd.f32 %v1642, 1.0
  %v1771 = vadd.f32 %v1643, 1.0
  %v1772 = vadd.f32 %v1644, 1.0
  %v1773 = vadd.f32 %v1645, 1.0
  %v1774 = vadd.f32 %v1646, 1.0
  %v1775 = vadd.f32 %v1647, 1.0
  %v1776 = vadd.f32 %v1648, 1.0
  %v1777 = vadd.f32 %v1649, 1.0
  %v1778 = vadd.f32 %v1650, 1.0
  %v1779 = vadd.f32 %v1651, 1.0
  %v1780 = vadd.f32 %v1652, 1.0
  %v1781 = vadd.f32 %v1653, 1.0
  %v1782 = vadd.f32 %v1654, 1.0
  %v1783 = vadd.f32 %v1655, 1.0
  %v1784 = vadd.f32 %v1656, 1.0
  %v1785 = vadd.f32 %v1657, 1.0
  %v1786 = vadd.f32 %v1658, 1.0
  %v1787 = vadd.f32 %v1659, 1.0
  %v1788 = vadd.f32 %v1660, 1.0
  %v1789 = vadd.f32 %v1661, 1.0
  %v1790 = vadd.f32 %v1662, 1.0
  %v1791 = vadd.f32 %v1663, 1.0
  %v1792 = vadd.f32 %v1664, 1.0
  %v1793 = vadd.f32 %v1665, 1.0
  %v1794 = vadd.f32 %v1666, 1.0
  %v1795 = vadd.f32 %v1667, 1.0
  %v1796 = vadd.f32 %v1668, 1.0
  %v1797 = vadd.f32 %v1669, 1.0
  %v1798 = vadd.f32 %v1670, 1.0
  %v1799 = vadd.f32 %v1671, 1.0
  %v1800 = vadd.f32 %v1672, 1.0
  %v1801 = vadd.f32 %v1673, 1.0
  %v1802 = vadd.f32 %v1674, 1.0
  %v1803 = vadd.f32 %v1675, 1.0
  %v1804 = vadd.f32 %v1676, 1.0
  %v1805 = vadd.f32 %v1677, 1.0
  %v1806 = vadd.f32 %v1678, 1.0
  %v1807 = vadd.f32 %v1679, 1.0
  %v1808 = vadd.f32 %v1680, 1.0
  %v1809 = vadd.f32 %v1681, 1.0
  %v1810 = vadd.f32 %v1682, 1.0
  %v1811 = vadd.f32 %v1683, 1.0
  %v1812 = vadd.f32 %v1684, 1.0
  %v1813 = vadd.f32 %v1685, 1.0
  %v1814 = vadd.f32 %v1686, 1.0
  %v1815 = vmul.f32 %v791, %v1687
  %v1816 = vmul.f32 %v792, %v1688
  %v1817 = vmul.f32 %v793, %v1689
  %v1818 = vmul.f32 %v794, %v1690
  %v1819 = vmul.f32 %v795, %v1691
  %v1820 = vmul.f32 %v796, %v1692
  %v1821 = vmul.f32 %v797, %v1693
  %v1822 = vmul.f32 %v798, %v1694
  %v1823 = vmul.f32 %v799, %v1695
  %v1824 = vmul.f32 %v800, %v1696
  %v1825 = vmul.f32 %v801, %v1697
  %v1826 = vmul.f32 %v802, %v1698
  %v1827 = vmul.f32 %v803, %v1699
  %v1828 = vmul.f32 %v804, %v1700
  %v1829 = vmul.f32 %v805, %v1701
  %v1830 = vmul.f32 %v806, %v1702
  %v1831 = vmul.f32 %v807, %v1703
  %v1832 = vmul.f32 %v808, %v1704
  %v1833 = vmul.f32 %v809, %v1705
  %v1834 = vmul.f32 %v810, %v1706
  %v1835 = vmul.f32 %v811, %v1707
  %v1836 = vmul.f32 %v812, %v1708
  %v1837 = vmul.f32 %v813, %v1709
  %v1838 = vmul.f32 %v814, %v1710
  %v1839 = vmul.f32 %v815, %v1711
  %v1840 = vmul.f32 %v816, %v1712
  %v1841 = vmul.f32 %v817, %v1713
  %v1842 = vmul.f32 %v818, %v1714
  %v1843 = vmul.f32 %v819, %v1715
  %v1844 = vmul.f32 %v820, %v1716
  %v1845 = vmul.f32 %v821, %v1717
  %v1846 = vmul.f32 %v822, %v1718
  %v1847 = vmul.f32 %v823, %v1719
  %v1848 = vmul.f32 %v824, %v1720
  %v1849 = vmul.f32 %v825, %v1721
  %v1850 = vmul.f32 %v826, %v1722
  %v1851 = vmul.f32 %v827, %v1723
  %v1852 = vmul.f32 %v828, %v1724
  %v1853 = vmul.f32 %v829, %v1725
  %v1854 = vmul.f32 %v830, %v1726
  %v1855 = vmul.f32 %v831, %v1727
  %v1856 = vmul.f32 %v832, %v1728
  %v1857 = vmul.f32 %v833, %v1729
  %v1858 = vmul.f32 %v834, %v1730
  %v1859 = vmul.f32 %v835, %v1731
  %v1860 = vmul.f32 %v836, %v1732
  %v1861 = vmul.f32 %v837, %v1733
  %v1862 = vmul.f32 %v838, %v1734
  %v1863 = vmul.f32 %v839, %v1735
  %v1864 = vmul.f32 %v840, %v1736
  %v1865 = vmul.f32 %v841, %v1737
  %v1866 = vmul.f32 %v842, %v1738
  %v1867 = vmul.f32 %v843, %v1739
  %v1868 = vmul.f32 %v844, %v1740
  %v1869 = vmul.f32 %v845, %v1741
  %v1870 = vmul.f32 %v846, %v1742
  %v1871 = vmul.f32 %v847, %v1743
  %v1872 = vmul.f32 %v848, %v1744
  %v1873 = vmul.f32 %v849, %v1745
  %v1874 = vmul.f32 %v850, %v1746
  %v1875 = vmul.f32 %v851, %v1747
  %v1876 = vmul.f32 %v852, %v1748
  %v1877 = vmul.f32 %v853, %v1749
  %v1878 = vmul.f32 %v854, %v1750
  %v1879 = vmul.f32 %v855, %v1751
  %v1880 = vmul.f32 %v856, %v1752
  %v1881 = vmul.f32 %v857, %v1753
  %v1882 = vmul.f32 %v858, %v1754
  %v1883 = vmul.f32 %v859, %v1755
  %v1884 = vmul.f32 %v860, %v1756
  %v1885 = vmul.f32 %v861, %v1757
  %v1886 = vmul.f32 %v862, %v1758
  %v1887 = vmul.f32 %v863, %v1759
  %v1888 = vmul.f32 %v864, %v1760
  %v1889 = vmul.f32 %v865, %v1761
  %v1890 = vmul.f32 %v866, %v1762
  %v1891 = vmul.f32 %v867, %v1763
  %v1892 = vmul.f32 %v868, %v1764
  %v1893 = vmul.f32 %v869, %v1765
  %v1894 = vmul.f32 %v870, %v1766
  %v1895 = vmul.f32 %v871, %v1767
  %v1896 = vmul.f32 %v872, %v1768
  %v1897 = vmul.f32 %v873, %v1769
  %v1898 = vmul.f32 %v874, %v1770
  %v1899 = vmul.f32 %v875, %v1771
  %v1900 = vmul.f32 %v876, %v1772
  %v1901 = vmul.f32 %v877, %v1773
  %v1902 = vmul.f32 %v878, %v1774
  %v1903 = vmul.f32 %v879, %v1775
  %v1904 = vmul.f32 %v880, %v1776
  %v1905 = vmul.f32 %v881, %v1777
  %v1906 = vmul.f32 %v882, %v1778
  %v1907 = vmul.f32 %v883, %v1779
  %v1908 = vmul.f32 %v884, %v1780
  %v1909 = vmul.f32 %v885, %v1781
  %v1910 = vmul.f32 %v886, %v1782
  %v1911 = vmul.f32 %v887, %v1783
  %v1912 = vmul.f32 %v888, %v1784
  %v1913 = vmul.f32 %v889, %v1785
  %v1914 = vmul.f32 %v890, %v1786
  %v1915 = vmul.f32 %v891, %v1787
  %v1916 = vmul.f32 %v892, %v1788
  %v1917 = vmul.f32 %v893, %v1789
  %v1918 = vmul.f32 %v894, %v1790
  %v1919 = vmul.f32 %v895, %v1791
  %v1920 = vmul.f32 %v896, %v1792
  %v1921 = vmul.f32 %v897, %v1793
  %v1922 = vmul.f32 %v898, %v1794
  %v1923 = vmul.f32 %v899, %v1795
  %v1924 = vmul.f32 %v900, %v1796
  %v1925 = vmul.f32 %v901, %v1797
  %v1926 = vmul.f32 %v902, %v1798
  %v1927 = vmul.f32 %v903, %v1799
  %v1928 = vmul.f32 %v904, %v1800
  %v1929 = vmul.f32 %v905, %v1801
  %v1930 = vmul.f32 %v906, %v1802
  %v1931 = vmul.f32 %v907, %v1803
  %v1932 = vmul.f32 %v908, %v1804
  %v1933 = vmul.f32 %v909, %v1805
  %v1934 = vmul.f32 %v910, %v1806
  %v1935 = vmul.f32 %v911, %v1807
  %v1936 = vmul.f32 %v912, %v1808
  %v1937 = vmul.f32 %v913, %v1809
  %v1938 = vmul.f32 %v914, %v1810
  %v1939 = vmul.f32 %v915, %v1811
  %v1940 = vmul.f32 %v916, %v1812
  %v1941 = vmul.f32 %v917, %v1813
  %v1942 = vmul.f32 %v918, %v1814
  %v1943 = vld [vmem:[#allocation2] sm:$0xff]
  %v1944 = vld [vmem:[#allocation2 + $0x8] sm:$0xff]
  %v1945 = vld [vmem:[#allocation2 + $0x10] sm:$0xff]
  %v1946 = vld [vmem:[#allocation2 + $0x18] sm:$0xff]
  %v1947 = vld [vmem:[#allocation2 + $0x20] sm:$0xff]
  %v1948 = vld [vmem:[#allocation2 + $0x28] sm:$0xff]
  %v1949 = vld [vmem:[#allocation2 + $0x30] sm:$0xff]
  %v1950 = vld [vmem:[#allocation2 + $0x38] sm:$0xff]
  %v1951 = vld [vmem:[#allocation2 + $0x40] sm:$0xff]
  %v1952 = vld [vmem:[#allocation2 + $0x48] sm:$0xff]
  %v1953 = vld [vmem:[#allocation2 + $0x50] sm:$0xff]
  %v1954 = vld [vmem:[#allocation2 + $0x58] sm:$0xff]
  %v1955 = vld [vmem:[#allocation2 + $0x60] sm:$0xff]
  %v1956 = vld [vmem:[#allocation2 + $0x68] sm:$0xff]
  %v1957 = vld [vmem:[#allocation2 + $0x70] sm:$0xff]
  %v1958 = vld [vmem:[#allocation2 + $0x78] sm:$0xff]
  %v1959 = vld [vmem:[#allocation2 + $0x80] sm:$0xff]
  %v1960 = vld [vmem:[#allocation2 + $0x88] sm:$0xff]
  %v1961 = vld [vmem:[#allocation2 + $0x90] sm:$0xff]
  %v1962 = vld [vmem:[#allocation2 + $0x98] sm:$0xff]
  %v1963 = vld [vmem:[#allocation2 + $0xa0] sm:$0xff]
  %v1964 = vld [vmem:[#allocation2 + $0xa8] sm:$0xff]
  %v1965 = vld [vmem:[#allocation2 + $0xb0] sm:$0xff]
  %v1966 = vld [vmem:[#allocation2 + $0xb8] sm:$0xff]
  %v1967 = vld [vmem:[#allocation2 + $0xc0] sm:$0xff]
  %v1968 = vld [vmem:[#allocation2 + $0xc8] sm:$0xff]
  %v1969 = vld [vmem:[#allocation2 + $0xd0] sm:$0xff]
  %v1970 = vld [vmem:[#allocation2 + $0xd8] sm:$0xff]
  %v1971 = vld [vmem:[#allocation2 + $0xe0] sm:$0xff]
  %v1972 = vld [vmem:[#allocation2 + $0xe8] sm:$0xff]
  %v1973 = vld [vmem:[#allocation2 + $0xf0] sm:$0xff]
  %v1974 = vld [vmem:[#allocation2 + $0xf8] sm:$0xff]
  %v1975 = vpack.c.bf16 %v1819, %v1815
  %v1976 = vpack.c.bf16 %v1820, %v1816
  %v1977 = vpack.c.bf16 %v1821, %v1817
  %v1978 = vpack.c.bf16 %v1822, %v1818
  %v1979 = vpack.c.bf16 %v1827, %v1823
  %v1980 = vpack.c.bf16 %v1828, %v1824
  %v1981 = vpack.c.bf16 %v1829, %v1825
  %v1982 = vpack.c.bf16 %v1830, %v1826
  %v1983 = vpack.c.bf16 %v1835, %v1831
  %v1984 = vpack.c.bf16 %v1836, %v1832
  %v1985 = vpack.c.bf16 %v1837, %v1833
  %v1986 = vpack.c.bf16 %v1838, %v1834
  %v1987 = vpack.c.bf16 %v1843, %v1839
  %v1988 = vpack.c.bf16 %v1844, %v1840
  %v1989 = vpack.c.bf16 %v1845, %v1841
  %v1990 = vpack.c.bf16 %v1846, %v1842
  %v1991 = vpack.c.bf16 %v1851, %v1847
  %v1992 = vpack.c.bf16 %v1852, %v1848
  %v1993 = vpack.c.bf16 %v1853, %v1849
  %v1994 = vpack.c.bf16 %v1854, %v1850
  %v1995 = vpack.c.bf16 %v1859, %v1855
  %v1996 = vpack.c.bf16 %v1860, %v1856
  %v1997 = vpack.c.bf16 %v1861, %v1857
  %v1998 = vpack.c.bf16 %v1862, %v1858
  %v1999 = vpack.c.bf16 %v1867, %v1863
  %v2000 = vpack.c.bf16 %v1868, %v1864
  %v2001 = vpack.c.bf16 %v1869, %v1865
  %v2002 = vpack.c.bf16 %v1870, %v1866
  %v2003 = vpack.c.bf16 %v1875, %v1871
  %v2004 = vpack.c.bf16 %v1876, %v1872
  %v2005 = vpack.c.bf16 %v1877, %v1873
  %v2006 = vpack.c.bf16 %v1878, %v1874
  %v2007 = vpack.c.bf16 %v1883, %v1879
  %v2008 = vpack.c.bf16 %v1884, %v1880
  %v2009 = vpack.c.bf16 %v1885, %v1881
  %v2010 = vpack.c.bf16 %v1886, %v1882
  %v2011 = vpack.c.bf16 %v1891, %v1887
  %v2012 = vpack.c.bf16 %v1892, %v1888
  %v2013 = vpack.c.bf16 %v1893, %v1889
  %v2014 = vpack.c.bf16 %v1894, %v1890
  %v2015 = vpack.c.bf16 %v1899, %v1895
  %v2016 = vpack.c.bf16 %v1900, %v1896
  %v2017 = vpack.c.bf16 %v1901, %v1897
  %v2018 = vpack.c.bf16 %v1902, %v1898
  %v2019 = vpack.c.bf16 %v1907, %v1903
  %v2020 = vpack.c.bf16 %v1908, %v1904
  %v2021 = vpack.c.bf16 %v1909, %v1905
  %v2022 = vpack.c.bf16 %v1910, %v1906
  %v2023 = vpack.c.bf16 %v1915, %v1911
  %v2024 = vpack.c.bf16 %v1916, %v1912
  %v2025 = vpack.c.bf16 %v1917, %v1913
  %v2026 = vpack.c.bf16 %v1918, %v1914
  %v2027 = vpack.c.bf16 %v1923, %v1919
  %v2028 = vpack.c.bf16 %v1924, %v1920
  %v2029 = vpack.c.bf16 %v1925, %v1921
  %v2030 = vpack.c.bf16 %v1926, %v1922
  %v2031 = vpack.c.bf16 %v1931, %v1927
  %v2032 = vpack.c.bf16 %v1932, %v1928
  %v2033 = vpack.c.bf16 %v1933, %v1929
  %v2034 = vpack.c.bf16 %v1934, %v1930
  %v2035 = vpack.c.bf16 %v1939, %v1935
  %v2036 = vpack.c.bf16 %v1940, %v1936
  %v2037 = vpack.c.bf16 %v1941, %v1937
  %v2038 = vpack.c.bf16 %v1942, %v1938
  %v2039 = vld [vmem:[%s3] sm:$0xf]
  %v2040 = vld [vmem:[%s3 + $0x4] sm:$0xf]
  %v2041 = vld [vmem:[%s3 + $0x8] sm:$0xf]
  %v2042 = vld [vmem:[%s3 + $0xc] sm:$0xf]
  %v2043 = vld [vmem:[%s3 + $0x10] sm:$0xf]
  %v2044 = vld [vmem:[%s3 + $0x14] sm:$0xf]
  %v2045 = vld [vmem:[%s3 + $0x18] sm:$0xf]
  %v2046 = vld [vmem:[%s3 + $0x1c] sm:$0xf]
  %v2047 = vld [vmem:[%s3 + $0x20] sm:$0xf]
  %v2048 = vld [vmem:[%s3 + $0x24] sm:$0xf]
  %v2049 = vld [vmem:[%s3 + $0x28] sm:$0xf]
  %v2050 = vld [vmem:[%s3 + $0x2c] sm:$0xf]
  %v2051 = vld [vmem:[%s3 + $0x30] sm:$0xf]
  %v2052 = vld [vmem:[%s3 + $0x34] sm:$0xf]
  %v2053 = vld [vmem:[%s3 + $0x38] sm:$0xf]
  %v2054 = vld [vmem:[%s3 + $0x3c] sm:$0xf]
  %v2055 = vld [vmem:[%s3 + $0x40] sm:$0xf]
  %v2056 = vld [vmem:[%s3 + $0x44] sm:$0xf]
  %v2057 = vld [vmem:[%s3 + $0x48] sm:$0xf]
  %v2058 = vld [vmem:[%s3 + $0x4c] sm:$0xf]
  %v2059 = vld [vmem:[%s3 + $0x50] sm:$0xf]
  %v2060 = vld [vmem:[%s3 + $0x54] sm:$0xf]
  %v2061 = vld [vmem:[%s3 + $0x58] sm:$0xf]
  %v2062 = vld [vmem:[%s3 + $0x5c] sm:$0xf]
  %v2063 = vld [vmem:[%s3 + $0x60] sm:$0xf]
  %v2064 = vld [vmem:[%s3 + $0x64] sm:$0xf]
  %v2065 = vld [vmem:[%s3 + $0x68] sm:$0xf]
  %v2066 = vld [vmem:[%s3 + $0x6c] sm:$0xf]
  %v2067 = vld [vmem:[%s3 + $0x70] sm:$0xf]
  %v2068 = vld [vmem:[%s3 + $0x74] sm:$0xf]
  %v2069 = vld [vmem:[%s3 + $0x78] sm:$0xf]
  %v2070 = vld [vmem:[%s3 + $0x7c] sm:$0xf]
  %v2071 = vld [vmem:[%s3 + $0x80] sm:$0xf]
  %v2072 = vld [vmem:[%s3 + $0x84] sm:$0xf]
  %v2073 = vld [vmem:[%s3 + $0x88] sm:$0xf]
  %v2074 = vld [vmem:[%s3 + $0x8c] sm:$0xf]
  %v2075 = vld [vmem:[%s3 + $0x90] sm:$0xf]
  %v2076 = vld [vmem:[%s3 + $0x94] sm:$0xf]
  %v2077 = vld [vmem:[%s3 + $0x98] sm:$0xf]
  %v2078 = vld [vmem:[%s3 + $0x9c] sm:$0xf]
  %v2079 = vld [vmem:[%s3 + $0xa0] sm:$0xf]
  %v2080 = vld [vmem:[%s3 + $0xa4] sm:$0xf]
  %v2081 = vld [vmem:[%s3 + $0xa8] sm:$0xf]
  %v2082 = vld [vmem:[%s3 + $0xac] sm:$0xf]
  %v2083 = vld [vmem:[%s3 + $0xb0] sm:$0xf]
  %v2084 = vld [vmem:[%s3 + $0xb4] sm:$0xf]
  %v2085 = vld [vmem:[%s3 + $0xb8] sm:$0xf]
  %v2086 = vld [vmem:[%s3 + $0xbc] sm:$0xf]
  %v2087 = vld [vmem:[%s3 + $0xc0] sm:$0xf]
  %v2088 = vld [vmem:[%s3 + $0xc4] sm:$0xf]
  %v2089 = vld [vmem:[%s3 + $0xc8] sm:$0xf]
  %v2090 = vld [vmem:[%s3 + $0xcc] sm:$0xf]
  %v2091 = vld [vmem:[%s3 + $0xd0] sm:$0xf]
  %v2092 = vld [vmem:[%s3 + $0xd4] sm:$0xf]
  %v2093 = vld [vmem:[%s3 + $0xd8] sm:$0xf]
  %v2094 = vld [vmem:[%s3 + $0xdc] sm:$0xf]
  %v2095 = vld [vmem:[%s3 + $0xe0] sm:$0xf]
  %v2096 = vld [vmem:[%s3 + $0xe4] sm:$0xf]
  %v2097 = vld [vmem:[%s3 + $0xe8] sm:$0xf]
  %v2098 = vld [vmem:[%s3 + $0xec] sm:$0xf]
  %v2099 = vld [vmem:[%s3 + $0xf0] sm:$0xf]
  %v2100 = vld [vmem:[%s3 + $0xf4] sm:$0xf]
  %v2101 = vld [vmem:[%s3 + $0xf8] sm:$0xf]
  %v2102 = vld [vmem:[%s3 + $0xfc] sm:$0xf]
  %v2167 = vunpack.c.l.b16 %v2039
  %v2168 = vunpack.c.l.b16 %v2040
  %v2169 = vunpack.c.l.b16 %v2041
  %v2170 = vunpack.c.l.b16 %v2042
  %v2171 = vunpack.c.l.b16 %v2043
  %v2172 = vunpack.c.l.b16 %v2044
  %v2173 = vunpack.c.l.b16 %v2045
  %v2174 = vunpack.c.l.b16 %v2046
  %v2175 = vunpack.c.l.b16 %v2047
  %v2176 = vunpack.c.l.b16 %v2048
  %v2177 = vunpack.c.l.b16 %v2049
  %v2178 = vunpack.c.l.b16 %v2050
  %v2179 = vunpack.c.l.b16 %v2051
  %v2180 = vunpack.c.l.b16 %v2052
  %v2181 = vunpack.c.l.b16 %v2053
  %v2182 = vunpack.c.l.b16 %v2054
  %v2183 = vunpack.c.l.b16 %v2055
  %v2184 = vunpack.c.l.b16 %v2056
  %v2185 = vunpack.c.l.b16 %v2057
  %v2186 = vunpack.c.l.b16 %v2058
  %v2187 = vunpack.c.l.b16 %v2059
  %v2188 = vunpack.c.l.b16 %v2060
  %v2189 = vunpack.c.l.b16 %v2061
  %v2190 = vunpack.c.l.b16 %v2062
  %v2191 = vunpack.c.l.b16 %v2063
  %v2192 = vunpack.c.l.b16 %v2064
  %v2193 = vunpack.c.l.b16 %v2065
  %v2194 = vunpack.c.l.b16 %v2066
  %v2195 = vunpack.c.l.b16 %v2067
  %v2196 = vunpack.c.l.b16 %v2068
  %v2197 = vunpack.c.l.b16 %v2069
  %v2198 = vunpack.c.l.b16 %v2070
  %v2199 = vunpack.c.l.b16 %v2071
  %v2200 = vunpack.c.l.b16 %v2072
  %v2201 = vunpack.c.l.b16 %v2073
  %v2202 = vunpack.c.l.b16 %v2074
  %v2203 = vunpack.c.l.b16 %v2075
  %v2204 = vunpack.c.l.b16 %v2076
  %v2205 = vunpack.c.l.b16 %v2077
  %v2206 = vunpack.c.l.b16 %v2078
  %v2207 = vunpack.c.l.b16 %v2079
  %v2208 = vunpack.c.l.b16 %v2080
  %v2209 = vunpack.c.l.b16 %v2081
  %v2210 = vunpack.c.l.b16 %v2082
  %v2211 = vunpack.c.l.b16 %v2083
  %v2212 = vunpack.c.l.b16 %v2084
  %v2213 = vunpack.c.l.b16 %v2085
  %v2214 = vunpack.c.l.b16 %v2086
  %v2215 = vunpack.c.l.b16 %v2087
  %v2216 = vunpack.c.l.b16 %v2088
  %v2217 = vunpack.c.l.b16 %v2089
  %v2218 = vunpack.c.l.b16 %v2090
  %v2219 = vunpack.c.l.b16 %v2091
  %v2220 = vunpack.c.l.b16 %v2092
  %v2221 = vunpack.c.l.b16 %v2093
  %v2222 = vunpack.c.l.b16 %v2094
  %v2223 = vunpack.c.l.b16 %v2095
  %v2224 = vunpack.c.l.b16 %v2096
  %v2225 = vunpack.c.l.b16 %v2097
  %v2226 = vunpack.c.l.b16 %v2098
  %v2227 = vunpack.c.l.b16 %v2099
  %v2228 = vunpack.c.l.b16 %v2100
  %v2229 = vunpack.c.l.b16 %v2101
  %v2230 = vunpack.c.l.b16 %v2102
  %v2231 = vpack.c.b16 %v2168, %v2167
  %v2232 = vpack.c.b16 %v2170, %v2169
  %v2233 = vpack.c.b16 %v2172, %v2171
  %v2234 = vpack.c.b16 %v2174, %v2173
  %v2235 = vpack.c.b16 %v2176, %v2175
  %v2236 = vpack.c.b16 %v2178, %v2177
  %v2237 = vpack.c.b16 %v2180, %v2179
  %v2238 = vpack.c.b16 %v2182, %v2181
  %v2239 = vpack.c.b16 %v2184, %v2183
  %v2240 = vpack.c.b16 %v2186, %v2185
  %v2241 = vpack.c.b16 %v2188, %v2187
  %v2242 = vpack.c.b16 %v2190, %v2189
  %v2243 = vpack.c.b16 %v2192, %v2191
  %v2244 = vpack.c.b16 %v2194, %v2193
  %v2245 = vpack.c.b16 %v2196, %v2195
  %v2246 = vpack.c.b16 %v2198, %v2197
  %v2247 = vpack.c.b16 %v2200, %v2199
  %v2248 = vpack.c.b16 %v2202, %v2201
  %v2249 = vpack.c.b16 %v2204, %v2203
  %v2250 = vpack.c.b16 %v2206, %v2205
  %v2251 = vpack.c.b16 %v2208, %v2207
  %v2252 = vpack.c.b16 %v2210, %v2209
  %v2253 = vpack.c.b16 %v2212, %v2211
  %v2254 = vpack.c.b16 %v2214, %v2213
  %v2255 = vpack.c.b16 %v2216, %v2215
  %v2256 = vpack.c.b16 %v2218, %v2217
  %v2257 = vpack.c.b16 %v2220, %v2219
  %v2258 = vpack.c.b16 %v2222, %v2221
  %v2259 = vpack.c.b16 %v2224, %v2223
  %v2260 = vpack.c.b16 %v2226, %v2225
  %v2261 = vpack.c.b16 %v2228, %v2227
  %v2262 = vpack.c.b16 %v2230, %v2229
  %2295 = vmatprep.subr.bf16.mxu0 0
  %2296 = vmatpush1.bf16.msra.mxu0 %v2231
  %2297 = vmatprep.subr.bf16.mxu0 0
  %2298 = vmatpush1.bf16.msra.mxu0 %v2232
  %2299 = vmatprep.subr.bf16.mxu0 0
  %2300 = vmatpush1.bf16.msra.mxu0 %v2233
  %2301 = vmatprep.subr.bf16.mxu0 0
  %2302 = vmatpush1.bf16.msra.mxu0 %v2234
  %2303 = vmatprep.subr.bf16.mxu0 0
  %2304 = vmatpush1.bf16.msra.mxu0 %v2235
  %2305 = vmatprep.subr.bf16.mxu0 0
  %2306 = vmatpush1.bf16.msra.mxu0 %v2236
  %2307 = vmatprep.subr.bf16.mxu0 0
  %2308 = vmatpush1.bf16.msra.mxu0 %v2237
  %2309 = vmatprep.subr.bf16.mxu0 0
  %2310 = vmatpush1.bf16.msra.mxu0 %v2238
  %2311 = vmatprep.subr.bf16.mxu0 0
  %2312 = vmatpush1.bf16.msra.mxu0 %v2239
  %2313 = vmatprep.subr.bf16.mxu0 0
  %2314 = vmatpush1.bf16.msra.mxu0 %v2240
  %2315 = vmatprep.subr.bf16.mxu0 0
  %2316 = vmatpush1.bf16.msra.mxu0 %v2241
  %2317 = vmatprep.subr.bf16.mxu0 0
  %2318 = vmatpush1.bf16.msra.mxu0 %v2242
  %2319 = vmatprep.subr.bf16.mxu0 0
  %2320 = vmatpush1.bf16.msra.mxu0 %v2243
  %2321 = vmatprep.subr.bf16.mxu0 0
  %2322 = vmatpush1.bf16.msra.mxu0 %v2244
  %2323 = vmatprep.subr.bf16.mxu0 0
  %2324 = vmatpush1.bf16.msra.mxu0 %v2245
  %2325 = vmatprep.subr.bf16.mxu0 0
  %2326 = vmatpush1.bf16.msra.mxu0 %v2246
  %2327 = vmatprep.mubr.bf16.mxu0 %v1976
  %2328 = vmatmul.mubr.bf16.gmra.mrb[0].mxu0 %v1975
  %v2329 = vpop.f32.mrb[0].mxu0
  %v2330 = vadd.f32 0.0, %v2329
  %v2331 = vpop.f32.mrb[0].mxu0
  %v2332 = vpop.f32.mrb[0].mxu0
  %v2333 = vadd.f32 0.0, %v2332
  %v2334 = vpop.f32.mrb[0].mxu0
  %2335 = vmatprep.mubr.bf16.mxu0 %v1980
  %2336 = vmatmul.mubr.bf16.gmra.mrb[0].mxu0 %v1979
  %v2337 = vpop.f32.mrb[0].mxu0
  %v2338 = vadd.f32 0.0, %v2337
  %v2339 = vpop.f32.mrb[0].mxu0
  %v2340 = vpop.f32.mrb[0].mxu0
  %v2341 = vadd.f32 0.0, %v2340
  %v2342 = vpop.f32.mrb[0].mxu0
  %2343 = vmatprep.mubr.bf16.mxu0 %v1984
  %2344 = vmatmul.mubr.bf16.gmra.mrb[0].mxu0 %v1983
  %v2345 = vpop.f32.mrb[0].mxu0
  %v2346 = vadd.f32 0.0, %v2345
  %v2347 = vpop.f32.mrb[0].mxu0
  %v2348 = vpop.f32.mrb[0].mxu0
  %v2349 = vadd.f32 0.0, %v2348
  %v2350 = vpop.f32.mrb[0].mxu0
  %2351 = vmatprep.mubr.bf16.mxu0 %v1988
  %2352 = vmatmul.mubr.bf16.gmra.mrb[0].mxu0 %v1987
  %v2353 = vpop.f32.mrb[0].mxu0
  %v2354 = vadd.f32 0.0, %v2353
  %v2355 = vpop.f32.mrb[0].mxu0
  %v2356 = vpop.f32.mrb[0].mxu0
  %v2357 = vadd.f32 0.0, %v2356
  %v2358 = vpop.f32.mrb[0].mxu0
  %2359 = vmatprep.mubr.bf16.mxu0 %v1992
  %2360 = vmatmul.mubr.bf16.gmra.mrb[0].mxu0 %v1991
  %v2361 = vpop.f32.mrb[0].mxu0
  %v2362 = vadd.f32 0.0, %v2361
  %v2363 = vpop.f32.mrb[0].mxu0
  %v2364 = vpop.f32.mrb[0].mxu0
  %v2365 = vadd.f32 0.0, %v2364
  %v2366 = vpop.f32.mrb[0].mxu0
  %2367 = vmatprep.mubr.bf16.mxu0 %v1996
  %2368 = vmatmul.mubr.bf16.gmra.mrb[0].mxu0 %v1995
  %v2369 = vpop.f32.mrb[0].mxu0
  %v2370 = vadd.f32 0.0, %v2369
  %v2371 = vpop.f32.mrb[0].mxu0
  %v2372 = vpop.f32.mrb[0].mxu0
  %v2373 = vadd.f32 0.0, %v2372
  %v2374 = vpop.f32.mrb[0].mxu0
  %2375 = vmatprep.mubr.bf16.mxu0 %v2000
  %2376 = vmatmul.mubr.bf16.gmra.mrb[0].mxu0 %v1999
  %v2377 = vpop.f32.mrb[0].mxu0
  %v2378 = vadd.f32 0.0, %v2377
  %v2379 = vpop.f32.mrb[0].mxu0
  %v2380 = vpop.f32.mrb[0].mxu0
  %v2381 = vadd.f32 0.0, %v2380
  %v2382 = vpop.f32.mrb[0].mxu0
  %2383 = vmatprep.mubr.bf16.mxu0 %v2004
  %2384 = vmatmul.mubr.bf16.gmra.mrb[0].mxu0 %v2003
  %v2385 = vpop.f32.mrb[0].mxu0
  %v2386 = vadd.f32 0.0, %v2385
  %v2387 = vpop.f32.mrb[0].mxu0
  %v2388 = vpop.f32.mrb[0].mxu0
  %v2389 = vadd.f32 0.0, %v2388
  %v2390 = vpop.f32.mrb[0].mxu0
  %2391 = vmatprep.mubr.bf16.mxu0 %v2008
  %2392 = vmatmul.mubr.bf16.gmra.mrb[0].mxu0 %v2007
  %v2393 = vpop.f32.mrb[0].mxu0
  %v2394 = vadd.f32 0.0, %v2393
  %v2395 = vpop.f32.mrb[0].mxu0
  %v2396 = vpop.f32.mrb[0].mxu0
  %v2397 = vadd.f32 0.0, %v2396
  %v2398 = vpop.f32.mrb[0].mxu0
  %2399 = vmatprep.mubr.bf16.mxu0 %v2012
  %2400 = vmatmul.mubr.bf16.gmra.mrb[0].mxu0 %v2011
  %v2401 = vpop.f32.mrb[0].mxu0
  %v2402 = vadd.f32 0.0, %v2401
  %v2403 = vpop.f32.mrb[0].mxu0
  %v2404 = vpop.f32.mrb[0].mxu0
  %v2405 = vadd.f32 0.0, %v2404
  %v2406 = vpop.f32.mrb[0].mxu0
  %2407 = vmatprep.mubr.bf16.mxu0 %v2016
  %2408 = vmatmul.mubr.bf16.gmra.mrb[0].mxu0 %v2015
  %v2409 = vpop.f32.mrb[0].mxu0
  %v2410 = vadd.f32 0.0, %v2409
  %v2411 = vpop.f32.mrb[0].mxu0
  %v2412 = vpop.f32.mrb[0].mxu0
  %v2413 = vadd.f32 0.0, %v2412
  %v2414 = vpop.f32.mrb[0].mxu0
  %2415 = vmatprep.mubr.bf16.mxu0 %v2020
  %2416 = vmatmul.mubr.bf16.gmra.mrb[0].mxu0 %v2019
  %v2417 = vpop.f32.mrb[0].mxu0
  %v2418 = vadd.f32 0.0, %v2417
  %v2419 = vpop.f32.mrb[0].mxu0
  %v2420 = vpop.f32.mrb[0].mxu0
  %v2421 = vadd.f32 0.0, %v2420
  %v2422 = vpop.f32.mrb[0].mxu0
  %2423 = vmatprep.mubr.bf16.mxu0 %v2024
  %2424 = vmatmul.mubr.bf16.gmra.mrb[0].mxu0 %v2023
  %v2425 = vpop.f32.mrb[0].mxu0
  %v2426 = vadd.f32 0.0, %v2425
  %v2427 = vpop.f32.mrb[0].mxu0
  %v2428 = vpop.f32.mrb[0].mxu0
  %v2429 = vadd.f32 0.0, %v2428
  %v2430 = vpop.f32.mrb[0].mxu0
  %2431 = vmatprep.mubr.bf16.mxu0 %v2028
  %2432 = vmatmul.mubr.bf16.gmra.mrb[0].mxu0 %v2027
  %v2433 = vpop.f32.mrb[0].mxu0
  %v2434 = vadd.f32 0.0, %v2433
  %v2435 = vpop.f32.mrb[0].mxu0
  %v2436 = vpop.f32.mrb[0].mxu0
  %v2437 = vadd.f32 0.0, %v2436
  %v2438 = vpop.f32.mrb[0].mxu0
  %2439 = vmatprep.mubr.bf16.mxu0 %v2032
  %2440 = vmatmul.mubr.bf16.gmra.mrb[0].mxu0 %v2031
  %v2441 = vpop.f32.mrb[0].mxu0
  %v2442 = vadd.f32 0.0, %v2441
  %v2443 = vpop.f32.mrb[0].mxu0
  %v2444 = vpop.f32.mrb[0].mxu0
  %v2445 = vadd.f32 0.0, %v2444
  %v2446 = vpop.f32.mrb[0].mxu0
  %2447 = vmatprep.mubr.bf16.mxu0 %v2036
  %2448 = vmatmul.mubr.bf16.gmra.mrb[0].mxu0 %v2035
  %v2449 = vpop.f32.mrb[0].mxu0
  %v2450 = vadd.f32 0.0, %v2449
  %v2451 = vpop.f32.mrb[0].mxu0
  %v2452 = vpop.f32.mrb[0].mxu0
  %v2453 = vadd.f32 0.0, %v2452
  %v2454 = vpop.f32.mrb[0].mxu0
  %2455 = vdwg.mxu0
  %2456 = vmatprep.subr.bf16.mxu0 0
  %2457 = vmatpush1.bf16.msra.mxu0 %v2247
  %2458 = vmatprep.subr.bf16.mxu0 0
  %2459 = vmatpush1.bf16.msra.mxu0 %v2248
  %2460 = vmatprep.subr.bf16.mxu0 0
  %2461 = vmatpush1.bf16.msra.mxu0 %v2249
  %2462 = vmatprep.subr.bf16.mxu0 0
  %2463 = vmatpush1.bf16.msra.mxu0 %v2250
  %2464 = vmatprep.subr.bf16.mxu0 0
  %2465 = vmatpush1.bf16.msra.mxu0 %v2251
  %2466 = vmatprep.subr.bf16.mxu0 0
  %2467 = vmatpush1.bf16.msra.mxu0 %v2252
  %2468 = vmatprep.subr.bf16.mxu0 0
  %2469 = vmatpush1.bf16.msra.mxu0 %v2253
  %2470 = vmatprep.subr.bf16.mxu0 0
  %2471 = vmatpush1.bf16.msra.mxu0 %v2254
  %2472 = vmatprep.subr.bf16.mxu0 0
  %2473 = vmatpush1.bf16.msra.mxu0 %v2255
  %2474 = vmatprep.subr.bf16.mxu0 0
  %2475 = vmatpush1.bf16.msra.mxu0 %v2256
  %2476 = vmatprep.subr.bf16.mxu0 0
  %2477 = vmatpush1.bf16.msra.mxu0 %v2257
  %2478 = vmatprep.subr.bf16.mxu0 0
  %2479 = vmatpush1.bf16.msra.mxu0 %v2258
  %2480 = vmatprep.subr.bf16.mxu0 0
  %2481 = vmatpush1.bf16.msra.mxu0 %v2259
  %2482 = vmatprep.subr.bf16.mxu0 0
  %2483 = vmatpush1.bf16.msra.mxu0 %v2260
  %2484 = vmatprep.subr.bf16.mxu0 0
  %2485 = vmatpush1.bf16.msra.mxu0 %v2261
  %2486 = vmatprep.subr.bf16.mxu0 0
  %2487 = vmatpush1.bf16.msra.mxu0 %v2262
  %2488 = vmatprep.mubr.bf16.mxu0 %v1978
  %2489 = vmatmul.mubr.bf16.gmra.mrb[0].mxu0 %v1977
  %v2490 = vpop.f32.mrb[0].mxu0
  %v2491 = vadd.f32 %v2330, %v2490
  %v2492 = vpop.f32.mrb[0].mxu0
  %v2493 = vpop.f32.mrb[0].mxu0
  %v2494 = vadd.f32 %v2333, %v2493
  %v2495 = vpop.f32.mrb[0].mxu0
  %2496 = vmatprep.mubr.bf16.mxu0 %v1982
  %2497 = vmatmul.mubr.bf16.gmra.mrb[0].mxu0 %v1981
  %v2498 = vpop.f32.mrb[0].mxu0
  %v2499 = vadd.f32 %v2338, %v2498
  %v2500 = vpop.f32.mrb[0].mxu0
  %v2501 = vpop.f32.mrb[0].mxu0
  %v2502 = vadd.f32 %v2341, %v2501
  %v2503 = vpop.f32.mrb[0].mxu0
  %2504 = vmatprep.mubr.bf16.mxu0 %v1986
  %2505 = vmatmul.mubr.bf16.gmra.mrb[0].mxu0 %v1985
  %v2506 = vpop.f32.mrb[0].mxu0
  %v2507 = vadd.f32 %v2346, %v2506
  %v2508 = vpop.f32.mrb[0].mxu0
  %v2509 = vpop.f32.mrb[0].mxu0
  %v2510 = vadd.f32 %v2349, %v2509
  %v2511 = vpop.f32.mrb[0].mxu0
  %2512 = vmatprep.mubr.bf16.mxu0 %v1990
  %2513 = vmatmul.mubr.bf16.gmra.mrb[0].mxu0 %v1989
  %v2514 = vpop.f32.mrb[0].mxu0
  %v2515 = vadd.f32 %v2354, %v2514
  %v2516 = vpop.f32.mrb[0].mxu0
  %v2517 = vpop.f32.mrb[0].mxu0
  %v2518 = vadd.f32 %v2357, %v2517
  %v2519 = vpop.f32.mrb[0].mxu0
  %2520 = vmatprep.mubr.bf16.mxu0 %v1994
  %2521 = vmatmul.mubr.bf16.gmra.mrb[0].mxu0 %v1993
  %v2522 = vpop.f32.mrb[0].mxu0
  %v2523 = vadd.f32 %v2362, %v2522
  %v2524 = vpop.f32.mrb[0].mxu0
  %v2525 = vpop.f32.mrb[0].mxu0
  %v2526 = vadd.f32 %v2365, %v2525
  %v2527 = vpop.f32.mrb[0].mxu0
  %2528 = vmatprep.mubr.bf16.mxu0 %v1998
  %2529 = vmatmul.mubr.bf16.gmra.mrb[0].mxu0 %v1997
  %v2530 = vpop.f32.mrb[0].mxu0
  %v2531 = vadd.f32 %v2370, %v2530
  %v2532 = vpop.f32.mrb[0].mxu0
  %v2533 = vpop.f32.mrb[0].mxu0
  %v2534 = vadd.f32 %v2373, %v2533
  %v2535 = vpop.f32.mrb[0].mxu0
  %2536 = vmatprep.mubr.bf16.mxu0 %v2002
  %2537 = vmatmul.mubr.bf16.gmra.mrb[0].mxu0 %v2001
  %v2538 = vpop.f32.mrb[0].mxu0
  %v2539 = vadd.f32 %v2378, %v2538
  %v2540 = vpop.f32.mrb[0].mxu0
  %v2541 = vpop.f32.mrb[0].mxu0
  %v2542 = vadd.f32 %v2381, %v2541
  %v2543 = vpop.f32.mrb[0].mxu0
  %2544 = vmatprep.mubr.bf16.mxu0 %v2006
  %2545 = vmatmul.mubr.bf16.gmra.mrb[0].mxu0 %v2005
  %v2546 = vpop.f32.mrb[0].mxu0
  %v2547 = vadd.f32 %v2386, %v2546
  %v2548 = vpop.f32.mrb[0].mxu0
  %v2549 = vpop.f32.mrb[0].mxu0
  %v2550 = vadd.f32 %v2389, %v2549
  %v2551 = vpop.f32.mrb[0].mxu0
  %2552 = vmatprep.mubr.bf16.mxu0 %v2010
  %2553 = vmatmul.mubr.bf16.gmra.mrb[0].mxu0 %v2009
  %v2554 = vpop.f32.mrb[0].mxu0
  %v2555 = vadd.f32 %v2394, %v2554
  %v2556 = vpop.f32.mrb[0].mxu0
  %v2557 = vpop.f32.mrb[0].mxu0
  %v2558 = vadd.f32 %v2397, %v2557
  %v2559 = vpop.f32.mrb[0].mxu0
  %2560 = vmatprep.mubr.bf16.mxu0 %v2014
  %2561 = vmatmul.mubr.bf16.gmra.mrb[0].mxu0 %v2013
  %v2562 = vpop.f32.mrb[0].mxu0
  %v2563 = vadd.f32 %v2402, %v2562
  %v2564 = vpop.f32.mrb[0].mxu0
  %v2565 = vpop.f32.mrb[0].mxu0
  %v2566 = vadd.f32 %v2405, %v2565
  %v2567 = vpop.f32.mrb[0].mxu0
  %2568 = vmatprep.mubr.bf16.mxu0 %v2018
  %2569 = vmatmul.mubr.bf16.gmra.mrb[0].mxu0 %v2017
  %v2570 = vpop.f32.mrb[0].mxu0
  %v2571 = vadd.f32 %v2410, %v2570
  %v2572 = vpop.f32.mrb[0].mxu0
  %v2573 = vpop.f32.mrb[0].mxu0
  %v2574 = vadd.f32 %v2413, %v2573
  %v2575 = vpop.f32.mrb[0].mxu0
  %2576 = vmatprep.mubr.bf16.mxu0 %v2022
  %2577 = vmatmul.mubr.bf16.gmra.mrb[0].mxu0 %v2021
  %v2578 = vpop.f32.mrb[0].mxu0
  %v2579 = vadd.f32 %v2418, %v2578
  %v2580 = vpop.f32.mrb[0].mxu0
  %v2581 = vpop.f32.mrb[0].mxu0
  %v2582 = vadd.f32 %v2421, %v2581
  %v2583 = vpop.f32.mrb[0].mxu0
  %2584 = vmatprep.mubr.bf16.mxu0 %v2026
  %2585 = vmatmul.mubr.bf16.gmra.mrb[0].mxu0 %v2025
  %v2586 = vpop.f32.mrb[0].mxu0
  %v2587 = vadd.f32 %v2426, %v2586
  %v2588 = vpop.f32.mrb[0].mxu0
  %v2589 = vpop.f32.mrb[0].mxu0
  %v2590 = vadd.f32 %v2429, %v2589
  %v2591 = vpop.f32.mrb[0].mxu0
  %2592 = vmatprep.mubr.bf16.mxu0 %v2030
  %2593 = vmatmul.mubr.bf16.gmra.mrb[0].mxu0 %v2029
  %v2594 = vpop.f32.mrb[0].mxu0
  %v2595 = vadd.f32 %v2434, %v2594
  %v2596 = vpop.f32.mrb[0].mxu0
  %v2597 = vpop.f32.mrb[0].mxu0
  %v2598 = vadd.f32 %v2437, %v2597
  %v2599 = vpop.f32.mrb[0].mxu0
  %2600 = vmatprep.mubr.bf16.mxu0 %v2034
  %2601 = vmatmul.mubr.bf16.gmra.mrb[0].mxu0 %v2033
  %v2602 = vpop.f32.mrb[0].mxu0
  %v2603 = vadd.f32 %v2442, %v2602
  %v2604 = vpop.f32.mrb[0].mxu0
  %v2605 = vpop.f32.mrb[0].mxu0
  %v2606 = vadd.f32 %v2445, %v2605
  %v2607 = vpop.f32.mrb[0].mxu0
  %2608 = vmatprep.mubr.bf16.mxu0 %v2038
  %2609 = vmatmul.mubr.bf16.gmra.mrb[0].mxu0 %v2037
  %v2610 = vpop.f32.mrb[0].mxu0
  %v2611 = vadd.f32 %v2450, %v2610
  %v2612 = vpop.f32.mrb[0].mxu0
  %v2613 = vpop.f32.mrb[0].mxu0
  %v2614 = vadd.f32 %v2453, %v2613
  %v2615 = vpop.f32.mrb[0].mxu0
  %2616 = vdwg.mxu0
  %v2617 = vadd.f32 %v1943, %v2491
  %v2618 = vadd.f32 %v1944, %v2494
  %v2619 = vadd.f32 %v1945, %v2499
  %v2620 = vadd.f32 %v1946, %v2502
  %v2621 = vadd.f32 %v1947, %v2507
  %v2622 = vadd.f32 %v1948, %v2510
  %v2623 = vadd.f32 %v1949, %v2515
  %v2624 = vadd.f32 %v1950, %v2518
  %v2625 = vadd.f32 %v1951, %v2523
  %v2626 = vadd.f32 %v1952, %v2526
  %v2627 = vadd.f32 %v1953, %v2531
  %v2628 = vadd.f32 %v1954, %v2534
  %v2629 = vadd.f32 %v1955, %v2539
  %v2630 = vadd.f32 %v1956, %v2542
  %v2631 = vadd.f32 %v1957, %v2547
  %v2632 = vadd.f32 %v1958, %v2550
  %v2633 = vadd.f32 %v1959, %v2555
  %v2634 = vadd.f32 %v1960, %v2558
  %v2635 = vadd.f32 %v1961, %v2563
  %v2636 = vadd.f32 %v1962, %v2566
  %v2637 = vadd.f32 %v1963, %v2571
  %v2638 = vadd.f32 %v1964, %v2574
  %v2639 = vadd.f32 %v1965, %v2579
  %v2640 = vadd.f32 %v1966, %v2582
  %v2641 = vadd.f32 %v1967, %v2587
  %v2642 = vadd.f32 %v1968, %v2590
  %v2643 = vadd.f32 %v1969, %v2595
  %v2644 = vadd.f32 %v1970, %v2598
  %v2645 = vadd.f32 %v1971, %v2603
  %v2646 = vadd.f32 %v1972, %v2606
  %v2647 = vadd.f32 %v1973, %v2611
  %v2648 = vadd.f32 %v1974, %v2614
  %2649 = vst [vmem:[#allocation2] sm:$0xff] %v2617
  %2650 = vst [vmem:[#allocation2 + $0x8] sm:$0xff] %v2618
  %2651 = vst [vmem:[#allocation2 + $0x10] sm:$0xff] %v2619
  %2652 = vst [vmem:[#allocation2 + $0x18] sm:$0xff] %v2620
  %2653 = vst [vmem:[#allocation2 + $0x20] sm:$0xff] %v2621
  %2654 = vst [vmem:[#allocation2 + $0x28] sm:$0xff] %v2622
  %2655 = vst [vmem:[#allocation2 + $0x30] sm:$0xff] %v2623
  %2656 = vst [vmem:[#allocation2 + $0x38] sm:$0xff] %v2624
  %2657 = vst [vmem:[#allocation2 + $0x40] sm:$0xff] %v2625
  %2658 = vst [vmem:[#allocation2 + $0x48] sm:$0xff] %v2626
  %2659 = vst [vmem:[#allocation2 + $0x50] sm:$0xff] %v2627
  %2660 = vst [vmem:[#allocation2 + $0x58] sm:$0xff] %v2628
  %2661 = vst [vmem:[#allocation2 + $0x60] sm:$0xff] %v2629
  %2662 = vst [vmem:[#allocation2 + $0x68] sm:$0xff] %v2630
  %2663 = vst [vmem:[#allocation2 + $0x70] sm:$0xff] %v2631
  %2664 = vst [vmem:[#allocation2 + $0x78] sm:$0xff] %v2632
  %2665 = vst [vmem:[#allocation2 + $0x80] sm:$0xff] %v2633
  %2666 = vst [vmem:[#allocation2 + $0x88] sm:$0xff] %v2634
  %2667 = vst [vmem:[#allocation2 + $0x90] sm:$0xff] %v2635
  %2668 = vst [vmem:[#allocation2 + $0x98] sm:$0xff] %v2636
  %2669 = vst [vmem:[#allocation2 + $0xa0] sm:$0xff] %v2637
  %2670 = vst [vmem:[#allocation2 + $0xa8] sm:$0xff] %v2638
  %2671 = vst [vmem:[#allocation2 + $0xb0] sm:$0xff] %v2639
  %2672 = vst [vmem:[#allocation2 + $0xb8] sm:$0xff] %v2640
  %2673 = vst [vmem:[#allocation2 + $0xc0] sm:$0xff] %v2641
  %2674 = vst [vmem:[#allocation2 + $0xc8] sm:$0xff] %v2642
  %2675 = vst [vmem:[#allocation2 + $0xd0] sm:$0xff] %v2643
  %2676 = vst [vmem:[#allocation2 + $0xd8] sm:$0xff] %v2644
  %2677 = vst [vmem:[#allocation2 + $0xe0] sm:$0xff] %v2645
  %2678 = vst [vmem:[#allocation2 + $0xe8] sm:$0xff] %v2646
  %2679 = vst [vmem:[#allocation2 + $0xf0] sm:$0xff] %v2647
  %2680 = vst [vmem:[#allocation2 + $0xf8] sm:$0xff] %v2648
  // Predicated region
  $region34: #{bert_encoder_forward.13} parent=0 // pred_check
    %p2681 = pneg %p27
  $region35: #{bert_encoder_forward.13} parent=0 // pred_check_branch
    %2683 = sbr.rel (%p2681) target = $region37
  $region36: #{bert_encoder_forward.13} parent=0 // pred_region
    %v2684 = vld [vmem:[#allocation2] sm:$0xff]
    %v2685 = vld [vmem:[#allocation2 + $0x8] sm:$0xff]
    %v2686 = vld [vmem:[#allocation2 + $0x10] sm:$0xff]
    %v2687 = vld [vmem:[#allocation2 + $0x18] sm:$0xff]
    %v2688 = vld [vmem:[#allocation2 + $0x20] sm:$0xff]
    %v2689 = vld [vmem:[#allocation2 + $0x28] sm:$0xff]
    %v2690 = vld [vmem:[#allocation2 + $0x30] sm:$0xff]
    %v2691 = vld [vmem:[#allocation2 + $0x38] sm:$0xff]
    %v2692 = vld [vmem:[#allocation2 + $0x40] sm:$0xff]
    %v2693 = vld [vmem:[#allocation2 + $0x48] sm:$0xff]
    %v2694 = vld [vmem:[#allocation2 + $0x50] sm:$0xff]
    %v2695 = vld [vmem:[#allocation2 + $0x58] sm:$0xff]
    %v2696 = vld [vmem:[#allocation2 + $0x60] sm:$0xff]
    %v2697 = vld [vmem:[#allocation2 + $0x68] sm:$0xff]
    %v2698 = vld [vmem:[#allocation2 + $0x70] sm:$0xff]
    %v2699 = vld [vmem:[#allocation2 + $0x78] sm:$0xff]
    %v2700 = vld [vmem:[#allocation2 + $0x80] sm:$0xff]
    %v2701 = vld [vmem:[#allocation2 + $0x88] sm:$0xff]
    %v2702 = vld [vmem:[#allocation2 + $0x90] sm:$0xff]
    %v2703 = vld [vmem:[#allocation2 + $0x98] sm:$0xff]
    %v2704 = vld [vmem:[#allocation2 + $0xa0] sm:$0xff]
    %v2705 = vld [vmem:[#allocation2 + $0xa8] sm:$0xff]
    %v2706 = vld [vmem:[#allocation2 + $0xb0] sm:$0xff]
    %v2707 = vld [vmem:[#allocation2 + $0xb8] sm:$0xff]
    %v2708 = vld [vmem:[#allocation2 + $0xc0] sm:$0xff]
    %v2709 = vld [vmem:[#allocation2 + $0xc8] sm:$0xff]
    %v2710 = vld [vmem:[#allocation2 + $0xd0] sm:$0xff]
    %v2711 = vld [vmem:[#allocation2 + $0xd8] sm:$0xff]
    %v2712 = vld [vmem:[#allocation2 + $0xe0] sm:$0xff]
    %v2713 = vld [vmem:[#allocation2 + $0xe8] sm:$0xff]
    %v2714 = vld [vmem:[#allocation2 + $0xf0] sm:$0xff]
    %v2715 = vld [vmem:[#allocation2 + $0xf8] sm:$0xff]
    %v2716 = vld [vmem:[%s4] sm:$0x1]
    %v2718 = vlaneseq
    %v2719 = vshrl.u32 %v2718, 7
    %v2720 = vsub.s32 0, %v2719
    %v2721 = vrot.slane %v2716, %v2720
    %v2723 = vadd.f32 %v2684, %v2721
    %v2724 = vadd.f32 %v2685, %v2721
    %v2725 = vadd.f32 %v2686, %v2721
    %v2726 = vadd.f32 %v2687, %v2721
    %v2727 = vadd.f32 %v2688, %v2721
    %v2728 = vadd.f32 %v2689, %v2721
    %v2729 = vadd.f32 %v2690, %v2721
    %v2730 = vadd.f32 %v2691, %v2721
    %v2731 = vadd.f32 %v2692, %v2721
    %v2732 = vadd.f32 %v2693, %v2721
    %v2733 = vadd.f32 %v2694, %v2721
    %v2734 = vadd.f32 %v2695, %v2721
    %v2735 = vadd.f32 %v2696, %v2721
    %v2736 = vadd.f32 %v2697, %v2721
    %v2737 = vadd.f32 %v2698, %v2721
    %v2738 = vadd.f32 %v2699, %v2721
    %v2739 = vadd.f32 %v2700, %v2721
    %v2740 = vadd.f32 %v2701, %v2721
    %v2741 = vadd.f32 %v2702, %v2721
    %v2742 = vadd.f32 %v2703, %v2721
    %v2743 = vadd.f32 %v2704, %v2721
    %v2744 = vadd.f32 %v2705, %v2721
    %v2745 = vadd.f32 %v2706, %v2721
    %v2746 = vadd.f32 %v2707, %v2721
    %v2747 = vadd.f32 %v2708, %v2721
    %v2748 = vadd.f32 %v2709, %v2721
    %v2749 = vadd.f32 %v2710, %v2721
    %v2750 = vadd.f32 %v2711, %v2721
    %v2751 = vadd.f32 %v2712, %v2721
    %v2752 = vadd.f32 %v2713, %v2721
    %v2753 = vadd.f32 %v2714, %v2721
    %v2754 = vadd.f32 %v2715, %v2721
    %v2755 = vld [vmem:[%s0] sm:$0xf]
    %v2756 = vld [vmem:[%s0 + $0x4] sm:$0xf]
    %v2757 = vld [vmem:[%s0 + $0x8] sm:$0xf]
    %v2758 = vld [vmem:[%s0 + $0xc] sm:$0xf]
    %v2759 = vld [vmem:[%s0 + $0x10] sm:$0xf]
    %v2760 = vld [vmem:[%s0 + $0x14] sm:$0xf]
    %v2761 = vld [vmem:[%s0 + $0x18] sm:$0xf]
    %v2762 = vld [vmem:[%s0 + $0x1c] sm:$0xf]
    %v2763 = vld [vmem:[%s0 + $0x20] sm:$0xf]
    %v2764 = vld [vmem:[%s0 + $0x24] sm:$0xf]
    %v2765 = vld [vmem:[%s0 + $0x28] sm:$0xf]
    %v2766 = vld [vmem:[%s0 + $0x2c] sm:$0xf]
    %v2767 = vld [vmem:[%s0 + $0x30] sm:$0xf]
    %v2768 = vld [vmem:[%s0 + $0x34] sm:$0xf]
    %v2769 = vld [vmem:[%s0 + $0x38] sm:$0xf]
    %v2770 = vld [vmem:[%s0 + $0x3c] sm:$0xf]
    %v2771 = vld [vmem:[%s0 + $0x40] sm:$0xf]
    %v2772 = vld [vmem:[%s0 + $0x44] sm:$0xf]
    %v2773 = vld [vmem:[%s0 + $0x48] sm:$0xf]
    %v2774 = vld [vmem:[%s0 + $0x4c] sm:$0xf]
    %v2775 = vld [vmem:[%s0 + $0x50] sm:$0xf]
    %v2776 = vld [vmem:[%s0 + $0x54] sm:$0xf]
    %v2777 = vld [vmem:[%s0 + $0x58] sm:$0xf]
    %v2778 = vld [vmem:[%s0 + $0x5c] sm:$0xf]
    %v2779 = vld [vmem:[%s0 + $0x60] sm:$0xf]
    %v2780 = vld [vmem:[%s0 + $0x64] sm:$0xf]
    %v2781 = vld [vmem:[%s0 + $0x68] sm:$0xf]
    %v2782 = vld [vmem:[%s0 + $0x6c] sm:$0xf]
    %v2783 = vld [vmem:[%s0 + $0x70] sm:$0xf]
    %v2784 = vld [vmem:[%s0 + $0x74] sm:$0xf]
    %v2785 = vld [vmem:[%s0 + $0x78] sm:$0xf]
    %v2786 = vld [vmem:[%s0 + $0x7c] sm:$0xf]
    %v2787 = vunpack.c.l.bf16 %v2755
    %v2788 = vunpack.c.l.bf16 %v2756
    %v2789 = vunpack.c.l.bf16 %v2757
    %v2790 = vunpack.c.l.bf16 %v2758
    %v2791 = vunpack.c.l.bf16 %v2759
    %v2792 = vunpack.c.l.bf16 %v2760
    %v2793 = vunpack.c.l.bf16 %v2761
    %v2794 = vunpack.c.l.bf16 %v2762
    %v2795 = vunpack.c.l.bf16 %v2763
    %v2796 = vunpack.c.l.bf16 %v2764
    %v2797 = vunpack.c.l.bf16 %v2765
    %v2798 = vunpack.c.l.bf16 %v2766
    %v2799 = vunpack.c.l.bf16 %v2767
    %v2800 = vunpack.c.l.bf16 %v2768
    %v2801 = vunpack.c.l.bf16 %v2769
    %v2802 = vunpack.c.l.bf16 %v2770
    %v2803 = vunpack.c.l.bf16 %v2771
    %v2804 = vunpack.c.l.bf16 %v2772
    %v2805 = vunpack.c.l.bf16 %v2773
    %v2806 = vunpack.c.l.bf16 %v2774
    %v2807 = vunpack.c.l.bf16 %v2775
    %v2808 = vunpack.c.l.bf16 %v2776
    %v2809 = vunpack.c.l.bf16 %v2777
    %v2810 = vunpack.c.l.bf16 %v2778
    %v2811 = vunpack.c.l.bf16 %v2779
    %v2812 = vunpack.c.l.bf16 %v2780
    %v2813 = vunpack.c.l.bf16 %v2781
    %v2814 = vunpack.c.l.bf16 %v2782
    %v2815 = vunpack.c.l.bf16 %v2783
    %v2816 = vunpack.c.l.bf16 %v2784
    %v2817 = vunpack.c.l.bf16 %v2785
    %v2818 = vunpack.c.l.bf16 %v2786
    %v2819 = vadd.f32 %v2723, %v2787
    %v2820 = vadd.f32 %v2724, %v2788
    %v2821 = vadd.f32 %v2725, %v2789
    %v2822 = vadd.f32 %v2726, %v2790
    %v2823 = vadd.f32 %v2727, %v2791
    %v2824 = vadd.f32 %v2728, %v2792
    %v2825 = vadd.f32 %v2729, %v2793
    %v2826 = vadd.f32 %v2730, %v2794
    %v2827 = vadd.f32 %v2731, %v2795
    %v2828 = vadd.f32 %v2732, %v2796
    %v2829 = vadd.f32 %v2733, %v2797
    %v2830 = vadd.f32 %v2734, %v2798
    %v2831 = vadd.f32 %v2735, %v2799
    %v2832 = vadd.f32 %v2736, %v2800
    %v2833 = vadd.f32 %v2737, %v2801
    %v2834 = vadd.f32 %v2738, %v2802
    %v2835 = vadd.f32 %v2739, %v2803
    %v2836 = vadd.f32 %v2740, %v2804
    %v2837 = vadd.f32 %v2741, %v2805
    %v2838 = vadd.f32 %v2742, %v2806
    %v2839 = vadd.f32 %v2743, %v2807
    %v2840 = vadd.f32 %v2744, %v2808
    %v2841 = vadd.f32 %v2745, %v2809
    %v2842 = vadd.f32 %v2746, %v2810
    %v2843 = vadd.f32 %v2747, %v2811
    %v2844 = vadd.f32 %v2748, %v2812
    %v2845 = vadd.f32 %v2749, %v2813
    %v2846 = vadd.f32 %v2750, %v2814
    %v2847 = vadd.f32 %v2751, %v2815
    %v2848 = vadd.f32 %v2752, %v2816
    %v2849 = vadd.f32 %v2753, %v2817
    %v2850 = vadd.f32 %v2754, %v2818
    %2851 = vadd.xlane.f32.xlu0 %v2819
    %v2852 = vpop.xlane.xlu0 %2851
    %2853 = vadd.xlane.f32.xlu0 %v2820
    %v2854 = vpop.xlane.xlu0 %2853
    %2855 = vadd.xlane.f32.xlu0 %v2821
    %v2856 = vpop.xlane.xlu0 %2855
    %2857 = vadd.xlane.f32.xlu0 %v2822
    %v2858 = vpop.xlane.xlu0 %2857
    %2859 = vadd.xlane.f32.xlu0 %v2823
    %v2860 = vpop.xlane.xlu0 %2859
    %2861 = vadd.xlane.f32.xlu0 %v2824
    %v2862 = vpop.xlane.xlu0 %2861
    %2863 = vadd.xlane.f32.xlu0 %v2825
    %v2864 = vpop.xlane.xlu0 %2863
    %2865 = vadd.xlane.f32.xlu0 %v2826
    %v2866 = vpop.xlane.xlu0 %2865
    %2867 = vadd.xlane.f32.xlu0 %v2827
    %v2868 = vpop.xlane.xlu0 %2867
    %2869 = vadd.xlane.f32.xlu0 %v2828
    %v2870 = vpop.xlane.xlu0 %2869
    %2871 = vadd.xlane.f32.xlu0 %v2829
    %v2872 = vpop.xlane.xlu0 %2871
    %2873 = vadd.xlane.f32.xlu0 %v2830
    %v2874 = vpop.xlane.xlu0 %2873
    %2875 = vadd.xlane.f32.xlu0 %v2831
    %v2876 = vpop.xlane.xlu0 %2875
    %2877 = vadd.xlane.f32.xlu0 %v2832
    %v2878 = vpop.xlane.xlu0 %2877
    %2879 = vadd.xlane.f32.xlu0 %v2833
    %v2880 = vpop.xlane.xlu0 %2879
    %2881 = vadd.xlane.f32.xlu0 %v2834
    %v2882 = vpop.xlane.xlu0 %2881
    %2883 = vadd.xlane.f32.xlu0 %v2835
    %v2884 = vpop.xlane.xlu0 %2883
    %2885 = vadd.xlane.f32.xlu0 %v2836
    %v2886 = vpop.xlane.xlu0 %2885
    %2887 = vadd.xlane.f32.xlu0 %v2837
    %v2888 = vpop.xlane.xlu0 %2887
    %2889 = vadd.xlane.f32.xlu0 %v2838
    %v2890 = vpop.xlane.xlu0 %2889
    %2891 = vadd.xlane.f32.xlu0 %v2839
    %v2892 = vpop.xlane.xlu0 %2891
    %2893 = vadd.xlane.f32.xlu0 %v2840
    %v2894 = vpop.xlane.xlu0 %2893
    %2895 = vadd.xlane.f32.xlu0 %v2841
    %v2896 = vpop.xlane.xlu0 %2895
    %2897 = vadd.xlane.f32.xlu0 %v2842
    %v2898 = vpop.xlane.xlu0 %2897
    %2899 = vadd.xlane.f32.xlu0 %v2843
    %v2900 = vpop.xlane.xlu0 %2899
    %2901 = vadd.xlane.f32.xlu0 %v2844
    %v2902 = vpop.xlane.xlu0 %2901
    %2903 = vadd.xlane.f32.xlu0 %v2845
    %v2904 = vpop.xlane.xlu0 %2903
    %2905 = vadd.xlane.f32.xlu0 %v2846
    %v2906 = vpop.xlane.xlu0 %2905
    %2907 = vadd.xlane.f32.xlu0 %v2847
    %v2908 = vpop.xlane.xlu0 %2907
    %2909 = vadd.xlane.f32.xlu0 %v2848
    %v2910 = vpop.xlane.xlu0 %2909
    %2911 = vadd.xlane.f32.xlu0 %v2849
    %v2912 = vpop.xlane.xlu0 %2911
    %2913 = vadd.xlane.f32.xlu0 %v2850
    %v2914 = vpop.xlane.xlu0 %2913
    %v2915 = vrcp.pop 128.0
    %v2916 = vmul.f32 %v2852, %v2915
    %v2917 = vmul.f32 %v2854, %v2915
    %v2918 = vmul.f32 %v2856, %v2915
    %v2919 = vmul.f32 %v2858, %v2915
    %v2920 = vmul.f32 %v2860, %v2915
    %v2921 = vmul.f32 %v2862, %v2915
    %v2922 = vmul.f32 %v2864, %v2915
    %v2923 = vmul.f32 %v2866, %v2915
    %v2924 = vmul.f32 %v2868, %v2915
    %v2925 = vmul.f32 %v2870, %v2915
    %v2926 = vmul.f32 %v2872, %v2915
    %v2927 = vmul.f32 %v2874, %v2915
    %v2928 = vmul.f32 %v2876, %v2915
    %v2929 = vmul.f32 %v2878, %v2915
    %v2930 = vmul.f32 %v2880, %v2915
    %v2931 = vmul.f32 %v2882, %v2915
    %v2932 = vmul.f32 %v2884, %v2915
    %v2933 = vmul.f32 %v2886, %v2915
    %v2934 = vmul.f32 %v2888, %v2915
    %v2935 = vmul.f32 %v2890, %v2915
    %v2936 = vmul.f32 %v2892, %v2915
    %v2937 = vmul.f32 %v2894, %v2915
    %v2938 = vmul.f32 %v2896, %v2915
    %v2939 = vmul.f32 %v2898, %v2915
    %v2940 = vmul.f32 %v2900, %v2915
    %v2941 = vmul.f32 %v2902, %v2915
    %v2942 = vmul.f32 %v2904, %v2915
    %v2943 = vmul.f32 %v2906, %v2915
    %v2944 = vmul.f32 %v2908, %v2915
    %v2945 = vmul.f32 %v2910, %v2915
    %v2946 = vmul.f32 %v2912, %v2915
    %v2947 = vmul.f32 %v2914, %v2915
    %v2948 = vsub.f32 %v2819, %v2916
    %v2949 = vsub.f32 %v2820, %v2917
    %v2950 = vsub.f32 %v2821, %v2918
    %v2951 = vsub.f32 %v2822, %v2919
    %v2952 = vsub.f32 %v2823, %v2920
    %v2953 = vsub.f32 %v2824, %v2921
    %v2954 = vsub.f32 %v2825, %v2922
    %v2955 = vsub.f32 %v2826, %v2923
    %v2956 = vsub.f32 %v2827, %v2924
    %v2957 = vsub.f32 %v2828, %v2925
    %v2958 = vsub.f32 %v2829, %v2926
    %v2959 = vsub.f32 %v2830, %v2927
    %v2960 = vsub.f32 %v2831, %v2928
    %v2961 = vsub.f32 %v2832, %v2929
    %v2962 = vsub.f32 %v2833, %v2930
    %v2963 = vsub.f32 %v2834, %v2931
    %v2964 = vsub.f32 %v2835, %v2932
    %v2965 = vsub.f32 %v2836, %v2933
    %v2966 = vsub.f32 %v2837, %v2934
    %v2967 = vsub.f32 %v2838, %v2935
    %v2968 = vsub.f32 %v2839, %v2936
    %v2969 = vsub.f32 %v2840, %v2937
    %v2970 = vsub.f32 %v2841, %v2938
    %v2971 = vsub.f32 %v2842, %v2939
    %v2972 = vsub.f32 %v2843, %v2940
    %v2973 = vsub.f32 %v2844, %v2941
    %v2974 = vsub.f32 %v2845, %v2942
    %v2975 = vsub.f32 %v2846, %v2943
    %v2976 = vsub.f32 %v2847, %v2944
    %v2977 = vsub.f32 %v2848, %v2945
    %v2978 = vsub.f32 %v2849, %v2946
    %v2979 = vsub.f32 %v2850, %v2947
    %v2980 = vmul.f32 %v2948, %v2948
    %v2981 = vmul.f32 %v2949, %v2949
    %v2982 = vmul.f32 %v2950, %v2950
    %v2983 = vmul.f32 %v2951, %v2951
    %v2984 = vmul.f32 %v2952, %v2952
    %v2985 = vmul.f32 %v2953, %v2953
    %v2986 = vmul.f32 %v2954, %v2954
    %v2987 = vmul.f32 %v2955, %v2955
    %v2988 = vmul.f32 %v2956, %v2956
    %v2989 = vmul.f32 %v2957, %v2957
    %v2990 = vmul.f32 %v2958, %v2958
    %v2991 = vmul.f32 %v2959, %v2959
    %v2992 = vmul.f32 %v2960, %v2960
    %v2993 = vmul.f32 %v2961, %v2961
    %v2994 = vmul.f32 %v2962, %v2962
    %v2995 = vmul.f32 %v2963, %v2963
    %v2996 = vmul.f32 %v2964, %v2964
    %v2997 = vmul.f32 %v2965, %v2965
    %v2998 = vmul.f32 %v2966, %v2966
    %v2999 = vmul.f32 %v2967, %v2967
    %v3000 = vmul.f32 %v2968, %v2968
    %v3001 = vmul.f32 %v2969, %v2969
    %v3002 = vmul.f32 %v2970, %v2970
    %v3003 = vmul.f32 %v2971, %v2971
    %v3004 = vmul.f32 %v2972, %v2972
    %v3005 = vmul.f32 %v2973, %v2973
    %v3006 = vmul.f32 %v2974, %v2974
    %v3007 = vmul.f32 %v2975, %v2975
    %v3008 = vmul.f32 %v2976, %v2976
    %v3009 = vmul.f32 %v2977, %v2977
    %v3010 = vmul.f32 %v2978, %v2978
    %v3011 = vmul.f32 %v2979, %v2979
    %3012 = vadd.xlane.f32.xlu0 %v2980
    %v3013 = vpop.xlane.xlu0 %3012
    %3014 = vadd.xlane.f32.xlu0 %v2981
    %v3015 = vpop.xlane.xlu0 %3014
    %3016 = vadd.xlane.f32.xlu0 %v2982
    %v3017 = vpop.xlane.xlu0 %3016
    %3018 = vadd.xlane.f32.xlu0 %v2983
    %v3019 = vpop.xlane.xlu0 %3018
    %3020 = vadd.xlane.f32.xlu0 %v2984
    %v3021 = vpop.xlane.xlu0 %3020
    %3022 = vadd.xlane.f32.xlu0 %v2985
    %v3023 = vpop.xlane.xlu0 %3022
    %3024 = vadd.xlane.f32.xlu0 %v2986
    %v3025 = vpop.xlane.xlu0 %3024
    %3026 = vadd.xlane.f32.xlu0 %v2987
    %v3027 = vpop.xlane.xlu0 %3026
    %3028 = vadd.xlane.f32.xlu0 %v2988
    %v3029 = vpop.xlane.xlu0 %3028
    %3030 = vadd.xlane.f32.xlu0 %v2989
    %v3031 = vpop.xlane.xlu0 %3030
    %3032 = vadd.xlane.f32.xlu0 %v2990
    %v3033 = vpop.xlane.xlu0 %3032
    %3034 = vadd.xlane.f32.xlu0 %v2991
    %v3035 = vpop.xlane.xlu0 %3034
    %3036 = vadd.xlane.f32.xlu0 %v2992
    %v3037 = vpop.xlane.xlu0 %3036
    %3038 = vadd.xlane.f32.xlu0 %v2993
    %v3039 = vpop.xlane.xlu0 %3038
    %3040 = vadd.xlane.f32.xlu0 %v2994
    %v3041 = vpop.xlane.xlu0 %3040
    %3042 = vadd.xlane.f32.xlu0 %v2995
    %v3043 = vpop.xlane.xlu0 %3042
    %3044 = vadd.xlane.f32.xlu0 %v2996
    %v3045 = vpop.xlane.xlu0 %3044
    %3046 = vadd.xlane.f32.xlu0 %v2997
    %v3047 = vpop.xlane.xlu0 %3046
    %3048 = vadd.xlane.f32.xlu0 %v2998
    %v3049 = vpop.xlane.xlu0 %3048
    %3050 = vadd.xlane.f32.xlu0 %v2999
    %v3051 = vpop.xlane.xlu0 %3050
    %3052 = vadd.xlane.f32.xlu0 %v3000
    %v3053 = vpop.xlane.xlu0 %3052
    %3054 = vadd.xlane.f32.xlu0 %v3001
    %v3055 = vpop.xlane.xlu0 %3054
    %3056 = vadd.xlane.f32.xlu0 %v3002
    %v3057 = vpop.xlane.xlu0 %3056
    %3058 = vadd.xlane.f32.xlu0 %v3003
    %v3059 = vpop.xlane.xlu0 %3058
    %3060 = vadd.xlane.f32.xlu0 %v3004
    %v3061 = vpop.xlane.xlu0 %3060
    %3062 = vadd.xlane.f32.xlu0 %v3005
    %v3063 = vpop.xlane.xlu0 %3062
    %3064 = vadd.xlane.f32.xlu0 %v3006
    %v3065 = vpop.xlane.xlu0 %3064
    %3066 = vadd.xlane.f32.xlu0 %v3007
    %v3067 = vpop.xlane.xlu0 %3066
    %3068 = vadd.xlane.f32.xlu0 %v3008
    %v3069 = vpop.xlane.xlu0 %3068
    %3070 = vadd.xlane.f32.xlu0 %v3009
    %v3071 = vpop.xlane.xlu0 %3070
    %3072 = vadd.xlane.f32.xlu0 %v3010
    %v3073 = vpop.xlane.xlu0 %3072
    %3074 = vadd.xlane.f32.xlu0 %v3011
    %v3075 = vpop.xlane.xlu0 %3074
    %v3076 = vmul.f32 %v3013, %v2915
    %v3077 = vmul.f32 %v3015, %v2915
    %v3078 = vmul.f32 %v3017, %v2915
    %v3079 = vmul.f32 %v3019, %v2915
    %v3080 = vmul.f32 %v3021, %v2915
    %v3081 = vmul.f32 %v3023, %v2915
    %v3082 = vmul.f32 %v3025, %v2915
    %v3083 = vmul.f32 %v3027, %v2915
    %v3084 = vmul.f32 %v3029, %v2915
    %v3085 = vmul.f32 %v3031, %v2915
    %v3086 = vmul.f32 %v3033, %v2915
    %v3087 = vmul.f32 %v3035, %v2915
    %v3088 = vmul.f32 %v3037, %v2915
    %v3089 = vmul.f32 %v3039, %v2915
    %v3090 = vmul.f32 %v3041, %v2915
    %v3091 = vmul.f32 %v3043, %v2915
    %v3092 = vmul.f32 %v3045, %v2915
    %v3093 = vmul.f32 %v3047, %v2915
    %v3094 = vmul.f32 %v3049, %v2915
    %v3095 = vmul.f32 %v3051, %v2915
    %v3096 = vmul.f32 %v3053, %v2915
    %v3097 = vmul.f32 %v3055, %v2915
    %v3098 = vmul.f32 %v3057, %v2915
    %v3099 = vmul.f32 %v3059, %v2915
    %v3100 = vmul.f32 %v3061, %v2915
    %v3101 = vmul.f32 %v3063, %v2915
    %v3102 = vmul.f32 %v3065, %v2915
    %v3103 = vmul.f32 %v3067, %v2915
    %v3104 = vmul.f32 %v3069, %v2915
    %v3105 = vmul.f32 %v3071, %v2915
    %v3106 = vmul.f32 %v3073, %v2915
    %v3107 = vmul.f32 %v3075, %v2915
    %v3108 = vadd.f32 %v3076, 1e-12
    %v3109 = vadd.f32 %v3077, 1e-12
    %v3110 = vadd.f32 %v3078, 1e-12
    %v3111 = vadd.f32 %v3079, 1e-12
    %v3112 = vadd.f32 %v3080, 1e-12
    %v3113 = vadd.f32 %v3081, 1e-12
    %v3114 = vadd.f32 %v3082, 1e-12
    %v3115 = vadd.f32 %v3083, 1e-12
    %v3116 = vadd.f32 %v3084, 1e-12
    %v3117 = vadd.f32 %v3085, 1e-12
    %v3118 = vadd.f32 %v3086, 1e-12
    %v3119 = vadd.f32 %v3087, 1e-12
    %v3120 = vadd.f32 %v3088, 1e-12
    %v3121 = vadd.f32 %v3089, 1e-12
    %v3122 = vadd.f32 %v3090, 1e-12
    %v3123 = vadd.f32 %v3091, 1e-12
    %v3124 = vadd.f32 %v3092, 1e-12
    %v3125 = vadd.f32 %v3093, 1e-12
    %v3126 = vadd.f32 %v3094, 1e-12
    %v3127 = vadd.f32 %v3095, 1e-12
    %v3128 = vadd.f32 %v3096, 1e-12
    %v3129 = vadd.f32 %v3097, 1e-12
    %v3130 = vadd.f32 %v3098, 1e-12
    %v3131 = vadd.f32 %v3099, 1e-12
    %v3132 = vadd.f32 %v3100, 1e-12
    %v3133 = vadd.f32 %v3101, 1e-12
    %v3134 = vadd.f32 %v3102, 1e-12
    %v3135 = vadd.f32 %v3103, 1e-12
    %v3136 = vadd.f32 %v3104, 1e-12
    %v3137 = vadd.f32 %v3105, 1e-12
    %v3138 = vadd.f32 %v3106, 1e-12
    %v3139 = vadd.f32 %v3107, 1e-12
    %v3140 = vrsqrt.pop %v3108
    %v3141 = vrsqrt.pop %v3109
    %v3142 = vrsqrt.pop %v3110
    %v3143 = vrsqrt.pop %v3111
    %v3144 = vrsqrt.pop %v3112
    %v3145 = vrsqrt.pop %v3113
    %v3146 = vrsqrt.pop %v3114
    %v3147 = vrsqrt.pop %v3115
    %v3148 = vrsqrt.pop %v3116
    %v3149 = vrsqrt.pop %v3117
    %v3150 = vrsqrt.pop %v3118
    %v3151 = vrsqrt.pop %v3119
    %v3152 = vrsqrt.pop %v3120
    %v3153 = vrsqrt.pop %v3121
    %v3154 = vrsqrt.pop %v3122
    %v3155 = vrsqrt.pop %v3123
    %v3156 = vrsqrt.pop %v3124
    %v3157 = vrsqrt.pop %v3125
    %v3158 = vrsqrt.pop %v3126
    %v3159 = vrsqrt.pop %v3127
    %v3160 = vrsqrt.pop %v3128
    %v3161 = vrsqrt.pop %v3129
    %v3162 = vrsqrt.pop %v3130
    %v3163 = vrsqrt.pop %v3131
    %v3164 = vrsqrt.pop %v3132
    %v3165 = vrsqrt.pop %v3133
    %v3166 = vrsqrt.pop %v3134
    %v3167 = vrsqrt.pop %v3135
    %v3168 = vrsqrt.pop %v3136
    %v3169 = vrsqrt.pop %v3137
    %v3170 = vrsqrt.pop %v3138
    %v3171 = vrsqrt.pop %v3139
    %v3172 = vmul.f32 %v2948, %v3140
    %v3173 = vmul.f32 %v2949, %v3141
    %v3174 = vmul.f32 %v2950, %v3142
    %v3175 = vmul.f32 %v2951, %v3143
    %v3176 = vmul.f32 %v2952, %v3144
    %v3177 = vmul.f32 %v2953, %v3145
    %v3178 = vmul.f32 %v2954, %v3146
    %v3179 = vmul.f32 %v2955, %v3147
    %v3180 = vmul.f32 %v2956, %v3148
    %v3181 = vmul.f32 %v2957, %v3149
    %v3182 = vmul.f32 %v2958, %v3150
    %v3183 = vmul.f32 %v2959, %v3151
    %v3184 = vmul.f32 %v2960, %v3152
    %v3185 = vmul.f32 %v2961, %v3153
    %v3186 = vmul.f32 %v2962, %v3154
    %v3187 = vmul.f32 %v2963, %v3155
    %v3188 = vmul.f32 %v2964, %v3156
    %v3189 = vmul.f32 %v2965, %v3157
    %v3190 = vmul.f32 %v2966, %v3158
    %v3191 = vmul.f32 %v2967, %v3159
    %v3192 = vmul.f32 %v2968, %v3160
    %v3193 = vmul.f32 %v2969, %v3161
    %v3194 = vmul.f32 %v2970, %v3162
    %v3195 = vmul.f32 %v2971, %v3163
    %v3196 = vmul.f32 %v2972, %v3164
    %v3197 = vmul.f32 %v2973, %v3165
    %v3198 = vmul.f32 %v2974, %v3166
    %v3199 = vmul.f32 %v2975, %v3167
    %v3200 = vmul.f32 %v2976, %v3168
    %v3201 = vmul.f32 %v2977, %v3169
    %v3202 = vmul.f32 %v2978, %v3170
    %v3203 = vmul.f32 %v2979, %v3171
    %v3204 = vld [vmem:[%s5] sm:$0x1]
    %v3206 = vlaneseq
    %v3207 = vshrl.u32 %v3206, 7
    %v3208 = vsub.s32 0, %v3207
    %v3209 = vrot.slane %v3204, %v3208
    %v3211 = vmul.f32 %v3172, %v3209
    %v3212 = vmul.f32 %v3173, %v3209
    %v3213 = vmul.f32 %v3174, %v3209
    %v3214 = vmul.f32 %v3175, %v3209
    %v3215 = vmul.f32 %v3176, %v3209
    %v3216 = vmul.f32 %v3177, %v3209
    %v3217 = vmul.f32 %v3178, %v3209
    %v3218 = vmul.f32 %v3179, %v3209
    %v3219 = vmul.f32 %v3180, %v3209
    %v3220 = vmul.f32 %v3181, %v3209
    %v3221 = vmul.f32 %v3182, %v3209
    %v3222 = vmul.f32 %v3183, %v3209
    %v3223 = vmul.f32 %v3184, %v3209
    %v3224 = vmul.f32 %v3185, %v3209
    %v3225 = vmul.f32 %v3186, %v3209
    %v3226 = vmul.f32 %v3187, %v3209
    %v3227 = vmul.f32 %v3188, %v3209
    %v3228 = vmul.f32 %v3189, %v3209
    %v3229 = vmul.f32 %v3190, %v3209
    %v3230 = vmul.f32 %v3191, %v3209
    %v3231 = vmul.f32 %v3192, %v3209
    %v3232 = vmul.f32 %v3193, %v3209
    %v3233 = vmul.f32 %v3194, %v3209
    %v3234 = vmul.f32 %v3195, %v3209
    %v3235 = vmul.f32 %v3196, %v3209
    %v3236 = vmul.f32 %v3197, %v3209
    %v3237 = vmul.f32 %v3198, %v3209
    %v3238 = vmul.f32 %v3199, %v3209
    %v3239 = vmul.f32 %v3200, %v3209
    %v3240 = vmul.f32 %v3201, %v3209
    %v3241 = vmul.f32 %v3202, %v3209
    %v3242 = vmul.f32 %v3203, %v3209
    %v3243 = vld [vmem:[%s6] sm:$0x1]
    %v3245 = vlaneseq
    %v3246 = vshrl.u32 %v3245, 7
    %v3247 = vsub.s32 0, %v3246
    %v3248 = vrot.slane %v3243, %v3247
    %v3250 = vadd.f32 %v3211, %v3248
    %v3251 = vadd.f32 %v3212, %v3248
    %v3252 = vadd.f32 %v3213, %v3248
    %v3253 = vadd.f32 %v3214, %v3248
    %v3254 = vadd.f32 %v3215, %v3248
    %v3255 = vadd.f32 %v3216, %v3248
    %v3256 = vadd.f32 %v3217, %v3248
    %v3257 = vadd.f32 %v3218, %v3248
    %v3258 = vadd.f32 %v3219, %v3248
    %v3259 = vadd.f32 %v3220, %v3248
    %v3260 = vadd.f32 %v3221, %v3248
    %v3261 = vadd.f32 %v3222, %v3248
    %v3262 = vadd.f32 %v3223, %v3248
    %v3263 = vadd.f32 %v3224, %v3248
    %v3264 = vadd.f32 %v3225, %v3248
    %v3265 = vadd.f32 %v3226, %v3248
    %v3266 = vadd.f32 %v3227, %v3248
    %v3267 = vadd.f32 %v3228, %v3248
    %v3268 = vadd.f32 %v3229, %v3248
    %v3269 = vadd.f32 %v3230, %v3248
    %v3270 = vadd.f32 %v3231, %v3248
    %v3271 = vadd.f32 %v3232, %v3248
    %v3272 = vadd.f32 %v3233, %v3248
    %v3273 = vadd.f32 %v3234, %v3248
    %v3274 = vadd.f32 %v3235, %v3248
    %v3275 = vadd.f32 %v3236, %v3248
    %v3276 = vadd.f32 %v3237, %v3248
    %v3277 = vadd.f32 %v3238, %v3248
    %v3278 = vadd.f32 %v3239, %v3248
    %v3279 = vadd.f32 %v3240, %v3248
    %v3280 = vadd.f32 %v3241, %v3248
    %v3281 = vadd.f32 %v3242, %v3248
    %v3282 = vpack.c.bf16 %v3251, %v3250
    %v3283 = vpack.c.bf16 %v3253, %v3252
    %v3284 = vpack.c.bf16 %v3255, %v3254
    %v3285 = vpack.c.bf16 %v3257, %v3256
    %v3286 = vpack.c.bf16 %v3259, %v3258
    %v3287 = vpack.c.bf16 %v3261, %v3260
    %v3288 = vpack.c.bf16 %v3263, %v3262
    %v3289 = vpack.c.bf16 %v3265, %v3264
    %v3290 = vpack.c.bf16 %v3267, %v3266
    %v3291 = vpack.c.bf16 %v3269, %v3268
    %v3292 = vpack.c.bf16 %v3271, %v3270
    %v3293 = vpack.c.bf16 %v3273, %v3272
    %v3294 = vpack.c.bf16 %v3275, %v3274
    %v3295 = vpack.c.bf16 %v3277, %v3276
    %v3296 = vpack.c.bf16 %v3279, %v3278
    %v3297 = vpack.c.bf16 %v3281, %v3280
    %v3314 = vunpack.c.l.b16 %v3282
    %v3315 = vunpack.c.h.b16 %v3282
    %v3316 = vunpack.c.l.b16 %v3283
    %v3317 = vunpack.c.h.b16 %v3283
    %v3318 = vunpack.c.l.b16 %v3284
    %v3319 = vunpack.c.h.b16 %v3284
    %v3320 = vunpack.c.l.b16 %v3285
    %v3321 = vunpack.c.h.b16 %v3285
    %v3322 = vunpack.c.l.b16 %v3286
    %v3323 = vunpack.c.h.b16 %v3286
    %v3324 = vunpack.c.l.b16 %v3287
    %v3325 = vunpack.c.h.b16 %v3287
    %v3326 = vunpack.c.l.b16 %v3288
    %v3327 = vunpack.c.h.b16 %v3288
    %v3328 = vunpack.c.l.b16 %v3289
    %v3329 = vunpack.c.h.b16 %v3289
    %v3330 = vunpack.c.l.b16 %v3290
    %v3331 = vunpack.c.h.b16 %v3290
    %v3332 = vunpack.c.l.b16 %v3291
    %v3333 = vunpack.c.h.b16 %v3291
    %v3334 = vunpack.c.l.b16 %v3292
    %v3335 = vunpack.c.h.b16 %v3292
    %v3336 = vunpack.c.l.b16 %v3293
    %v3337 = vunpack.c.h.b16 %v3293
    %v3338 = vunpack.c.l.b16 %v3294
    %v3339 = vunpack.c.h.b16 %v3294
    %v3340 = vunpack.c.l.b16 %v3295
    %v3341 = vunpack.c.h.b16 %v3295
    %v3342 = vunpack.c.l.b16 %v3296
    %v3343 = vunpack.c.h.b16 %v3296
    %v3344 = vunpack.c.l.b16 %v3297
    %v3345 = vunpack.c.h.b16 %v3297
    %v3346 = vpack.c.b16 %v3314, %v3314
    %v3347 = vpack.c.b16 %v3315, %v3315
    %v3348 = vpack.c.b16 %v3316, %v3316
    %v3349 = vpack.c.b16 %v3317, %v3317
    %v3350 = vpack.c.b16 %v3318, %v3318
    %v3351 = vpack.c.b16 %v3319, %v3319
    %v3352 = vpack.c.b16 %v3320, %v3320
    %v3353 = vpack.c.b16 %v3321, %v3321
    %v3354 = vpack.c.b16 %v3322, %v3322
    %v3355 = vpack.c.b16 %v3323, %v3323
    %v3356 = vpack.c.b16 %v3324, %v3324
    %v3357 = vpack.c.b16 %v3325, %v3325
    %v3358 = vpack.c.b16 %v3326, %v3326
    %v3359 = vpack.c.b16 %v3327, %v3327
    %v3360 = vpack.c.b16 %v3328, %v3328
    %v3361 = vpack.c.b16 %v3329, %v3329
    %v3362 = vpack.c.b16 %v3330, %v3330
    %v3363 = vpack.c.b16 %v3331, %v3331
    %v3364 = vpack.c.b16 %v3332, %v3332
    %v3365 = vpack.c.b16 %v3333, %v3333
    %v3366 = vpack.c.b16 %v3334, %v3334
    %v3367 = vpack.c.b16 %v3335, %v3335
    %v3368 = vpack.c.b16 %v3336, %v3336
    %v3369 = vpack.c.b16 %v3337, %v3337
    %v3370 = vpack.c.b16 %v3338, %v3338
    %v3371 = vpack.c.b16 %v3339, %v3339
    %v3372 = vpack.c.b16 %v3340, %v3340
    %v3373 = vpack.c.b16 %v3341, %v3341
    %v3374 = vpack.c.b16 %v3342, %v3342
    %v3375 = vpack.c.b16 %v3343, %v3343
    %v3376 = vpack.c.b16 %v3344, %v3344
    %v3377 = vpack.c.b16 %v3345, %v3345
    %3410 = vst [vmem:[%s7] sm:$0xf] %v3346
    %3411 = vst [vmem:[%s7 + $0x4] sm:$0xf] %v3347
    %3412 = vst [vmem:[%s7 + $0x8] sm:$0xf] %v3348
    %3413 = vst [vmem:[%s7 + $0xc] sm:$0xf] %v3349
    %3414 = vst [vmem:[%s7 + $0x10] sm:$0xf] %v3350
    %3415 = vst [vmem:[%s7 + $0x14] sm:$0xf] %v3351
    %3416 = vst [vmem:[%s7 + $0x18] sm:$0xf] %v3352
    %3417 = vst [vmem:[%s7 + $0x1c] sm:$0xf] %v3353
    %3418 = vst [vmem:[%s7 + $0x20] sm:$0xf] %v3354
    %3419 = vst [vmem:[%s7 + $0x24] sm:$0xf] %v3355
    %3420 = vst [vmem:[%s7 + $0x28] sm:$0xf] %v3356
    %3421 = vst [vmem:[%s7 + $0x2c] sm:$0xf] %v3357
    %3422 = vst [vmem:[%s7 + $0x30] sm:$0xf] %v3358
    %3423 = vst [vmem:[%s7 + $0x34] sm:$0xf] %v3359
    %3424 = vst [vmem:[%s7 + $0x38] sm:$0xf] %v3360
    %3425 = vst [vmem:[%s7 + $0x3c] sm:$0xf] %v3361
    %3426 = vst [vmem:[%s7 + $0x40] sm:$0xf] %v3362
    %3427 = vst [vmem:[%s7 + $0x44] sm:$0xf] %v3363
    %3428 = vst [vmem:[%s7 + $0x48] sm:$0xf] %v3364
    %3429 = vst [vmem:[%s7 + $0x4c] sm:$0xf] %v3365
    %3430 = vst [vmem:[%s7 + $0x50] sm:$0xf] %v3366
    %3431 = vst [vmem:[%s7 + $0x54] sm:$0xf] %v3367
    %3432 = vst [vmem:[%s7 + $0x58] sm:$0xf] %v3368
    %3433 = vst [vmem:[%s7 + $0x5c] sm:$0xf] %v3369
    %3434 = vst [vmem:[%s7 + $0x60] sm:$0xf] %v3370
    %3435 = vst [vmem:[%s7 + $0x64] sm:$0xf] %v3371
    %3436 = vst [vmem:[%s7 + $0x68] sm:$0xf] %v3372
    %3437 = vst [vmem:[%s7 + $0x6c] sm:$0xf] %v3373
    %3438 = vst [vmem:[%s7 + $0x70] sm:$0xf] %v3374
    %3439 = vst [vmem:[%s7 + $0x74] sm:$0xf] %v3375
    %3440 = vst [vmem:[%s7 + $0x78] sm:$0xf] %v3376
    %3441 = vst [vmem:[%s7 + $0x7c] sm:$0xf] %v3377
  $region37: #{bert_encoder_forward.13} parent=0 // pred_fallthru
    _
  // Predicated region
  $region38: #{bert_encoder_forward.13} parent=0 // pred_check
    _
  $region39: #{bert_encoder_forward.13} parent=0 // pred_check_branch
    %3443 = sbr.rel (0) target = $region41
  $region40: #{bert_encoder_forward.13} parent=0 // pred_region
    _
  $region41: #{bert_encoder_forward.13} parent=0 // pred_fallthru
    _
  // Predicated region
  $region42: #{bert_encoder_forward.13} parent=0 // pred_check
    _
  $region43: #{bert_encoder_forward.13} parent=0 // pred_check_branch
    %3445 = sbr.rel (0) target = $region45
  $region44: #{bert_encoder_forward.13} parent=0 // pred_region
    _
  $region45: #{bert_encoder_forward.13} parent=0 // pred_fallthru
    _

</llo_original>
